<compile_context>
chip_gen: v5e
topology: v5e:2x2
jax: 0.10.0
libtpu: 0.0.40
codegen_flags: <defaults>
</compile_context>

<pallas_src>
import jax
import jax.numpy as jnp
from jax.experimental import pallas as pl
from jax.experimental.pallas import tpu as pltpu

NC = 1        # input channels (nc)
NDF = 8       # ndf (opt.ndf) — small synthetic value
BN_EPS = 1e-5
LRELU_SLOPE = 0.2
LANE = 128    # lane-pad width for all conv output channels


# ------------------------------ kernel helpers ------------------------------

def _leaky_relu(y):
    # single VALU max instead of compare + select
    return jnp.maximum(y, LRELU_SLOPE * y)


def _bn_scale_shift(y, g, b):
    """Train-mode BatchNorm folded into one scale/shift, single pass over y."""
    inv_m = 1.0 / y.shape[0]
    mu = jnp.sum(y, axis=0, keepdims=True) * inv_m
    ex2 = jnp.sum(y * y, axis=0, keepdims=True) * inv_m
    var = jnp.maximum(ex2 - mu * mu, 0.0)
    scale = g * jax.lax.rsqrt(var + BN_EPS)
    shift = b - mu * scale
    return y * scale + shift


# ------------------------------ Pallas kernels ------------------------------

def _conv_lrelu_kernel(x_ref, w_ref, o_ref):
    y = jnp.dot(x_ref[...], w_ref[...], preferred_element_type=jnp.float32)
    o_ref[...] = _leaky_relu(y).astype(o_ref.dtype)


def _conv_bn_lrelu_kernel(x_ref, w_ref, g_ref, b_ref, o_ref):
    y = jnp.dot(x_ref[...], w_ref[...], preferred_element_type=jnp.float32)
    yn = _bn_scale_shift(y, g_ref[...], b_ref[...])
    o_ref[...] = _leaky_relu(yn).astype(o_ref.dtype)


def _conv_bn_lrelu_head_kernel(x_ref, w_ref, g_ref, b_ref, w5_ref, sel_ref, o_ref):
    # Layer 4: conv-as-matmul + BN + LeakyReLU, kept resident in f32 vregs/VMEM.
    y = jnp.dot(x_ref[...], w_ref[...], preferred_element_type=jnp.float32)
    y4 = _leaky_relu(_bn_scale_shift(y, g_ref[...], b_ref[...]))
    # Layer 5 (4x4 valid conv to 1 channel) fused as VPU multiply + reductions.
    prod = y4 * w5_ref[...]                               # [N*16, 128]
    per_row = jnp.sum(prod, axis=1, keepdims=True)        # [N*16, 1]  lane reduce
    s = jnp.dot(sel_ref[...], per_row,
                preferred_element_type=jnp.float32)       # [N, 1] per-sample sum
    # overflow-free sigmoid
    z = jnp.exp(-jnp.abs(s))
    r = 1.0 / (1.0 + z)
    sig = jnp.where(s >= 0.0, r, z * r)
    o_ref[...] = jnp.broadcast_to(sig, o_ref.shape)       # lane-dense [N, 128]


# ---------------------------- pallas_call plumbing ---------------------------

def _full_spec(shape):
    zeros = (0,) * len(shape)
    return pl.BlockSpec(shape, lambda i: zeros)


def _matmul_cost(m, k, c, in_bytes=2, out_bytes=2, transcendentals=0):
    return pl.CostEstimate(
        flops=2 * m * k * c + 10 * m * c,
        transcendentals=transcendentals,
        bytes_accessed=(m * k + k * c) * in_bytes + m * c * out_bytes,
    )


def _fused_call(kernel, args, out_shape, cost):
    return pl.pallas_call(
        kernel,
        out_shape=out_shape,
        grid=(1,),
        in_specs=[_full_spec(a.shape) for a in args],
        out_specs=_full_spec(out_shape.shape),
        cost_estimate=cost,
        compiler_params=pltpu.CompilerParams(dimension_semantics=("arbitrary",)),
    )(*args)


# ------------------------------ JAX glue code --------------------------------

def im2col_nhwc(x, k, stride, pad):
    """x: [N, H, W, C] -> patches [N*Ho*Wo, k*k*C] (tap-major (kh, kw), then C)."""
    n, h, w, c = x.shape
    if pad:
        x = jnp.pad(x, ((0, 0), (pad, pad), (pad, pad), (0, 0)))
    ho = (h + 2 * pad - k) // stride + 1
    wo = (w + 2 * pad - k) // stride + 1
    taps = [x[:, i:i + stride * (ho - 1) + 1:stride,
                 j:j + stride * (wo - 1) + 1:stride, :]
            for i in range(k) for j in range(k)]
    p = jnp.concatenate(taps, axis=-1)                    # [N, Ho, Wo, k*k*C]
    return p.reshape(n * ho * wo, k * k * c), ho, wo


def pack_conv_weight(w, cin_pad, cout_pad):
    """(Cout, Cin, kh, kw) -> bf16 (kh*kw*cin_pad, cout_pad) matching im2col order."""
    co, ci, kh, kw = w.shape
    w = jnp.pad(w, ((0, cout_pad - co), (0, cin_pad - ci), (0, 0), (0, 0)))
    w = jnp.transpose(w, (2, 3, 1, 0)).reshape(kh * kw * cin_pad, cout_pad)
    return w.astype(jnp.bfloat16)


def pack_affine(v, cpad):
    return jnp.pad(v, (0, cpad - v.shape[0])).reshape(1, cpad).astype(jnp.float32)


def make_params(key):
    ks = jax.random.split(key, 12)
    std = 0.02  # DCGAN-style init
    return {
        "w1": jax.random.normal(ks[0], (NDF,      NC,      4, 4), jnp.float32) * std,
        "w2": jax.random.normal(ks[1], (NDF * 2,  NDF,     4, 4), jnp.float32) * std,
        "w3": jax.random.normal(ks[2], (NDF * 4,  NDF * 2, 4, 4), jnp.float32) * std,
        "w4": jax.random.normal(ks[3], (NDF * 8,  NDF * 4, 4, 4), jnp.float32) * std,
        "w5": jax.random.normal(ks[4], (1,        NDF * 8, 4, 4), jnp.float32) * std,
        "g2": 1.0 + 0.1 * jax.random.normal(ks[5], (NDF * 2,), jnp.float32),
        "b2": 0.1 * jax.random.normal(ks[6], (NDF * 2,), jnp.float32),
        "g3": 1.0 + 0.1 * jax.random.normal(ks[7], (NDF * 4,), jnp.float32),
        "b3": 0.1 * jax.random.normal(ks[8], (NDF * 4,), jnp.float32),
        "g4": 1.0 + 0.1 * jax.random.normal(ks[9], (NDF * 8,), jnp.float32),
        "b4": 0.1 * jax.random.normal(ks[10], (NDF * 8,), jnp.float32),
    }


def discriminator_forward(x, p):
    """x: [N, nc, 64, 64] f32 -> [N] (matches output.view(-1, 1).squeeze(1))."""
    n = x.shape[0]

    # ---- parameter packing: lane-padded, bf16 matmul operands, f32 affine ----
    w1p = pack_conv_weight(p["w1"], NC, LANE)
    w2p = pack_conv_weight(p["w2"], LANE, LANE)
    w3p = pack_conv_weight(p["w3"], LANE, LANE)
    w4p = pack_conv_weight(p["w4"], LANE, LANE)
    g2, b2 = pack_affine(p["g2"], LANE), pack_affine(p["b2"], LANE)
    g3, b3 = pack_affine(p["g3"], LANE), pack_affine(p["b3"], LANE)
    g4, b4 = pack_affine(p["g4"], LANE), pack_affine(p["b4"], LANE)
    # Layer-5 weight as a per-row (n, ho, wo) multiply tile for the fused head.
    w5r = jnp.transpose(p["w5"][0], (1, 2, 0)).reshape(16, NDF * 8)   # [(ho,wo), c]
    w5r = jnp.pad(w5r, ((0, 0), (0, LANE - NDF * 8)))
    w5t = jnp.tile(w5r, (n, 1)).astype(jnp.float32)                   # [N*16, 128]
    sel = jnp.repeat(jnp.eye(n, dtype=jnp.float32), 16, axis=1)       # [N, N*16]

    # ---- layer 1: Conv(nc -> ndf, 4, 2, 1) + LeakyReLU(0.2) ----
    act = jnp.transpose(x, (0, 2, 3, 1)).astype(jnp.bfloat16)         # NHWC bf16
    patches, ho, wo = im2col_nhwc(act, 4, 2, 1)
    m, k = patches.shape
    y = _fused_call(_conv_lrelu_kernel, (patches, w1p),
                    jax.ShapeDtypeStruct((m, LANE), jnp.bfloat16),
                    _matmul_cost(m, k, LANE))
    act = y.reshape(n, ho, wo, LANE)

    # ---- layers 2-3: Conv + BatchNorm(batch stats) + LeakyReLU ----
    for wp, g, b in ((w2p, g2, b2), (w3p, g3, b3)):
        patches, ho, wo = im2col_nhwc(act, 4, 2, 1)
        m, k = patches.shape
        y = _fused_call(_conv_bn_lrelu_kernel, (patches, wp, g, b),
                        jax.ShapeDtypeStruct((m, LANE), jnp.bfloat16),
                        _matmul_cost(m, k, LANE))
        act = y.reshape(n, ho, wo, LANE)

    # ---- layers 4+5 fused: Conv + BN + LeakyReLU + Conv(8ndf->1,4,1,0) + Sigmoid
    patches, ho, wo = im2col_nhwc(act, 4, 2, 1)       # ho = wo = 4
    m, k = patches.shape
    out = _fused_call(_conv_bn_lrelu_head_kernel,
                      (patches, w4p, g4, b4, w5t, sel),
                      jax.ShapeDtypeStruct((n, LANE), jnp.float32),
                      _matmul_cost(m, k, LANE, out_bytes=4, transcendentals=n))
    return out[:, 0]   # output.view(-1, 1).squeeze(1) -> shape (N,)


if __name__ == "__main__":
    key = jax.random.PRNGKey(0)
    k_in, k_par = jax.random.split(key)
    # DCGAN discriminator structurally requires 64x64 inputs (final 4x4 valid conv).
    x = jax.random.normal(k_in, (2, NC, 64, 64), jnp.float32)
    params = make_params(k_par)

    fwd = jax.jit(discriminator_forward)
    out = jax.block_until_ready(fwd(x, params))

    assert out.shape == (2,), out.shape
    assert bool(jnp.all(jnp.isfinite(out)))
    assert bool(jnp.all((out >= 0.0) & (out <= 1.0)))
    print("KERNEL_OK")
</pallas_src>

<mosaic_0001>
module attributes {stable_mosaic.version = 11 : i64} {
  func.func @_conv_lrelu_kernel(%arg0: i32, %arg1: memref<2048x16xbf16, #tpu.memory_space<vmem>>, %arg2: memref<16x128xbf16, #tpu.memory_space<vmem>>, %arg3: memref<2048x128xbf16, #tpu.memory_space<vmem>>) attributes {dimension_semantics = [#tpu.dimension_semantics<arbitrary>], iteration_bounds = array<i64: 1>, scalar_prefetch = 0 : i64, scratch_operands = 0 : i64, tpu.core_type = #tpu.core_type<tc>, window_params = [{pipeline_mode = #tpu.pipeline_mode<synchronous>, transform_indices = @transform_0, window_bounds = array<i64: 2048, 16>}, {pipeline_mode = #tpu.pipeline_mode<synchronous>, transform_indices = @transform_1, window_bounds = array<i64: 16, 128>}, {pipeline_mode = #tpu.pipeline_mode<synchronous>, transform_indices = @transform_2, window_bounds = array<i64: 2048, 128>}]} {
    %c0 = arith.constant 0 : index
    %c0_0 = arith.constant 0 : index
    %0 = vector.load %arg1[%c0, %c0_0] : memref<2048x16xbf16, #tpu.memory_space<vmem>>, vector<2048x16xbf16>
    %c0_1 = arith.constant 0 : index
    %c0_2 = arith.constant 0 : index
    %1 = vector.load %arg2[%c0_1, %c0_2] : memref<16x128xbf16, #tpu.memory_space<vmem>>, vector<16x128xbf16>
    %cst = arith.constant dense<0.000000e+00> : vector<2048x128xf32>
    %2 = tpu.matmul %0, %1, %cst {dimension_numbers = #tpu.dot_dimension_numbers<[1], [0], [0], [1], [0, 0, 1, 1], [], []>} : vector<2048x16xbf16>, vector<16x128xbf16>, vector<2048x128xf32> -> vector<2048x128xf32>
    %cst_3 = arith.constant 2.000000e-01 : f32
    %3 = vector.broadcast %cst_3 : f32 to vector<2048x128xf32>
    %4 = arith.mulf %3, %2 : vector<2048x128xf32>
    %5 = arith.maximumf %2, %4 : vector<2048x128xf32>
    %6 = arith.truncf %5 : vector<2048x128xf32> to vector<2048x128xbf16>
    %c0_4 = arith.constant 0 : index
    %c0_5 = arith.constant 0 : index
    %7 = vector.load %arg3[%c0_4, %c0_5] : memref<2048x128xbf16, #tpu.memory_space<vmem>>, vector<2048x128xbf16>
    tpu.vector_store %arg3[%c0_4, %c0_5], %6 {strides = array<i32>} : memref<2048x128xbf16, #tpu.memory_space<vmem>>, vector<2048x128xbf16>,
    return
  }
  func.func @transform_0(%arg0: i32) -> (i32, i32) {
    %c0_i32 = arith.constant 0 : i32
    %c0_i32_0 = arith.constant 0 : i32
    %c0_i32_1 = arith.constant 0 : i32
    return %c0_i32, %c0_i32_0 : i32, i32
  }
  func.func @transform_1(%arg0: i32) -> (i32, i32) {
    %c0_i32 = arith.constant 0 : i32
    %c0_i32_0 = arith.constant 0 : i32
    %c0_i32_1 = arith.constant 0 : i32
    return %c0_i32, %c0_i32_0 : i32, i32
  }
  func.func @transform_2(%arg0: i32) -> (i32, i32) {
    %c0_i32 = arith.constant 0 : i32
    %c0_i32_0 = arith.constant 0 : i32
    %c0_i32_1 = arith.constant 0 : i32
    return %c0_i32, %c0_i32_0 : i32, i32
  }
}

module attributes {stable_mosaic.version = 11 : i64} {
  func.func @_conv_bn_lrelu_kernel(%arg0: i32, %arg1: memref<512x2048xbf16, #tpu.memory_space<vmem>>, %arg2: memref<2048x128xbf16, #tpu.memory_space<vmem>>, %arg3: memref<1x128xf32, #tpu.memory_space<vmem>>, %arg4: memref<1x128xf32, #tpu.memory_space<vmem>>, %arg5: memref<512x128xbf16, #tpu.memory_space<vmem>>) attributes {dimension_semantics = [#tpu.dimension_semantics<arbitrary>], iteration_bounds = array<i64: 1>, scalar_prefetch = 0 : i64, scratch_operands = 0 : i64, tpu.core_type = #tpu.core_type<tc>, window_params = [{pipeline_mode = #tpu.pipeline_mode<synchronous>, transform_indices = @transform_0, window_bounds = array<i64: 512, 2048>}, {pipeline_mode = #tpu.pipeline_mode<synchronous>, transform_indices = @transform_1, window_bounds = array<i64: 2048, 128>}, {pipeline_mode = #tpu.pipeline_mode<synchronous>, transform_indices = @transform_2, window_bounds = array<i64: 1, 128>}, {pipeline_mode = #tpu.pipeline_mode<synchronous>, transform_indices = @transform_3, window_bounds = array<i64: 1, 128>}, {pipeline_mode = #tpu.pipeline_mode<synchronous>, transform_indices = @transform_4, window_bounds = array<i64: 512, 128>}]} {
    %c0 = arith.constant 0 : index
    %c0_0 = arith.constant 0 : index
    %0 = vector.load %arg1[%c0, %c0_0] : memref<512x2048xbf16, #tpu.memory_space<vmem>>, vector<512x2048xbf16>
    %c0_1 = arith.constant 0 : index
    %c0_2 = arith.constant 0 : index
    %1 = vector.load %arg2[%c0_1, %c0_2] : memref<2048x128xbf16, #tpu.memory_space<vmem>>, vector<2048x128xbf16>
    %cst = arith.constant dense<0.000000e+00> : vector<512x128xf32>
    %2 = tpu.matmul %0, %1, %cst {dimension_numbers = #tpu.dot_dimension_numbers<[1], [0], [0], [1], [0, 0, 1, 1], [], []>} : vector<512x2048xbf16>, vector<2048x128xbf16>, vector<512x128xf32> -> vector<512x128xf32>
    %c0_3 = arith.constant 0 : index
    %c0_4 = arith.constant 0 : index
    %3 = vector.load %arg3[%c0_3, %c0_4] : memref<1x128xf32, #tpu.memory_space<vmem>>, vector<1x128xf32>
    %c0_5 = arith.constant 0 : index
    %c0_6 = arith.constant 0 : index
    %4 = vector.load %arg4[%c0_5, %c0_6] : memref<1x128xf32, #tpu.memory_space<vmem>>, vector<1x128xf32>
    %cst_7 = arith.constant dense<0.000000e+00> : vector<128xf32>
    %5 = vector.multi_reduction <add>, %2, %cst_7 [0] : vector<512x128xf32> to vector<128xf32>
    %6 = vector.shape_cast %5 : vector<128xf32> to vector<1x128xf32>
    %cst_8 = arith.constant 0.001953125 : f32
    %7 = vector.broadcast %cst_8 : f32 to vector<1x128xf32>
    %8 = arith.mulf %6, %7 : vector<1x128xf32>
    %9 = arith.mulf %2, %2 : vector<512x128xf32>
    %cst_9 = arith.constant dense<0.000000e+00> : vector<128xf32>
    %10 = vector.multi_reduction <add>, %9, %cst_9 [0] : vector<512x128xf32> to vector<128xf32>
    %11 = vector.shape_cast %10 : vector<128xf32> to vector<1x128xf32>
    %cst_10 = arith.constant 0.001953125 : f32
    %12 = vector.broadcast %cst_10 : f32 to vector<1x128xf32>
    %13 = arith.mulf %11, %12 : vector<1x128xf32>
    %14 = arith.mulf %8, %8 : vector<1x128xf32>
    %15 = arith.subf %13, %14 : vector<1x128xf32>
    %cst_11 = arith.constant 0.000000e+00 : f32
    %16 = vector.broadcast %cst_11 : f32 to vector<1x128xf32>
    %17 = arith.maximumf %15, %16 : vector<1x128xf32>
    %cst_12 = arith.constant 9.99999974E-6 : f32
    %18 = vector.broadcast %cst_12 : f32 to vector<1x128xf32>
    %19 = arith.addf %17, %18 : vector<1x128xf32>
    %20 = math.rsqrt %19 : vector<1x128xf32>
    %21 = arith.mulf %3, %20 : vector<1x128xf32>
    %22 = arith.mulf %8, %21 : vector<1x128xf32>
    %23 = arith.subf %4, %22 : vector<1x128xf32>
    %24 = vector.broadcast %21 : vector<1x128xf32> to vector<512x128xf32>
    %25 = arith.mulf %2, %24 : vector<512x128xf32>
    %26 = vector.broadcast %23 : vector<1x128xf32> to vector<512x128xf32>
    %27 = arith.addf %25, %26 : vector<512x128xf32>
    %cst_13 = arith.constant 2.000000e-01 : f32
    %28 = vector.broadcast %cst_13 : f32 to vector<512x128xf32>
    %29 = arith.mulf %28, %27 : vector<512x128xf32>
    %30 = arith.maximumf %27, %29 : vector<512x128xf32>
    %31 = arith.truncf %30 : vector<512x128xf32> to vector<512x128xbf16>
    %c0_14 = arith.constant 0 : index
    %c0_15 = arith.constant 0 : index
    %32 = vector.load %arg5[%c0_14, %c0_15] : memref<512x128xbf16, #tpu.memory_space<vmem>>, vector<512x128xbf16>
    tpu.vector_store %arg5[%c0_14, %c0_15], %31 {strides = array<i32>} : memref<512x128xbf16, #tpu.memory_space<vmem>>, vector<512x128xbf16>,
    return
  }
  func.func @transform_0(%arg0: i32) -> (i32, i32) {
    %c0_i32 = arith.constant 0 : i32
    %c0_i32_0 = arith.constant 0 : i32
    %c0_i32_1 = arith.constant 0 : i32
    return %c0_i32, %c0_i32_0 : i32, i32
  }
  func.func @transform_1(%arg0: i32) -> (i32, i32) {
    %c0_i32 = arith.constant 0 : i32
    %c0_i32_0 = arith.constant 0 : i32
    %c0_i32_1 = arith.constant 0 : i32
    return %c0_i32, %c0_i32_0 : i32, i32
  }
  func.func @transform_2(%arg0: i32) -> (i32, i32) {
    %c0_i32 = arith.constant 0 : i32
    %c0_i32_0 = arith.constant 0 : i32
    %c0_i32_1 = arith.constant 0 : i32
    return %c0_i32, %c0_i32_0 : i32, i32
  }
  func.func @transform_3(%arg0: i32) -> (i32, i32) {
    %c0_i32 = arith.constant 0 : i32
    %c0_i32_0 = arith.constant 0 : i32
    %c0_i32_1 = arith.constant 0 : i32
    return %c0_i32, %c0_i32_0 : i32, i32
  }
  func.func @transform_4(%arg0: i32) -> (i32, i32) {
    %c0_i32 = arith.constant 0 : i32
    %c0_i32_0 = arith.constant 0 : i32
    %c0_i32_1 = arith.constant 0 : i32
    return %c0_i32, %c0_i32_0 : i32, i32
  }
}

module attributes {stable_mosaic.version = 11 : i64} {
  func.func @_conv_bn_lrelu_kernel(%arg0: i32, %arg1: memref<128x2048xbf16, #tpu.memory_space<vmem>>, %arg2: memref<2048x128xbf16, #tpu.memory_space<vmem>>, %arg3: memref<1x128xf32, #tpu.memory_space<vmem>>, %arg4: memref<1x128xf32, #tpu.memory_space<vmem>>, %arg5: memref<128x128xbf16, #tpu.memory_space<vmem>>) attributes {dimension_semantics = [#tpu.dimension_semantics<arbitrary>], iteration_bounds = array<i64: 1>, scalar_prefetch = 0 : i64, scratch_operands = 0 : i64, tpu.core_type = #tpu.core_type<tc>, window_params = [{pipeline_mode = #tpu.pipeline_mode<synchronous>, transform_indices = @transform_0, window_bounds = array<i64: 128, 2048>}, {pipeline_mode = #tpu.pipeline_mode<synchronous>, transform_indices = @transform_1, window_bounds = array<i64: 2048, 128>}, {pipeline_mode = #tpu.pipeline_mode<synchronous>, transform_indices = @transform_2, window_bounds = array<i64: 1, 128>}, {pipeline_mode = #tpu.pipeline_mode<synchronous>, transform_indices = @transform_3, window_bounds = array<i64: 1, 128>}, {pipeline_mode = #tpu.pipeline_mode<synchronous>, transform_indices = @transform_4, window_bounds = array<i64: 128, 128>}]} {
    %c0 = arith.constant 0 : index
    %c0_0 = arith.constant 0 : index
    %0 = vector.load %arg1[%c0, %c0_0] : memref<128x2048xbf16, #tpu.memory_space<vmem>>, vector<128x2048xbf16>
    %c0_1 = arith.constant 0 : index
    %c0_2 = arith.constant 0 : index
    %1 = vector.load %arg2[%c0_1, %c0_2] : memref<2048x128xbf16, #tpu.memory_space<vmem>>, vector<2048x128xbf16>
    %cst = arith.constant dense<0.000000e+00> : vector<128x128xf32>
    %2 = tpu.matmul %0, %1, %cst {dimension_numbers = #tpu.dot_dimension_numbers<[1], [0], [0], [1], [0, 0, 1, 1], [], []>} : vector<128x2048xbf16>, vector<2048x128xbf16>, vector<128x128xf32> -> vector<128x128xf32>
    %c0_3 = arith.constant 0 : index
    %c0_4 = arith.constant 0 : index
    %3 = vector.load %arg3[%c0_3, %c0_4] : memref<1x128xf32, #tpu.memory_space<vmem>>, vector<1x128xf32>
    %c0_5 = arith.constant 0 : index
    %c0_6 = arith.constant 0 : index
    %4 = vector.load %arg4[%c0_5, %c0_6] : memref<1x128xf32, #tpu.memory_space<vmem>>, vector<1x128xf32>
    %cst_7 = arith.constant dense<0.000000e+00> : vector<128xf32>
    %5 = vector.multi_reduction <add>, %2, %cst_7 [0] : vector<128x128xf32> to vector<128xf32>
    %6 = vector.shape_cast %5 : vector<128xf32> to vector<1x128xf32>
    %cst_8 = arith.constant 7.812500e-03 : f32
    %7 = vector.broadcast %cst_8 : f32 to vector<1x128xf32>
    %8 = arith.mulf %6, %7 : vector<1x128xf32>
    %9 = arith.mulf %2, %2 : vector<128x128xf32>
    %cst_9 = arith.constant dense<0.000000e+00> : vector<128xf32>
    %10 = vector.multi_reduction <add>, %9, %cst_9 [0] : vector<128x128xf32> to vector<128xf32>
    %11 = vector.shape_cast %10 : vector<128xf32> to vector<1x128xf32>
    %cst_10 = arith.constant 7.812500e-03 : f32
    %12 = vector.broadcast %cst_10 : f32 to vector<1x128xf32>
    %13 = arith.mulf %11, %12 : vector<1x128xf32>
    %14 = arith.mulf %8, %8 : vector<1x128xf32>
    %15 = arith.subf %13, %14 : vector<1x128xf32>
    %cst_11 = arith.constant 0.000000e+00 : f32
    %16 = vector.broadcast %cst_11 : f32 to vector<1x128xf32>
    %17 = arith.maximumf %15, %16 : vector<1x128xf32>
    %cst_12 = arith.constant 9.99999974E-6 : f32
    %18 = vector.broadcast %cst_12 : f32 to vector<1x128xf32>
    %19 = arith.addf %17, %18 : vector<1x128xf32>
    %20 = math.rsqrt %19 : vector<1x128xf32>
    %21 = arith.mulf %3, %20 : vector<1x128xf32>
    %22 = arith.mulf %8, %21 : vector<1x128xf32>
    %23 = arith.subf %4, %22 : vector<1x128xf32>
    %24 = vector.broadcast %21 : vector<1x128xf32> to vector<128x128xf32>
    %25 = arith.mulf %2, %24 : vector<128x128xf32>
    %26 = vector.broadcast %23 : vector<1x128xf32> to vector<128x128xf32>
    %27 = arith.addf %25, %26 : vector<128x128xf32>
    %cst_13 = arith.constant 2.000000e-01 : f32
    %28 = vector.broadcast %cst_13 : f32 to vector<128x128xf32>
    %29 = arith.mulf %28, %27 : vector<128x128xf32>
    %30 = arith.maximumf %27, %29 : vector<128x128xf32>
    %31 = arith.truncf %30 : vector<128x128xf32> to vector<128x128xbf16>
    %c0_14 = arith.constant 0 : index
    %c0_15 = arith.constant 0 : index
    %32 = vector.load %arg5[%c0_14, %c0_15] : memref<128x128xbf16, #tpu.memory_space<vmem>>, vector<128x128xbf16>
    tpu.vector_store %arg5[%c0_14, %c0_15], %31 {strides = array<i32>} : memref<128x128xbf16, #tpu.memory_space<vmem>>, vector<128x128xbf16>,
    return
  }
  func.func @transform_0(%arg0: i32) -> (i32, i32) {
    %c0_i32 = arith.constant 0 : i32
    %c0_i32_0 = arith.constant 0 : i32
    %c0_i32_1 = arith.constant 0 : i32
    return %c0_i32, %c0_i32_0 : i32, i32
  }
  func.func @transform_1(%arg0: i32) -> (i32, i32) {
    %c0_i32 = arith.constant 0 : i32
    %c0_i32_0 = arith.constant 0 : i32
    %c0_i32_1 = arith.constant 0 : i32
    return %c0_i32, %c0_i32_0 : i32, i32
  }
  func.func @transform_2(%arg0: i32) -> (i32, i32) {
    %c0_i32 = arith.constant 0 : i32
    %c0_i32_0 = arith.constant 0 : i32
    %c0_i32_1 = arith.constant 0 : i32
    return %c0_i32, %c0_i32_0 : i32, i32
  }
  func.func @transform_3(%arg0: i32) -> (i32, i32) {
    %c0_i32 = arith.constant 0 : i32
    %c0_i32_0 = arith.constant 0 : i32
    %c0_i32_1 = arith.constant 0 : i32
    return %c0_i32, %c0_i32_0 : i32, i32
  }
  func.func @transform_4(%arg0: i32) -> (i32, i32) {
    %c0_i32 = arith.constant 0 : i32
    %c0_i32_0 = arith.constant 0 : i32
    %c0_i32_1 = arith.constant 0 : i32
    return %c0_i32, %c0_i32_0 : i32, i32
  }
}

module attributes {stable_mosaic.version = 11 : i64} {
  func.func @_conv_bn_lrelu_head_kernel(%arg0: i32, %arg1: memref<32x2048xbf16, #tpu.memory_space<vmem>>, %arg2: memref<2048x128xbf16, #tpu.memory_space<vmem>>, %arg3: memref<1x128xf32, #tpu.memory_space<vmem>>, %arg4: memref<1x128xf32, #tpu.memory_space<vmem>>, %arg5: memref<32x128xf32, #tpu.memory_space<vmem>>, %arg6: memref<2x32xf32, #tpu.memory_space<vmem>>, %arg7: memref<2x128xf32, #tpu.memory_space<vmem>>) attributes {dimension_semantics = [#tpu.dimension_semantics<arbitrary>], iteration_bounds = array<i64: 1>, scalar_prefetch = 0 : i64, scratch_operands = 0 : i64, tpu.core_type = #tpu.core_type<tc>, window_params = [{pipeline_mode = #tpu.pipeline_mode<synchronous>, transform_indices = @transform_0, window_bounds = array<i64: 32, 2048>}, {pipeline_mode = #tpu.pipeline_mode<synchronous>, transform_indices = @transform_1, window_bounds = array<i64: 2048, 128>}, {pipeline_mode = #tpu.pipeline_mode<synchronous>, transform_indices = @transform_2, window_bounds = array<i64: 1, 128>}, {pipeline_mode = #tpu.pipeline_mode<synchronous>, transform_indices = @transform_3, window_bounds = array<i64: 1, 128>}, {pipeline_mode = #tpu.pipeline_mode<synchronous>, transform_indices = @transform_4, window_bounds = array<i64: 32, 128>}, {pipeline_mode = #tpu.pipeline_mode<synchronous>, transform_indices = @transform_5, window_bounds = array<i64: 2, 32>}, {pipeline_mode = #tpu.pipeline_mode<synchronous>, transform_indices = @transform_6, window_bounds = array<i64: 2, 128>}]} {
    %c0 = arith.constant 0 : index
    %c0_0 = arith.constant 0 : index
    %0 = vector.load %arg1[%c0, %c0_0] : memref<32x2048xbf16, #tpu.memory_space<vmem>>, vector<32x2048xbf16>
    %c0_1 = arith.constant 0 : index
    %c0_2 = arith.constant 0 : index
    %1 = vector.load %arg2[%c0_1, %c0_2] : memref<2048x128xbf16, #tpu.memory_space<vmem>>, vector<2048x128xbf16>
    %cst = arith.constant dense<0.000000e+00> : vector<32x128xf32>
    %2 = tpu.matmul %0, %1, %cst {dimension_numbers = #tpu.dot_dimension_numbers<[1], [0], [0], [1], [0, 0, 1, 1], [], []>} : vector<32x2048xbf16>, vector<2048x128xbf16>, vector<32x128xf32> -> vector<32x128xf32>
    %c0_3 = arith.constant 0 : index
    %c0_4 = arith.constant 0 : index
    %3 = vector.load %arg3[%c0_3, %c0_4] : memref<1x128xf32, #tpu.memory_space<vmem>>, vector<1x128xf32>
    %c0_5 = arith.constant 0 : index
    %c0_6 = arith.constant 0 : index
    %4 = vector.load %arg4[%c0_5, %c0_6] : memref<1x128xf32, #tpu.memory_space<vmem>>, vector<1x128xf32>
    %cst_7 = arith.constant dense<0.000000e+00> : vector<128xf32>
    %5 = vector.multi_reduction <add>, %2, %cst_7 [0] : vector<32x128xf32> to vector<128xf32>
    %6 = vector.shape_cast %5 : vector<128xf32> to vector<1x128xf32>
    %cst_8 = arith.constant 3.125000e-02 : f32
    %7 = vector.broadcast %cst_8 : f32 to vector<1x128xf32>
    %8 = arith.mulf %6, %7 : vector<1x128xf32>
    %9 = arith.mulf %2, %2 : vector<32x128xf32>
    %cst_9 = arith.constant dense<0.000000e+00> : vector<128xf32>
    %10 = vector.multi_reduction <add>, %9, %cst_9 [0] : vector<32x128xf32> to vector<128xf32>
    %11 = vector.shape_cast %10 : vector<128xf32> to vector<1x128xf32>
    %cst_10 = arith.constant 3.125000e-02 : f32
    %12 = vector.broadcast %cst_10 : f32 to vector<1x128xf32>
    %13 = arith.mulf %11, %12 : vector<1x128xf32>
    %14 = arith.mulf %8, %8 : vector<1x128xf32>
    %15 = arith.subf %13, %14 : vector<1x128xf32>
    %cst_11 = arith.constant 0.000000e+00 : f32
    %16 = vector.broadcast %cst_11 : f32 to vector<1x128xf32>
    %17 = arith.maximumf %15, %16 : vector<1x128xf32>
    %cst_12 = arith.constant 9.99999974E-6 : f32
    %18 = vector.broadcast %cst_12 : f32 to vector<1x128xf32>
    %19 = arith.addf %17, %18 : vector<1x128xf32>
    %20 = math.rsqrt %19 : vector<1x128xf32>
    %21 = arith.mulf %3, %20 : vector<1x128xf32>
    %22 = arith.mulf %8, %21 : vector<1x128xf32>
    %23 = arith.subf %4, %22 : vector<1x128xf32>
    %24 = vector.broadcast %21 : vector<1x128xf32> to vector<32x128xf32>
    %25 = arith.mulf %2, %24 : vector<32x128xf32>
    %26 = vector.broadcast %23 : vector<1x128xf32> to vector<32x128xf32>
    %27 = arith.addf %25, %26 : vector<32x128xf32>
    %cst_13 = arith.constant 2.000000e-01 : f32
    %28 = vector.broadcast %cst_13 : f32 to vector<32x128xf32>
    %29 = arith.mulf %28, %27 : vector<32x128xf32>
    %30 = arith.maximumf %27, %29 : vector<32x128xf32>
    %c0_14 = arith.constant 0 : index
    %c0_15 = arith.constant 0 : index
    %31 = vector.load %arg5[%c0_14, %c0_15] : memref<32x128xf32, #tpu.memory_space<vmem>>, vector<32x128xf32>
    %32 = arith.mulf %30, %31 : vector<32x128xf32>
    %cst_16 = arith.constant dense<0.000000e+00> : vector<32xf32>
    %33 = vector.multi_reduction <add>, %32, %cst_16 [1] : vector<32x128xf32> to vector<32xf32>
    %34 = vector.shape_cast %33 : vector<32xf32> to vector<32x1xf32>
    %c0_17 = arith.constant 0 : index
    %c0_18 = arith.constant 0 : index
    %35 = vector.load %arg6[%c0_17, %c0_18] : memref<2x32xf32, #tpu.memory_space<vmem>>, vector<2x32xf32>
    %cst_19 = arith.constant dense<0.000000e+00> : vector<2x1xf32>
    %36 = tpu.matmul %35, %34, %cst_19 {dimension_numbers = #tpu.dot_dimension_numbers<[1], [0], [0], [1], [0, 0, 1, 1], [], []>} : vector<2x32xf32>, vector<32x1xf32>, vector<2x1xf32> -> vector<2x1xf32>
    %37 = math.absf %36 : vector<2x1xf32>
    %cst_20 = arith.constant 0.000000e+00 : f32
    %38 = vector.broadcast %cst_20 : f32 to vector<2x1xf32>
    %39 = arith.subf %38, %37 : vector<2x1xf32>
    %40 = math.exp %39 : vector<2x1xf32>
    %cst_21 = arith.constant 1.000000e+00 : f32
    %41 = vector.broadcast %cst_21 : f32 to vector<2x1xf32>
    %42 = arith.addf %41, %40 : vector<2x1xf32>
    %cst_22 = arith.constant 1.000000e+00 : f32
    %43 = vector.broadcast %cst_22 : f32 to vector<2x1xf32>
    %44 = arith.divf %43, %42 : vector<2x1xf32>
    %cst_23 = arith.constant 0.000000e+00 : f32
    %45 = vector.broadcast %cst_23 : f32 to vector<2x1xf32>
    %46 = arith.cmpf oge, %36, %45 : vector<2x1xf32>
    %47 = arith.mulf %40, %44 : vector<2x1xf32>
    %48 = arith.select %46, %44, %47 : vector<2x1xi1>, vector<2x1xf32>
    %49 = vector.shape_cast %48 : vector<2x1xf32> to vector<2x1xf32>
    %50 = vector.broadcast %49 : vector<2x1xf32> to vector<2x128xf32>
    %c0_24 = arith.constant 0 : index
    %c0_25 = arith.constant 0 : index
    %51 = vector.load %arg7[%c0_24, %c0_25] : memref<2x128xf32, #tpu.memory_space<vmem>>, vector<2x128xf32>
    tpu.vector_store %arg7[%c0_24, %c0_25], %50 {strides = array<i32>} : memref<2x128xf32, #tpu.memory_space<vmem>>, vector<2x128xf32>,
    return
  }
  func.func @transform_0(%arg0: i32) -> (i32, i32) {
    %c0_i32 = arith.constant 0 : i32
    %c0_i32_0 = arith.constant 0 : i32
    %c0_i32_1 = arith.constant 0 : i32
    return %c0_i32, %c0_i32_0 : i32, i32
  }
  func.func @transform_1(%arg0: i32) -> (i32, i32) {
    %c0_i32 = arith.constant 0 : i32
    %c0_i32_0 = arith.constant 0 : i32
    %c0_i32_1 = arith.constant 0 : i32
    return %c0_i32, %c0_i32_0 : i32, i32
  }
  func.func @transform_2(%arg0: i32) -> (i32, i32) {
    %c0_i32 = arith.constant 0 : i32
    %c0_i32_0 = arith.constant 0 : i32
    %c0_i32_1 = arith.constant 0 : i32
    return %c0_i32, %c0_i32_0 : i32, i32
  }
  func.func @transform_3(%arg0: i32) -> (i32, i32) {
    %c0_i32 = arith.constant 0 : i32
    %c0_i32_0 = arith.constant 0 : i32
    %c0_i32_1 = arith.constant 0 : i32
    return %c0_i32, %c0_i32_0 : i32, i32
  }
  func.func @transform_4(%arg0: i32) -> (i32, i32) {
    %c0_i32 = arith.constant 0 : i32
    %c0_i32_0 = arith.constant 0 : i32
    %c0_i32_1 = arith.constant 0 : i32
    return %c0_i32, %c0_i32_0 : i32, i32
  }
  func.func @transform_5(%arg0: i32) -> (i32, i32) {
    %c0_i32 = arith.constant 0 : i32
    %c0_i32_0 = arith.constant 0 : i32
    %c0_i32_1 = arith.constant 0 : i32
    return %c0_i32, %c0_i32_0 : i32, i32
  }
  func.func @transform_6(%arg0: i32) -> (i32, i32) {
    %c0_i32 = arith.constant 0 : i32
    %c0_i32_0 = arith.constant 0 : i32
    %c0_i32_1 = arith.constant 0 : i32
    return %c0_i32, %c0_i32_0 : i32, i32
  }
}

</mosaic_0001>

<llo_original>
// kernel: discriminator_forward.4
$region0: #{discriminator_forward.4}
  #allocation0 [shape = 'u32[]', space=smem, size = 0x4, offset = 0x4, fixed_abs, tag = 'smem constant byte address 0x4 - core index']
  #allocation1 [shape = 'u32[72,128]{1,0:T(1,128)}', space=vmem, size = 0x9000, scoped, tag = 'internal scratch']
  %s0 = inlined_call_operand.vmem [shape: bf16[2048,16], index: 0, kind: input, shape index: {}]
  %s1 = inlined_call_operand.vmem [shape: bf16[16,128], index: 1, kind: input, shape index: {}]
  %s2 = inlined_call_operand.vmem [shape: bf16[2048,128], index: 2, kind: output, shape index: {}]
  %s3 = sld [smem:[#allocation0]]
  $region18: #{discriminator_forward.4} parent=0
    _
  %s5 = ssub.s32 1, %s3
  %s6 = scalar_select 0, %s5, %s3
  // Predicated region
  $region2: #{discriminator_forward.4} parent=0 // pred_check
    _
  $region3: #{discriminator_forward.4} parent=0 // pred_check_branch
    %8 = sbr.rel (0) target = $region5
  $region4: #{discriminator_forward.4} parent=0 // pred_region
    _
  $region5: #{discriminator_forward.4} parent=0 // pred_fallthru
    _
  // Predicated region
  $region6: #{discriminator_forward.4} parent=0 // pred_check
    _
  $region7: #{discriminator_forward.4} parent=0 // pred_check_branch
    %10 = sbr.rel (0) target = $region9
  $region8: #{discriminator_forward.4} parent=0 // pred_region
    _
  $region9: #{discriminator_forward.4} parent=0 // pred_fallthru
    _
  %v12 = vld [vmem:[%s0] sm:$0xf]
  %v13 = vld [vmem:[%s0 + $0x4] sm:$0xf]
  %v14 = vld [vmem:[%s0 + $0x8] sm:$0xf]
  %v15 = vld [vmem:[%s0 + $0xc] sm:$0xf]
  %v16 = vld [vmem:[%s0 + $0x10] sm:$0xf]
  %v17 = vld [vmem:[%s0 + $0x14] sm:$0xf]
  %v18 = vld [vmem:[%s0 + $0x18] sm:$0xf]
  %v19 = vld [vmem:[%s0 + $0x1c] sm:$0xf]
  %v20 = vld [vmem:[%s0 + $0x20] sm:$0xf]
  %v21 = vld [vmem:[%s0 + $0x24] sm:$0xf]
  %v22 = vld [vmem:[%s0 + $0x28] sm:$0xf]
  %v23 = vld [vmem:[%s0 + $0x2c] sm:$0xf]
  %v24 = vld [vmem:[%s0 + $0x30] sm:$0xf]
  %v25 = vld [vmem:[%s0 + $0x34] sm:$0xf]
  %v26 = vld [vmem:[%s0 + $0x38] sm:$0xf]
  %v27 = vld [vmem:[%s0 + $0x3c] sm:$0xf]
  %v28 = vld [vmem:[%s0 + $0x40] sm:$0xf]
  %v29 = vld [vmem:[%s0 + $0x44] sm:$0xf]
  %v30 = vld [vmem:[%s0 + $0x48] sm:$0xf]
  %v31 = vld [vmem:[%s0 + $0x4c] sm:$0xf]
  %v32 = vld [vmem:[%s0 + $0x50] sm:$0xf]
  %v33 = vld [vmem:[%s0 + $0x54] sm:$0xf]
  %v34 = vld [vmem:[%s0 + $0x58] sm:$0xf]
  %v35 = vld [vmem:[%s0 + $0x5c] sm:$0xf]
  %v36 = vld [vmem:[%s0 + $0x60] sm:$0xf]
  %v37 = vld [vmem:[%s0 + $0x64] sm:$0xf]
  %v38 = vld [vmem:[%s0 + $0x68] sm:$0xf]
  %v39 = vld [vmem:[%s0 + $0x6c] sm:$0xf]
  %v40 = vld [vmem:[%s0 + $0x70] sm:$0xf]
  %v41 = vld [vmem:[%s0 + $0x74] sm:$0xf]
  %v42 = vld [vmem:[%s0 + $0x78] sm:$0xf]
  %v43 = vld [vmem:[%s0 + $0x7c] sm:$0xf]
  %v44 = vld [vmem:[%s0 + $0x80] sm:$0xf]
  %v45 = vld [vmem:[%s0 + $0x84] sm:$0xf]
  %v46 = vld [vmem:[%s0 + $0x88] sm:$0xf]
  %v47 = vld [vmem:[%s0 + $0x8c] sm:$0xf]
  %v48 = vld [vmem:[%s0 + $0x90] sm:$0xf]
  %v49 = vld [vmem:[%s0 + $0x94] sm:$0xf]
  %v50 = vld [vmem:[%s0 + $0x98] sm:$0xf]
  %v51 = vld [vmem:[%s0 + $0x9c] sm:$0xf]
  %v52 = vld [vmem:[%s0 + $0xa0] sm:$0xf]
  %v53 = vld [vmem:[%s0 + $0xa4] sm:$0xf]
  %v54 = vld [vmem:[%s0 + $0xa8] sm:$0xf]
  %v55 = vld [vmem:[%s0 + $0xac] sm:$0xf]
  %v56 = vld [vmem:[%s0 + $0xb0] sm:$0xf]
  %v57 = vld [vmem:[%s0 + $0xb4] sm:$0xf]
  %v58 = vld [vmem:[%s0 + $0xb8] sm:$0xf]
  %v59 = vld [vmem:[%s0 + $0xbc] sm:$0xf]
  %v60 = vld [vmem:[%s0 + $0xc0] sm:$0xf]
  %v61 = vld [vmem:[%s0 + $0xc4] sm:$0xf]
  %v62 = vld [vmem:[%s0 + $0xc8] sm:$0xf]
  %v63 = vld [vmem:[%s0 + $0xcc] sm:$0xf]
  %v64 = vld [vmem:[%s0 + $0xd0] sm:$0xf]
  %v65 = vld [vmem:[%s0 + $0xd4] sm:$0xf]
  %v66 = vld [vmem:[%s0 + $0xd8] sm:$0xf]
  %v67 = vld [vmem:[%s0 + $0xdc] sm:$0xf]
  %v68 = vld [vmem:[%s0 + $0xe0] sm:$0xf]
  %v69 = vld [vmem:[%s0 + $0xe4] sm:$0xf]
  %v70 = vld [vmem:[%s0 + $0xe8] sm:$0xf]
  %v71 = vld [vmem:[%s0 + $0xec] sm:$0xf]
  %v72 = vld [vmem:[%s0 + $0xf0] sm:$0xf]
  %v73 = vld [vmem:[%s0 + $0xf4] sm:$0xf]
  %v74 = vld [vmem:[%s0 + $0xf8] sm:$0xf]
  %v75 = vld [vmem:[%s0 + $0xfc] sm:$0xf]
  %v76 = vld [vmem:[%s0 + $0x100] sm:$0xf]
  %v77 = vld [vmem:[%s0 + $0x104] sm:$0xf]
  %v78 = vld [vmem:[%s0 + $0x108] sm:$0xf]
  %v79 = vld [vmem:[%s0 + $0x10c] sm:$0xf]
  %v80 = vld [vmem:[%s0 + $0x110] sm:$0xf]
  %v81 = vld [vmem:[%s0 + $0x114] sm:$0xf]
  %v82 = vld [vmem:[%s0 + $0x118] sm:$0xf]
  %v83 = vld [vmem:[%s0 + $0x11c] sm:$0xf]
  %v84 = vld [vmem:[%s0 + $0x120] sm:$0xf]
  %v85 = vld [vmem:[%s0 + $0x124] sm:$0xf]
  %v86 = vld [vmem:[%s0 + $0x128] sm:$0xf]
  %v87 = vld [vmem:[%s0 + $0x12c] sm:$0xf]
  %v88 = vld [vmem:[%s0 + $0x130] sm:$0xf]
  %v89 = vld [vmem:[%s0 + $0x134] sm:$0xf]
  %v90 = vld [vmem:[%s0 + $0x138] sm:$0xf]
  %v91 = vld [vmem:[%s0 + $0x13c] sm:$0xf]
  %v92 = vld [vmem:[%s0 + $0x140] sm:$0xf]
  %v93 = vld [vmem:[%s0 + $0x144] sm:$0xf]
  %v94 = vld [vmem:[%s0 + $0x148] sm:$0xf]
  %v95 = vld [vmem:[%s0 + $0x14c] sm:$0xf]
  %v96 = vld [vmem:[%s0 + $0x150] sm:$0xf]
  %v97 = vld [vmem:[%s0 + $0x154] sm:$0xf]
  %v98 = vld [vmem:[%s0 + $0x158] sm:$0xf]
  %v99 = vld [vmem:[%s0 + $0x15c] sm:$0xf]
  %v100 = vld [vmem:[%s0 + $0x160] sm:$0xf]
  %v101 = vld [vmem:[%s0 + $0x164] sm:$0xf]
  %v102 = vld [vmem:[%s0 + $0x168] sm:$0xf]
  %v103 = vld [vmem:[%s0 + $0x16c] sm:$0xf]
  %v104 = vld [vmem:[%s0 + $0x170] sm:$0xf]
  %v105 = vld [vmem:[%s0 + $0x174] sm:$0xf]
  %v106 = vld [vmem:[%s0 + $0x178] sm:$0xf]
  %v107 = vld [vmem:[%s0 + $0x17c] sm:$0xf]
  %v108 = vld [vmem:[%s0 + $0x180] sm:$0xf]
  %v109 = vld [vmem:[%s0 + $0x184] sm:$0xf]
  %v110 = vld [vmem:[%s0 + $0x188] sm:$0xf]
  %v111 = vld [vmem:[%s0 + $0x18c] sm:$0xf]
  %v112 = vld [vmem:[%s0 + $0x190] sm:$0xf]
  %v113 = vld [vmem:[%s0 + $0x194] sm:$0xf]
  %v114 = vld [vmem:[%s0 + $0x198] sm:$0xf]
  %v115 = vld [vmem:[%s0 + $0x19c] sm:$0xf]
  %v116 = vld [vmem:[%s0 + $0x1a0] sm:$0xf]
  %v117 = vld [vmem:[%s0 + $0x1a4] sm:$0xf]
  %v118 = vld [vmem:[%s0 + $0x1a8] sm:$0xf]
  %v119 = vld [vmem:[%s0 + $0x1ac] sm:$0xf]
  %v120 = vld [vmem:[%s0 + $0x1b0] sm:$0xf]
  %v121 = vld [vmem:[%s0 + $0x1b4] sm:$0xf]
  %v122 = vld [vmem:[%s0 + $0x1b8] sm:$0xf]
  %v123 = vld [vmem:[%s0 + $0x1bc] sm:$0xf]
  %v124 = vld [vmem:[%s0 + $0x1c0] sm:$0xf]
  %v125 = vld [vmem:[%s0 + $0x1c4] sm:$0xf]
  %v126 = vld [vmem:[%s0 + $0x1c8] sm:$0xf]
  %v127 = vld [vmem:[%s0 + $0x1cc] sm:$0xf]
  %v128 = vld [vmem:[%s0 + $0x1d0] sm:$0xf]
  %v129 = vld [vmem:[%s0 + $0x1d4] sm:$0xf]
  %v130 = vld [vmem:[%s0 + $0x1d8] sm:$0xf]
  %v131 = vld [vmem:[%s0 + $0x1dc] sm:$0xf]
  %v132 = vld [vmem:[%s0 + $0x1e0] sm:$0xf]
  %v133 = vld [vmem:[%s0 + $0x1e4] sm:$0xf]
  %v134 = vld [vmem:[%s0 + $0x1e8] sm:$0xf]
  %v135 = vld [vmem:[%s0 + $0x1ec] sm:$0xf]
  %v136 = vld [vmem:[%s0 + $0x1f0] sm:$0xf]
  %v137 = vld [vmem:[%s0 + $0x1f4] sm:$0xf]
  %v138 = vld [vmem:[%s0 + $0x1f8] sm:$0xf]
  %v139 = vld [vmem:[%s0 + $0x1fc] sm:$0xf]
  %v140 = vld [vmem:[%s0 + $0x200] sm:$0xf]
  %v141 = vld [vmem:[%s0 + $0x204] sm:$0xf]
  %v142 = vld [vmem:[%s0 + $0x208] sm:$0xf]
  %v143 = vld [vmem:[%s0 + $0x20c] sm:$0xf]
  %v144 = vld [vmem:[%s0 + $0x210] sm:$0xf]
  %v145 = vld [vmem:[%s0 + $0x214] sm:$0xf]
  %v146 = vld [vmem:[%s0 + $0x218] sm:$0xf]
  %v147 = vld [vmem:[%s0 + $0x21c] sm:$0xf]
  %v148 = vld [vmem:[%s0 + $0x220] sm:$0xf]
  %v149 = vld [vmem:[%s0 + $0x224] sm:$0xf]
  %v150 = vld [vmem:[%s0 + $0x228] sm:$0xf]
  %v151 = vld [vmem:[%s0 + $0x22c] sm:$0xf]
  %v152 = vld [vmem:[%s0 + $0x230] sm:$0xf]
  %v153 = vld [vmem:[%s0 + $0x234] sm:$0xf]
  %v154 = vld [vmem:[%s0 + $0x238] sm:$0xf]
  %v155 = vld [vmem:[%s0 + $0x23c] sm:$0xf]
  %v156 = vld [vmem:[%s0 + $0x240] sm:$0xf]
  %v157 = vld [vmem:[%s0 + $0x244] sm:$0xf]
  %v158 = vld [vmem:[%s0 + $0x248] sm:$0xf]
  %v159 = vld [vmem:[%s0 + $0x24c] sm:$0xf]
  %v160 = vld [vmem:[%s0 + $0x250] sm:$0xf]
  %v161 = vld [vmem:[%s0 + $0x254] sm:$0xf]
  %v162 = vld [vmem:[%s0 + $0x258] sm:$0xf]
  %v163 = vld [vmem:[%s0 + $0x25c] sm:$0xf]
  %v164 = vld [vmem:[%s0 + $0x260] sm:$0xf]
  %v165 = vld [vmem:[%s0 + $0x264] sm:$0xf]
  %v166 = vld [vmem:[%s0 + $0x268] sm:$0xf]
  %v167 = vld [vmem:[%s0 + $0x26c] sm:$0xf]
  %v168 = vld [vmem:[%s0 + $0x270] sm:$0xf]
  %v169 = vld [vmem:[%s0 + $0x274] sm:$0xf]
  %v170 = vld [vmem:[%s0 + $0x278] sm:$0xf]
  %v171 = vld [vmem:[%s0 + $0x27c] sm:$0xf]
  %v172 = vld [vmem:[%s0 + $0x280] sm:$0xf]
  %v173 = vld [vmem:[%s0 + $0x284] sm:$0xf]
  %v174 = vld [vmem:[%s0 + $0x288] sm:$0xf]
  %v175 = vld [vmem:[%s0 + $0x28c] sm:$0xf]
  %v176 = vld [vmem:[%s0 + $0x290] sm:$0xf]
  %v177 = vld [vmem:[%s0 + $0x294] sm:$0xf]
  %v178 = vld [vmem:[%s0 + $0x298] sm:$0xf]
  %v179 = vld [vmem:[%s0 + $0x29c] sm:$0xf]
  %v180 = vld [vmem:[%s0 + $0x2a0] sm:$0xf]
  %v181 = vld [vmem:[%s0 + $0x2a4] sm:$0xf]
  %v182 = vld [vmem:[%s0 + $0x2a8] sm:$0xf]
  %v183 = vld [vmem:[%s0 + $0x2ac] sm:$0xf]
  %v184 = vld [vmem:[%s0 + $0x2b0] sm:$0xf]
  %v185 = vld [vmem:[%s0 + $0x2b4] sm:$0xf]
  %v186 = vld [vmem:[%s0 + $0x2b8] sm:$0xf]
  %v187 = vld [vmem:[%s0 + $0x2bc] sm:$0xf]
  %v188 = vld [vmem:[%s0 + $0x2c0] sm:$0xf]
  %v189 = vld [vmem:[%s0 + $0x2c4] sm:$0xf]
  %v190 = vld [vmem:[%s0 + $0x2c8] sm:$0xf]
  %v191 = vld [vmem:[%s0 + $0x2cc] sm:$0xf]
  %v192 = vld [vmem:[%s0 + $0x2d0] sm:$0xf]
  %v193 = vld [vmem:[%s0 + $0x2d4] sm:$0xf]
  %v194 = vld [vmem:[%s0 + $0x2d8] sm:$0xf]
  %v195 = vld [vmem:[%s0 + $0x2dc] sm:$0xf]
  %v196 = vld [vmem:[%s0 + $0x2e0] sm:$0xf]
  %v197 = vld [vmem:[%s0 + $0x2e4] sm:$0xf]
  %v198 = vld [vmem:[%s0 + $0x2e8] sm:$0xf]
  %v199 = vld [vmem:[%s0 + $0x2ec] sm:$0xf]
  %v200 = vld [vmem:[%s0 + $0x2f0] sm:$0xf]
  %v201 = vld [vmem:[%s0 + $0x2f4] sm:$0xf]
  %v202 = vld [vmem:[%s0 + $0x2f8] sm:$0xf]
  %v203 = vld [vmem:[%s0 + $0x2fc] sm:$0xf]
  %v204 = vld [vmem:[%s0 + $0x300] sm:$0xf]
  %v205 = vld [vmem:[%s0 + $0x304] sm:$0xf]
  %v206 = vld [vmem:[%s0 + $0x308] sm:$0xf]
  %v207 = vld [vmem:[%s0 + $0x30c] sm:$0xf]
  %v208 = vld [vmem:[%s0 + $0x310] sm:$0xf]
  %v209 = vld [vmem:[%s0 + $0x314] sm:$0xf]
  %v210 = vld [vmem:[%s0 + $0x318] sm:$0xf]
  %v211 = vld [vmem:[%s0 + $0x31c] sm:$0xf]
  %v212 = vld [vmem:[%s0 + $0x320] sm:$0xf]
  %v213 = vld [vmem:[%s0 + $0x324] sm:$0xf]
  %v214 = vld [vmem:[%s0 + $0x328] sm:$0xf]
  %v215 = vld [vmem:[%s0 + $0x32c] sm:$0xf]
  %v216 = vld [vmem:[%s0 + $0x330] sm:$0xf]
  %v217 = vld [vmem:[%s0 + $0x334] sm:$0xf]
  %v218 = vld [vmem:[%s0 + $0x338] sm:$0xf]
  %v219 = vld [vmem:[%s0 + $0x33c] sm:$0xf]
  %v220 = vld [vmem:[%s0 + $0x340] sm:$0xf]
  %v221 = vld [vmem:[%s0 + $0x344] sm:$0xf]
  %v222 = vld [vmem:[%s0 + $0x348] sm:$0xf]
  %v223 = vld [vmem:[%s0 + $0x34c] sm:$0xf]
  %v224 = vld [vmem:[%s0 + $0x350] sm:$0xf]
  %v225 = vld [vmem:[%s0 + $0x354] sm:$0xf]
  %v226 = vld [vmem:[%s0 + $0x358] sm:$0xf]
  %v227 = vld [vmem:[%s0 + $0x35c] sm:$0xf]
  %v228 = vld [vmem:[%s0 + $0x360] sm:$0xf]
  %v229 = vld [vmem:[%s0 + $0x364] sm:$0xf]
  %v230 = vld [vmem:[%s0 + $0x368] sm:$0xf]
  %v231 = vld [vmem:[%s0 + $0x36c] sm:$0xf]
  %v232 = vld [vmem:[%s0 + $0x370] sm:$0xf]
  %v233 = vld [vmem:[%s0 + $0x374] sm:$0xf]
  %v234 = vld [vmem:[%s0 + $0x378] sm:$0xf]
  %v235 = vld [vmem:[%s0 + $0x37c] sm:$0xf]
  %v236 = vld [vmem:[%s0 + $0x380] sm:$0xf]
  %v237 = vld [vmem:[%s0 + $0x384] sm:$0xf]
  %v238 = vld [vmem:[%s0 + $0x388] sm:$0xf]
  %v239 = vld [vmem:[%s0 + $0x38c] sm:$0xf]
  %v240 = vld [vmem:[%s0 + $0x390] sm:$0xf]
  %v241 = vld [vmem:[%s0 + $0x394] sm:$0xf]
  %v242 = vld [vmem:[%s0 + $0x398] sm:$0xf]
  %v243 = vld [vmem:[%s0 + $0x39c] sm:$0xf]
  %v244 = vld [vmem:[%s0 + $0x3a0] sm:$0xf]
  %v245 = vld [vmem:[%s0 + $0x3a4] sm:$0xf]
  %v246 = vld [vmem:[%s0 + $0x3a8] sm:$0xf]
  %v247 = vld [vmem:[%s0 + $0x3ac] sm:$0xf]
  %v248 = vld [vmem:[%s0 + $0x3b0] sm:$0xf]
  %v249 = vld [vmem:[%s0 + $0x3b4] sm:$0xf]
  %v250 = vld [vmem:[%s0 + $0x3b8] sm:$0xf]
  %v251 = vld [vmem:[%s0 + $0x3bc] sm:$0xf]
  %v252 = vld [vmem:[%s0 + $0x3c0] sm:$0xf]
  %v253 = vld [vmem:[%s0 + $0x3c4] sm:$0xf]
  %v254 = vld [vmem:[%s0 + $0x3c8] sm:$0xf]
  %v255 = vld [vmem:[%s0 + $0x3cc] sm:$0xf]
  %v256 = vld [vmem:[%s0 + $0x3d0] sm:$0xf]
  %v257 = vld [vmem:[%s0 + $0x3d4] sm:$0xf]
  %v258 = vld [vmem:[%s0 + $0x3d8] sm:$0xf]
  %v259 = vld [vmem:[%s0 + $0x3dc] sm:$0xf]
  %v260 = vld [vmem:[%s0 + $0x3e0] sm:$0xf]
  %v261 = vld [vmem:[%s0 + $0x3e4] sm:$0xf]
  %v262 = vld [vmem:[%s0 + $0x3e8] sm:$0xf]
  %v263 = vld [vmem:[%s0 + $0x3ec] sm:$0xf]
  %v264 = vld [vmem:[%s0 + $0x3f0] sm:$0xf]
  %v265 = vld [vmem:[%s0 + $0x3f4] sm:$0xf]
  %v266 = vld [vmem:[%s0 + $0x3f8] sm:$0xf]
  %v267 = vld [vmem:[%s0 + $0x3fc] sm:$0xf]
  %v268 = vld [vmem:[%s1] sm:$0xf]
  %v269 = vld [vmem:[%s1 + $0x4] sm:$0xf]
  %v526 = vunpack.c.l.b16 %v12
  %v527 = vunpack.c.l.b16 %v13
  %v528 = vunpack.c.l.b16 %v14
  %v529 = vunpack.c.l.b16 %v15
  %v530 = vunpack.c.l.b16 %v16
  %v531 = vunpack.c.l.b16 %v17
  %v532 = vunpack.c.l.b16 %v18
  %v533 = vunpack.c.l.b16 %v19
  %v534 = vunpack.c.l.b16 %v20
  %v535 = vunpack.c.l.b16 %v21
  %v536 = vunpack.c.l.b16 %v22
  %v537 = vunpack.c.l.b16 %v23
  %v538 = vunpack.c.l.b16 %v24
  %v539 = vunpack.c.l.b16 %v25
  %v540 = vunpack.c.l.b16 %v26
  %v541 = vunpack.c.l.b16 %v27
  %v542 = vunpack.c.l.b16 %v28
  %v543 = vunpack.c.l.b16 %v29
  %v544 = vunpack.c.l.b16 %v30
  %v545 = vunpack.c.l.b16 %v31
  %v546 = vunpack.c.l.b16 %v32
  %v547 = vunpack.c.l.b16 %v33
  %v548 = vunpack.c.l.b16 %v34
  %v549 = vunpack.c.l.b16 %v35
  %v550 = vunpack.c.l.b16 %v36
  %v551 = vunpack.c.l.b16 %v37
  %v552 = vunpack.c.l.b16 %v38
  %v553 = vunpack.c.l.b16 %v39
  %v554 = vunpack.c.l.b16 %v40
  %v555 = vunpack.c.l.b16 %v41
  %v556 = vunpack.c.l.b16 %v42
  %v557 = vunpack.c.l.b16 %v43
  %v558 = vunpack.c.l.b16 %v44
  %v559 = vunpack.c.l.b16 %v45
  %v560 = vunpack.c.l.b16 %v46
  %v561 = vunpack.c.l.b16 %v47
  %v562 = vunpack.c.l.b16 %v48
  %v563 = vunpack.c.l.b16 %v49
  %v564 = vunpack.c.l.b16 %v50
  %v565 = vunpack.c.l.b16 %v51
  %v566 = vunpack.c.l.b16 %v52
  %v567 = vunpack.c.l.b16 %v53
  %v568 = vunpack.c.l.b16 %v54
  %v569 = vunpack.c.l.b16 %v55
  %v570 = vunpack.c.l.b16 %v56
  %v571 = vunpack.c.l.b16 %v57
  %v572 = vunpack.c.l.b16 %v58
  %v573 = vunpack.c.l.b16 %v59
  %v574 = vunpack.c.l.b16 %v60
  %v575 = vunpack.c.l.b16 %v61
  %v576 = vunpack.c.l.b16 %v62
  %v577 = vunpack.c.l.b16 %v63
  %v578 = vunpack.c.l.b16 %v64
  %v579 = vunpack.c.l.b16 %v65
  %v580 = vunpack.c.l.b16 %v66
  %v581 = vunpack.c.l.b16 %v67
  %v582 = vunpack.c.l.b16 %v68
  %v583 = vunpack.c.l.b16 %v69
  %v584 = vunpack.c.l.b16 %v70
  %v585 = vunpack.c.l.b16 %v71
  %v586 = vunpack.c.l.b16 %v72
  %v587 = vunpack.c.l.b16 %v73
  %v588 = vunpack.c.l.b16 %v74
  %v589 = vunpack.c.l.b16 %v75
  %v590 = vunpack.c.l.b16 %v76
  %v591 = vunpack.c.l.b16 %v77
  %v592 = vunpack.c.l.b16 %v78
  %v593 = vunpack.c.l.b16 %v79
  %v594 = vunpack.c.l.b16 %v80
  %v595 = vunpack.c.l.b16 %v81
  %v596 = vunpack.c.l.b16 %v82
  %v597 = vunpack.c.l.b16 %v83
  %v598 = vunpack.c.l.b16 %v84
  %v599 = vunpack.c.l.b16 %v85
  %v600 = vunpack.c.l.b16 %v86
  %v601 = vunpack.c.l.b16 %v87
  %v602 = vunpack.c.l.b16 %v88
  %v603 = vunpack.c.l.b16 %v89
  %v604 = vunpack.c.l.b16 %v90
  %v605 = vunpack.c.l.b16 %v91
  %v606 = vunpack.c.l.b16 %v92
  %v607 = vunpack.c.l.b16 %v93
  %v608 = vunpack.c.l.b16 %v94
  %v609 = vunpack.c.l.b16 %v95
  %v610 = vunpack.c.l.b16 %v96
  %v611 = vunpack.c.l.b16 %v97
  %v612 = vunpack.c.l.b16 %v98
  %v613 = vunpack.c.l.b16 %v99
  %v614 = vunpack.c.l.b16 %v100
  %v615 = vunpack.c.l.b16 %v101
  %v616 = vunpack.c.l.b16 %v102
  %v617 = vunpack.c.l.b16 %v103
  %v618 = vunpack.c.l.b16 %v104
  %v619 = vunpack.c.l.b16 %v105
  %v620 = vunpack.c.l.b16 %v106
  %v621 = vunpack.c.l.b16 %v107
  %v622 = vunpack.c.l.b16 %v108
  %v623 = vunpack.c.l.b16 %v109
  %v624 = vunpack.c.l.b16 %v110
  %v625 = vunpack.c.l.b16 %v111
  %v626 = vunpack.c.l.b16 %v112
  %v627 = vunpack.c.l.b16 %v113
  %v628 = vunpack.c.l.b16 %v114
  %v629 = vunpack.c.l.b16 %v115
  %v630 = vunpack.c.l.b16 %v116
  %v631 = vunpack.c.l.b16 %v117
  %v632 = vunpack.c.l.b16 %v118
  %v633 = vunpack.c.l.b16 %v119
  %v634 = vunpack.c.l.b16 %v120
  %v635 = vunpack.c.l.b16 %v121
  %v636 = vunpack.c.l.b16 %v122
  %v637 = vunpack.c.l.b16 %v123
  %v638 = vunpack.c.l.b16 %v124
  %v639 = vunpack.c.l.b16 %v125
  %v640 = vunpack.c.l.b16 %v126
  %v641 = vunpack.c.l.b16 %v127
  %v642 = vunpack.c.l.b16 %v128
  %v643 = vunpack.c.l.b16 %v129
  %v644 = vunpack.c.l.b16 %v130
  %v645 = vunpack.c.l.b16 %v131
  %v646 = vunpack.c.l.b16 %v132
  %v647 = vunpack.c.l.b16 %v133
  %v648 = vunpack.c.l.b16 %v134
  %v649 = vunpack.c.l.b16 %v135
  %v650 = vunpack.c.l.b16 %v136
  %v651 = vunpack.c.l.b16 %v137
  %v652 = vunpack.c.l.b16 %v138
  %v653 = vunpack.c.l.b16 %v139
  %v654 = vunpack.c.l.b16 %v140
  %v655 = vunpack.c.l.b16 %v141
  %v656 = vunpack.c.l.b16 %v142
  %v657 = vunpack.c.l.b16 %v143
  %v658 = vunpack.c.l.b16 %v144
  %v659 = vunpack.c.l.b16 %v145
  %v660 = vunpack.c.l.b16 %v146
  %v661 = vunpack.c.l.b16 %v147
  %v662 = vunpack.c.l.b16 %v148
  %v663 = vunpack.c.l.b16 %v149
  %v664 = vunpack.c.l.b16 %v150
  %v665 = vunpack.c.l.b16 %v151
  %v666 = vunpack.c.l.b16 %v152
  %v667 = vunpack.c.l.b16 %v153
  %v668 = vunpack.c.l.b16 %v154
  %v669 = vunpack.c.l.b16 %v155
  %v670 = vunpack.c.l.b16 %v156
  %v671 = vunpack.c.l.b16 %v157
  %v672 = vunpack.c.l.b16 %v158
  %v673 = vunpack.c.l.b16 %v159
  %v674 = vunpack.c.l.b16 %v160
  %v675 = vunpack.c.l.b16 %v161
  %v676 = vunpack.c.l.b16 %v162
  %v677 = vunpack.c.l.b16 %v163
  %v678 = vunpack.c.l.b16 %v164
  %v679 = vunpack.c.l.b16 %v165
  %v680 = vunpack.c.l.b16 %v166
  %v681 = vunpack.c.l.b16 %v167
  %v682 = vunpack.c.l.b16 %v168
  %v683 = vunpack.c.l.b16 %v169
  %v684 = vunpack.c.l.b16 %v170
  %v685 = vunpack.c.l.b16 %v171
  %v686 = vunpack.c.l.b16 %v172
  %v687 = vunpack.c.l.b16 %v173
  %v688 = vunpack.c.l.b16 %v174
  %v689 = vunpack.c.l.b16 %v175
  %v690 = vunpack.c.l.b16 %v176
  %v691 = vunpack.c.l.b16 %v177
  %v692 = vunpack.c.l.b16 %v178
  %v693 = vunpack.c.l.b16 %v179
  %v694 = vunpack.c.l.b16 %v180
  %v695 = vunpack.c.l.b16 %v181
  %v696 = vunpack.c.l.b16 %v182
  %v697 = vunpack.c.l.b16 %v183
  %v698 = vunpack.c.l.b16 %v184
  %v699 = vunpack.c.l.b16 %v185
  %v700 = vunpack.c.l.b16 %v186
  %v701 = vunpack.c.l.b16 %v187
  %v702 = vunpack.c.l.b16 %v188
  %v703 = vunpack.c.l.b16 %v189
  %v704 = vunpack.c.l.b16 %v190
  %v705 = vunpack.c.l.b16 %v191
  %v706 = vunpack.c.l.b16 %v192
  %v707 = vunpack.c.l.b16 %v193
  %v708 = vunpack.c.l.b16 %v194
  %v709 = vunpack.c.l.b16 %v195
  %v710 = vunpack.c.l.b16 %v196
  %v711 = vunpack.c.l.b16 %v197
  %v712 = vunpack.c.l.b16 %v198
  %v713 = vunpack.c.l.b16 %v199
  %v714 = vunpack.c.l.b16 %v200
  %v715 = vunpack.c.l.b16 %v201
  %v716 = vunpack.c.l.b16 %v202
  %v717 = vunpack.c.l.b16 %v203
  %v718 = vunpack.c.l.b16 %v204
  %v719 = vunpack.c.l.b16 %v205
  %v720 = vunpack.c.l.b16 %v206
  %v721 = vunpack.c.l.b16 %v207
  %v722 = vunpack.c.l.b16 %v208
  %v723 = vunpack.c.l.b16 %v209
  %v724 = vunpack.c.l.b16 %v210
  %v725 = vunpack.c.l.b16 %v211
  %v726 = vunpack.c.l.b16 %v212
  %v727 = vunpack.c.l.b16 %v213
  %v728 = vunpack.c.l.b16 %v214
  %v729 = vunpack.c.l.b16 %v215
  %v730 = vunpack.c.l.b16 %v216
  %v731 = vunpack.c.l.b16 %v217
  %v732 = vunpack.c.l.b16 %v218
  %v733 = vunpack.c.l.b16 %v219
  %v734 = vunpack.c.l.b16 %v220
  %v735 = vunpack.c.l.b16 %v221
  %v736 = vunpack.c.l.b16 %v222
  %v737 = vunpack.c.l.b16 %v223
  %v738 = vunpack.c.l.b16 %v224
  %v739 = vunpack.c.l.b16 %v225
  %v740 = vunpack.c.l.b16 %v226
  %v741 = vunpack.c.l.b16 %v227
  %v742 = vunpack.c.l.b16 %v228
  %v743 = vunpack.c.l.b16 %v229
  %v744 = vunpack.c.l.b16 %v230
  %v745 = vunpack.c.l.b16 %v231
  %v746 = vunpack.c.l.b16 %v232
  %v747 = vunpack.c.l.b16 %v233
  %v748 = vunpack.c.l.b16 %v234
  %v749 = vunpack.c.l.b16 %v235
  %v750 = vunpack.c.l.b16 %v236
  %v751 = vunpack.c.l.b16 %v237
  %v752 = vunpack.c.l.b16 %v238
  %v753 = vunpack.c.l.b16 %v239
  %v754 = vunpack.c.l.b16 %v240
  %v755 = vunpack.c.l.b16 %v241
  %v756 = vunpack.c.l.b16 %v242
  %v757 = vunpack.c.l.b16 %v243
  %v758 = vunpack.c.l.b16 %v244
  %v759 = vunpack.c.l.b16 %v245
  %v760 = vunpack.c.l.b16 %v246
  %v761 = vunpack.c.l.b16 %v247
  %v762 = vunpack.c.l.b16 %v248
  %v763 = vunpack.c.l.b16 %v249
  %v764 = vunpack.c.l.b16 %v250
  %v765 = vunpack.c.l.b16 %v251
  %v766 = vunpack.c.l.b16 %v252
  %v767 = vunpack.c.l.b16 %v253
  %v768 = vunpack.c.l.b16 %v254
  %v769 = vunpack.c.l.b16 %v255
  %v770 = vunpack.c.l.b16 %v256
  %v771 = vunpack.c.l.b16 %v257
  %v772 = vunpack.c.l.b16 %v258
  %v773 = vunpack.c.l.b16 %v259
  %v774 = vunpack.c.l.b16 %v260
  %v775 = vunpack.c.l.b16 %v261
  %v776 = vunpack.c.l.b16 %v262
  %v777 = vunpack.c.l.b16 %v263
  %v778 = vunpack.c.l.b16 %v264
  %v779 = vunpack.c.l.b16 %v265
  %v780 = vunpack.c.l.b16 %v266
  %v781 = vunpack.c.l.b16 %v267
  %v782 = vpack.c.b16 %v527, %v526
  %v783 = vpack.c.b16 %v529, %v528
  %v784 = vpack.c.b16 %v531, %v530
  %v785 = vpack.c.b16 %v533, %v532
  %v786 = vpack.c.b16 %v535, %v534
  %v787 = vpack.c.b16 %v537, %v536
  %v788 = vpack.c.b16 %v539, %v538
  %v789 = vpack.c.b16 %v541, %v540
  %v790 = vpack.c.b16 %v543, %v542
  %v791 = vpack.c.b16 %v545, %v544
  %v792 = vpack.c.b16 %v547, %v546
  %v793 = vpack.c.b16 %v549, %v548
  %v794 = vpack.c.b16 %v551, %v550
  %v795 = vpack.c.b16 %v553, %v552
  %v796 = vpack.c.b16 %v555, %v554
  %v797 = vpack.c.b16 %v557, %v556
  %v798 = vpack.c.b16 %v559, %v558
  %v799 = vpack.c.b16 %v561, %v560
  %v800 = vpack.c.b16 %v563, %v562
  %v801 = vpack.c.b16 %v565, %v564
  %v802 = vpack.c.b16 %v567, %v566
  %v803 = vpack.c.b16 %v569, %v568
  %v804 = vpack.c.b16 %v571, %v570
  %v805 = vpack.c.b16 %v573, %v572
  %v806 = vpack.c.b16 %v575, %v574
  %v807 = vpack.c.b16 %v577, %v576
  %v808 = vpack.c.b16 %v579, %v578
  %v809 = vpack.c.b16 %v581, %v580
  %v810 = vpack.c.b16 %v583, %v582
  %v811 = vpack.c.b16 %v585, %v584
  %v812 = vpack.c.b16 %v587, %v586
  %v813 = vpack.c.b16 %v589, %v588
  %v814 = vpack.c.b16 %v591, %v590
  %v815 = vpack.c.b16 %v593, %v592
  %v816 = vpack.c.b16 %v595, %v594
  %v817 = vpack.c.b16 %v597, %v596
  %v818 = vpack.c.b16 %v599, %v598
  %v819 = vpack.c.b16 %v601, %v600
  %v820 = vpack.c.b16 %v603, %v602
  %v821 = vpack.c.b16 %v605, %v604
  %v822 = vpack.c.b16 %v607, %v606
  %v823 = vpack.c.b16 %v609, %v608
  %v824 = vpack.c.b16 %v611, %v610
  %v825 = vpack.c.b16 %v613, %v612
  %v826 = vpack.c.b16 %v615, %v614
  %v827 = vpack.c.b16 %v617, %v616
  %v828 = vpack.c.b16 %v619, %v618
  %v829 = vpack.c.b16 %v621, %v620
  %v830 = vpack.c.b16 %v623, %v622
  %v831 = vpack.c.b16 %v625, %v624
  %v832 = vpack.c.b16 %v627, %v626
  %v833 = vpack.c.b16 %v629, %v628
  %v834 = vpack.c.b16 %v631, %v630
  %v835 = vpack.c.b16 %v633, %v632
  %v836 = vpack.c.b16 %v635, %v634
  %v837 = vpack.c.b16 %v637, %v636
  %v838 = vpack.c.b16 %v639, %v638
  %v839 = vpack.c.b16 %v641, %v640
  %v840 = vpack.c.b16 %v643, %v642
  %v841 = vpack.c.b16 %v645, %v644
  %v842 = vpack.c.b16 %v647, %v646
  %v843 = vpack.c.b16 %v649, %v648
  %v844 = vpack.c.b16 %v651, %v650
  %v845 = vpack.c.b16 %v653, %v652
  %v846 = vpack.c.b16 %v655, %v654
  %v847 = vpack.c.b16 %v657, %v656
  %v848 = vpack.c.b16 %v659, %v658
  %v849 = vpack.c.b16 %v661, %v660
  %v850 = vpack.c.b16 %v663, %v662
  %v851 = vpack.c.b16 %v665, %v664
  %v852 = vpack.c.b16 %v667, %v666
  %v853 = vpack.c.b16 %v669, %v668
  %v854 = vpack.c.b16 %v671, %v670
  %v855 = vpack.c.b16 %v673, %v672
  %v856 = vpack.c.b16 %v675, %v674
  %v857 = vpack.c.b16 %v677, %v676
  %v858 = vpack.c.b16 %v679, %v678
  %v859 = vpack.c.b16 %v681, %v680
  %v860 = vpack.c.b16 %v683, %v682
  %v861 = vpack.c.b16 %v685, %v684
  %v862 = vpack.c.b16 %v687, %v686
  %v863 = vpack.c.b16 %v689, %v688
  %v864 = vpack.c.b16 %v691, %v690
  %v865 = vpack.c.b16 %v693, %v692
  %v866 = vpack.c.b16 %v695, %v694
  %v867 = vpack.c.b16 %v697, %v696
  %v868 = vpack.c.b16 %v699, %v698
  %v869 = vpack.c.b16 %v701, %v700
  %v870 = vpack.c.b16 %v703, %v702
  %v871 = vpack.c.b16 %v705, %v704
  %v872 = vpack.c.b16 %v707, %v706
  %v873 = vpack.c.b16 %v709, %v708
  %v874 = vpack.c.b16 %v711, %v710
  %v875 = vpack.c.b16 %v713, %v712
  %v876 = vpack.c.b16 %v715, %v714
  %v877 = vpack.c.b16 %v717, %v716
  %v878 = vpack.c.b16 %v719, %v718
  %v879 = vpack.c.b16 %v721, %v720
  %v880 = vpack.c.b16 %v723, %v722
  %v881 = vpack.c.b16 %v725, %v724
  %v882 = vpack.c.b16 %v727, %v726
  %v883 = vpack.c.b16 %v729, %v728
  %v884 = vpack.c.b16 %v731, %v730
  %v885 = vpack.c.b16 %v733, %v732
  %v886 = vpack.c.b16 %v735, %v734
  %v887 = vpack.c.b16 %v737, %v736
  %v888 = vpack.c.b16 %v739, %v738
  %v889 = vpack.c.b16 %v741, %v740
  %v890 = vpack.c.b16 %v743, %v742
  %v891 = vpack.c.b16 %v745, %v744
  %v892 = vpack.c.b16 %v747, %v746
  %v893 = vpack.c.b16 %v749, %v748
  %v894 = vpack.c.b16 %v751, %v750
  %v895 = vpack.c.b16 %v753, %v752
  %v896 = vpack.c.b16 %v755, %v754
  %v897 = vpack.c.b16 %v757, %v756
  %v898 = vpack.c.b16 %v759, %v758
  %v899 = vpack.c.b16 %v761, %v760
  %v900 = vpack.c.b16 %v763, %v762
  %v901 = vpack.c.b16 %v765, %v764
  %v902 = vpack.c.b16 %v767, %v766
  %v903 = vpack.c.b16 %v769, %v768
  %v904 = vpack.c.b16 %v771, %v770
  %v905 = vpack.c.b16 %v773, %v772
  %v906 = vpack.c.b16 %v775, %v774
  %v907 = vpack.c.b16 %v777, %v776
  %v908 = vpack.c.b16 %v779, %v778
  %v909 = vpack.c.b16 %v781, %v780
  %v912 = vunpack.c.l.b16 %v268
  %v913 = vunpack.c.l.b16 %v269
  %v914 = vpack.c.b16 %v913, %v912
  %vm916 = vcmask 130048
  %v918 = vsel %vm916, %v782, 0
  %v921 = vsel %vm916, %v783, 0
  %v924 = vsel %vm916, %v784, 0
  %v927 = vsel %vm916, %v785, 0
  %v930 = vsel %vm916, %v786, 0
  %v933 = vsel %vm916, %v787, 0
  %v936 = vsel %vm916, %v788, 0
  %v939 = vsel %vm916, %v789, 0
  %v942 = vsel %vm916, %v790, 0
  %v945 = vsel %vm916, %v791, 0
  %v948 = vsel %vm916, %v792, 0
  %v951 = vsel %vm916, %v793, 0
  %v954 = vsel %vm916, %v794, 0
  %v957 = vsel %vm916, %v795, 0
  %v960 = vsel %vm916, %v796, 0
  %v963 = vsel %vm916, %v797, 0
  %v966 = vsel %vm916, %v798, 0
  %v969 = vsel %vm916, %v799, 0
  %v972 = vsel %vm916, %v800, 0
  %v975 = vsel %vm916, %v801, 0
  %v978 = vsel %vm916, %v802, 0
  %v981 = vsel %vm916, %v803, 0
  %v984 = vsel %vm916, %v804, 0
  %v987 = vsel %vm916, %v805, 0
  %v990 = vsel %vm916, %v806, 0
  %v993 = vsel %vm916, %v807, 0
  %v996 = vsel %vm916, %v808, 0
  %v999 = vsel %vm916, %v809, 0
  %v1002 = vsel %vm916, %v810, 0
  %v1005 = vsel %vm916, %v811, 0
  %v1008 = vsel %vm916, %v812, 0
  %v1011 = vsel %vm916, %v813, 0
  %v1014 = vsel %vm916, %v814, 0
  %v1017 = vsel %vm916, %v815, 0
  %v1020 = vsel %vm916, %v816, 0
  %v1023 = vsel %vm916, %v817, 0
  %v1026 = vsel %vm916, %v818, 0
  %v1029 = vsel %vm916, %v819, 0
  %v1032 = vsel %vm916, %v820, 0
  %v1035 = vsel %vm916, %v821, 0
  %v1038 = vsel %vm916, %v822, 0
  %v1041 = vsel %vm916, %v823, 0
  %v1044 = vsel %vm916, %v824, 0
  %v1047 = vsel %vm916, %v825, 0
  %v1050 = vsel %vm916, %v826, 0
  %v1053 = vsel %vm916, %v827, 0
  %v1056 = vsel %vm916, %v828, 0
  %v1059 = vsel %vm916, %v829, 0
  %v1062 = vsel %vm916, %v830, 0
  %v1065 = vsel %vm916, %v831, 0
  %v1068 = vsel %vm916, %v832, 0
  %v1071 = vsel %vm916, %v833, 0
  %v1074 = vsel %vm916, %v834, 0
  %v1077 = vsel %vm916, %v835, 0
  %v1080 = vsel %vm916, %v836, 0
  %v1083 = vsel %vm916, %v837, 0
  %v1086 = vsel %vm916, %v838, 0
  %v1089 = vsel %vm916, %v839, 0
  %v1092 = vsel %vm916, %v840, 0
  %v1095 = vsel %vm916, %v841, 0
  %v1098 = vsel %vm916, %v842, 0
  %v1101 = vsel %vm916, %v843, 0
  %v1104 = vsel %vm916, %v844, 0
  %v1107 = vsel %vm916, %v845, 0
  %v1110 = vsel %vm916, %v846, 0
  %v1113 = vsel %vm916, %v847, 0
  %v1116 = vsel %vm916, %v848, 0
  %v1119 = vsel %vm916, %v849, 0
  %v1122 = vsel %vm916, %v850, 0
  %v1125 = vsel %vm916, %v851, 0
  %v1128 = vsel %vm916, %v852, 0
  %v1131 = vsel %vm916, %v853, 0
  %v1134 = vsel %vm916, %v854, 0
  %v1137 = vsel %vm916, %v855, 0
  %v1140 = vsel %vm916, %v856, 0
  %v1143 = vsel %vm916, %v857, 0
  %v1146 = vsel %vm916, %v858, 0
  %v1149 = vsel %vm916, %v859, 0
  %v1152 = vsel %vm916, %v860, 0
  %v1155 = vsel %vm916, %v861, 0
  %v1158 = vsel %vm916, %v862, 0
  %v1161 = vsel %vm916, %v863, 0
  %v1164 = vsel %vm916, %v864, 0
  %v1167 = vsel %vm916, %v865, 0
  %v1170 = vsel %vm916, %v866, 0
  %v1173 = vsel %vm916, %v867, 0
  %v1176 = vsel %vm916, %v868, 0
  %v1179 = vsel %vm916, %v869, 0
  %v1182 = vsel %vm916, %v870, 0
  %v1185 = vsel %vm916, %v871, 0
  %v1188 = vsel %vm916, %v872, 0
  %v1191 = vsel %vm916, %v873, 0
  %v1194 = vsel %vm916, %v874, 0
  %v1197 = vsel %vm916, %v875, 0
  %v1200 = vsel %vm916, %v876, 0
  %v1203 = vsel %vm916, %v877, 0
  %v1206 = vsel %vm916, %v878, 0
  %v1209 = vsel %vm916, %v879, 0
  %v1212 = vsel %vm916, %v880, 0
  %v1215 = vsel %vm916, %v881, 0
  %v1218 = vsel %vm916, %v882, 0
  %v1221 = vsel %vm916, %v883, 0
  %v1224 = vsel %vm916, %v884, 0
  %v1227 = vsel %vm916, %v885, 0
  %v1230 = vsel %vm916, %v886, 0
  %v1233 = vsel %vm916, %v887, 0
  %v1236 = vsel %vm916, %v888, 0
  %v1239 = vsel %vm916, %v889, 0
  %v1242 = vsel %vm916, %v890, 0
  %v1245 = vsel %vm916, %v891, 0
  %v1248 = vsel %vm916, %v892, 0
  %v1251 = vsel %vm916, %v893, 0
  %v1254 = vsel %vm916, %v894, 0
  %v1257 = vsel %vm916, %v895, 0
  %v1260 = vsel %vm916, %v896, 0
  %v1263 = vsel %vm916, %v897, 0
  %v1266 = vsel %vm916, %v898, 0
  %v1269 = vsel %vm916, %v899, 0
  %v1272 = vsel %vm916, %v900, 0
  %v1275 = vsel %vm916, %v901, 0
  %v1278 = vsel %vm916, %v902, 0
  %v1281 = vsel %vm916, %v903, 0
  %v1284 = vsel %vm916, %v904, 0
  %v1287 = vsel %vm916, %v905, 0
  %v1290 = vsel %vm916, %v906, 0
  %v1293 = vsel %vm916, %v907, 0
  %v1296 = vsel %vm916, %v908, 0
  %v1299 = vsel %vm916, %v909, 0
  %1301 = vmatpush.bf16.msra.mxu0 0
  %1302 = vmatpush.bf16.msra.mxu0 0
  %1303 = vmatpush.bf16.msra.mxu0 0
  %1304 = vmatpush.bf16.msra.mxu0 0
  %1305 = vmatpush.bf16.msra.mxu0 0
  %1306 = vmatpush.bf16.msra.mxu0 0
  %1307 = vmatpush.bf16.msra.mxu0 0
  %1308 = vmatpush.bf16.msra.mxu0 %v914
  %1309 = vmatmul.bf16.gmra.mxu0 %v918
  %v1310 = vpop.f32.mrf.mxu0
  %v1311 = vadd.f32 0.0, %v1310
  %v1312 = vpop.f32.mrf.mxu0
  %v1313 = vadd.f32 0.0, %v1312
  %1314 = vmatmul.bf16.gmra.mxu0 %v921
  %v1315 = vpop.f32.mrf.mxu0
  %v1316 = vadd.f32 0.0, %v1315
  %v1317 = vpop.f32.mrf.mxu0
  %v1318 = vadd.f32 0.0, %v1317
  %1319 = vmatmul.bf16.gmra.mxu0 %v924
  %v1320 = vpop.f32.mrf.mxu0
  %v1321 = vadd.f32 0.0, %v1320
  %v1322 = vpop.f32.mrf.mxu0
  %v1323 = vadd.f32 0.0, %v1322
  %1324 = vmatmul.bf16.gmra.mxu0 %v927
  %v1325 = vpop.f32.mrf.mxu0
  %v1326 = vadd.f32 0.0, %v1325
  %v1327 = vpop.f32.mrf.mxu0
  %v1328 = vadd.f32 0.0, %v1327
  %1329 = vmatmul.bf16.gmra.mxu0 %v930
  %v1330 = vpop.f32.mrf.mxu0
  %v1331 = vadd.f32 0.0, %v1330
  %v1332 = vpop.f32.mrf.mxu0
  %v1333 = vadd.f32 0.0, %v1332
  %1334 = vmatmul.bf16.gmra.mxu0 %v933
  %v1335 = vpop.f32.mrf.mxu0
  %v1336 = vadd.f32 0.0, %v1335
  %v1337 = vpop.f32.mrf.mxu0
  %v1338 = vadd.f32 0.0, %v1337
  %1339 = vmatmul.bf16.gmra.mxu0 %v936
  %v1340 = vpop.f32.mrf.mxu0
  %v1341 = vadd.f32 0.0, %v1340
  %v1342 = vpop.f32.mrf.mxu0
  %v1343 = vadd.f32 0.0, %v1342
  %1344 = vmatmul.bf16.gmra.mxu0 %v939
  %v1345 = vpop.f32.mrf.mxu0
  %v1346 = vadd.f32 0.0, %v1345
  %v1347 = vpop.f32.mrf.mxu0
  %v1348 = vadd.f32 0.0, %v1347
  %1349 = vmatmul.bf16.gmra.mxu0 %v942
  %v1350 = vpop.f32.mrf.mxu0
  %v1351 = vadd.f32 0.0, %v1350
  %v1352 = vpop.f32.mrf.mxu0
  %v1353 = vadd.f32 0.0, %v1352
  %1354 = vmatmul.bf16.gmra.mxu0 %v945
  %v1355 = vpop.f32.mrf.mxu0
  %v1356 = vadd.f32 0.0, %v1355
  %v1357 = vpop.f32.mrf.mxu0
  %v1358 = vadd.f32 0.0, %v1357
  %1359 = vmatmul.bf16.gmra.mxu0 %v948
  %v1360 = vpop.f32.mrf.mxu0
  %v1361 = vadd.f32 0.0, %v1360
  %v1362 = vpop.f32.mrf.mxu0
  %v1363 = vadd.f32 0.0, %v1362
  %1364 = vmatmul.bf16.gmra.mxu0 %v951
  %v1365 = vpop.f32.mrf.mxu0
  %v1366 = vadd.f32 0.0, %v1365
  %v1367 = vpop.f32.mrf.mxu0
  %v1368 = vadd.f32 0.0, %v1367
  %1369 = vmatmul.bf16.gmra.mxu0 %v954
  %v1370 = vpop.f32.mrf.mxu0
  %v1371 = vadd.f32 0.0, %v1370
  %v1372 = vpop.f32.mrf.mxu0
  %v1373 = vadd.f32 0.0, %v1372
  %1374 = vmatmul.bf16.gmra.mxu0 %v957
  %v1375 = vpop.f32.mrf.mxu0
  %v1376 = vadd.f32 0.0, %v1375
  %v1377 = vpop.f32.mrf.mxu0
  %v1378 = vadd.f32 0.0, %v1377
  %1379 = vmatmul.bf16.gmra.mxu0 %v960
  %v1380 = vpop.f32.mrf.mxu0
  %v1381 = vadd.f32 0.0, %v1380
  %v1382 = vpop.f32.mrf.mxu0
  %v1383 = vadd.f32 0.0, %v1382
  %1384 = vmatmul.bf16.gmra.mxu0 %v963
  %v1385 = vpop.f32.mrf.mxu0
  %v1386 = vadd.f32 0.0, %v1385
  %v1387 = vpop.f32.mrf.mxu0
  %v1388 = vadd.f32 0.0, %v1387
  %1389 = vmatmul.bf16.gmra.mxu0 %v966
  %v1390 = vpop.f32.mrf.mxu0
  %v1391 = vadd.f32 0.0, %v1390
  %v1392 = vpop.f32.mrf.mxu0
  %v1393 = vadd.f32 0.0, %v1392
  %1394 = vmatmul.bf16.gmra.mxu0 %v969
  %v1395 = vpop.f32.mrf.mxu0
  %v1396 = vadd.f32 0.0, %v1395
  %v1397 = vpop.f32.mrf.mxu0
  %v1398 = vadd.f32 0.0, %v1397
  %1399 = vmatmul.bf16.gmra.mxu0 %v972
  %v1400 = vpop.f32.mrf.mxu0
  %v1401 = vadd.f32 0.0, %v1400
  %v1402 = vpop.f32.mrf.mxu0
  %v1403 = vadd.f32 0.0, %v1402
  %1404 = vmatmul.bf16.gmra.mxu0 %v975
  %v1405 = vpop.f32.mrf.mxu0
  %v1406 = vadd.f32 0.0, %v1405
  %v1407 = vpop.f32.mrf.mxu0
  %v1408 = vadd.f32 0.0, %v1407
  %1409 = vmatmul.bf16.gmra.mxu0 %v978
  %v1410 = vpop.f32.mrf.mxu0
  %v1411 = vadd.f32 0.0, %v1410
  %v1412 = vpop.f32.mrf.mxu0
  %v1413 = vadd.f32 0.0, %v1412
  %1414 = vmatmul.bf16.gmra.mxu0 %v981
  %v1415 = vpop.f32.mrf.mxu0
  %v1416 = vadd.f32 0.0, %v1415
  %v1417 = vpop.f32.mrf.mxu0
  %v1418 = vadd.f32 0.0, %v1417
  %1419 = vmatmul.bf16.gmra.mxu0 %v984
  %v1420 = vpop.f32.mrf.mxu0
  %v1421 = vadd.f32 0.0, %v1420
  %v1422 = vpop.f32.mrf.mxu0
  %v1423 = vadd.f32 0.0, %v1422
  %1424 = vmatmul.bf16.gmra.mxu0 %v987
  %v1425 = vpop.f32.mrf.mxu0
  %v1426 = vadd.f32 0.0, %v1425
  %v1427 = vpop.f32.mrf.mxu0
  %v1428 = vadd.f32 0.0, %v1427
  %1429 = vmatmul.bf16.gmra.mxu0 %v990
  %v1430 = vpop.f32.mrf.mxu0
  %v1431 = vadd.f32 0.0, %v1430
  %v1432 = vpop.f32.mrf.mxu0
  %v1433 = vadd.f32 0.0, %v1432
  %1434 = vmatmul.bf16.gmra.mxu0 %v993
  %v1435 = vpop.f32.mrf.mxu0
  %v1436 = vadd.f32 0.0, %v1435
  %v1437 = vpop.f32.mrf.mxu0
  %v1438 = vadd.f32 0.0, %v1437
  %1439 = vmatmul.bf16.gmra.mxu0 %v996
  %v1440 = vpop.f32.mrf.mxu0
  %v1441 = vadd.f32 0.0, %v1440
  %v1442 = vpop.f32.mrf.mxu0
  %v1443 = vadd.f32 0.0, %v1442
  %1444 = vmatmul.bf16.gmra.mxu0 %v999
  %v1445 = vpop.f32.mrf.mxu0
  %v1446 = vadd.f32 0.0, %v1445
  %v1447 = vpop.f32.mrf.mxu0
  %v1448 = vadd.f32 0.0, %v1447
  %1449 = vmatmul.bf16.gmra.mxu0 %v1002
  %v1450 = vpop.f32.mrf.mxu0
  %v1451 = vadd.f32 0.0, %v1450
  %v1452 = vpop.f32.mrf.mxu0
  %v1453 = vadd.f32 0.0, %v1452
  %1454 = vmatmul.bf16.gmra.mxu0 %v1005
  %v1455 = vpop.f32.mrf.mxu0
  %v1456 = vadd.f32 0.0, %v1455
  %v1457 = vpop.f32.mrf.mxu0
  %v1458 = vadd.f32 0.0, %v1457
  %1459 = vmatmul.bf16.gmra.mxu0 %v1008
  %v1460 = vpop.f32.mrf.mxu0
  %v1461 = vadd.f32 0.0, %v1460
  %v1462 = vpop.f32.mrf.mxu0
  %v1463 = vadd.f32 0.0, %v1462
  %1464 = vmatmul.bf16.gmra.mxu0 %v1011
  %v1465 = vpop.f32.mrf.mxu0
  %v1466 = vadd.f32 0.0, %v1465
  %v1467 = vpop.f32.mrf.mxu0
  %v1468 = vadd.f32 0.0, %v1467
  %1469 = vmatmul.bf16.gmra.mxu0 %v1014
  %v1470 = vpop.f32.mrf.mxu0
  %v1471 = vadd.f32 0.0, %v1470
  %v1472 = vpop.f32.mrf.mxu0
  %v1473 = vadd.f32 0.0, %v1472
  %1474 = vmatmul.bf16.gmra.mxu0 %v1017
  %v1475 = vpop.f32.mrf.mxu0
  %v1476 = vadd.f32 0.0, %v1475
  %v1477 = vpop.f32.mrf.mxu0
  %v1478 = vadd.f32 0.0, %v1477
  %1479 = vmatmul.bf16.gmra.mxu0 %v1020
  %v1480 = vpop.f32.mrf.mxu0
  %v1481 = vadd.f32 0.0, %v1480
  %v1482 = vpop.f32.mrf.mxu0
  %v1483 = vadd.f32 0.0, %v1482
  %1484 = vmatmul.bf16.gmra.mxu0 %v1023
  %v1485 = vpop.f32.mrf.mxu0
  %v1486 = vadd.f32 0.0, %v1485
  %v1487 = vpop.f32.mrf.mxu0
  %v1488 = vadd.f32 0.0, %v1487
  %1489 = vmatmul.bf16.gmra.mxu0 %v1026
  %v1490 = vpop.f32.mrf.mxu0
  %v1491 = vadd.f32 0.0, %v1490
  %v1492 = vpop.f32.mrf.mxu0
  %v1493 = vadd.f32 0.0, %v1492
  %1494 = vmatmul.bf16.gmra.mxu0 %v1029
  %v1495 = vpop.f32.mrf.mxu0
  %v1496 = vadd.f32 0.0, %v1495
  %v1497 = vpop.f32.mrf.mxu0
  %v1498 = vadd.f32 0.0, %v1497
  %1499 = vmatmul.bf16.gmra.mxu0 %v1032
  %v1500 = vpop.f32.mrf.mxu0
  %v1501 = vadd.f32 0.0, %v1500
  %v1502 = vpop.f32.mrf.mxu0
  %v1503 = vadd.f32 0.0, %v1502
  %1504 = vmatmul.bf16.gmra.mxu0 %v1035
  %v1505 = vpop.f32.mrf.mxu0
  %v1506 = vadd.f32 0.0, %v1505
  %v1507 = vpop.f32.mrf.mxu0
  %v1508 = vadd.f32 0.0, %v1507
  %1509 = vmatmul.bf16.gmra.mxu0 %v1038
  %v1510 = vpop.f32.mrf.mxu0
  %v1511 = vadd.f32 0.0, %v1510
  %v1512 = vpop.f32.mrf.mxu0
  %v1513 = vadd.f32 0.0, %v1512
  %1514 = vmatmul.bf16.gmra.mxu0 %v1041
  %v1515 = vpop.f32.mrf.mxu0
  %v1516 = vadd.f32 0.0, %v1515
  %v1517 = vpop.f32.mrf.mxu0
  %v1518 = vadd.f32 0.0, %v1517
  %1519 = vmatmul.bf16.gmra.mxu0 %v1044
  %v1520 = vpop.f32.mrf.mxu0
  %v1521 = vadd.f32 0.0, %v1520
  %v1522 = vpop.f32.mrf.mxu0
  %v1523 = vadd.f32 0.0, %v1522
  %1524 = vmatmul.bf16.gmra.mxu0 %v1047
  %v1525 = vpop.f32.mrf.mxu0
  %v1526 = vadd.f32 0.0, %v1525
  %v1527 = vpop.f32.mrf.mxu0
  %v1528 = vadd.f32 0.0, %v1527
  %1529 = vmatmul.bf16.gmra.mxu0 %v1050
  %v1530 = vpop.f32.mrf.mxu0
  %v1531 = vadd.f32 0.0, %v1530
  %v1532 = vpop.f32.mrf.mxu0
  %v1533 = vadd.f32 0.0, %v1532
  %1534 = vmatmul.bf16.gmra.mxu0 %v1053
  %v1535 = vpop.f32.mrf.mxu0
  %v1536 = vadd.f32 0.0, %v1535
  %v1537 = vpop.f32.mrf.mxu0
  %v1538 = vadd.f32 0.0, %v1537
  %1539 = vmatmul.bf16.gmra.mxu0 %v1056
  %v1540 = vpop.f32.mrf.mxu0
  %v1541 = vadd.f32 0.0, %v1540
  %v1542 = vpop.f32.mrf.mxu0
  %v1543 = vadd.f32 0.0, %v1542
  %1544 = vmatmul.bf16.gmra.mxu0 %v1059
  %v1545 = vpop.f32.mrf.mxu0
  %v1546 = vadd.f32 0.0, %v1545
  %v1547 = vpop.f32.mrf.mxu0
  %v1548 = vadd.f32 0.0, %v1547
  %1549 = vmatmul.bf16.gmra.mxu0 %v1062
  %v1550 = vpop.f32.mrf.mxu0
  %v1551 = vadd.f32 0.0, %v1550
  %v1552 = vpop.f32.mrf.mxu0
  %v1553 = vadd.f32 0.0, %v1552
  %1554 = vmatmul.bf16.gmra.mxu0 %v1065
  %v1555 = vpop.f32.mrf.mxu0
  %v1556 = vadd.f32 0.0, %v1555
  %v1557 = vpop.f32.mrf.mxu0
  %v1558 = vadd.f32 0.0, %v1557
  %1559 = vmatmul.bf16.gmra.mxu0 %v1068
  %v1560 = vpop.f32.mrf.mxu0
  %v1561 = vadd.f32 0.0, %v1560
  %v1562 = vpop.f32.mrf.mxu0
  %v1563 = vadd.f32 0.0, %v1562
  %1564 = vmatmul.bf16.gmra.mxu0 %v1071
  %v1565 = vpop.f32.mrf.mxu0
  %v1566 = vadd.f32 0.0, %v1565
  %v1567 = vpop.f32.mrf.mxu0
  %v1568 = vadd.f32 0.0, %v1567
  %1569 = vmatmul.bf16.gmra.mxu0 %v1074
  %v1570 = vpop.f32.mrf.mxu0
  %v1571 = vadd.f32 0.0, %v1570
  %v1572 = vpop.f32.mrf.mxu0
  %v1573 = vadd.f32 0.0, %v1572
  %1574 = vmatmul.bf16.gmra.mxu0 %v1077
  %v1575 = vpop.f32.mrf.mxu0
  %v1576 = vadd.f32 0.0, %v1575
  %v1577 = vpop.f32.mrf.mxu0
  %v1578 = vadd.f32 0.0, %v1577
  %1579 = vmatmul.bf16.gmra.mxu0 %v1080
  %v1580 = vpop.f32.mrf.mxu0
  %v1581 = vadd.f32 0.0, %v1580
  %v1582 = vpop.f32.mrf.mxu0
  %v1583 = vadd.f32 0.0, %v1582
  %1584 = vmatmul.bf16.gmra.mxu0 %v1083
  %v1585 = vpop.f32.mrf.mxu0
  %v1586 = vadd.f32 0.0, %v1585
  %v1587 = vpop.f32.mrf.mxu0
  %v1588 = vadd.f32 0.0, %v1587
  %1589 = vmatmul.bf16.gmra.mxu0 %v1086
  %v1590 = vpop.f32.mrf.mxu0
  %v1591 = vadd.f32 0.0, %v1590
  %v1592 = vpop.f32.mrf.mxu0
  %v1593 = vadd.f32 0.0, %v1592
  %1594 = vmatmul.bf16.gmra.mxu0 %v1089
  %v1595 = vpop.f32.mrf.mxu0
  %v1596 = vadd.f32 0.0, %v1595
  %v1597 = vpop.f32.mrf.mxu0
  %v1598 = vadd.f32 0.0, %v1597
  %1599 = vmatmul.bf16.gmra.mxu0 %v1092
  %v1600 = vpop.f32.mrf.mxu0
  %v1601 = vadd.f32 0.0, %v1600
  %v1602 = vpop.f32.mrf.mxu0
  %v1603 = vadd.f32 0.0, %v1602
  %1604 = vmatmul.bf16.gmra.mxu0 %v1095
  %v1605 = vpop.f32.mrf.mxu0
  %v1606 = vadd.f32 0.0, %v1605
  %v1607 = vpop.f32.mrf.mxu0
  %v1608 = vadd.f32 0.0, %v1607
  %1609 = vmatmul.bf16.gmra.mxu0 %v1098
  %v1610 = vpop.f32.mrf.mxu0
  %v1611 = vadd.f32 0.0, %v1610
  %v1612 = vpop.f32.mrf.mxu0
  %v1613 = vadd.f32 0.0, %v1612
  %1614 = vmatmul.bf16.gmra.mxu0 %v1101
  %v1615 = vpop.f32.mrf.mxu0
  %v1616 = vadd.f32 0.0, %v1615
  %v1617 = vpop.f32.mrf.mxu0
  %v1618 = vadd.f32 0.0, %v1617
  %1619 = vmatmul.bf16.gmra.mxu0 %v1104
  %v1620 = vpop.f32.mrf.mxu0
  %v1621 = vadd.f32 0.0, %v1620
  %v1622 = vpop.f32.mrf.mxu0
  %v1623 = vadd.f32 0.0, %v1622
  %1624 = vmatmul.bf16.gmra.mxu0 %v1107
  %v1625 = vpop.f32.mrf.mxu0
  %v1626 = vadd.f32 0.0, %v1625
  %v1627 = vpop.f32.mrf.mxu0
  %v1628 = vadd.f32 0.0, %v1627
  %1629 = vmatmul.bf16.gmra.mxu0 %v1110
  %v1630 = vpop.f32.mrf.mxu0
  %v1631 = vadd.f32 0.0, %v1630
  %v1632 = vpop.f32.mrf.mxu0
  %v1633 = vadd.f32 0.0, %v1632
  %1634 = vmatmul.bf16.gmra.mxu0 %v1113
  %v1635 = vpop.f32.mrf.mxu0
  %v1636 = vadd.f32 0.0, %v1635
  %v1637 = vpop.f32.mrf.mxu0
  %v1638 = vadd.f32 0.0, %v1637
  %1639 = vmatmul.bf16.gmra.mxu0 %v1116
  %v1640 = vpop.f32.mrf.mxu0
  %v1641 = vadd.f32 0.0, %v1640
  %v1642 = vpop.f32.mrf.mxu0
  %v1643 = vadd.f32 0.0, %v1642
  %1644 = vmatmul.bf16.gmra.mxu0 %v1119
  %v1645 = vpop.f32.mrf.mxu0
  %v1646 = vadd.f32 0.0, %v1645
  %v1647 = vpop.f32.mrf.mxu0
  %v1648 = vadd.f32 0.0, %v1647
  %1649 = vmatmul.bf16.gmra.mxu0 %v1122
  %v1650 = vpop.f32.mrf.mxu0
  %v1651 = vadd.f32 0.0, %v1650
  %v1652 = vpop.f32.mrf.mxu0
  %v1653 = vadd.f32 0.0, %v1652
  %1654 = vmatmul.bf16.gmra.mxu0 %v1125
  %v1655 = vpop.f32.mrf.mxu0
  %v1656 = vadd.f32 0.0, %v1655
  %v1657 = vpop.f32.mrf.mxu0
  %v1658 = vadd.f32 0.0, %v1657
  %1659 = vmatmul.bf16.gmra.mxu0 %v1128
  %v1660 = vpop.f32.mrf.mxu0
  %v1661 = vadd.f32 0.0, %v1660
  %v1662 = vpop.f32.mrf.mxu0
  %v1663 = vadd.f32 0.0, %v1662
  %1664 = vmatmul.bf16.gmra.mxu0 %v1131
  %v1665 = vpop.f32.mrf.mxu0
  %v1666 = vadd.f32 0.0, %v1665
  %v1667 = vpop.f32.mrf.mxu0
  %v1668 = vadd.f32 0.0, %v1667
  %1669 = vmatmul.bf16.gmra.mxu0 %v1134
  %v1670 = vpop.f32.mrf.mxu0
  %v1671 = vadd.f32 0.0, %v1670
  %v1672 = vpop.f32.mrf.mxu0
  %v1673 = vadd.f32 0.0, %v1672
  %1674 = vmatmul.bf16.gmra.mxu0 %v1137
  %v1675 = vpop.f32.mrf.mxu0
  %v1676 = vadd.f32 0.0, %v1675
  %v1677 = vpop.f32.mrf.mxu0
  %v1678 = vadd.f32 0.0, %v1677
  %1679 = vmatmul.bf16.gmra.mxu0 %v1140
  %v1680 = vpop.f32.mrf.mxu0
  %v1681 = vadd.f32 0.0, %v1680
  %v1682 = vpop.f32.mrf.mxu0
  %v1683 = vadd.f32 0.0, %v1682
  %1684 = vmatmul.bf16.gmra.mxu0 %v1143
  %v1685 = vpop.f32.mrf.mxu0
  %v1686 = vadd.f32 0.0, %v1685
  %v1687 = vpop.f32.mrf.mxu0
  %v1688 = vadd.f32 0.0, %v1687
  %1689 = vmatmul.bf16.gmra.mxu0 %v1146
  %v1690 = vpop.f32.mrf.mxu0
  %v1691 = vadd.f32 0.0, %v1690
  %v1692 = vpop.f32.mrf.mxu0
  %v1693 = vadd.f32 0.0, %v1692
  %1694 = vmatmul.bf16.gmra.mxu0 %v1149
  %v1695 = vpop.f32.mrf.mxu0
  %v1696 = vadd.f32 0.0, %v1695
  %v1697 = vpop.f32.mrf.mxu0
  %v1698 = vadd.f32 0.0, %v1697
  %1699 = vmatmul.bf16.gmra.mxu0 %v1152
  %v1700 = vpop.f32.mrf.mxu0
  %v1701 = vadd.f32 0.0, %v1700
  %v1702 = vpop.f32.mrf.mxu0
  %v1703 = vadd.f32 0.0, %v1702
  %1704 = vmatmul.bf16.gmra.mxu0 %v1155
  %v1705 = vpop.f32.mrf.mxu0
  %v1706 = vadd.f32 0.0, %v1705
  %v1707 = vpop.f32.mrf.mxu0
  %v1708 = vadd.f32 0.0, %v1707
  %1709 = vmatmul.bf16.gmra.mxu0 %v1158
  %v1710 = vpop.f32.mrf.mxu0
  %v1711 = vadd.f32 0.0, %v1710
  %v1712 = vpop.f32.mrf.mxu0
  %v1713 = vadd.f32 0.0, %v1712
  %1714 = vmatmul.bf16.gmra.mxu0 %v1161
  %v1715 = vpop.f32.mrf.mxu0
  %v1716 = vadd.f32 0.0, %v1715
  %v1717 = vpop.f32.mrf.mxu0
  %v1718 = vadd.f32 0.0, %v1717
  %1719 = vmatmul.bf16.gmra.mxu0 %v1164
  %v1720 = vpop.f32.mrf.mxu0
  %v1721 = vadd.f32 0.0, %v1720
  %v1722 = vpop.f32.mrf.mxu0
  %v1723 = vadd.f32 0.0, %v1722
  %1724 = vmatmul.bf16.gmra.mxu0 %v1167
  %v1725 = vpop.f32.mrf.mxu0
  %v1726 = vadd.f32 0.0, %v1725
  %v1727 = vpop.f32.mrf.mxu0
  %v1728 = vadd.f32 0.0, %v1727
  %1729 = vmatmul.bf16.gmra.mxu0 %v1170
  %v1730 = vpop.f32.mrf.mxu0
  %v1731 = vadd.f32 0.0, %v1730
  %v1732 = vpop.f32.mrf.mxu0
  %v1733 = vadd.f32 0.0, %v1732
  %1734 = vmatmul.bf16.gmra.mxu0 %v1173
  %v1735 = vpop.f32.mrf.mxu0
  %v1736 = vadd.f32 0.0, %v1735
  %v1737 = vpop.f32.mrf.mxu0
  %v1738 = vadd.f32 0.0, %v1737
  %1739 = vmatmul.bf16.gmra.mxu0 %v1176
  %v1740 = vpop.f32.mrf.mxu0
  %v1741 = vadd.f32 0.0, %v1740
  %v1742 = vpop.f32.mrf.mxu0
  %v1743 = vadd.f32 0.0, %v1742
  %1744 = vmatmul.bf16.gmra.mxu0 %v1179
  %v1745 = vpop.f32.mrf.mxu0
  %v1746 = vadd.f32 0.0, %v1745
  %v1747 = vpop.f32.mrf.mxu0
  %v1748 = vadd.f32 0.0, %v1747
  %1749 = vmatmul.bf16.gmra.mxu0 %v1182
  %v1750 = vpop.f32.mrf.mxu0
  %v1751 = vadd.f32 0.0, %v1750
  %v1752 = vpop.f32.mrf.mxu0
  %v1753 = vadd.f32 0.0, %v1752
  %1754 = vmatmul.bf16.gmra.mxu0 %v1185
  %v1755 = vpop.f32.mrf.mxu0
  %v1756 = vadd.f32 0.0, %v1755
  %v1757 = vpop.f32.mrf.mxu0
  %v1758 = vadd.f32 0.0, %v1757
  %1759 = vmatmul.bf16.gmra.mxu0 %v1188
  %v1760 = vpop.f32.mrf.mxu0
  %v1761 = vadd.f32 0.0, %v1760
  %v1762 = vpop.f32.mrf.mxu0
  %v1763 = vadd.f32 0.0, %v1762
  %1764 = vmatmul.bf16.gmra.mxu0 %v1191
  %v1765 = vpop.f32.mrf.mxu0
  %v1766 = vadd.f32 0.0, %v1765
  %v1767 = vpop.f32.mrf.mxu0
  %v1768 = vadd.f32 0.0, %v1767
  %1769 = vmatmul.bf16.gmra.mxu0 %v1194
  %v1770 = vpop.f32.mrf.mxu0
  %v1771 = vadd.f32 0.0, %v1770
  %v1772 = vpop.f32.mrf.mxu0
  %v1773 = vadd.f32 0.0, %v1772
  %1774 = vmatmul.bf16.gmra.mxu0 %v1197
  %v1775 = vpop.f32.mrf.mxu0
  %v1776 = vadd.f32 0.0, %v1775
  %v1777 = vpop.f32.mrf.mxu0
  %v1778 = vadd.f32 0.0, %v1777
  %1779 = vmatmul.bf16.gmra.mxu0 %v1200
  %v1780 = vpop.f32.mrf.mxu0
  %v1781 = vadd.f32 0.0, %v1780
  %v1782 = vpop.f32.mrf.mxu0
  %v1783 = vadd.f32 0.0, %v1782
  %1784 = vmatmul.bf16.gmra.mxu0 %v1203
  %v1785 = vpop.f32.mrf.mxu0
  %v1786 = vadd.f32 0.0, %v1785
  %v1787 = vpop.f32.mrf.mxu0
  %v1788 = vadd.f32 0.0, %v1787
  %1789 = vmatmul.bf16.gmra.mxu0 %v1206
  %v1790 = vpop.f32.mrf.mxu0
  %v1791 = vadd.f32 0.0, %v1790
  %v1792 = vpop.f32.mrf.mxu0
  %v1793 = vadd.f32 0.0, %v1792
  %1794 = vmatmul.bf16.gmra.mxu0 %v1209
  %v1795 = vpop.f32.mrf.mxu0
  %v1796 = vadd.f32 0.0, %v1795
  %v1797 = vpop.f32.mrf.mxu0
  %v1798 = vadd.f32 0.0, %v1797
  %1799 = vmatmul.bf16.gmra.mxu0 %v1212
  %v1800 = vpop.f32.mrf.mxu0
  %v1801 = vadd.f32 0.0, %v1800
  %v1802 = vpop.f32.mrf.mxu0
  %v1803 = vadd.f32 0.0, %v1802
  %1804 = vmatmul.bf16.gmra.mxu0 %v1215
  %v1805 = vpop.f32.mrf.mxu0
  %v1806 = vadd.f32 0.0, %v1805
  %v1807 = vpop.f32.mrf.mxu0
  %v1808 = vadd.f32 0.0, %v1807
  %1809 = vmatmul.bf16.gmra.mxu0 %v1218
  %v1810 = vpop.f32.mrf.mxu0
  %v1811 = vadd.f32 0.0, %v1810
  %v1812 = vpop.f32.mrf.mxu0
  %v1813 = vadd.f32 0.0, %v1812
  %1814 = vmatmul.bf16.gmra.mxu0 %v1221
  %v1815 = vpop.f32.mrf.mxu0
  %v1816 = vadd.f32 0.0, %v1815
  %v1817 = vpop.f32.mrf.mxu0
  %v1818 = vadd.f32 0.0, %v1817
  %1819 = vmatmul.bf16.gmra.mxu0 %v1224
  %v1820 = vpop.f32.mrf.mxu0
  %v1821 = vadd.f32 0.0, %v1820
  %v1822 = vpop.f32.mrf.mxu0
  %v1823 = vadd.f32 0.0, %v1822
  %1824 = vmatmul.bf16.gmra.mxu0 %v1227
  %v1825 = vpop.f32.mrf.mxu0
  %v1826 = vadd.f32 0.0, %v1825
  %v1827 = vpop.f32.mrf.mxu0
  %v1828 = vadd.f32 0.0, %v1827
  %1829 = vmatmul.bf16.gmra.mxu0 %v1230
  %v1830 = vpop.f32.mrf.mxu0
  %v1831 = vadd.f32 0.0, %v1830
  %v1832 = vpop.f32.mrf.mxu0
  %v1833 = vadd.f32 0.0, %v1832
  %1834 = vmatmul.bf16.gmra.mxu0 %v1233
  %v1835 = vpop.f32.mrf.mxu0
  %v1836 = vadd.f32 0.0, %v1835
  %v1837 = vpop.f32.mrf.mxu0
  %v1838 = vadd.f32 0.0, %v1837
  %1839 = vmatmul.bf16.gmra.mxu0 %v1236
  %v1840 = vpop.f32.mrf.mxu0
  %v1841 = vadd.f32 0.0, %v1840
  %v1842 = vpop.f32.mrf.mxu0
  %v1843 = vadd.f32 0.0, %v1842
  %1844 = vmatmul.bf16.gmra.mxu0 %v1239
  %v1845 = vpop.f32.mrf.mxu0
  %v1846 = vadd.f32 0.0, %v1845
  %v1847 = vpop.f32.mrf.mxu0
  %v1848 = vadd.f32 0.0, %v1847
  %1849 = vmatmul.bf16.gmra.mxu0 %v1242
  %v1850 = vpop.f32.mrf.mxu0
  %v1851 = vadd.f32 0.0, %v1850
  %v1852 = vpop.f32.mrf.mxu0
  %v1853 = vadd.f32 0.0, %v1852
  %1854 = vmatmul.bf16.gmra.mxu0 %v1245
  %v1855 = vpop.f32.mrf.mxu0
  %v1856 = vadd.f32 0.0, %v1855
  %v1857 = vpop.f32.mrf.mxu0
  %v1858 = vadd.f32 0.0, %v1857
  %1859 = vmatmul.bf16.gmra.mxu0 %v1248
  %v1860 = vpop.f32.mrf.mxu0
  %v1861 = vadd.f32 0.0, %v1860
  %v1862 = vpop.f32.mrf.mxu0
  %v1863 = vadd.f32 0.0, %v1862
  %1864 = vmatmul.bf16.gmra.mxu0 %v1251
  %v1865 = vpop.f32.mrf.mxu0
  %v1866 = vadd.f32 0.0, %v1865
  %v1867 = vpop.f32.mrf.mxu0
  %v1868 = vadd.f32 0.0, %v1867
  %1869 = vmatmul.bf16.gmra.mxu0 %v1254
  %v1870 = vpop.f32.mrf.mxu0
  %v1871 = vadd.f32 0.0, %v1870
  %v1872 = vpop.f32.mrf.mxu0
  %v1873 = vadd.f32 0.0, %v1872
  %1874 = vmatmul.bf16.gmra.mxu0 %v1257
  %v1875 = vpop.f32.mrf.mxu0
  %v1876 = vadd.f32 0.0, %v1875
  %v1877 = vpop.f32.mrf.mxu0
  %v1878 = vadd.f32 0.0, %v1877
  %1879 = vmatmul.bf16.gmra.mxu0 %v1260
  %v1880 = vpop.f32.mrf.mxu0
  %v1881 = vadd.f32 0.0, %v1880
  %v1882 = vpop.f32.mrf.mxu0
  %v1883 = vadd.f32 0.0, %v1882
  %1884 = vmatmul.bf16.gmra.mxu0 %v1263
  %v1885 = vpop.f32.mrf.mxu0
  %v1886 = vadd.f32 0.0, %v1885
  %v1887 = vpop.f32.mrf.mxu0
  %v1888 = vadd.f32 0.0, %v1887
  %1889 = vmatmul.bf16.gmra.mxu0 %v1266
  %v1890 = vpop.f32.mrf.mxu0
  %v1891 = vadd.f32 0.0, %v1890
  %v1892 = vpop.f32.mrf.mxu0
  %v1893 = vadd.f32 0.0, %v1892
  %1894 = vmatmul.bf16.gmra.mxu0 %v1269
  %v1895 = vpop.f32.mrf.mxu0
  %v1896 = vadd.f32 0.0, %v1895
  %v1897 = vpop.f32.mrf.mxu0
  %v1898 = vadd.f32 0.0, %v1897
  %1899 = vmatmul.bf16.gmra.mxu0 %v1272
  %v1900 = vpop.f32.mrf.mxu0
  %v1901 = vadd.f32 0.0, %v1900
  %v1902 = vpop.f32.mrf.mxu0
  %v1903 = vadd.f32 0.0, %v1902
  %1904 = vmatmul.bf16.gmra.mxu0 %v1275
  %v1905 = vpop.f32.mrf.mxu0
  %v1906 = vadd.f32 0.0, %v1905
  %v1907 = vpop.f32.mrf.mxu0
  %v1908 = vadd.f32 0.0, %v1907
  %1909 = vmatmul.bf16.gmra.mxu0 %v1278
  %v1910 = vpop.f32.mrf.mxu0
  %v1911 = vadd.f32 0.0, %v1910
  %v1912 = vpop.f32.mrf.mxu0
  %v1913 = vadd.f32 0.0, %v1912
  %1914 = vmatmul.bf16.gmra.mxu0 %v1281
  %v1915 = vpop.f32.mrf.mxu0
  %v1916 = vadd.f32 0.0, %v1915
  %v1917 = vpop.f32.mrf.mxu0
  %v1918 = vadd.f32 0.0, %v1917
  %1919 = vmatmul.bf16.gmra.mxu0 %v1284
  %v1920 = vpop.f32.mrf.mxu0
  %v1921 = vadd.f32 0.0, %v1920
  %v1922 = vpop.f32.mrf.mxu0
  %v1923 = vadd.f32 0.0, %v1922
  %1924 = vmatmul.bf16.gmra.mxu0 %v1287
  %v1925 = vpop.f32.mrf.mxu0
  %v1926 = vadd.f32 0.0, %v1925
  %v1927 = vpop.f32.mrf.mxu0
  %v1928 = vadd.f32 0.0, %v1927
  %1929 = vmatmul.bf16.gmra.mxu0 %v1290
  %v1930 = vpop.f32.mrf.mxu0
  %v1931 = vadd.f32 0.0, %v1930
  %v1932 = vpop.f32.mrf.mxu0
  %v1933 = vadd.f32 0.0, %v1932
  %1934 = vmatmul.bf16.gmra.mxu0 %v1293
  %v1935 = vpop.f32.mrf.mxu0
  %v1936 = vadd.f32 0.0, %v1935
  %v1937 = vpop.f32.mrf.mxu0
  %v1938 = vadd.f32 0.0, %v1937
  %1939 = vmatmul.bf16.gmra.mxu0 %v1296
  %v1940 = vpop.f32.mrf.mxu0
  %v1941 = vadd.f32 0.0, %v1940
  %v1942 = vpop.f32.mrf.mxu0
  %v1943 = vadd.f32 0.0, %v1942
  %1944 = vmatmul.bf16.gmra.mxu0 %v1299
  %v1945 = vpop.f32.mrf.mxu0
  %v1946 = vadd.f32 0.0, %v1945
  %v1947 = vpop.f32.mrf.mxu0
  %v1948 = vadd.f32 0.0, %v1947
  %1949 = vdwg.mxu0
  %v1950 = vmul.f32 %v1311, 0.2
  %v1951 = vmul.f32 %v1313, 0.2
  %v1952 = vmul.f32 %v1316, 0.2
  %v1953 = vmul.f32 %v1318, 0.2
  %v1954 = vmul.f32 %v1321, 0.2
  %v1955 = vmul.f32 %v1323, 0.2
  %v1956 = vmul.f32 %v1326, 0.2
  %v1957 = vmul.f32 %v1328, 0.2
  %v1958 = vmul.f32 %v1331, 0.2
  %v1959 = vmul.f32 %v1333, 0.2
  %v1960 = vmul.f32 %v1336, 0.2
  %v1961 = vmul.f32 %v1338, 0.2
  %v1962 = vmul.f32 %v1341, 0.2
  %v1963 = vmul.f32 %v1343, 0.2
  %v1964 = vmul.f32 %v1346, 0.2
  %v1965 = vmul.f32 %v1348, 0.2
  %v1966 = vmul.f32 %v1351, 0.2
  %v1967 = vmul.f32 %v1353, 0.2
  %v1968 = vmul.f32 %v1356, 0.2
  %v1969 = vmul.f32 %v1358, 0.2
  %v1970 = vmul.f32 %v1361, 0.2
  %v1971 = vmul.f32 %v1363, 0.2
  %v1972 = vmul.f32 %v1366, 0.2
  %v1973 = vmul.f32 %v1368, 0.2
  %v1974 = vmul.f32 %v1371, 0.2
  %v1975 = vmul.f32 %v1373, 0.2
  %v1976 = vmul.f32 %v1376, 0.2
  %v1977 = vmul.f32 %v1378, 0.2
  %v1978 = vmul.f32 %v1381, 0.2
  %v1979 = vmul.f32 %v1383, 0.2
  %v1980 = vmul.f32 %v1386, 0.2
  %v1981 = vmul.f32 %v1388, 0.2
  %v1982 = vmul.f32 %v1391, 0.2
  %v1983 = vmul.f32 %v1393, 0.2
  %v1984 = vmul.f32 %v1396, 0.2
  %v1985 = vmul.f32 %v1398, 0.2
  %v1986 = vmul.f32 %v1401, 0.2
  %v1987 = vmul.f32 %v1403, 0.2
  %v1988 = vmul.f32 %v1406, 0.2
  %v1989 = vmul.f32 %v1408, 0.2
  %v1990 = vmul.f32 %v1411, 0.2
  %v1991 = vmul.f32 %v1413, 0.2
  %v1992 = vmul.f32 %v1416, 0.2
  %v1993 = vmul.f32 %v1418, 0.2
  %v1994 = vmul.f32 %v1421, 0.2
  %v1995 = vmul.f32 %v1423, 0.2
  %v1996 = vmul.f32 %v1426, 0.2
  %v1997 = vmul.f32 %v1428, 0.2
  %v1998 = vmul.f32 %v1431, 0.2
  %v1999 = vmul.f32 %v1433, 0.2
  %v2000 = vmul.f32 %v1436, 0.2
  %v2001 = vmul.f32 %v1438, 0.2
  %v2002 = vmul.f32 %v1441, 0.2
  %v2003 = vmul.f32 %v1443, 0.2
  %v2004 = vmul.f32 %v1446, 0.2
  %v2005 = vmul.f32 %v1448, 0.2
  %v2006 = vmul.f32 %v1451, 0.2
  %v2007 = vmul.f32 %v1453, 0.2
  %v2008 = vmul.f32 %v1456, 0.2
  %v2009 = vmul.f32 %v1458, 0.2
  %v2010 = vmul.f32 %v1461, 0.2
  %v2011 = vmul.f32 %v1463, 0.2
  %v2012 = vmul.f32 %v1466, 0.2
  %v2013 = vmul.f32 %v1468, 0.2
  %v2014 = vmul.f32 %v1471, 0.2
  %v2015 = vmul.f32 %v1473, 0.2
  %v2016 = vmul.f32 %v1476, 0.2
  %v2017 = vmul.f32 %v1478, 0.2
  %v2018 = vmul.f32 %v1481, 0.2
  %v2019 = vmul.f32 %v1483, 0.2
  %v2020 = vmul.f32 %v1486, 0.2
  %v2021 = vmul.f32 %v1488, 0.2
  %v2022 = vmul.f32 %v1491, 0.2
  %v2023 = vmul.f32 %v1493, 0.2
  %v2024 = vmul.f32 %v1496, 0.2
  %v2025 = vmul.f32 %v1498, 0.2
  %v2026 = vmul.f32 %v1501, 0.2
  %v2027 = vmul.f32 %v1503, 0.2
  %v2028 = vmul.f32 %v1506, 0.2
  %v2029 = vmul.f32 %v1508, 0.2
  %v2030 = vmul.f32 %v1511, 0.2
  %v2031 = vmul.f32 %v1513, 0.2
  %v2032 = vmul.f32 %v1516, 0.2
  %v2033 = vmul.f32 %v1518, 0.2
  %v2034 = vmul.f32 %v1521, 0.2
  %v2035 = vmul.f32 %v1523, 0.2
  %v2036 = vmul.f32 %v1526, 0.2
  %v2037 = vmul.f32 %v1528, 0.2
  %v2038 = vmul.f32 %v1531, 0.2
  %v2039 = vmul.f32 %v1533, 0.2
  %v2040 = vmul.f32 %v1536, 0.2
  %v2041 = vmul.f32 %v1538, 0.2
  %v2042 = vmul.f32 %v1541, 0.2
  %v2043 = vmul.f32 %v1543, 0.2
  %v2044 = vmul.f32 %v1546, 0.2
  %v2045 = vmul.f32 %v1548, 0.2
  %v2046 = vmul.f32 %v1551, 0.2
  %v2047 = vmul.f32 %v1553, 0.2
  %v2048 = vmul.f32 %v1556, 0.2
  %v2049 = vmul.f32 %v1558, 0.2
  %v2050 = vmul.f32 %v1561, 0.2
  %v2051 = vmul.f32 %v1563, 0.2
  %v2052 = vmul.f32 %v1566, 0.2
  %v2053 = vmul.f32 %v1568, 0.2
  %v2054 = vmul.f32 %v1571, 0.2
  %v2055 = vmul.f32 %v1573, 0.2
  %v2056 = vmul.f32 %v1576, 0.2
  %v2057 = vmul.f32 %v1578, 0.2
  %v2058 = vmul.f32 %v1581, 0.2
  %v2059 = vmul.f32 %v1583, 0.2
  %v2060 = vmul.f32 %v1586, 0.2
  %v2061 = vmul.f32 %v1588, 0.2
  %v2062 = vmul.f32 %v1591, 0.2
  %v2063 = vmul.f32 %v1593, 0.2
  %v2064 = vmul.f32 %v1596, 0.2
  %v2065 = vmul.f32 %v1598, 0.2
  %v2066 = vmul.f32 %v1601, 0.2
  %v2067 = vmul.f32 %v1603, 0.2
  %v2068 = vmul.f32 %v1606, 0.2
  %v2069 = vmul.f32 %v1608, 0.2
  %v2070 = vmul.f32 %v1611, 0.2
  %v2071 = vmul.f32 %v1613, 0.2
  %v2072 = vmul.f32 %v1616, 0.2
  %v2073 = vmul.f32 %v1618, 0.2
  %v2074 = vmul.f32 %v1621, 0.2
  %v2075 = vmul.f32 %v1623, 0.2
  %v2076 = vmul.f32 %v1626, 0.2
  %v2077 = vmul.f32 %v1628, 0.2
  %v2078 = vmul.f32 %v1631, 0.2
  %v2079 = vmul.f32 %v1633, 0.2
  %v2080 = vmul.f32 %v1636, 0.2
  %v2081 = vmul.f32 %v1638, 0.2
  %v2082 = vmul.f32 %v1641, 0.2
  %v2083 = vmul.f32 %v1643, 0.2
  %v2084 = vmul.f32 %v1646, 0.2
  %v2085 = vmul.f32 %v1648, 0.2
  %v2086 = vmul.f32 %v1651, 0.2
  %v2087 = vmul.f32 %v1653, 0.2
  %v2088 = vmul.f32 %v1656, 0.2
  %v2089 = vmul.f32 %v1658, 0.2
  %v2090 = vmul.f32 %v1661, 0.2
  %v2091 = vmul.f32 %v1663, 0.2
  %v2092 = vmul.f32 %v1666, 0.2
  %v2093 = vmul.f32 %v1668, 0.2
  %v2094 = vmul.f32 %v1671, 0.2
  %v2095 = vmul.f32 %v1673, 0.2
  %v2096 = vmul.f32 %v1676, 0.2
  %v2097 = vmul.f32 %v1678, 0.2
  %v2098 = vmul.f32 %v1681, 0.2
  %v2099 = vmul.f32 %v1683, 0.2
  %v2100 = vmul.f32 %v1686, 0.2
  %v2101 = vmul.f32 %v1688, 0.2
  %v2102 = vmul.f32 %v1691, 0.2
  %v2103 = vmul.f32 %v1693, 0.2
  %v2104 = vmul.f32 %v1696, 0.2
  %v2105 = vmul.f32 %v1698, 0.2
  %v2106 = vmul.f32 %v1701, 0.2
  %v2107 = vmul.f32 %v1703, 0.2
  %v2108 = vmul.f32 %v1706, 0.2
  %v2109 = vmul.f32 %v1708, 0.2
  %v2110 = vmul.f32 %v1711, 0.2
  %v2111 = vmul.f32 %v1713, 0.2
  %v2112 = vmul.f32 %v1716, 0.2
  %v2113 = vmul.f32 %v1718, 0.2
  %v2114 = vmul.f32 %v1721, 0.2
  %v2115 = vmul.f32 %v1723, 0.2
  %v2116 = vmul.f32 %v1726, 0.2
  %v2117 = vmul.f32 %v1728, 0.2
  %v2118 = vmul.f32 %v1731, 0.2
  %v2119 = vmul.f32 %v1733, 0.2
  %v2120 = vmul.f32 %v1736, 0.2
  %v2121 = vmul.f32 %v1738, 0.2
  %v2122 = vmul.f32 %v1741, 0.2
  %v2123 = vmul.f32 %v1743, 0.2
  %v2124 = vmul.f32 %v1746, 0.2
  %v2125 = vmul.f32 %v1748, 0.2
  %v2126 = vmul.f32 %v1751, 0.2
  %v2127 = vmul.f32 %v1753, 0.2
  %v2128 = vmul.f32 %v1756, 0.2
  %v2129 = vmul.f32 %v1758, 0.2
  %v2130 = vmul.f32 %v1761, 0.2
  %v2131 = vmul.f32 %v1763, 0.2
  %v2132 = vmul.f32 %v1766, 0.2
  %v2133 = vmul.f32 %v1768, 0.2
  %v2134 = vmul.f32 %v1771, 0.2
  %v2135 = vmul.f32 %v1773, 0.2
  %v2136 = vmul.f32 %v1776, 0.2
  %v2137 = vmul.f32 %v1778, 0.2
  %v2138 = vmul.f32 %v1781, 0.2
  %v2139 = vmul.f32 %v1783, 0.2
  %v2140 = vmul.f32 %v1786, 0.2
  %v2141 = vmul.f32 %v1788, 0.2
  %v2142 = vmul.f32 %v1791, 0.2
  %v2143 = vmul.f32 %v1793, 0.2
  %v2144 = vmul.f32 %v1796, 0.2
  %v2145 = vmul.f32 %v1798, 0.2
  %v2146 = vmul.f32 %v1801, 0.2
  %v2147 = vmul.f32 %v1803, 0.2
  %v2148 = vmul.f32 %v1806, 0.2
  %v2149 = vmul.f32 %v1808, 0.2
  %v2150 = vmul.f32 %v1811, 0.2
  %v2151 = vmul.f32 %v1813, 0.2
  %v2152 = vmul.f32 %v1816, 0.2
  %v2153 = vmul.f32 %v1818, 0.2
  %v2154 = vmul.f32 %v1821, 0.2
  %v2155 = vmul.f32 %v1823, 0.2
  %v2156 = vmul.f32 %v1826, 0.2
  %v2157 = vmul.f32 %v1828, 0.2
  %v2158 = vmul.f32 %v1831, 0.2
  %v2159 = vmul.f32 %v1833, 0.2
  %v2160 = vmul.f32 %v1836, 0.2
  %v2161 = vmul.f32 %v1838, 0.2
  %v2162 = vmul.f32 %v1841, 0.2
  %v2163 = vmul.f32 %v1843, 0.2
  %v2164 = vmul.f32 %v1846, 0.2
  %v2165 = vmul.f32 %v1848, 0.2
  %v2166 = vmul.f32 %v1851, 0.2
  %v2167 = vmul.f32 %v1853, 0.2
  %v2168 = vmul.f32 %v1856, 0.2
  %v2169 = vmul.f32 %v1858, 0.2
  %v2170 = vmul.f32 %v1861, 0.2
  %v2171 = vmul.f32 %v1863, 0.2
  %v2172 = vmul.f32 %v1866, 0.2
  %v2173 = vmul.f32 %v1868, 0.2
  %v2174 = vmul.f32 %v1871, 0.2
  %v2175 = vmul.f32 %v1873, 0.2
  %v2176 = vmul.f32 %v1876, 0.2
  %v2177 = vmul.f32 %v1878, 0.2
  %v2178 = vmul.f32 %v1881, 0.2
  %v2179 = vmul.f32 %v1883, 0.2
  %v2180 = vmul.f32 %v1886, 0.2
  %v2181 = vmul.f32 %v1888, 0.2
  %v2182 = vmul.f32 %v1891, 0.2
  %v2183 = vmul.f32 %v1893, 0.2
  %v2184 = vmul.f32 %v1896, 0.2
  %v2185 = vmul.f32 %v1898, 0.2
  %v2186 = vmul.f32 %v1901, 0.2
  %v2187 = vmul.f32 %v1903, 0.2
  %v2188 = vmul.f32 %v1906, 0.2
  %v2189 = vmul.f32 %v1908, 0.2
  %v2190 = vmul.f32 %v1911, 0.2
  %v2191 = vmul.f32 %v1913, 0.2
  %v2192 = vmul.f32 %v1916, 0.2
  %v2193 = vmul.f32 %v1918, 0.2
  %v2194 = vmul.f32 %v1921, 0.2
  %v2195 = vmul.f32 %v1923, 0.2
  %v2196 = vmul.f32 %v1926, 0.2
  %v2197 = vmul.f32 %v1928, 0.2
  %v2198 = vmul.f32 %v1931, 0.2
  %v2199 = vmul.f32 %v1933, 0.2
  %v2200 = vmul.f32 %v1936, 0.2
  %v2201 = vmul.f32 %v1938, 0.2
  %v2202 = vmul.f32 %v1941, 0.2
  %v2203 = vmul.f32 %v1943, 0.2
  %v2204 = vmul.f32 %v1946, 0.2
  %v2205 = vmul.f32 %v1948, 0.2
  %v2206 = vmax.f32 %v1311, %v1950
  %v2207 = vmax.f32 %v1313, %v1951
  %v2208 = vmax.f32 %v1316, %v1952
  %v2209 = vmax.f32 %v1318, %v1953
  %v2210 = vmax.f32 %v1321, %v1954
  %v2211 = vmax.f32 %v1323, %v1955
  %v2212 = vmax.f32 %v1326, %v1956
  %v2213 = vmax.f32 %v1328, %v1957
  %v2214 = vmax.f32 %v1331, %v1958
  %v2215 = vmax.f32 %v1333, %v1959
  %v2216 = vmax.f32 %v1336, %v1960
  %v2217 = vmax.f32 %v1338, %v1961
  %v2218 = vmax.f32 %v1341, %v1962
  %v2219 = vmax.f32 %v1343, %v1963
  %v2220 = vmax.f32 %v1346, %v1964
  %v2221 = vmax.f32 %v1348, %v1965
  %v2222 = vmax.f32 %v1351, %v1966
  %v2223 = vmax.f32 %v1353, %v1967
  %v2224 = vmax.f32 %v1356, %v1968
  %v2225 = vmax.f32 %v1358, %v1969
  %v2226 = vmax.f32 %v1361, %v1970
  %v2227 = vmax.f32 %v1363, %v1971
  %v2228 = vmax.f32 %v1366, %v1972
  %v2229 = vmax.f32 %v1368, %v1973
  %v2230 = vmax.f32 %v1371, %v1974
  %v2231 = vmax.f32 %v1373, %v1975
  %v2232 = vmax.f32 %v1376, %v1976
  %v2233 = vmax.f32 %v1378, %v1977
  %v2234 = vmax.f32 %v1381, %v1978
  %v2235 = vmax.f32 %v1383, %v1979
  %v2236 = vmax.f32 %v1386, %v1980
  %v2237 = vmax.f32 %v1388, %v1981
  %v2238 = vmax.f32 %v1391, %v1982
  %v2239 = vmax.f32 %v1393, %v1983
  %v2240 = vmax.f32 %v1396, %v1984
  %v2241 = vmax.f32 %v1398, %v1985
  %v2242 = vmax.f32 %v1401, %v1986
  %v2243 = vmax.f32 %v1403, %v1987
  %v2244 = vmax.f32 %v1406, %v1988
  %v2245 = vmax.f32 %v1408, %v1989
  %v2246 = vmax.f32 %v1411, %v1990
  %v2247 = vmax.f32 %v1413, %v1991
  %v2248 = vmax.f32 %v1416, %v1992
  %v2249 = vmax.f32 %v1418, %v1993
  %v2250 = vmax.f32 %v1421, %v1994
  %v2251 = vmax.f32 %v1423, %v1995
  %v2252 = vmax.f32 %v1426, %v1996
  %v2253 = vmax.f32 %v1428, %v1997
  %v2254 = vmax.f32 %v1431, %v1998
  %v2255 = vmax.f32 %v1433, %v1999
  %v2256 = vmax.f32 %v1436, %v2000
  %v2257 = vmax.f32 %v1438, %v2001
  %v2258 = vmax.f32 %v1441, %v2002
  %v2259 = vmax.f32 %v1443, %v2003
  %v2260 = vmax.f32 %v1446, %v2004
  %v2261 = vmax.f32 %v1448, %v2005
  %v2262 = vmax.f32 %v1451, %v2006
  %v2263 = vmax.f32 %v1453, %v2007
  %v2264 = vmax.f32 %v1456, %v2008
  %v2265 = vmax.f32 %v1458, %v2009
  %v2266 = vmax.f32 %v1461, %v2010
  %v2267 = vmax.f32 %v1463, %v2011
  %v2268 = vmax.f32 %v1466, %v2012
  %v2269 = vmax.f32 %v1468, %v2013
  %v2270 = vmax.f32 %v1471, %v2014
  %v2271 = vmax.f32 %v1473, %v2015
  %v2272 = vmax.f32 %v1476, %v2016
  %v2273 = vmax.f32 %v1478, %v2017
  %v2274 = vmax.f32 %v1481, %v2018
  %v2275 = vmax.f32 %v1483, %v2019
  %v2276 = vmax.f32 %v1486, %v2020
  %v2277 = vmax.f32 %v1488, %v2021
  %v2278 = vmax.f32 %v1491, %v2022
  %v2279 = vmax.f32 %v1493, %v2023
  %v2280 = vmax.f32 %v1496, %v2024
  %v2281 = vmax.f32 %v1498, %v2025
  %v2282 = vmax.f32 %v1501, %v2026
  %v2283 = vmax.f32 %v1503, %v2027
  %v2284 = vmax.f32 %v1506, %v2028
  %v2285 = vmax.f32 %v1508, %v2029
  %v2286 = vmax.f32 %v1511, %v2030
  %v2287 = vmax.f32 %v1513, %v2031
  %v2288 = vmax.f32 %v1516, %v2032
  %v2289 = vmax.f32 %v1518, %v2033
  %v2290 = vmax.f32 %v1521, %v2034
  %v2291 = vmax.f32 %v1523, %v2035
  %v2292 = vmax.f32 %v1526, %v2036
  %v2293 = vmax.f32 %v1528, %v2037
  %v2294 = vmax.f32 %v1531, %v2038
  %v2295 = vmax.f32 %v1533, %v2039
  %v2296 = vmax.f32 %v1536, %v2040
  %v2297 = vmax.f32 %v1538, %v2041
  %v2298 = vmax.f32 %v1541, %v2042
  %v2299 = vmax.f32 %v1543, %v2043
  %v2300 = vmax.f32 %v1546, %v2044
  %v2301 = vmax.f32 %v1548, %v2045
  %v2302 = vmax.f32 %v1551, %v2046
  %v2303 = vmax.f32 %v1553, %v2047
  %v2304 = vmax.f32 %v1556, %v2048
  %v2305 = vmax.f32 %v1558, %v2049
  %v2306 = vmax.f32 %v1561, %v2050
  %v2307 = vmax.f32 %v1563, %v2051
  %v2308 = vmax.f32 %v1566, %v2052
  %v2309 = vmax.f32 %v1568, %v2053
  %v2310 = vmax.f32 %v1571, %v2054
  %v2311 = vmax.f32 %v1573, %v2055
  %v2312 = vmax.f32 %v1576, %v2056
  %v2313 = vmax.f32 %v1578, %v2057
  %v2314 = vmax.f32 %v1581, %v2058
  %v2315 = vmax.f32 %v1583, %v2059
  %v2316 = vmax.f32 %v1586, %v2060
  %v2317 = vmax.f32 %v1588, %v2061
  %v2318 = vmax.f32 %v1591, %v2062
  %v2319 = vmax.f32 %v1593, %v2063
  %v2320 = vmax.f32 %v1596, %v2064
  %v2321 = vmax.f32 %v1598, %v2065
  %v2322 = vmax.f32 %v1601, %v2066
  %v2323 = vmax.f32 %v1603, %v2067
  %v2324 = vmax.f32 %v1606, %v2068
  %v2325 = vmax.f32 %v1608, %v2069
  %v2326 = vmax.f32 %v1611, %v2070
  %v2327 = vmax.f32 %v1613, %v2071
  %v2328 = vmax.f32 %v1616, %v2072
  %v2329 = vmax.f32 %v1618, %v2073
  %v2330 = vmax.f32 %v1621, %v2074
  %v2331 = vmax.f32 %v1623, %v2075
  %v2332 = vmax.f32 %v1626, %v2076
  %v2333 = vmax.f32 %v1628, %v2077
  %v2334 = vmax.f32 %v1631, %v2078
  %v2335 = vmax.f32 %v1633, %v2079
  %v2336 = vmax.f32 %v1636, %v2080
  %v2337 = vmax.f32 %v1638, %v2081
  %v2338 = vmax.f32 %v1641, %v2082
  %v2339 = vmax.f32 %v1643, %v2083
  %v2340 = vmax.f32 %v1646, %v2084
  %v2341 = vmax.f32 %v1648, %v2085
  %v2342 = vmax.f32 %v1651, %v2086
  %v2343 = vmax.f32 %v1653, %v2087
  %v2344 = vmax.f32 %v1656, %v2088
  %v2345 = vmax.f32 %v1658, %v2089
  %v2346 = vmax.f32 %v1661, %v2090
  %v2347 = vmax.f32 %v1663, %v2091
  %v2348 = vmax.f32 %v1666, %v2092
  %v2349 = vmax.f32 %v1668, %v2093
  %v2350 = vmax.f32 %v1671, %v2094
  %v2351 = vmax.f32 %v1673, %v2095
  %v2352 = vmax.f32 %v1676, %v2096
  %v2353 = vmax.f32 %v1678, %v2097
  %v2354 = vmax.f32 %v1681, %v2098
  %v2355 = vmax.f32 %v1683, %v2099
  %v2356 = vmax.f32 %v1686, %v2100
  %v2357 = vmax.f32 %v1688, %v2101
  %v2358 = vmax.f32 %v1691, %v2102
  %v2359 = vmax.f32 %v1693, %v2103
  %v2360 = vmax.f32 %v1696, %v2104
  %v2361 = vmax.f32 %v1698, %v2105
  %v2362 = vmax.f32 %v1701, %v2106
  %v2363 = vmax.f32 %v1703, %v2107
  %v2364 = vmax.f32 %v1706, %v2108
  %v2365 = vmax.f32 %v1708, %v2109
  %v2366 = vmax.f32 %v1711, %v2110
  %v2367 = vmax.f32 %v1713, %v2111
  %v2368 = vmax.f32 %v1716, %v2112
  %v2369 = vmax.f32 %v1718, %v2113
  %v2370 = vmax.f32 %v1721, %v2114
  %v2371 = vmax.f32 %v1723, %v2115
  %v2372 = vmax.f32 %v1726, %v2116
  %v2373 = vmax.f32 %v1728, %v2117
  %v2374 = vmax.f32 %v1731, %v2118
  %v2375 = vmax.f32 %v1733, %v2119
  %v2376 = vmax.f32 %v1736, %v2120
  %v2377 = vmax.f32 %v1738, %v2121
  %v2378 = vmax.f32 %v1741, %v2122
  %v2379 = vmax.f32 %v1743, %v2123
  %v2380 = vmax.f32 %v1746, %v2124
  %v2381 = vmax.f32 %v1748, %v2125
  %v2382 = vmax.f32 %v1751, %v2126
  %v2383 = vmax.f32 %v1753, %v2127
  %v2384 = vmax.f32 %v1756, %v2128
  %v2385 = vmax.f32 %v1758, %v2129
  %v2386 = vmax.f32 %v1761, %v2130
  %v2387 = vmax.f32 %v1763, %v2131
  %v2388 = vmax.f32 %v1766, %v2132
  %v2389 = vmax.f32 %v1768, %v2133
  %v2390 = vmax.f32 %v1771, %v2134
  %v2391 = vmax.f32 %v1773, %v2135
  %v2392 = vmax.f32 %v1776, %v2136
  %v2393 = vmax.f32 %v1778, %v2137
  %v2394 = vmax.f32 %v1781, %v2138
  %v2395 = vmax.f32 %v1783, %v2139
  %v2396 = vmax.f32 %v1786, %v2140
  %v2397 = vmax.f32 %v1788, %v2141
  %v2398 = vmax.f32 %v1791, %v2142
  %v2399 = vmax.f32 %v1793, %v2143
  %v2400 = vmax.f32 %v1796, %v2144
  %v2401 = vmax.f32 %v1798, %v2145
  %v2402 = vmax.f32 %v1801, %v2146
  %v2403 = vmax.f32 %v1803, %v2147
  %v2404 = vmax.f32 %v1806, %v2148
  %v2405 = vmax.f32 %v1808, %v2149
  %v2406 = vmax.f32 %v1811, %v2150
  %v2407 = vmax.f32 %v1813, %v2151
  %v2408 = vmax.f32 %v1816, %v2152
  %v2409 = vmax.f32 %v1818, %v2153
  %v2410 = vmax.f32 %v1821, %v2154
  %v2411 = vmax.f32 %v1823, %v2155
  %v2412 = vmax.f32 %v1826, %v2156
  %v2413 = vmax.f32 %v1828, %v2157
  %v2414 = vmax.f32 %v1831, %v2158
  %v2415 = vmax.f32 %v1833, %v2159
  %v2416 = vmax.f32 %v1836, %v2160
  %v2417 = vmax.f32 %v1838, %v2161
  %v2418 = vmax.f32 %v1841, %v2162
  %v2419 = vmax.f32 %v1843, %v2163
  %v2420 = vmax.f32 %v1846, %v2164
  %v2421 = vmax.f32 %v1848, %v2165
  %v2422 = vmax.f32 %v1851, %v2166
  %v2423 = vmax.f32 %v1853, %v2167
  %v2424 = vmax.f32 %v1856, %v2168
  %v2425 = vmax.f32 %v1858, %v2169
  %v2426 = vmax.f32 %v1861, %v2170
  %v2427 = vmax.f32 %v1863, %v2171
  %v2428 = vmax.f32 %v1866, %v2172
  %v2429 = vmax.f32 %v1868, %v2173
  %v2430 = vmax.f32 %v1871, %v2174
  %v2431 = vmax.f32 %v1873, %v2175
  %v2432 = vmax.f32 %v1876, %v2176
  %v2433 = vmax.f32 %v1878, %v2177
  %v2434 = vmax.f32 %v1881, %v2178
  %v2435 = vmax.f32 %v1883, %v2179
  %v2436 = vmax.f32 %v1886, %v2180
  %v2437 = vmax.f32 %v1888, %v2181
  %v2438 = vmax.f32 %v1891, %v2182
  %v2439 = vmax.f32 %v1893, %v2183
  %v2440 = vmax.f32 %v1896, %v2184
  %v2441 = vmax.f32 %v1898, %v2185
  %v2442 = vmax.f32 %v1901, %v2186
  %v2443 = vmax.f32 %v1903, %v2187
  %v2444 = vmax.f32 %v1906, %v2188
  %v2445 = vmax.f32 %v1908, %v2189
  %v2446 = vmax.f32 %v1911, %v2190
  %v2447 = vmax.f32 %v1913, %v2191
  %v2448 = vmax.f32 %v1916, %v2192
  %v2449 = vmax.f32 %v1918, %v2193
  %v2450 = vmax.f32 %v1921, %v2194
  %v2451 = vmax.f32 %v1923, %v2195
  %v2452 = vmax.f32 %v1926, %v2196
  %v2453 = vmax.f32 %v1928, %v2197
  %v2454 = vmax.f32 %v1931, %v2198
  %v2455 = vmax.f32 %v1933, %v2199
  %v2456 = vmax.f32 %v1936, %v2200
  %v2457 = vmax.f32 %v1938, %v2201
  %v2458 = vmax.f32 %v1941, %v2202
  %v2459 = vmax.f32 %v1943, %v2203
  %v2460 = vmax.f32 %v1946, %v2204
  %v2461 = vmax.f32 %v1948, %v2205
  %v2462 = vpack.c.bf16 %v2206, %v2206
  %v2463 = vpack.c.bf16 %v2207, %v2207
  %v2464 = vpack.c.bf16 %v2208, %v2208
  %v2465 = vpack.c.bf16 %v2209, %v2209
  %v2466 = vpack.c.bf16 %v2210, %v2210
  %v2467 = vpack.c.bf16 %v2211, %v2211
  %v2468 = vpack.c.bf16 %v2212, %v2212
  %v2469 = vpack.c.bf16 %v2213, %v2213
  %v2470 = vpack.c.bf16 %v2214, %v2214
  %v2471 = vpack.c.bf16 %v2215, %v2215
  %v2472 = vpack.c.bf16 %v2216, %v2216
  %v2473 = vpack.c.bf16 %v2217, %v2217
  %v2474 = vpack.c.bf16 %v2218, %v2218
  %v2475 = vpack.c.bf16 %v2219, %v2219
  %v2476 = vpack.c.bf16 %v2220, %v2220
  %v2477 = vpack.c.bf16 %v2221, %v2221
  %v2478 = vpack.c.bf16 %v2222, %v2222
  %v2479 = vpack.c.bf16 %v2223, %v2223
  %v2480 = vpack.c.bf16 %v2224, %v2224
  %v2481 = vpack.c.bf16 %v2225, %v2225
  %v2482 = vpack.c.bf16 %v2226, %v2226
  %v2483 = vpack.c.bf16 %v2227, %v2227
  %v2484 = vpack.c.bf16 %v2228, %v2228
  %v2485 = vpack.c.bf16 %v2229, %v2229
  %v2486 = vpack.c.bf16 %v2230, %v2230
  %v2487 = vpack.c.bf16 %v2231, %v2231
  %v2488 = vpack.c.bf16 %v2232, %v2232
  %v2489 = vpack.c.bf16 %v2233, %v2233
  %v2490 = vpack.c.bf16 %v2234, %v2234
  %v2491 = vpack.c.bf16 %v2235, %v2235
  %v2492 = vpack.c.bf16 %v2236, %v2236
  %v2493 = vpack.c.bf16 %v2237, %v2237
  %v2494 = vpack.c.bf16 %v2238, %v2238
  %v2495 = vpack.c.bf16 %v2239, %v2239
  %v2496 = vpack.c.bf16 %v2240, %v2240
  %v2497 = vpack.c.bf16 %v2241, %v2241
  %v2498 = vpack.c.bf16 %v2242, %v2242
  %v2499 = vpack.c.bf16 %v2243, %v2243
  %v2500 = vpack.c.bf16 %v2244, %v2244
  %v2501 = vpack.c.bf16 %v2245, %v2245
  %v2502 = vpack.c.bf16 %v2246, %v2246
  %v2503 = vpack.c.bf16 %v2247, %v2247
  %v2504 = vpack.c.bf16 %v2248, %v2248
  %v2505 = vpack.c.bf16 %v2249, %v2249
  %v2506 = vpack.c.bf16 %v2250, %v2250
  %v2507 = vpack.c.bf16 %v2251, %v2251
  %v2508 = vpack.c.bf16 %v2252, %v2252
  %v2509 = vpack.c.bf16 %v2253, %v2253
  %v2510 = vpack.c.bf16 %v2254, %v2254
  %v2511 = vpack.c.bf16 %v2255, %v2255
  %v2512 = vpack.c.bf16 %v2256, %v2256
  %v2513 = vpack.c.bf16 %v2257, %v2257
  %v2514 = vpack.c.bf16 %v2258, %v2258
  %v2515 = vpack.c.bf16 %v2259, %v2259
  %v2516 = vpack.c.bf16 %v2260, %v2260
  %v2517 = vpack.c.bf16 %v2261, %v2261
  %v2518 = vpack.c.bf16 %v2262, %v2262
  %v2519 = vpack.c.bf16 %v2263, %v2263
  %v2520 = vpack.c.bf16 %v2264, %v2264
  %v2521 = vpack.c.bf16 %v2265, %v2265
  %v2522 = vpack.c.bf16 %v2266, %v2266
  %v2523 = vpack.c.bf16 %v2267, %v2267
  %v2524 = vpack.c.bf16 %v2268, %v2268
  %v2525 = vpack.c.bf16 %v2269, %v2269
  %v2526 = vpack.c.bf16 %v2270, %v2270
  %v2527 = vpack.c.bf16 %v2271, %v2271
  %v2528 = vpack.c.bf16 %v2272, %v2272
  %v2529 = vpack.c.bf16 %v2273, %v2273
  %v2530 = vpack.c.bf16 %v2274, %v2274
  %v2531 = vpack.c.bf16 %v2275, %v2275
  %v2532 = vpack.c.bf16 %v2276, %v2276
  %v2533 = vpack.c.bf16 %v2277, %v2277
  %v2534 = vpack.c.bf16 %v2278, %v2278
  %v2535 = vpack.c.bf16 %v2279, %v2279
  %v2536 = vpack.c.bf16 %v2280, %v2280
  %v2537 = vpack.c.bf16 %v2281, %v2281
  %v2538 = vpack.c.bf16 %v2282, %v2282
  %v2539 = vpack.c.bf16 %v2283, %v2283
  %v2540 = vpack.c.bf16 %v2284, %v2284
  %v2541 = vpack.c.bf16 %v2285, %v2285
  %v2542 = vpack.c.bf16 %v2286, %v2286
  %v2543 = vpack.c.bf16 %v2287, %v2287
  %v2544 = vpack.c.bf16 %v2288, %v2288
  %v2545 = vpack.c.bf16 %v2289, %v2289
  %v2546 = vpack.c.bf16 %v2290, %v2290
  %v2547 = vpack.c.bf16 %v2291, %v2291
  %v2548 = vpack.c.bf16 %v2292, %v2292
  %v2549 = vpack.c.bf16 %v2293, %v2293
  %v2550 = vpack.c.bf16 %v2294, %v2294
  %v2551 = vpack.c.bf16 %v2295, %v2295
  %v2552 = vpack.c.bf16 %v2296, %v2296
  %v2553 = vpack.c.bf16 %v2297, %v2297
  %v2554 = vpack.c.bf16 %v2298, %v2298
  %v2555 = vpack.c.bf16 %v2299, %v2299
  %v2556 = vpack.c.bf16 %v2300, %v2300
  %v2557 = vpack.c.bf16 %v2301, %v2301
  %v2558 = vpack.c.bf16 %v2302, %v2302
  %v2559 = vpack.c.bf16 %v2303, %v2303
  %v2560 = vpack.c.bf16 %v2304, %v2304
  %v2561 = vpack.c.bf16 %v2305, %v2305
  %v2562 = vpack.c.bf16 %v2306, %v2306
  %v2563 = vpack.c.bf16 %v2307, %v2307
  %v2564 = vpack.c.bf16 %v2308, %v2308
  %v2565 = vpack.c.bf16 %v2309, %v2309
  %v2566 = vpack.c.bf16 %v2310, %v2310
  %v2567 = vpack.c.bf16 %v2311, %v2311
  %v2568 = vpack.c.bf16 %v2312, %v2312
  %v2569 = vpack.c.bf16 %v2313, %v2313
  %v2570 = vpack.c.bf16 %v2314, %v2314
  %v2571 = vpack.c.bf16 %v2315, %v2315
  %v2572 = vpack.c.bf16 %v2316, %v2316
  %v2573 = vpack.c.bf16 %v2317, %v2317
  %v2574 = vpack.c.bf16 %v2318, %v2318
  %v2575 = vpack.c.bf16 %v2319, %v2319
  %v2576 = vpack.c.bf16 %v2320, %v2320
  %v2577 = vpack.c.bf16 %v2321, %v2321
  %v2578 = vpack.c.bf16 %v2322, %v2322
  %v2579 = vpack.c.bf16 %v2323, %v2323
  %v2580 = vpack.c.bf16 %v2324, %v2324
  %v2581 = vpack.c.bf16 %v2325, %v2325
  %v2582 = vpack.c.bf16 %v2326, %v2326
  %v2583 = vpack.c.bf16 %v2327, %v2327
  %v2584 = vpack.c.bf16 %v2328, %v2328
  %v2585 = vpack.c.bf16 %v2329, %v2329
  %v2586 = vpack.c.bf16 %v2330, %v2330
  %v2587 = vpack.c.bf16 %v2331, %v2331
  %v2588 = vpack.c.bf16 %v2332, %v2332
  %v2589 = vpack.c.bf16 %v2333, %v2333
  %v2590 = vpack.c.bf16 %v2334, %v2334
  %v2591 = vpack.c.bf16 %v2335, %v2335
  %v2592 = vpack.c.bf16 %v2336, %v2336
  %v2593 = vpack.c.bf16 %v2337, %v2337
  %v2594 = vpack.c.bf16 %v2338, %v2338
  %v2595 = vpack.c.bf16 %v2339, %v2339
  %v2596 = vpack.c.bf16 %v2340, %v2340
  %v2597 = vpack.c.bf16 %v2341, %v2341
  %v2598 = vpack.c.bf16 %v2342, %v2342
  %v2599 = vpack.c.bf16 %v2343, %v2343
  %v2600 = vpack.c.bf16 %v2344, %v2344
  %v2601 = vpack.c.bf16 %v2345, %v2345
  %v2602 = vpack.c.bf16 %v2346, %v2346
  %v2603 = vpack.c.bf16 %v2347, %v2347
  %v2604 = vpack.c.bf16 %v2348, %v2348
  %v2605 = vpack.c.bf16 %v2349, %v2349
  %v2606 = vpack.c.bf16 %v2350, %v2350
  %v2607 = vpack.c.bf16 %v2351, %v2351
  %v2608 = vpack.c.bf16 %v2352, %v2352
  %v2609 = vpack.c.bf16 %v2353, %v2353
  %v2610 = vpack.c.bf16 %v2354, %v2354
  %v2611 = vpack.c.bf16 %v2355, %v2355
  %v2612 = vpack.c.bf16 %v2356, %v2356
  %v2613 = vpack.c.bf16 %v2357, %v2357
  %v2614 = vpack.c.bf16 %v2358, %v2358
  %v2615 = vpack.c.bf16 %v2359, %v2359
  %v2616 = vpack.c.bf16 %v2360, %v2360
  %v2617 = vpack.c.bf16 %v2361, %v2361
  %v2618 = vpack.c.bf16 %v2362, %v2362
  %v2619 = vpack.c.bf16 %v2363, %v2363
  %v2620 = vpack.c.bf16 %v2364, %v2364
  %v2621 = vpack.c.bf16 %v2365, %v2365
  %v2622 = vpack.c.bf16 %v2366, %v2366
  %v2623 = vpack.c.bf16 %v2367, %v2367
  %v2624 = vpack.c.bf16 %v2368, %v2368
  %v2625 = vpack.c.bf16 %v2369, %v2369
  %v2626 = vpack.c.bf16 %v2370, %v2370
  %v2627 = vpack.c.bf16 %v2371, %v2371
  %v2628 = vpack.c.bf16 %v2372, %v2372
  %v2629 = vpack.c.bf16 %v2373, %v2373
  %v2630 = vpack.c.bf16 %v2374, %v2374
  %v2631 = vpack.c.bf16 %v2375, %v2375
  %v2632 = vpack.c.bf16 %v2376, %v2376
  %v2633 = vpack.c.bf16 %v2377, %v2377
  %v2634 = vpack.c.bf16 %v2378, %v2378
  %v2635 = vpack.c.bf16 %v2379, %v2379
  %v2636 = vpack.c.bf16 %v2380, %v2380
  %v2637 = vpack.c.bf16 %v2381, %v2381
  %v2638 = vpack.c.bf16 %v2382, %v2382
  %v2639 = vpack.c.bf16 %v2383, %v2383
  %v2640 = vpack.c.bf16 %v2384, %v2384
  %v2641 = vpack.c.bf16 %v2385, %v2385
  %v2642 = vpack.c.bf16 %v2386, %v2386
  %v2643 = vpack.c.bf16 %v2387, %v2387
  %v2644 = vpack.c.bf16 %v2388, %v2388
  %v2645 = vpack.c.bf16 %v2389, %v2389
  %v2646 = vpack.c.bf16 %v2390, %v2390
  %v2647 = vpack.c.bf16 %v2391, %v2391
  %v2648 = vpack.c.bf16 %v2392, %v2392
  %v2649 = vpack.c.bf16 %v2393, %v2393
  %v2650 = vpack.c.bf16 %v2394, %v2394
  %v2651 = vpack.c.bf16 %v2395, %v2395
  %v2652 = vpack.c.bf16 %v2396, %v2396
  %v2653 = vpack.c.bf16 %v2397, %v2397
  %v2654 = vpack.c.bf16 %v2398, %v2398
  %v2655 = vpack.c.bf16 %v2399, %v2399
  %v2656 = vpack.c.bf16 %v2400, %v2400
  %v2657 = vpack.c.bf16 %v2401, %v2401
  %v2658 = vpack.c.bf16 %v2402, %v2402
  %v2659 = vpack.c.bf16 %v2403, %v2403
  %v2660 = vpack.c.bf16 %v2404, %v2404
  %v2661 = vpack.c.bf16 %v2405, %v2405
  %v2662 = vpack.c.bf16 %v2406, %v2406
  %v2663 = vpack.c.bf16 %v2407, %v2407
  %v2664 = vpack.c.bf16 %v2408, %v2408
  %v2665 = vpack.c.bf16 %v2409, %v2409
  %v2666 = vpack.c.bf16 %v2410, %v2410
  %v2667 = vpack.c.bf16 %v2411, %v2411
  %v2668 = vpack.c.bf16 %v2412, %v2412
  %v2669 = vpack.c.bf16 %v2413, %v2413
  %v2670 = vpack.c.bf16 %v2414, %v2414
  %v2671 = vpack.c.bf16 %v2415, %v2415
  %v2672 = vpack.c.bf16 %v2416, %v2416
  %v2673 = vpack.c.bf16 %v2417, %v2417
  %v2674 = vpack.c.bf16 %v2418, %v2418
  %v2675 = vpack.c.bf16 %v2419, %v2419
  %v2676 = vpack.c.bf16 %v2420, %v2420
  %v2677 = vpack.c.bf16 %v2421, %v2421
  %v2678 = vpack.c.bf16 %v2422, %v2422
  %v2679 = vpack.c.bf16 %v2423, %v2423
  %v2680 = vpack.c.bf16 %v2424, %v2424
  %v2681 = vpack.c.bf16 %v2425, %v2425
  %v2682 = vpack.c.bf16 %v2426, %v2426
  %v2683 = vpack.c.bf16 %v2427, %v2427
  %v2684 = vpack.c.bf16 %v2428, %v2428
  %v2685 = vpack.c.bf16 %v2429, %v2429
  %v2686 = vpack.c.bf16 %v2430, %v2430
  %v2687 = vpack.c.bf16 %v2431, %v2431
  %v2688 = vpack.c.bf16 %v2432, %v2432
  %v2689 = vpack.c.bf16 %v2433, %v2433
  %v2690 = vpack.c.bf16 %v2434, %v2434
  %v2691 = vpack.c.bf16 %v2435, %v2435
  %v2692 = vpack.c.bf16 %v2436, %v2436
  %v2693 = vpack.c.bf16 %v2437, %v2437
  %v2694 = vpack.c.bf16 %v2438, %v2438
  %v2695 = vpack.c.bf16 %v2439, %v2439
  %v2696 = vpack.c.bf16 %v2440, %v2440
  %v2697 = vpack.c.bf16 %v2441, %v2441
  %v2698 = vpack.c.bf16 %v2442, %v2442
  %v2699 = vpack.c.bf16 %v2443, %v2443
  %v2700 = vpack.c.bf16 %v2444, %v2444
  %v2701 = vpack.c.bf16 %v2445, %v2445
  %v2702 = vpack.c.bf16 %v2446, %v2446
  %v2703 = vpack.c.bf16 %v2447, %v2447
  %v2704 = vpack.c.bf16 %v2448, %v2448
  %v2705 = vpack.c.bf16 %v2449, %v2449
  %v2706 = vpack.c.bf16 %v2450, %v2450
  %v2707 = vpack.c.bf16 %v2451, %v2451
  %v2708 = vpack.c.bf16 %v2452, %v2452
  %v2709 = vpack.c.bf16 %v2453, %v2453
  %v2710 = vpack.c.bf16 %v2454, %v2454
  %v2711 = vpack.c.bf16 %v2455, %v2455
  %v2712 = vpack.c.bf16 %v2456, %v2456
  %v2713 = vpack.c.bf16 %v2457, %v2457
  %v2714 = vpack.c.bf16 %v2458, %v2458
  %v2715 = vpack.c.bf16 %v2459, %v2459
  %v2716 = vpack.c.bf16 %v2460, %v2460
  %v2717 = vpack.c.bf16 %v2461, %v2461
  %2718 = vst [vmem:[%s2] sm:$0xf] %v2462
  %2719 = vst [vmem:[%s2 + $0x4] sm:$0xf] %v2463
  %2720 = vst [vmem:[%s2 + $0x8] sm:$0xf] %v2464
  %2721 = vst [vmem:[%s2 + $0xc] sm:$0xf] %v2465
  %2722 = vst [vmem:[%s2 + $0x10] sm:$0xf] %v2466
  %2723 = vst [vmem:[%s2 + $0x14] sm:$0xf] %v2467
  %2724 = vst [vmem:[%s2 + $0x18] sm:$0xf] %v2468
  %2725 = vst [vmem:[%s2 + $0x1c] sm:$0xf] %v2469
  %2726 = vst [vmem:[%s2 + $0x20] sm:$0xf] %v2470
  %2727 = vst [vmem:[%s2 + $0x24] sm:$0xf] %v2471
  %2728 = vst [vmem:[%s2 + $0x28] sm:$0xf] %v2472
  %2729 = vst [vmem:[%s2 + $0x2c] sm:$0xf] %v2473
  %2730 = vst [vmem:[%s2 + $0x30] sm:$0xf] %v2474
  %2731 = vst [vmem:[%s2 + $0x34] sm:$0xf] %v2475
  %2732 = vst [vmem:[%s2 + $0x38] sm:$0xf] %v2476
  %2733 = vst [vmem:[%s2 + $0x3c] sm:$0xf] %v2477
  %2734 = vst [vmem:[%s2 + $0x40] sm:$0xf] %v2478
  %2735 = vst [vmem:[%s2 + $0x44] sm:$0xf] %v2479
  %2736 = vst [vmem:[%s2 + $0x48] sm:$0xf] %v2480
  %2737 = vst [vmem:[%s2 + $0x4c] sm:$0xf] %v2481
  %2738 = vst [vmem:[%s2 + $0x50] sm:$0xf] %v2482
  %2739 = vst [vmem:[%s2 + $0x54] sm:$0xf] %v2483
  %2740 = vst [vmem:[%s2 + $0x58] sm:$0xf] %v2484
  %2741 = vst [vmem:[%s2 + $0x5c] sm:$0xf] %v2485
  %2742 = vst [vmem:[%s2 + $0x60] sm:$0xf] %v2486
  %2743 = vst [vmem:[%s2 + $0x64] sm:$0xf] %v2487
  %2744 = vst [vmem:[%s2 + $0x68] sm:$0xf] %v2488
  %2745 = vst [vmem:[%s2 + $0x6c] sm:$0xf] %v2489
  %2746 = vst [vmem:[%s2 + $0x70] sm:$0xf] %v2490
  %2747 = vst [vmem:[%s2 + $0x74] sm:$0xf] %v2491
  %2748 = vst [vmem:[%s2 + $0x78] sm:$0xf] %v2492
  %2749 = vst [vmem:[%s2 + $0x7c] sm:$0xf] %v2493
  %2750 = vst [vmem:[%s2 + $0x80] sm:$0xf] %v2494
  %2751 = vst [vmem:[%s2 + $0x84] sm:$0xf] %v2495
  %2752 = vst [vmem:[%s2 + $0x88] sm:$0xf] %v2496
  %2753 = vst [vmem:[%s2 + $0x8c] sm:$0xf] %v2497
  %2754 = vst [vmem:[%s2 + $0x90] sm:$0xf] %v2498
  %2755 = vst [vmem:[%s2 + $0x94] sm:$0xf] %v2499
  %2756 = vst [vmem:[%s2 + $0x98] sm:$0xf] %v2500
  %2757 = vst [vmem:[%s2 + $0x9c] sm:$0xf] %v2501
  %2758 = vst [vmem:[%s2 + $0xa0] sm:$0xf] %v2502
  %2759 = vst [vmem:[%s2 + $0xa4] sm:$0xf] %v2503
  %2760 = vst [vmem:[%s2 + $0xa8] sm:$0xf] %v2504
  %2761 = vst [vmem:[%s2 + $0xac] sm:$0xf] %v2505
  %2762 = vst [vmem:[%s2 + $0xb0] sm:$0xf] %v2506
  %2763 = vst [vmem:[%s2 + $0xb4] sm:$0xf] %v2507
  %2764 = vst [vmem:[%s2 + $0xb8] sm:$0xf] %v2508
  %2765 = vst [vmem:[%s2 + $0xbc] sm:$0xf] %v2509
  %2766 = vst [vmem:[%s2 + $0xc0] sm:$0xf] %v2510
  %2767 = vst [vmem:[%s2 + $0xc4] sm:$0xf] %v2511
  %2768 = vst [vmem:[%s2 + $0xc8] sm:$0xf] %v2512
  %2769 = vst [vmem:[%s2 + $0xcc] sm:$0xf] %v2513
  %2770 = vst [vmem:[%s2 + $0xd0] sm:$0xf] %v2514
  %2771 = vst [vmem:[%s2 + $0xd4] sm:$0xf] %v2515
  %2772 = vst [vmem:[%s2 + $0xd8] sm:$0xf] %v2516
  %2773 = vst [vmem:[%s2 + $0xdc] sm:$0xf] %v2517
  %2774 = vst [vmem:[%s2 + $0xe0] sm:$0xf] %v2518
  %2775 = vst [vmem:[%s2 + $0xe4] sm:$0xf] %v2519
  %2776 = vst [vmem:[%s2 + $0xe8] sm:$0xf] %v2520
  %2777 = vst [vmem:[%s2 + $0xec] sm:$0xf] %v2521
  %2778 = vst [vmem:[%s2 + $0xf0] sm:$0xf] %v2522
  %2779 = vst [vmem:[%s2 + $0xf4] sm:$0xf] %v2523
  %2780 = vst [vmem:[%s2 + $0xf8] sm:$0xf] %v2524
  %2781 = vst [vmem:[%s2 + $0xfc] sm:$0xf] %v2525
  %2782 = vst [vmem:[%s2 + $0x100] sm:$0xf] %v2526
  %2783 = vst [vmem:[%s2 + $0x104] sm:$0xf] %v2527
  %2784 = vst [vmem:[%s2 + $0x108] sm:$0xf] %v2528
  %2785 = vst [vmem:[%s2 + $0x10c] sm:$0xf] %v2529
  %2786 = vst [vmem:[%s2 + $0x110] sm:$0xf] %v2530
  %2787 = vst [vmem:[%s2 + $0x114] sm:$0xf] %v2531
  %2788 = vst [vmem:[%s2 + $0x118] sm:$0xf] %v2532
  %2789 = vst [vmem:[%s2 + $0x11c] sm:$0xf] %v2533
  %2790 = vst [vmem:[%s2 + $0x120] sm:$0xf] %v2534
  %2791 = vst [vmem:[%s2 + $0x124] sm:$0xf] %v2535
  %2792 = vst [vmem:[%s2 + $0x128] sm:$0xf] %v2536
  %2793 = vst [vmem:[%s2 + $0x12c] sm:$0xf] %v2537
  %2794 = vst [vmem:[%s2 + $0x130] sm:$0xf] %v2538
  %2795 = vst [vmem:[%s2 + $0x134] sm:$0xf] %v2539
  %2796 = vst [vmem:[%s2 + $0x138] sm:$0xf] %v2540
  %2797 = vst [vmem:[%s2 + $0x13c] sm:$0xf] %v2541
  %2798 = vst [vmem:[%s2 + $0x140] sm:$0xf] %v2542
  %2799 = vst [vmem:[%s2 + $0x144] sm:$0xf] %v2543
  %2800 = vst [vmem:[%s2 + $0x148] sm:$0xf] %v2544
  %2801 = vst [vmem:[%s2 + $0x14c] sm:$0xf] %v2545
  %2802 = vst [vmem:[%s2 + $0x150] sm:$0xf] %v2546
  %2803 = vst [vmem:[%s2 + $0x154] sm:$0xf] %v2547
  %2804 = vst [vmem:[%s2 + $0x158] sm:$0xf] %v2548
  %2805 = vst [vmem:[%s2 + $0x15c] sm:$0xf] %v2549
  %2806 = vst [vmem:[%s2 + $0x160] sm:$0xf] %v2550
  %2807 = vst [vmem:[%s2 + $0x164] sm:$0xf] %v2551
  %2808 = vst [vmem:[%s2 + $0x168] sm:$0xf] %v2552
  %2809 = vst [vmem:[%s2 + $0x16c] sm:$0xf] %v2553
  %2810 = vst [vmem:[%s2 + $0x170] sm:$0xf] %v2554
  %2811 = vst [vmem:[%s2 + $0x174] sm:$0xf] %v2555
  %2812 = vst [vmem:[%s2 + $0x178] sm:$0xf] %v2556
  %2813 = vst [vmem:[%s2 + $0x17c] sm:$0xf] %v2557
  %2814 = vst [vmem:[%s2 + $0x180] sm:$0xf] %v2558
  %2815 = vst [vmem:[%s2 + $0x184] sm:$0xf] %v2559
  %2816 = vst [vmem:[%s2 + $0x188] sm:$0xf] %v2560
  %2817 = vst [vmem:[%s2 + $0x18c] sm:$0xf] %v2561
  %2818 = vst [vmem:[%s2 + $0x190] sm:$0xf] %v2562
  %2819 = vst [vmem:[%s2 + $0x194] sm:$0xf] %v2563
  %2820 = vst [vmem:[%s2 + $0x198] sm:$0xf] %v2564
  %2821 = vst [vmem:[%s2 + $0x19c] sm:$0xf] %v2565
  %2822 = vst [vmem:[%s2 + $0x1a0] sm:$0xf] %v2566
  %2823 = vst [vmem:[%s2 + $0x1a4] sm:$0xf] %v2567
  %2824 = vst [vmem:[%s2 + $0x1a8] sm:$0xf] %v2568
  %2825 = vst [vmem:[%s2 + $0x1ac] sm:$0xf] %v2569
  %2826 = vst [vmem:[%s2 + $0x1b0] sm:$0xf] %v2570
  %2827 = vst [vmem:[%s2 + $0x1b4] sm:$0xf] %v2571
  %2828 = vst [vmem:[%s2 + $0x1b8] sm:$0xf] %v2572
  %2829 = vst [vmem:[%s2 + $0x1bc] sm:$0xf] %v2573
  %2830 = vst [vmem:[%s2 + $0x1c0] sm:$0xf] %v2574
  %2831 = vst [vmem:[%s2 + $0x1c4] sm:$0xf] %v2575
  %2832 = vst [vmem:[%s2 + $0x1c8] sm:$0xf] %v2576
  %2833 = vst [vmem:[%s2 + $0x1cc] sm:$0xf] %v2577
  %2834 = vst [vmem:[%s2 + $0x1d0] sm:$0xf] %v2578
  %2835 = vst [vmem:[%s2 + $0x1d4] sm:$0xf] %v2579
  %2836 = vst [vmem:[%s2 + $0x1d8] sm:$0xf] %v2580
  %2837 = vst [vmem:[%s2 + $0x1dc] sm:$0xf] %v2581
  %2838 = vst [vmem:[%s2 + $0x1e0] sm:$0xf] %v2582
  %2839 = vst [vmem:[%s2 + $0x1e4] sm:$0xf] %v2583
  %2840 = vst [vmem:[%s2 + $0x1e8] sm:$0xf] %v2584
  %2841 = vst [vmem:[%s2 + $0x1ec] sm:$0xf] %v2585
  %2842 = vst [vmem:[%s2 + $0x1f0] sm:$0xf] %v2586
  %2843 = vst [vmem:[%s2 + $0x1f4] sm:$0xf] %v2587
  %2844 = vst [vmem:[%s2 + $0x1f8] sm:$0xf] %v2588
  %2845 = vst [vmem:[%s2 + $0x1fc] sm:$0xf] %v2589
  %2846 = vst [vmem:[%s2 + $0x200] sm:$0xf] %v2590
  %2847 = vst [vmem:[%s2 + $0x204] sm:$0xf] %v2591
  %2848 = vst [vmem:[%s2 + $0x208] sm:$0xf] %v2592
  %2849 = vst [vmem:[%s2 + $0x20c] sm:$0xf] %v2593
  %2850 = vst [vmem:[%s2 + $0x210] sm:$0xf] %v2594
  %2851 = vst [vmem:[%s2 + $0x214] sm:$0xf] %v2595
  %2852 = vst [vmem:[%s2 + $0x218] sm:$0xf] %v2596
  %2853 = vst [vmem:[%s2 + $0x21c] sm:$0xf] %v2597
  %2854 = vst [vmem:[%s2 + $0x220] sm:$0xf] %v2598
  %2855 = vst [vmem:[%s2 + $0x224] sm:$0xf] %v2599
  %2856 = vst [vmem:[%s2 + $0x228] sm:$0xf] %v2600
  %2857 = vst [vmem:[%s2 + $0x22c] sm:$0xf] %v2601
  %2858 = vst [vmem:[%s2 + $0x230] sm:$0xf] %v2602
  %2859 = vst [vmem:[%s2 + $0x234] sm:$0xf] %v2603
  %2860 = vst [vmem:[%s2 + $0x238] sm:$0xf] %v2604
  %2861 = vst [vmem:[%s2 + $0x23c] sm:$0xf] %v2605
  %2862 = vst [vmem:[%s2 + $0x240] sm:$0xf] %v2606
  %2863 = vst [vmem:[%s2 + $0x244] sm:$0xf] %v2607
  %2864 = vst [vmem:[%s2 + $0x248] sm:$0xf] %v2608
  %2865 = vst [vmem:[%s2 + $0x24c] sm:$0xf] %v2609
  %2866 = vst [vmem:[%s2 + $0x250] sm:$0xf] %v2610
  %2867 = vst [vmem:[%s2 + $0x254] sm:$0xf] %v2611
  %2868 = vst [vmem:[%s2 + $0x258] sm:$0xf] %v2612
  %2869 = vst [vmem:[%s2 + $0x25c] sm:$0xf] %v2613
  %2870 = vst [vmem:[%s2 + $0x260] sm:$0xf] %v2614
  %2871 = vst [vmem:[%s2 + $0x264] sm:$0xf] %v2615
  %2872 = vst [vmem:[%s2 + $0x268] sm:$0xf] %v2616
  %2873 = vst [vmem:[%s2 + $0x26c] sm:$0xf] %v2617
  %2874 = vst [vmem:[%s2 + $0x270] sm:$0xf] %v2618
  %2875 = vst [vmem:[%s2 + $0x274] sm:$0xf] %v2619
  %2876 = vst [vmem:[%s2 + $0x278] sm:$0xf] %v2620
  %2877 = vst [vmem:[%s2 + $0x27c] sm:$0xf] %v2621
  %2878 = vst [vmem:[%s2 + $0x280] sm:$0xf] %v2622
  %2879 = vst [vmem:[%s2 + $0x284] sm:$0xf] %v2623
  %2880 = vst [vmem:[%s2 + $0x288] sm:$0xf] %v2624
  %2881 = vst [vmem:[%s2 + $0x28c] sm:$0xf] %v2625
  %2882 = vst [vmem:[%s2 + $0x290] sm:$0xf] %v2626
  %2883 = vst [vmem:[%s2 + $0x294] sm:$0xf] %v2627
  %2884 = vst [vmem:[%s2 + $0x298] sm:$0xf] %v2628
  %2885 = vst [vmem:[%s2 + $0x29c] sm:$0xf] %v2629
  %2886 = vst [vmem:[%s2 + $0x2a0] sm:$0xf] %v2630
  %2887 = vst [vmem:[%s2 + $0x2a4] sm:$0xf] %v2631
  %2888 = vst [vmem:[%s2 + $0x2a8] sm:$0xf] %v2632
  %2889 = vst [vmem:[%s2 + $0x2ac] sm:$0xf] %v2633
  %2890 = vst [vmem:[%s2 + $0x2b0] sm:$0xf] %v2634
  %2891 = vst [vmem:[%s2 + $0x2b4] sm:$0xf] %v2635
  %2892 = vst [vmem:[%s2 + $0x2b8] sm:$0xf] %v2636
  %2893 = vst [vmem:[%s2 + $0x2bc] sm:$0xf] %v2637
  %2894 = vst [vmem:[%s2 + $0x2c0] sm:$0xf] %v2638
  %2895 = vst [vmem:[%s2 + $0x2c4] sm:$0xf] %v2639
  %2896 = vst [vmem:[%s2 + $0x2c8] sm:$0xf] %v2640
  %2897 = vst [vmem:[%s2 + $0x2cc] sm:$0xf] %v2641
  %2898 = vst [vmem:[%s2 + $0x2d0] sm:$0xf] %v2642
  %2899 = vst [vmem:[%s2 + $0x2d4] sm:$0xf] %v2643
  %2900 = vst [vmem:[%s2 + $0x2d8] sm:$0xf] %v2644
  %2901 = vst [vmem:[%s2 + $0x2dc] sm:$0xf] %v2645
  %2902 = vst [vmem:[%s2 + $0x2e0] sm:$0xf] %v2646
  %2903 = vst [vmem:[%s2 + $0x2e4] sm:$0xf] %v2647
  %2904 = vst [vmem:[%s2 + $0x2e8] sm:$0xf] %v2648
  %2905 = vst [vmem:[%s2 + $0x2ec] sm:$0xf] %v2649
  %2906 = vst [vmem:[%s2 + $0x2f0] sm:$0xf] %v2650
  %2907 = vst [vmem:[%s2 + $0x2f4] sm:$0xf] %v2651
  %2908 = vst [vmem:[%s2 + $0x2f8] sm:$0xf] %v2652
  %2909 = vst [vmem:[%s2 + $0x2fc] sm:$0xf] %v2653
  %2910 = vst [vmem:[%s2 + $0x300] sm:$0xf] %v2654
  %2911 = vst [vmem:[%s2 + $0x304] sm:$0xf] %v2655
  %2912 = vst [vmem:[%s2 + $0x308] sm:$0xf] %v2656
  %2913 = vst [vmem:[%s2 + $0x30c] sm:$0xf] %v2657
  %2914 = vst [vmem:[%s2 + $0x310] sm:$0xf] %v2658
  %2915 = vst [vmem:[%s2 + $0x314] sm:$0xf] %v2659
  %2916 = vst [vmem:[%s2 + $0x318] sm:$0xf] %v2660
  %2917 = vst [vmem:[%s2 + $0x31c] sm:$0xf] %v2661
  %2918 = vst [vmem:[%s2 + $0x320] sm:$0xf] %v2662
  %2919 = vst [vmem:[%s2 + $0x324] sm:$0xf] %v2663
  %2920 = vst [vmem:[%s2 + $0x328] sm:$0xf] %v2664
  %2921 = vst [vmem:[%s2 + $0x32c] sm:$0xf] %v2665
  %2922 = vst [vmem:[%s2 + $0x330] sm:$0xf] %v2666
  %2923 = vst [vmem:[%s2 + $0x334] sm:$0xf] %v2667
  %2924 = vst [vmem:[%s2 + $0x338] sm:$0xf] %v2668
  %2925 = vst [vmem:[%s2 + $0x33c] sm:$0xf] %v2669
  %2926 = vst [vmem:[%s2 + $0x340] sm:$0xf] %v2670
  %2927 = vst [vmem:[%s2 + $0x344] sm:$0xf] %v2671
  %2928 = vst [vmem:[%s2 + $0x348] sm:$0xf] %v2672
  %2929 = vst [vmem:[%s2 + $0x34c] sm:$0xf] %v2673
  %2930 = vst [vmem:[%s2 + $0x350] sm:$0xf] %v2674
  %2931 = vst [vmem:[%s2 + $0x354] sm:$0xf] %v2675
  %2932 = vst [vmem:[%s2 + $0x358] sm:$0xf] %v2676
  %2933 = vst [vmem:[%s2 + $0x35c] sm:$0xf] %v2677
  %2934 = vst [vmem:[%s2 + $0x360] sm:$0xf] %v2678
  %2935 = vst [vmem:[%s2 + $0x364] sm:$0xf] %v2679
  %2936 = vst [vmem:[%s2 + $0x368] sm:$0xf] %v2680
  %2937 = vst [vmem:[%s2 + $0x36c] sm:$0xf] %v2681
  %2938 = vst [vmem:[%s2 + $0x370] sm:$0xf] %v2682
  %2939 = vst [vmem:[%s2 + $0x374] sm:$0xf] %v2683
  %2940 = vst [vmem:[%s2 + $0x378] sm:$0xf] %v2684
  %2941 = vst [vmem:[%s2 + $0x37c] sm:$0xf] %v2685
  %2942 = vst [vmem:[%s2 + $0x380] sm:$0xf] %v2686
  %2943 = vst [vmem:[%s2 + $0x384] sm:$0xf] %v2687
  %2944 = vst [vmem:[%s2 + $0x388] sm:$0xf] %v2688
  %2945 = vst [vmem:[%s2 + $0x38c] sm:$0xf] %v2689
  %2946 = vst [vmem:[%s2 + $0x390] sm:$0xf] %v2690
  %2947 = vst [vmem:[%s2 + $0x394] sm:$0xf] %v2691
  %2948 = vst [vmem:[%s2 + $0x398] sm:$0xf] %v2692
  %2949 = vst [vmem:[%s2 + $0x39c] sm:$0xf] %v2693
  %2950 = vst [vmem:[%s2 + $0x3a0] sm:$0xf] %v2694
  %2951 = vst [vmem:[%s2 + $0x3a4] sm:$0xf] %v2695
  %2952 = vst [vmem:[%s2 + $0x3a8] sm:$0xf] %v2696
  %2953 = vst [vmem:[%s2 + $0x3ac] sm:$0xf] %v2697
  %2954 = vst [vmem:[%s2 + $0x3b0] sm:$0xf] %v2698
  %2955 = vst [vmem:[%s2 + $0x3b4] sm:$0xf] %v2699
  %2956 = vst [vmem:[%s2 + $0x3b8] sm:$0xf] %v2700
  %2957 = vst [vmem:[%s2 + $0x3bc] sm:$0xf] %v2701
  %2958 = vst [vmem:[%s2 + $0x3c0] sm:$0xf] %v2702
  %2959 = vst [vmem:[%s2 + $0x3c4] sm:$0xf] %v2703
  %2960 = vst [vmem:[%s2 + $0x3c8] sm:$0xf] %v2704
  %2961 = vst [vmem:[%s2 + $0x3cc] sm:$0xf] %v2705
  %2962 = vst [vmem:[%s2 + $0x3d0] sm:$0xf] %v2706
  %2963 = vst [vmem:[%s2 + $0x3d4] sm:$0xf] %v2707
  %2964 = vst [vmem:[%s2 + $0x3d8] sm:$0xf] %v2708
  %2965 = vst [vmem:[%s2 + $0x3dc] sm:$0xf] %v2709
  %2966 = vst [vmem:[%s2 + $0x3e0] sm:$0xf] %v2710
  %2967 = vst [vmem:[%s2 + $0x3e4] sm:$0xf] %v2711
  %2968 = vst [vmem:[%s2 + $0x3e8] sm:$0xf] %v2712
  %2969 = vst [vmem:[%s2 + $0x3ec] sm:$0xf] %v2713
  %2970 = vst [vmem:[%s2 + $0x3f0] sm:$0xf] %v2714
  %2971 = vst [vmem:[%s2 + $0x3f4] sm:$0xf] %v2715
  %2972 = vst [vmem:[%s2 + $0x3f8] sm:$0xf] %v2716
  %2973 = vst [vmem:[%s2 + $0x3fc] sm:$0xf] %v2717
  // Predicated region
  $region10: #{discriminator_forward.4} parent=0 // pred_check
    _
  $region11: #{discriminator_forward.4} parent=0 // pred_check_branch
    %2975 = sbr.rel (0) target = $region13
  $region12: #{discriminator_forward.4} parent=0 // pred_region
    _
  $region13: #{discriminator_forward.4} parent=0 // pred_fallthru
    _
  // Predicated region
  $region14: #{discriminator_forward.4} parent=0 // pred_check
    _
  $region15: #{discriminator_forward.4} parent=0 // pred_check_branch
    %2977 = sbr.rel (0) target = $region17
  $region16: #{discriminator_forward.4} parent=0 // pred_region
    _
  $region17: #{discriminator_forward.4} parent=0 // pred_fallthru
    _

// kernel: discriminator_forward.6
$region0: #{discriminator_forward.6}
  #allocation0 [shape = 'u32[]', space=smem, size = 0x4, offset = 0x4, fixed_abs, tag = 'smem constant byte address 0x4 - core index']
  #allocation1 [shape = 'u32[72,128]{1,0:T(1,128)}', space=vmem, size = 0x9000, scoped, tag = 'internal scratch']
  %s0 = inlined_call_operand.vmem [shape: bf16[128,2048], index: 0, kind: input, shape index: {}]
  %s1 = inlined_call_operand.vmem [shape: bf16[2048,128], index: 1, kind: input, shape index: {}]
  %s2 = inlined_call_operand.vmem [shape: f32[1,128], index: 2, kind: input, shape index: {}]
  %s3 = inlined_call_operand.vmem [shape: f32[1,128], index: 3, kind: input, shape index: {}]
  %s4 = inlined_call_operand.vmem [shape: bf16[128,128], index: 4, kind: output, shape index: {}]
  %s5 = sld [smem:[#allocation0]]
  $region26: #{discriminator_forward.6} parent=0
    _
  %s7 = ssub.s32 1, %s5
  %s8 = scalar_select 0, %s7, %s5
  // Predicated region
  $region2: #{discriminator_forward.6} parent=0 // pred_check
    _
  $region3: #{discriminator_forward.6} parent=0 // pred_check_branch
    %10 = sbr.rel (0) target = $region5
  $region4: #{discriminator_forward.6} parent=0 // pred_region
    _
  $region5: #{discriminator_forward.6} parent=0 // pred_fallthru
    _
  // Predicated region
  $region6: #{discriminator_forward.6} parent=0 // pred_check
    _
  $region7: #{discriminator_forward.6} parent=0 // pred_check_branch
    %12 = sbr.rel (0) target = $region9
  $region8: #{discriminator_forward.6} parent=0 // pred_region
    _
  $region9: #{discriminator_forward.6} parent=0 // pred_fallthru
    _
  // Predicated region
  $region10: #{discriminator_forward.6} parent=0 // pred_check
    _
  $region11: #{discriminator_forward.6} parent=0 // pred_check_branch
    %14 = sbr.rel (0) target = $region13
  $region12: #{discriminator_forward.6} parent=0 // pred_region
    _
  $region13: #{discriminator_forward.6} parent=0 // pred_fallthru
    _
  // Predicated region
  $region14: #{discriminator_forward.6} parent=0 // pred_check
    _
  $region15: #{discriminator_forward.6} parent=0 // pred_check_branch
    %16 = sbr.rel (0) target = $region17
  $region16: #{discriminator_forward.6} parent=0 // pred_region
    _
  $region17: #{discriminator_forward.6} parent=0 // pred_fallthru
    _
  %v17 = vld [vmem:[%s0] sm:$0xff]
  %v18 = vld [vmem:[%s0 + $0x8] sm:$0xff]
  %v19 = vld [vmem:[%s0 + $0x10] sm:$0xff]
  %v20 = vld [vmem:[%s0 + $0x18] sm:$0xff]
  %v21 = vld [vmem:[%s0 + $0x20] sm:$0xff]
  %v22 = vld [vmem:[%s0 + $0x28] sm:$0xff]
  %v23 = vld [vmem:[%s0 + $0x30] sm:$0xff]
  %v24 = vld [vmem:[%s0 + $0x38] sm:$0xff]
  %v25 = vld [vmem:[%s0 + $0x40] sm:$0xff]
  %v26 = vld [vmem:[%s0 + $0x48] sm:$0xff]
  %v27 = vld [vmem:[%s0 + $0x50] sm:$0xff]
  %v28 = vld [vmem:[%s0 + $0x58] sm:$0xff]
  %v29 = vld [vmem:[%s0 + $0x60] sm:$0xff]
  %v30 = vld [vmem:[%s0 + $0x68] sm:$0xff]
  %v31 = vld [vmem:[%s0 + $0x70] sm:$0xff]
  %v32 = vld [vmem:[%s0 + $0x78] sm:$0xff]
  %v33 = vld [vmem:[%s0 + $0x80] sm:$0xff]
  %v34 = vld [vmem:[%s0 + $0x88] sm:$0xff]
  %v35 = vld [vmem:[%s0 + $0x90] sm:$0xff]
  %v36 = vld [vmem:[%s0 + $0x98] sm:$0xff]
  %v37 = vld [vmem:[%s0 + $0xa0] sm:$0xff]
  %v38 = vld [vmem:[%s0 + $0xa8] sm:$0xff]
  %v39 = vld [vmem:[%s0 + $0xb0] sm:$0xff]
  %v40 = vld [vmem:[%s0 + $0xb8] sm:$0xff]
  %v41 = vld [vmem:[%s0 + $0xc0] sm:$0xff]
  %v42 = vld [vmem:[%s0 + $0xc8] sm:$0xff]
  %v43 = vld [vmem:[%s0 + $0xd0] sm:$0xff]
  %v44 = vld [vmem:[%s0 + $0xd8] sm:$0xff]
  %v45 = vld [vmem:[%s0 + $0xe0] sm:$0xff]
  %v46 = vld [vmem:[%s0 + $0xe8] sm:$0xff]
  %v47 = vld [vmem:[%s0 + $0xf0] sm:$0xff]
  %v48 = vld [vmem:[%s0 + $0xf8] sm:$0xff]
  %v49 = vld [vmem:[%s0 + $0x100] sm:$0xff]
  %v50 = vld [vmem:[%s0 + $0x108] sm:$0xff]
  %v51 = vld [vmem:[%s0 + $0x110] sm:$0xff]
  %v52 = vld [vmem:[%s0 + $0x118] sm:$0xff]
  %v53 = vld [vmem:[%s0 + $0x120] sm:$0xff]
  %v54 = vld [vmem:[%s0 + $0x128] sm:$0xff]
  %v55 = vld [vmem:[%s0 + $0x130] sm:$0xff]
  %v56 = vld [vmem:[%s0 + $0x138] sm:$0xff]
  %v57 = vld [vmem:[%s0 + $0x140] sm:$0xff]
  %v58 = vld [vmem:[%s0 + $0x148] sm:$0xff]
  %v59 = vld [vmem:[%s0 + $0x150] sm:$0xff]
  %v60 = vld [vmem:[%s0 + $0x158] sm:$0xff]
  %v61 = vld [vmem:[%s0 + $0x160] sm:$0xff]
  %v62 = vld [vmem:[%s0 + $0x168] sm:$0xff]
  %v63 = vld [vmem:[%s0 + $0x170] sm:$0xff]
  %v64 = vld [vmem:[%s0 + $0x178] sm:$0xff]
  %v65 = vld [vmem:[%s0 + $0x180] sm:$0xff]
  %v66 = vld [vmem:[%s0 + $0x188] sm:$0xff]
  %v67 = vld [vmem:[%s0 + $0x190] sm:$0xff]
  %v68 = vld [vmem:[%s0 + $0x198] sm:$0xff]
  %v69 = vld [vmem:[%s0 + $0x1a0] sm:$0xff]
  %v70 = vld [vmem:[%s0 + $0x1a8] sm:$0xff]
  %v71 = vld [vmem:[%s0 + $0x1b0] sm:$0xff]
  %v72 = vld [vmem:[%s0 + $0x1b8] sm:$0xff]
  %v73 = vld [vmem:[%s0 + $0x1c0] sm:$0xff]
  %v74 = vld [vmem:[%s0 + $0x1c8] sm:$0xff]
  %v75 = vld [vmem:[%s0 + $0x1d0] sm:$0xff]
  %v76 = vld [vmem:[%s0 + $0x1d8] sm:$0xff]
  %v77 = vld [vmem:[%s0 + $0x1e0] sm:$0xff]
  %v78 = vld [vmem:[%s0 + $0x1e8] sm:$0xff]
  %v79 = vld [vmem:[%s0 + $0x1f0] sm:$0xff]
  %v80 = vld [vmem:[%s0 + $0x1f8] sm:$0xff]
  %v81 = vld [vmem:[%s0 + $0x200] sm:$0xff]
  %v82 = vld [vmem:[%s0 + $0x208] sm:$0xff]
  %v83 = vld [vmem:[%s0 + $0x210] sm:$0xff]
  %v84 = vld [vmem:[%s0 + $0x218] sm:$0xff]
  %v85 = vld [vmem:[%s0 + $0x220] sm:$0xff]
  %v86 = vld [vmem:[%s0 + $0x228] sm:$0xff]
  %v87 = vld [vmem:[%s0 + $0x230] sm:$0xff]
  %v88 = vld [vmem:[%s0 + $0x238] sm:$0xff]
  %v89 = vld [vmem:[%s0 + $0x240] sm:$0xff]
  %v90 = vld [vmem:[%s0 + $0x248] sm:$0xff]
  %v91 = vld [vmem:[%s0 + $0x250] sm:$0xff]
  %v92 = vld [vmem:[%s0 + $0x258] sm:$0xff]
  %v93 = vld [vmem:[%s0 + $0x260] sm:$0xff]
  %v94 = vld [vmem:[%s0 + $0x268] sm:$0xff]
  %v95 = vld [vmem:[%s0 + $0x270] sm:$0xff]
  %v96 = vld [vmem:[%s0 + $0x278] sm:$0xff]
  %v97 = vld [vmem:[%s0 + $0x280] sm:$0xff]
  %v98 = vld [vmem:[%s0 + $0x288] sm:$0xff]
  %v99 = vld [vmem:[%s0 + $0x290] sm:$0xff]
  %v100 = vld [vmem:[%s0 + $0x298] sm:$0xff]
  %v101 = vld [vmem:[%s0 + $0x2a0] sm:$0xff]
  %v102 = vld [vmem:[%s0 + $0x2a8] sm:$0xff]
  %v103 = vld [vmem:[%s0 + $0x2b0] sm:$0xff]
  %v104 = vld [vmem:[%s0 + $0x2b8] sm:$0xff]
  %v105 = vld [vmem:[%s0 + $0x2c0] sm:$0xff]
  %v106 = vld [vmem:[%s0 + $0x2c8] sm:$0xff]
  %v107 = vld [vmem:[%s0 + $0x2d0] sm:$0xff]
  %v108 = vld [vmem:[%s0 + $0x2d8] sm:$0xff]
  %v109 = vld [vmem:[%s0 + $0x2e0] sm:$0xff]
  %v110 = vld [vmem:[%s0 + $0x2e8] sm:$0xff]
  %v111 = vld [vmem:[%s0 + $0x2f0] sm:$0xff]
  %v112 = vld [vmem:[%s0 + $0x2f8] sm:$0xff]
  %v113 = vld [vmem:[%s0 + $0x300] sm:$0xff]
  %v114 = vld [vmem:[%s0 + $0x308] sm:$0xff]
  %v115 = vld [vmem:[%s0 + $0x310] sm:$0xff]
  %v116 = vld [vmem:[%s0 + $0x318] sm:$0xff]
  %v117 = vld [vmem:[%s0 + $0x320] sm:$0xff]
  %v118 = vld [vmem:[%s0 + $0x328] sm:$0xff]
  %v119 = vld [vmem:[%s0 + $0x330] sm:$0xff]
  %v120 = vld [vmem:[%s0 + $0x338] sm:$0xff]
  %v121 = vld [vmem:[%s0 + $0x340] sm:$0xff]
  %v122 = vld [vmem:[%s0 + $0x348] sm:$0xff]
  %v123 = vld [vmem:[%s0 + $0x350] sm:$0xff]
  %v124 = vld [vmem:[%s0 + $0x358] sm:$0xff]
  %v125 = vld [vmem:[%s0 + $0x360] sm:$0xff]
  %v126 = vld [vmem:[%s0 + $0x368] sm:$0xff]
  %v127 = vld [vmem:[%s0 + $0x370] sm:$0xff]
  %v128 = vld [vmem:[%s0 + $0x378] sm:$0xff]
  %v129 = vld [vmem:[%s0 + $0x380] sm:$0xff]
  %v130 = vld [vmem:[%s0 + $0x388] sm:$0xff]
  %v131 = vld [vmem:[%s0 + $0x390] sm:$0xff]
  %v132 = vld [vmem:[%s0 + $0x398] sm:$0xff]
  %v133 = vld [vmem:[%s0 + $0x3a0] sm:$0xff]
  %v134 = vld [vmem:[%s0 + $0x3a8] sm:$0xff]
  %v135 = vld [vmem:[%s0 + $0x3b0] sm:$0xff]
  %v136 = vld [vmem:[%s0 + $0x3b8] sm:$0xff]
  %v137 = vld [vmem:[%s0 + $0x3c0] sm:$0xff]
  %v138 = vld [vmem:[%s0 + $0x3c8] sm:$0xff]
  %v139 = vld [vmem:[%s0 + $0x3d0] sm:$0xff]
  %v140 = vld [vmem:[%s0 + $0x3d8] sm:$0xff]
  %v141 = vld [vmem:[%s0 + $0x3e0] sm:$0xff]
  %v142 = vld [vmem:[%s0 + $0x3e8] sm:$0xff]
  %v143 = vld [vmem:[%s0 + $0x3f0] sm:$0xff]
  %v144 = vld [vmem:[%s0 + $0x3f8] sm:$0xff]
  %v145 = vld [vmem:[%s1] sm:$0xf]
  %v146 = vld [vmem:[%s1 + $0x4] sm:$0xf]
  %v147 = vld [vmem:[%s1 + $0x8] sm:$0xf]
  %v148 = vld [vmem:[%s1 + $0xc] sm:$0xf]
  %v149 = vld [vmem:[%s1 + $0x10] sm:$0xf]
  %v150 = vld [vmem:[%s1 + $0x14] sm:$0xf]
  %v151 = vld [vmem:[%s1 + $0x18] sm:$0xf]
  %v152 = vld [vmem:[%s1 + $0x1c] sm:$0xf]
  %v153 = vld [vmem:[%s1 + $0x20] sm:$0xf]
  %v154 = vld [vmem:[%s1 + $0x24] sm:$0xf]
  %v155 = vld [vmem:[%s1 + $0x28] sm:$0xf]
  %v156 = vld [vmem:[%s1 + $0x2c] sm:$0xf]
  %v157 = vld [vmem:[%s1 + $0x30] sm:$0xf]
  %v158 = vld [vmem:[%s1 + $0x34] sm:$0xf]
  %v159 = vld [vmem:[%s1 + $0x38] sm:$0xf]
  %v160 = vld [vmem:[%s1 + $0x3c] sm:$0xf]
  %v161 = vld [vmem:[%s1 + $0x40] sm:$0xf]
  %v162 = vld [vmem:[%s1 + $0x44] sm:$0xf]
  %v163 = vld [vmem:[%s1 + $0x48] sm:$0xf]
  %v164 = vld [vmem:[%s1 + $0x4c] sm:$0xf]
  %v165 = vld [vmem:[%s1 + $0x50] sm:$0xf]
  %v166 = vld [vmem:[%s1 + $0x54] sm:$0xf]
  %v167 = vld [vmem:[%s1 + $0x58] sm:$0xf]
  %v168 = vld [vmem:[%s1 + $0x5c] sm:$0xf]
  %v169 = vld [vmem:[%s1 + $0x60] sm:$0xf]
  %v170 = vld [vmem:[%s1 + $0x64] sm:$0xf]
  %v171 = vld [vmem:[%s1 + $0x68] sm:$0xf]
  %v172 = vld [vmem:[%s1 + $0x6c] sm:$0xf]
  %v173 = vld [vmem:[%s1 + $0x70] sm:$0xf]
  %v174 = vld [vmem:[%s1 + $0x74] sm:$0xf]
  %v175 = vld [vmem:[%s1 + $0x78] sm:$0xf]
  %v176 = vld [vmem:[%s1 + $0x7c] sm:$0xf]
  %v177 = vld [vmem:[%s1 + $0x80] sm:$0xf]
  %v178 = vld [vmem:[%s1 + $0x84] sm:$0xf]
  %v179 = vld [vmem:[%s1 + $0x88] sm:$0xf]
  %v180 = vld [vmem:[%s1 + $0x8c] sm:$0xf]
  %v181 = vld [vmem:[%s1 + $0x90] sm:$0xf]
  %v182 = vld [vmem:[%s1 + $0x94] sm:$0xf]
  %v183 = vld [vmem:[%s1 + $0x98] sm:$0xf]
  %v184 = vld [vmem:[%s1 + $0x9c] sm:$0xf]
  %v185 = vld [vmem:[%s1 + $0xa0] sm:$0xf]
  %v186 = vld [vmem:[%s1 + $0xa4] sm:$0xf]
  %v187 = vld [vmem:[%s1 + $0xa8] sm:$0xf]
  %v188 = vld [vmem:[%s1 + $0xac] sm:$0xf]
  %v189 = vld [vmem:[%s1 + $0xb0] sm:$0xf]
  %v190 = vld [vmem:[%s1 + $0xb4] sm:$0xf]
  %v191 = vld [vmem:[%s1 + $0xb8] sm:$0xf]
  %v192 = vld [vmem:[%s1 + $0xbc] sm:$0xf]
  %v193 = vld [vmem:[%s1 + $0xc0] sm:$0xf]
  %v194 = vld [vmem:[%s1 + $0xc4] sm:$0xf]
  %v195 = vld [vmem:[%s1 + $0xc8] sm:$0xf]
  %v196 = vld [vmem:[%s1 + $0xcc] sm:$0xf]
  %v197 = vld [vmem:[%s1 + $0xd0] sm:$0xf]
  %v198 = vld [vmem:[%s1 + $0xd4] sm:$0xf]
  %v199 = vld [vmem:[%s1 + $0xd8] sm:$0xf]
  %v200 = vld [vmem:[%s1 + $0xdc] sm:$0xf]
  %v201 = vld [vmem:[%s1 + $0xe0] sm:$0xf]
  %v202 = vld [vmem:[%s1 + $0xe4] sm:$0xf]
  %v203 = vld [vmem:[%s1 + $0xe8] sm:$0xf]
  %v204 = vld [vmem:[%s1 + $0xec] sm:$0xf]
  %v205 = vld [vmem:[%s1 + $0xf0] sm:$0xf]
  %v206 = vld [vmem:[%s1 + $0xf4] sm:$0xf]
  %v207 = vld [vmem:[%s1 + $0xf8] sm:$0xf]
  %v208 = vld [vmem:[%s1 + $0xfc] sm:$0xf]
  %v209 = vld [vmem:[%s1 + $0x100] sm:$0xf]
  %v210 = vld [vmem:[%s1 + $0x104] sm:$0xf]
  %v211 = vld [vmem:[%s1 + $0x108] sm:$0xf]
  %v212 = vld [vmem:[%s1 + $0x10c] sm:$0xf]
  %v213 = vld [vmem:[%s1 + $0x110] sm:$0xf]
  %v214 = vld [vmem:[%s1 + $0x114] sm:$0xf]
  %v215 = vld [vmem:[%s1 + $0x118] sm:$0xf]
  %v216 = vld [vmem:[%s1 + $0x11c] sm:$0xf]
  %v217 = vld [vmem:[%s1 + $0x120] sm:$0xf]
  %v218 = vld [vmem:[%s1 + $0x124] sm:$0xf]
  %v219 = vld [vmem:[%s1 + $0x128] sm:$0xf]
  %v220 = vld [vmem:[%s1 + $0x12c] sm:$0xf]
  %v221 = vld [vmem:[%s1 + $0x130] sm:$0xf]
  %v222 = vld [vmem:[%s1 + $0x134] sm:$0xf]
  %v223 = vld [vmem:[%s1 + $0x138] sm:$0xf]
  %v224 = vld [vmem:[%s1 + $0x13c] sm:$0xf]
  %v225 = vld [vmem:[%s1 + $0x140] sm:$0xf]
  %v226 = vld [vmem:[%s1 + $0x144] sm:$0xf]
  %v227 = vld [vmem:[%s1 + $0x148] sm:$0xf]
  %v228 = vld [vmem:[%s1 + $0x14c] sm:$0xf]
  %v229 = vld [vmem:[%s1 + $0x150] sm:$0xf]
  %v230 = vld [vmem:[%s1 + $0x154] sm:$0xf]
  %v231 = vld [vmem:[%s1 + $0x158] sm:$0xf]
  %v232 = vld [vmem:[%s1 + $0x15c] sm:$0xf]
  %v233 = vld [vmem:[%s1 + $0x160] sm:$0xf]
  %v234 = vld [vmem:[%s1 + $0x164] sm:$0xf]
  %v235 = vld [vmem:[%s1 + $0x168] sm:$0xf]
  %v236 = vld [vmem:[%s1 + $0x16c] sm:$0xf]
  %v237 = vld [vmem:[%s1 + $0x170] sm:$0xf]
  %v238 = vld [vmem:[%s1 + $0x174] sm:$0xf]
  %v239 = vld [vmem:[%s1 + $0x178] sm:$0xf]
  %v240 = vld [vmem:[%s1 + $0x17c] sm:$0xf]
  %v241 = vld [vmem:[%s1 + $0x180] sm:$0xf]
  %v242 = vld [vmem:[%s1 + $0x184] sm:$0xf]
  %v243 = vld [vmem:[%s1 + $0x188] sm:$0xf]
  %v244 = vld [vmem:[%s1 + $0x18c] sm:$0xf]
  %v245 = vld [vmem:[%s1 + $0x190] sm:$0xf]
  %v246 = vld [vmem:[%s1 + $0x194] sm:$0xf]
  %v247 = vld [vmem:[%s1 + $0x198] sm:$0xf]
  %v248 = vld [vmem:[%s1 + $0x19c] sm:$0xf]
  %v249 = vld [vmem:[%s1 + $0x1a0] sm:$0xf]
  %v250 = vld [vmem:[%s1 + $0x1a4] sm:$0xf]
  %v251 = vld [vmem:[%s1 + $0x1a8] sm:$0xf]
  %v252 = vld [vmem:[%s1 + $0x1ac] sm:$0xf]
  %v253 = vld [vmem:[%s1 + $0x1b0] sm:$0xf]
  %v254 = vld [vmem:[%s1 + $0x1b4] sm:$0xf]
  %v255 = vld [vmem:[%s1 + $0x1b8] sm:$0xf]
  %v256 = vld [vmem:[%s1 + $0x1bc] sm:$0xf]
  %v257 = vld [vmem:[%s1 + $0x1c0] sm:$0xf]
  %v258 = vld [vmem:[%s1 + $0x1c4] sm:$0xf]
  %v259 = vld [vmem:[%s1 + $0x1c8] sm:$0xf]
  %v260 = vld [vmem:[%s1 + $0x1cc] sm:$0xf]
  %v261 = vld [vmem:[%s1 + $0x1d0] sm:$0xf]
  %v262 = vld [vmem:[%s1 + $0x1d4] sm:$0xf]
  %v263 = vld [vmem:[%s1 + $0x1d8] sm:$0xf]
  %v264 = vld [vmem:[%s1 + $0x1dc] sm:$0xf]
  %v265 = vld [vmem:[%s1 + $0x1e0] sm:$0xf]
  %v266 = vld [vmem:[%s1 + $0x1e4] sm:$0xf]
  %v267 = vld [vmem:[%s1 + $0x1e8] sm:$0xf]
  %v268 = vld [vmem:[%s1 + $0x1ec] sm:$0xf]
  %v269 = vld [vmem:[%s1 + $0x1f0] sm:$0xf]
  %v270 = vld [vmem:[%s1 + $0x1f4] sm:$0xf]
  %v271 = vld [vmem:[%s1 + $0x1f8] sm:$0xf]
  %v272 = vld [vmem:[%s1 + $0x1fc] sm:$0xf]
  %v273 = vld [vmem:[%s1 + $0x200] sm:$0xf]
  %v274 = vld [vmem:[%s1 + $0x204] sm:$0xf]
  %v275 = vld [vmem:[%s1 + $0x208] sm:$0xf]
  %v276 = vld [vmem:[%s1 + $0x20c] sm:$0xf]
  %v277 = vld [vmem:[%s1 + $0x210] sm:$0xf]
  %v278 = vld [vmem:[%s1 + $0x214] sm:$0xf]
  %v279 = vld [vmem:[%s1 + $0x218] sm:$0xf]
  %v280 = vld [vmem:[%s1 + $0x21c] sm:$0xf]
  %v281 = vld [vmem:[%s1 + $0x220] sm:$0xf]
  %v282 = vld [vmem:[%s1 + $0x224] sm:$0xf]
  %v283 = vld [vmem:[%s1 + $0x228] sm:$0xf]
  %v284 = vld [vmem:[%s1 + $0x22c] sm:$0xf]
  %v285 = vld [vmem:[%s1 + $0x230] sm:$0xf]
  %v286 = vld [vmem:[%s1 + $0x234] sm:$0xf]
  %v287 = vld [vmem:[%s1 + $0x238] sm:$0xf]
  %v288 = vld [vmem:[%s1 + $0x23c] sm:$0xf]
  %v289 = vld [vmem:[%s1 + $0x240] sm:$0xf]
  %v290 = vld [vmem:[%s1 + $0x244] sm:$0xf]
  %v291 = vld [vmem:[%s1 + $0x248] sm:$0xf]
  %v292 = vld [vmem:[%s1 + $0x24c] sm:$0xf]
  %v293 = vld [vmem:[%s1 + $0x250] sm:$0xf]
  %v294 = vld [vmem:[%s1 + $0x254] sm:$0xf]
  %v295 = vld [vmem:[%s1 + $0x258] sm:$0xf]
  %v296 = vld [vmem:[%s1 + $0x25c] sm:$0xf]
  %v297 = vld [vmem:[%s1 + $0x260] sm:$0xf]
  %v298 = vld [vmem:[%s1 + $0x264] sm:$0xf]
  %v299 = vld [vmem:[%s1 + $0x268] sm:$0xf]
  %v300 = vld [vmem:[%s1 + $0x26c] sm:$0xf]
  %v301 = vld [vmem:[%s1 + $0x270] sm:$0xf]
  %v302 = vld [vmem:[%s1 + $0x274] sm:$0xf]
  %v303 = vld [vmem:[%s1 + $0x278] sm:$0xf]
  %v304 = vld [vmem:[%s1 + $0x27c] sm:$0xf]
  %v305 = vld [vmem:[%s1 + $0x280] sm:$0xf]
  %v306 = vld [vmem:[%s1 + $0x284] sm:$0xf]
  %v307 = vld [vmem:[%s1 + $0x288] sm:$0xf]
  %v308 = vld [vmem:[%s1 + $0x28c] sm:$0xf]
  %v309 = vld [vmem:[%s1 + $0x290] sm:$0xf]
  %v310 = vld [vmem:[%s1 + $0x294] sm:$0xf]
  %v311 = vld [vmem:[%s1 + $0x298] sm:$0xf]
  %v312 = vld [vmem:[%s1 + $0x29c] sm:$0xf]
  %v313 = vld [vmem:[%s1 + $0x2a0] sm:$0xf]
  %v314 = vld [vmem:[%s1 + $0x2a4] sm:$0xf]
  %v315 = vld [vmem:[%s1 + $0x2a8] sm:$0xf]
  %v316 = vld [vmem:[%s1 + $0x2ac] sm:$0xf]
  %v317 = vld [vmem:[%s1 + $0x2b0] sm:$0xf]
  %v318 = vld [vmem:[%s1 + $0x2b4] sm:$0xf]
  %v319 = vld [vmem:[%s1 + $0x2b8] sm:$0xf]
  %v320 = vld [vmem:[%s1 + $0x2bc] sm:$0xf]
  %v321 = vld [vmem:[%s1 + $0x2c0] sm:$0xf]
  %v322 = vld [vmem:[%s1 + $0x2c4] sm:$0xf]
  %v323 = vld [vmem:[%s1 + $0x2c8] sm:$0xf]
  %v324 = vld [vmem:[%s1 + $0x2cc] sm:$0xf]
  %v325 = vld [vmem:[%s1 + $0x2d0] sm:$0xf]
  %v326 = vld [vmem:[%s1 + $0x2d4] sm:$0xf]
  %v327 = vld [vmem:[%s1 + $0x2d8] sm:$0xf]
  %v328 = vld [vmem:[%s1 + $0x2dc] sm:$0xf]
  %v329 = vld [vmem:[%s1 + $0x2e0] sm:$0xf]
  %v330 = vld [vmem:[%s1 + $0x2e4] sm:$0xf]
  %v331 = vld [vmem:[%s1 + $0x2e8] sm:$0xf]
  %v332 = vld [vmem:[%s1 + $0x2ec] sm:$0xf]
  %v333 = vld [vmem:[%s1 + $0x2f0] sm:$0xf]
  %v334 = vld [vmem:[%s1 + $0x2f4] sm:$0xf]
  %v335 = vld [vmem:[%s1 + $0x2f8] sm:$0xf]
  %v336 = vld [vmem:[%s1 + $0x2fc] sm:$0xf]
  %v337 = vld [vmem:[%s1 + $0x300] sm:$0xf]
  %v338 = vld [vmem:[%s1 + $0x304] sm:$0xf]
  %v339 = vld [vmem:[%s1 + $0x308] sm:$0xf]
  %v340 = vld [vmem:[%s1 + $0x30c] sm:$0xf]
  %v341 = vld [vmem:[%s1 + $0x310] sm:$0xf]
  %v342 = vld [vmem:[%s1 + $0x314] sm:$0xf]
  %v343 = vld [vmem:[%s1 + $0x318] sm:$0xf]
  %v344 = vld [vmem:[%s1 + $0x31c] sm:$0xf]
  %v345 = vld [vmem:[%s1 + $0x320] sm:$0xf]
  %v346 = vld [vmem:[%s1 + $0x324] sm:$0xf]
  %v347 = vld [vmem:[%s1 + $0x328] sm:$0xf]
  %v348 = vld [vmem:[%s1 + $0x32c] sm:$0xf]
  %v349 = vld [vmem:[%s1 + $0x330] sm:$0xf]
  %v350 = vld [vmem:[%s1 + $0x334] sm:$0xf]
  %v351 = vld [vmem:[%s1 + $0x338] sm:$0xf]
  %v352 = vld [vmem:[%s1 + $0x33c] sm:$0xf]
  %v353 = vld [vmem:[%s1 + $0x340] sm:$0xf]
  %v354 = vld [vmem:[%s1 + $0x344] sm:$0xf]
  %v355 = vld [vmem:[%s1 + $0x348] sm:$0xf]
  %v356 = vld [vmem:[%s1 + $0x34c] sm:$0xf]
  %v357 = vld [vmem:[%s1 + $0x350] sm:$0xf]
  %v358 = vld [vmem:[%s1 + $0x354] sm:$0xf]
  %v359 = vld [vmem:[%s1 + $0x358] sm:$0xf]
  %v360 = vld [vmem:[%s1 + $0x35c] sm:$0xf]
  %v361 = vld [vmem:[%s1 + $0x360] sm:$0xf]
  %v362 = vld [vmem:[%s1 + $0x364] sm:$0xf]
  %v363 = vld [vmem:[%s1 + $0x368] sm:$0xf]
  %v364 = vld [vmem:[%s1 + $0x36c] sm:$0xf]
  %v365 = vld [vmem:[%s1 + $0x370] sm:$0xf]
  %v366 = vld [vmem:[%s1 + $0x374] sm:$0xf]
  %v367 = vld [vmem:[%s1 + $0x378] sm:$0xf]
  %v368 = vld [vmem:[%s1 + $0x37c] sm:$0xf]
  %v369 = vld [vmem:[%s1 + $0x380] sm:$0xf]
  %v370 = vld [vmem:[%s1 + $0x384] sm:$0xf]
  %v371 = vld [vmem:[%s1 + $0x388] sm:$0xf]
  %v372 = vld [vmem:[%s1 + $0x38c] sm:$0xf]
  %v373 = vld [vmem:[%s1 + $0x390] sm:$0xf]
  %v374 = vld [vmem:[%s1 + $0x394] sm:$0xf]
  %v375 = vld [vmem:[%s1 + $0x398] sm:$0xf]
  %v376 = vld [vmem:[%s1 + $0x39c] sm:$0xf]
  %v377 = vld [vmem:[%s1 + $0x3a0] sm:$0xf]
  %v378 = vld [vmem:[%s1 + $0x3a4] sm:$0xf]
  %v379 = vld [vmem:[%s1 + $0x3a8] sm:$0xf]
  %v380 = vld [vmem:[%s1 + $0x3ac] sm:$0xf]
  %v381 = vld [vmem:[%s1 + $0x3b0] sm:$0xf]
  %v382 = vld [vmem:[%s1 + $0x3b4] sm:$0xf]
  %v383 = vld [vmem:[%s1 + $0x3b8] sm:$0xf]
  %v384 = vld [vmem:[%s1 + $0x3bc] sm:$0xf]
  %v385 = vld [vmem:[%s1 + $0x3c0] sm:$0xf]
  %v386 = vld [vmem:[%s1 + $0x3c4] sm:$0xf]
  %v387 = vld [vmem:[%s1 + $0x3c8] sm:$0xf]
  %v388 = vld [vmem:[%s1 + $0x3cc] sm:$0xf]
  %v389 = vld [vmem:[%s1 + $0x3d0] sm:$0xf]
  %v390 = vld [vmem:[%s1 + $0x3d4] sm:$0xf]
  %v391 = vld [vmem:[%s1 + $0x3d8] sm:$0xf]
  %v392 = vld [vmem:[%s1 + $0x3dc] sm:$0xf]
  %v393 = vld [vmem:[%s1 + $0x3e0] sm:$0xf]
  %v394 = vld [vmem:[%s1 + $0x3e4] sm:$0xf]
  %v395 = vld [vmem:[%s1 + $0x3e8] sm:$0xf]
  %v396 = vld [vmem:[%s1 + $0x3ec] sm:$0xf]
  %v397 = vld [vmem:[%s1 + $0x3f0] sm:$0xf]
  %v398 = vld [vmem:[%s1 + $0x3f4] sm:$0xf]
  %v399 = vld [vmem:[%s1 + $0x3f8] sm:$0xf]
  %v400 = vld [vmem:[%s1 + $0x3fc] sm:$0xf]
  %v529 = vunpack.c.l.b16 %v17
  %v530 = vunpack.c.h.b16 %v17
  %v531 = vunpack.c.l.b16 %v18
  %v532 = vunpack.c.h.b16 %v18
  %v533 = vunpack.c.l.b16 %v19
  %v534 = vunpack.c.h.b16 %v19
  %v535 = vunpack.c.l.b16 %v20
  %v536 = vunpack.c.h.b16 %v20
  %v537 = vunpack.c.l.b16 %v21
  %v538 = vunpack.c.h.b16 %v21
  %v539 = vunpack.c.l.b16 %v22
  %v540 = vunpack.c.h.b16 %v22
  %v541 = vunpack.c.l.b16 %v23
  %v542 = vunpack.c.h.b16 %v23
  %v543 = vunpack.c.l.b16 %v24
  %v544 = vunpack.c.h.b16 %v24
  %v545 = vunpack.c.l.b16 %v25
  %v546 = vunpack.c.h.b16 %v25
  %v547 = vunpack.c.l.b16 %v26
  %v548 = vunpack.c.h.b16 %v26
  %v549 = vunpack.c.l.b16 %v27
  %v550 = vunpack.c.h.b16 %v27
  %v551 = vunpack.c.l.b16 %v28
  %v552 = vunpack.c.h.b16 %v28
  %v553 = vunpack.c.l.b16 %v29
  %v554 = vunpack.c.h.b16 %v29
  %v555 = vunpack.c.l.b16 %v30
  %v556 = vunpack.c.h.b16 %v30
  %v557 = vunpack.c.l.b16 %v31
  %v558 = vunpack.c.h.b16 %v31
  %v559 = vunpack.c.l.b16 %v32
  %v560 = vunpack.c.h.b16 %v32
  %v561 = vunpack.c.l.b16 %v33
  %v562 = vunpack.c.h.b16 %v33
  %v563 = vunpack.c.l.b16 %v34
  %v564 = vunpack.c.h.b16 %v34
  %v565 = vunpack.c.l.b16 %v35
  %v566 = vunpack.c.h.b16 %v35
  %v567 = vunpack.c.l.b16 %v36
  %v568 = vunpack.c.h.b16 %v36
  %v569 = vunpack.c.l.b16 %v37
  %v570 = vunpack.c.h.b16 %v37
  %v571 = vunpack.c.l.b16 %v38
  %v572 = vunpack.c.h.b16 %v38
  %v573 = vunpack.c.l.b16 %v39
  %v574 = vunpack.c.h.b16 %v39
  %v575 = vunpack.c.l.b16 %v40
  %v576 = vunpack.c.h.b16 %v40
  %v577 = vunpack.c.l.b16 %v41
  %v578 = vunpack.c.h.b16 %v41
  %v579 = vunpack.c.l.b16 %v42
  %v580 = vunpack.c.h.b16 %v42
  %v581 = vunpack.c.l.b16 %v43
  %v582 = vunpack.c.h.b16 %v43
  %v583 = vunpack.c.l.b16 %v44
  %v584 = vunpack.c.h.b16 %v44
  %v585 = vunpack.c.l.b16 %v45
  %v586 = vunpack.c.h.b16 %v45
  %v587 = vunpack.c.l.b16 %v46
  %v588 = vunpack.c.h.b16 %v46
  %v589 = vunpack.c.l.b16 %v47
  %v590 = vunpack.c.h.b16 %v47
  %v591 = vunpack.c.l.b16 %v48
  %v592 = vunpack.c.h.b16 %v48
  %v593 = vunpack.c.l.b16 %v49
  %v594 = vunpack.c.h.b16 %v49
  %v595 = vunpack.c.l.b16 %v50
  %v596 = vunpack.c.h.b16 %v50
  %v597 = vunpack.c.l.b16 %v51
  %v598 = vunpack.c.h.b16 %v51
  %v599 = vunpack.c.l.b16 %v52
  %v600 = vunpack.c.h.b16 %v52
  %v601 = vunpack.c.l.b16 %v53
  %v602 = vunpack.c.h.b16 %v53
  %v603 = vunpack.c.l.b16 %v54
  %v604 = vunpack.c.h.b16 %v54
  %v605 = vunpack.c.l.b16 %v55
  %v606 = vunpack.c.h.b16 %v55
  %v607 = vunpack.c.l.b16 %v56
  %v608 = vunpack.c.h.b16 %v56
  %v609 = vunpack.c.l.b16 %v57
  %v610 = vunpack.c.h.b16 %v57
  %v611 = vunpack.c.l.b16 %v58
  %v612 = vunpack.c.h.b16 %v58
  %v613 = vunpack.c.l.b16 %v59
  %v614 = vunpack.c.h.b16 %v59
  %v615 = vunpack.c.l.b16 %v60
  %v616 = vunpack.c.h.b16 %v60
  %v617 = vunpack.c.l.b16 %v61
  %v618 = vunpack.c.h.b16 %v61
  %v619 = vunpack.c.l.b16 %v62
  %v620 = vunpack.c.h.b16 %v62
  %v621 = vunpack.c.l.b16 %v63
  %v622 = vunpack.c.h.b16 %v63
  %v623 = vunpack.c.l.b16 %v64
  %v624 = vunpack.c.h.b16 %v64
  %v625 = vunpack.c.l.b16 %v65
  %v626 = vunpack.c.h.b16 %v65
  %v627 = vunpack.c.l.b16 %v66
  %v628 = vunpack.c.h.b16 %v66
  %v629 = vunpack.c.l.b16 %v67
  %v630 = vunpack.c.h.b16 %v67
  %v631 = vunpack.c.l.b16 %v68
  %v632 = vunpack.c.h.b16 %v68
  %v633 = vunpack.c.l.b16 %v69
  %v634 = vunpack.c.h.b16 %v69
  %v635 = vunpack.c.l.b16 %v70
  %v636 = vunpack.c.h.b16 %v70
  %v637 = vunpack.c.l.b16 %v71
  %v638 = vunpack.c.h.b16 %v71
  %v639 = vunpack.c.l.b16 %v72
  %v640 = vunpack.c.h.b16 %v72
  %v641 = vunpack.c.l.b16 %v73
  %v642 = vunpack.c.h.b16 %v73
  %v643 = vunpack.c.l.b16 %v74
  %v644 = vunpack.c.h.b16 %v74
  %v645 = vunpack.c.l.b16 %v75
  %v646 = vunpack.c.h.b16 %v75
  %v647 = vunpack.c.l.b16 %v76
  %v648 = vunpack.c.h.b16 %v76
  %v649 = vunpack.c.l.b16 %v77
  %v650 = vunpack.c.h.b16 %v77
  %v651 = vunpack.c.l.b16 %v78
  %v652 = vunpack.c.h.b16 %v78
  %v653 = vunpack.c.l.b16 %v79
  %v654 = vunpack.c.h.b16 %v79
  %v655 = vunpack.c.l.b16 %v80
  %v656 = vunpack.c.h.b16 %v80
  %v657 = vunpack.c.l.b16 %v81
  %v658 = vunpack.c.h.b16 %v81
  %v659 = vunpack.c.l.b16 %v82
  %v660 = vunpack.c.h.b16 %v82
  %v661 = vunpack.c.l.b16 %v83
  %v662 = vunpack.c.h.b16 %v83
  %v663 = vunpack.c.l.b16 %v84
  %v664 = vunpack.c.h.b16 %v84
  %v665 = vunpack.c.l.b16 %v85
  %v666 = vunpack.c.h.b16 %v85
  %v667 = vunpack.c.l.b16 %v86
  %v668 = vunpack.c.h.b16 %v86
  %v669 = vunpack.c.l.b16 %v87
  %v670 = vunpack.c.h.b16 %v87
  %v671 = vunpack.c.l.b16 %v88
  %v672 = vunpack.c.h.b16 %v88
  %v673 = vunpack.c.l.b16 %v89
  %v674 = vunpack.c.h.b16 %v89
  %v675 = vunpack.c.l.b16 %v90
  %v676 = vunpack.c.h.b16 %v90
  %v677 = vunpack.c.l.b16 %v91
  %v678 = vunpack.c.h.b16 %v91
  %v679 = vunpack.c.l.b16 %v92
  %v680 = vunpack.c.h.b16 %v92
  %v681 = vunpack.c.l.b16 %v93
  %v682 = vunpack.c.h.b16 %v93
  %v683 = vunpack.c.l.b16 %v94
  %v684 = vunpack.c.h.b16 %v94
  %v685 = vunpack.c.l.b16 %v95
  %v686 = vunpack.c.h.b16 %v95
  %v687 = vunpack.c.l.b16 %v96
  %v688 = vunpack.c.h.b16 %v96
  %v689 = vunpack.c.l.b16 %v97
  %v690 = vunpack.c.h.b16 %v97
  %v691 = vunpack.c.l.b16 %v98
  %v692 = vunpack.c.h.b16 %v98
  %v693 = vunpack.c.l.b16 %v99
  %v694 = vunpack.c.h.b16 %v99
  %v695 = vunpack.c.l.b16 %v100
  %v696 = vunpack.c.h.b16 %v100
  %v697 = vunpack.c.l.b16 %v101
  %v698 = vunpack.c.h.b16 %v101
  %v699 = vunpack.c.l.b16 %v102
  %v700 = vunpack.c.h.b16 %v102
  %v701 = vunpack.c.l.b16 %v103
  %v702 = vunpack.c.h.b16 %v103
  %v703 = vunpack.c.l.b16 %v104
  %v704 = vunpack.c.h.b16 %v104
  %v705 = vunpack.c.l.b16 %v105
  %v706 = vunpack.c.h.b16 %v105
  %v707 = vunpack.c.l.b16 %v106
  %v708 = vunpack.c.h.b16 %v106
  %v709 = vunpack.c.l.b16 %v107
  %v710 = vunpack.c.h.b16 %v107
  %v711 = vunpack.c.l.b16 %v108
  %v712 = vunpack.c.h.b16 %v108
  %v713 = vunpack.c.l.b16 %v109
  %v714 = vunpack.c.h.b16 %v109
  %v715 = vunpack.c.l.b16 %v110
  %v716 = vunpack.c.h.b16 %v110
  %v717 = vunpack.c.l.b16 %v111
  %v718 = vunpack.c.h.b16 %v111
  %v719 = vunpack.c.l.b16 %v112
  %v720 = vunpack.c.h.b16 %v112
  %v721 = vunpack.c.l.b16 %v113
  %v722 = vunpack.c.h.b16 %v113
  %v723 = vunpack.c.l.b16 %v114
  %v724 = vunpack.c.h.b16 %v114
  %v725 = vunpack.c.l.b16 %v115
  %v726 = vunpack.c.h.b16 %v115
  %v727 = vunpack.c.l.b16 %v116
  %v728 = vunpack.c.h.b16 %v116
  %v729 = vunpack.c.l.b16 %v117
  %v730 = vunpack.c.h.b16 %v117
  %v731 = vunpack.c.l.b16 %v118
  %v732 = vunpack.c.h.b16 %v118
  %v733 = vunpack.c.l.b16 %v119
  %v734 = vunpack.c.h.b16 %v119
  %v735 = vunpack.c.l.b16 %v120
  %v736 = vunpack.c.h.b16 %v120
  %v737 = vunpack.c.l.b16 %v121
  %v738 = vunpack.c.h.b16 %v121
  %v739 = vunpack.c.l.b16 %v122
  %v740 = vunpack.c.h.b16 %v122
  %v741 = vunpack.c.l.b16 %v123
  %v742 = vunpack.c.h.b16 %v123
  %v743 = vunpack.c.l.b16 %v124
  %v744 = vunpack.c.h.b16 %v124
  %v745 = vunpack.c.l.b16 %v125
  %v746 = vunpack.c.h.b16 %v125
  %v747 = vunpack.c.l.b16 %v126
  %v748 = vunpack.c.h.b16 %v126
  %v749 = vunpack.c.l.b16 %v127
  %v750 = vunpack.c.h.b16 %v127
  %v751 = vunpack.c.l.b16 %v128
  %v752 = vunpack.c.h.b16 %v128
  %v753 = vunpack.c.l.b16 %v129
  %v754 = vunpack.c.h.b16 %v129
  %v755 = vunpack.c.l.b16 %v130
  %v756 = vunpack.c.h.b16 %v130
  %v757 = vunpack.c.l.b16 %v131
  %v758 = vunpack.c.h.b16 %v131
  %v759 = vunpack.c.l.b16 %v132
  %v760 = vunpack.c.h.b16 %v132
  %v761 = vunpack.c.l.b16 %v133
  %v762 = vunpack.c.h.b16 %v133
  %v763 = vunpack.c.l.b16 %v134
  %v764 = vunpack.c.h.b16 %v134
  %v765 = vunpack.c.l.b16 %v135
  %v766 = vunpack.c.h.b16 %v135
  %v767 = vunpack.c.l.b16 %v136
  %v768 = vunpack.c.h.b16 %v136
  %v769 = vunpack.c.l.b16 %v137
  %v770 = vunpack.c.h.b16 %v137
  %v771 = vunpack.c.l.b16 %v138
  %v772 = vunpack.c.h.b16 %v138
  %v773 = vunpack.c.l.b16 %v139
  %v774 = vunpack.c.h.b16 %v139
  %v775 = vunpack.c.l.b16 %v140
  %v776 = vunpack.c.h.b16 %v140
  %v777 = vunpack.c.l.b16 %v141
  %v778 = vunpack.c.h.b16 %v141
  %v779 = vunpack.c.l.b16 %v142
  %v780 = vunpack.c.h.b16 %v142
  %v781 = vunpack.c.l.b16 %v143
  %v782 = vunpack.c.h.b16 %v143
  %v783 = vunpack.c.l.b16 %v144
  %v784 = vunpack.c.h.b16 %v144
  %v785 = vpack.c.b16 %v545, %v529
  %v786 = vpack.c.b16 %v546, %v530
  %v787 = vpack.c.b16 %v547, %v531
  %v788 = vpack.c.b16 %v548, %v532
  %v789 = vpack.c.b16 %v549, %v533
  %v790 = vpack.c.b16 %v550, %v534
  %v791 = vpack.c.b16 %v551, %v535
  %v792 = vpack.c.b16 %v552, %v536
  %v793 = vpack.c.b16 %v553, %v537
  %v794 = vpack.c.b16 %v554, %v538
  %v795 = vpack.c.b16 %v555, %v539
  %v796 = vpack.c.b16 %v556, %v540
  %v797 = vpack.c.b16 %v557, %v541
  %v798 = vpack.c.b16 %v558, %v542
  %v799 = vpack.c.b16 %v559, %v543
  %v800 = vpack.c.b16 %v560, %v544
  %v801 = vpack.c.b16 %v577, %v561
  %v802 = vpack.c.b16 %v578, %v562
  %v803 = vpack.c.b16 %v579, %v563
  %v804 = vpack.c.b16 %v580, %v564
  %v805 = vpack.c.b16 %v581, %v565
  %v806 = vpack.c.b16 %v582, %v566
  %v807 = vpack.c.b16 %v583, %v567
  %v808 = vpack.c.b16 %v584, %v568
  %v809 = vpack.c.b16 %v585, %v569
  %v810 = vpack.c.b16 %v586, %v570
  %v811 = vpack.c.b16 %v587, %v571
  %v812 = vpack.c.b16 %v588, %v572
  %v813 = vpack.c.b16 %v589, %v573
  %v814 = vpack.c.b16 %v590, %v574
  %v815 = vpack.c.b16 %v591, %v575
  %v816 = vpack.c.b16 %v592, %v576
  %v817 = vpack.c.b16 %v609, %v593
  %v818 = vpack.c.b16 %v610, %v594
  %v819 = vpack.c.b16 %v611, %v595
  %v820 = vpack.c.b16 %v612, %v596
  %v821 = vpack.c.b16 %v613, %v597
  %v822 = vpack.c.b16 %v614, %v598
  %v823 = vpack.c.b16 %v615, %v599
  %v824 = vpack.c.b16 %v616, %v600
  %v825 = vpack.c.b16 %v617, %v601
  %v826 = vpack.c.b16 %v618, %v602
  %v827 = vpack.c.b16 %v619, %v603
  %v828 = vpack.c.b16 %v620, %v604
  %v829 = vpack.c.b16 %v621, %v605
  %v830 = vpack.c.b16 %v622, %v606
  %v831 = vpack.c.b16 %v623, %v607
  %v832 = vpack.c.b16 %v624, %v608
  %v833 = vpack.c.b16 %v641, %v625
  %v834 = vpack.c.b16 %v642, %v626
  %v835 = vpack.c.b16 %v643, %v627
  %v836 = vpack.c.b16 %v644, %v628
  %v837 = vpack.c.b16 %v645, %v629
  %v838 = vpack.c.b16 %v646, %v630
  %v839 = vpack.c.b16 %v647, %v631
  %v840 = vpack.c.b16 %v648, %v632
  %v841 = vpack.c.b16 %v649, %v633
  %v842 = vpack.c.b16 %v650, %v634
  %v843 = vpack.c.b16 %v651, %v635
  %v844 = vpack.c.b16 %v652, %v636
  %v845 = vpack.c.b16 %v653, %v637
  %v846 = vpack.c.b16 %v654, %v638
  %v847 = vpack.c.b16 %v655, %v639
  %v848 = vpack.c.b16 %v656, %v640
  %v849 = vpack.c.b16 %v673, %v657
  %v850 = vpack.c.b16 %v674, %v658
  %v851 = vpack.c.b16 %v675, %v659
  %v852 = vpack.c.b16 %v676, %v660
  %v853 = vpack.c.b16 %v677, %v661
  %v854 = vpack.c.b16 %v678, %v662
  %v855 = vpack.c.b16 %v679, %v663
  %v856 = vpack.c.b16 %v680, %v664
  %v857 = vpack.c.b16 %v681, %v665
  %v858 = vpack.c.b16 %v682, %v666
  %v859 = vpack.c.b16 %v683, %v667
  %v860 = vpack.c.b16 %v684, %v668
  %v861 = vpack.c.b16 %v685, %v669
  %v862 = vpack.c.b16 %v686, %v670
  %v863 = vpack.c.b16 %v687, %v671
  %v864 = vpack.c.b16 %v688, %v672
  %v865 = vpack.c.b16 %v705, %v689
  %v866 = vpack.c.b16 %v706, %v690
  %v867 = vpack.c.b16 %v707, %v691
  %v868 = vpack.c.b16 %v708, %v692
  %v869 = vpack.c.b16 %v709, %v693
  %v870 = vpack.c.b16 %v710, %v694
  %v871 = vpack.c.b16 %v711, %v695
  %v872 = vpack.c.b16 %v712, %v696
  %v873 = vpack.c.b16 %v713, %v697
  %v874 = vpack.c.b16 %v714, %v698
  %v875 = vpack.c.b16 %v715, %v699
  %v876 = vpack.c.b16 %v716, %v700
  %v877 = vpack.c.b16 %v717, %v701
  %v878 = vpack.c.b16 %v718, %v702
  %v879 = vpack.c.b16 %v719, %v703
  %v880 = vpack.c.b16 %v720, %v704
  %v881 = vpack.c.b16 %v737, %v721
  %v882 = vpack.c.b16 %v738, %v722
  %v883 = vpack.c.b16 %v739, %v723
  %v884 = vpack.c.b16 %v740, %v724
  %v885 = vpack.c.b16 %v741, %v725
  %v886 = vpack.c.b16 %v742, %v726
  %v887 = vpack.c.b16 %v743, %v727
  %v888 = vpack.c.b16 %v744, %v728
  %v889 = vpack.c.b16 %v745, %v729
  %v890 = vpack.c.b16 %v746, %v730
  %v891 = vpack.c.b16 %v747, %v731
  %v892 = vpack.c.b16 %v748, %v732
  %v893 = vpack.c.b16 %v749, %v733
  %v894 = vpack.c.b16 %v750, %v734
  %v895 = vpack.c.b16 %v751, %v735
  %v896 = vpack.c.b16 %v752, %v736
  %v897 = vpack.c.b16 %v769, %v753
  %v898 = vpack.c.b16 %v770, %v754
  %v899 = vpack.c.b16 %v771, %v755
  %v900 = vpack.c.b16 %v772, %v756
  %v901 = vpack.c.b16 %v773, %v757
  %v902 = vpack.c.b16 %v774, %v758
  %v903 = vpack.c.b16 %v775, %v759
  %v904 = vpack.c.b16 %v776, %v760
  %v905 = vpack.c.b16 %v777, %v761
  %v906 = vpack.c.b16 %v778, %v762
  %v907 = vpack.c.b16 %v779, %v763
  %v908 = vpack.c.b16 %v780, %v764
  %v909 = vpack.c.b16 %v781, %v765
  %v910 = vpack.c.b16 %v782, %v766
  %v911 = vpack.c.b16 %v783, %v767
  %v912 = vpack.c.b16 %v784, %v768
  %v1297 = vunpack.c.l.b16 %v145
  %v1298 = vunpack.c.l.b16 %v146
  %v1299 = vunpack.c.l.b16 %v147
  %v1300 = vunpack.c.l.b16 %v148
  %v1301 = vunpack.c.l.b16 %v149
  %v1302 = vunpack.c.l.b16 %v150
  %v1303 = vunpack.c.l.b16 %v151
  %v1304 = vunpack.c.l.b16 %v152
  %v1305 = vunpack.c.l.b16 %v153
  %v1306 = vunpack.c.l.b16 %v154
  %v1307 = vunpack.c.l.b16 %v155
  %v1308 = vunpack.c.l.b16 %v156
  %v1309 = vunpack.c.l.b16 %v157
  %v1310 = vunpack.c.l.b16 %v158
  %v1311 = vunpack.c.l.b16 %v159
  %v1312 = vunpack.c.l.b16 %v160
  %v1313 = vunpack.c.l.b16 %v161
  %v1314 = vunpack.c.l.b16 %v162
  %v1315 = vunpack.c.l.b16 %v163
  %v1316 = vunpack.c.l.b16 %v164
  %v1317 = vunpack.c.l.b16 %v165
  %v1318 = vunpack.c.l.b16 %v166
  %v1319 = vunpack.c.l.b16 %v167
  %v1320 = vunpack.c.l.b16 %v168
  %v1321 = vunpack.c.l.b16 %v169
  %v1322 = vunpack.c.l.b16 %v170
  %v1323 = vunpack.c.l.b16 %v171
  %v1324 = vunpack.c.l.b16 %v172
  %v1325 = vunpack.c.l.b16 %v173
  %v1326 = vunpack.c.l.b16 %v174
  %v1327 = vunpack.c.l.b16 %v175
  %v1328 = vunpack.c.l.b16 %v176
  %v1329 = vunpack.c.l.b16 %v177
  %v1330 = vunpack.c.l.b16 %v178
  %v1331 = vunpack.c.l.b16 %v179
  %v1332 = vunpack.c.l.b16 %v180
  %v1333 = vunpack.c.l.b16 %v181
  %v1334 = vunpack.c.l.b16 %v182
  %v1335 = vunpack.c.l.b16 %v183
  %v1336 = vunpack.c.l.b16 %v184
  %v1337 = vunpack.c.l.b16 %v185
  %v1338 = vunpack.c.l.b16 %v186
  %v1339 = vunpack.c.l.b16 %v187
  %v1340 = vunpack.c.l.b16 %v188
  %v1341 = vunpack.c.l.b16 %v189
  %v1342 = vunpack.c.l.b16 %v190
  %v1343 = vunpack.c.l.b16 %v191
  %v1344 = vunpack.c.l.b16 %v192
  %v1345 = vunpack.c.l.b16 %v193
  %v1346 = vunpack.c.l.b16 %v194
  %v1347 = vunpack.c.l.b16 %v195
  %v1348 = vunpack.c.l.b16 %v196
  %v1349 = vunpack.c.l.b16 %v197
  %v1350 = vunpack.c.l.b16 %v198
  %v1351 = vunpack.c.l.b16 %v199
  %v1352 = vunpack.c.l.b16 %v200
  %v1353 = vunpack.c.l.b16 %v201
  %v1354 = vunpack.c.l.b16 %v202
  %v1355 = vunpack.c.l.b16 %v203
  %v1356 = vunpack.c.l.b16 %v204
  %v1357 = vunpack.c.l.b16 %v205
  %v1358 = vunpack.c.l.b16 %v206
  %v1359 = vunpack.c.l.b16 %v207
  %v1360 = vunpack.c.l.b16 %v208
  %v1361 = vunpack.c.l.b16 %v209
  %v1362 = vunpack.c.l.b16 %v210
  %v1363 = vunpack.c.l.b16 %v211
  %v1364 = vunpack.c.l.b16 %v212
  %v1365 = vunpack.c.l.b16 %v213
  %v1366 = vunpack.c.l.b16 %v214
  %v1367 = vunpack.c.l.b16 %v215
  %v1368 = vunpack.c.l.b16 %v216
  %v1369 = vunpack.c.l.b16 %v217
  %v1370 = vunpack.c.l.b16 %v218
  %v1371 = vunpack.c.l.b16 %v219
  %v1372 = vunpack.c.l.b16 %v220
  %v1373 = vunpack.c.l.b16 %v221
  %v1374 = vunpack.c.l.b16 %v222
  %v1375 = vunpack.c.l.b16 %v223
  %v1376 = vunpack.c.l.b16 %v224
  %v1377 = vunpack.c.l.b16 %v225
  %v1378 = vunpack.c.l.b16 %v226
  %v1379 = vunpack.c.l.b16 %v227
  %v1380 = vunpack.c.l.b16 %v228
  %v1381 = vunpack.c.l.b16 %v229
  %v1382 = vunpack.c.l.b16 %v230
  %v1383 = vunpack.c.l.b16 %v231
  %v1384 = vunpack.c.l.b16 %v232
  %v1385 = vunpack.c.l.b16 %v233
  %v1386 = vunpack.c.l.b16 %v234
  %v1387 = vunpack.c.l.b16 %v235
  %v1388 = vunpack.c.l.b16 %v236
  %v1389 = vunpack.c.l.b16 %v237
  %v1390 = vunpack.c.l.b16 %v238
  %v1391 = vunpack.c.l.b16 %v239
  %v1392 = vunpack.c.l.b16 %v240
  %v1393 = vunpack.c.l.b16 %v241
  %v1394 = vunpack.c.l.b16 %v242
  %v1395 = vunpack.c.l.b16 %v243
  %v1396 = vunpack.c.l.b16 %v244
  %v1397 = vunpack.c.l.b16 %v245
  %v1398 = vunpack.c.l.b16 %v246
  %v1399 = vunpack.c.l.b16 %v247
  %v1400 = vunpack.c.l.b16 %v248
  %v1401 = vunpack.c.l.b16 %v249
  %v1402 = vunpack.c.l.b16 %v250
  %v1403 = vunpack.c.l.b16 %v251
  %v1404 = vunpack.c.l.b16 %v252
  %v1405 = vunpack.c.l.b16 %v253
  %v1406 = vunpack.c.l.b16 %v254
  %v1407 = vunpack.c.l.b16 %v255
  %v1408 = vunpack.c.l.b16 %v256
  %v1409 = vunpack.c.l.b16 %v257
  %v1410 = vunpack.c.l.b16 %v258
  %v1411 = vunpack.c.l.b16 %v259
  %v1412 = vunpack.c.l.b16 %v260
  %v1413 = vunpack.c.l.b16 %v261
  %v1414 = vunpack.c.l.b16 %v262
  %v1415 = vunpack.c.l.b16 %v263
  %v1416 = vunpack.c.l.b16 %v264
  %v1417 = vunpack.c.l.b16 %v265
  %v1418 = vunpack.c.l.b16 %v266
  %v1419 = vunpack.c.l.b16 %v267
  %v1420 = vunpack.c.l.b16 %v268
  %v1421 = vunpack.c.l.b16 %v269
  %v1422 = vunpack.c.l.b16 %v270
  %v1423 = vunpack.c.l.b16 %v271
  %v1424 = vunpack.c.l.b16 %v272
  %v1425 = vunpack.c.l.b16 %v273
  %v1426 = vunpack.c.l.b16 %v274
  %v1427 = vunpack.c.l.b16 %v275
  %v1428 = vunpack.c.l.b16 %v276
  %v1429 = vunpack.c.l.b16 %v277
  %v1430 = vunpack.c.l.b16 %v278
  %v1431 = vunpack.c.l.b16 %v279
  %v1432 = vunpack.c.l.b16 %v280
  %v1433 = vunpack.c.l.b16 %v281
  %v1434 = vunpack.c.l.b16 %v282
  %v1435 = vunpack.c.l.b16 %v283
  %v1436 = vunpack.c.l.b16 %v284
  %v1437 = vunpack.c.l.b16 %v285
  %v1438 = vunpack.c.l.b16 %v286
  %v1439 = vunpack.c.l.b16 %v287
  %v1440 = vunpack.c.l.b16 %v288
  %v1441 = vunpack.c.l.b16 %v289
  %v1442 = vunpack.c.l.b16 %v290
  %v1443 = vunpack.c.l.b16 %v291
  %v1444 = vunpack.c.l.b16 %v292
  %v1445 = vunpack.c.l.b16 %v293
  %v1446 = vunpack.c.l.b16 %v294
  %v1447 = vunpack.c.l.b16 %v295
  %v1448 = vunpack.c.l.b16 %v296
  %v1449 = vunpack.c.l.b16 %v297
  %v1450 = vunpack.c.l.b16 %v298
  %v1451 = vunpack.c.l.b16 %v299
  %v1452 = vunpack.c.l.b16 %v300
  %v1453 = vunpack.c.l.b16 %v301
  %v1454 = vunpack.c.l.b16 %v302
  %v1455 = vunpack.c.l.b16 %v303
  %v1456 = vunpack.c.l.b16 %v304
  %v1457 = vunpack.c.l.b16 %v305
  %v1458 = vunpack.c.l.b16 %v306
  %v1459 = vunpack.c.l.b16 %v307
  %v1460 = vunpack.c.l.b16 %v308
  %v1461 = vunpack.c.l.b16 %v309
  %v1462 = vunpack.c.l.b16 %v310
  %v1463 = vunpack.c.l.b16 %v311
  %v1464 = vunpack.c.l.b16 %v312
  %v1465 = vunpack.c.l.b16 %v313
  %v1466 = vunpack.c.l.b16 %v314
  %v1467 = vunpack.c.l.b16 %v315
  %v1468 = vunpack.c.l.b16 %v316
  %v1469 = vunpack.c.l.b16 %v317
  %v1470 = vunpack.c.l.b16 %v318
  %v1471 = vunpack.c.l.b16 %v319
  %v1472 = vunpack.c.l.b16 %v320
  %v1473 = vunpack.c.l.b16 %v321
  %v1474 = vunpack.c.l.b16 %v322
  %v1475 = vunpack.c.l.b16 %v323
  %v1476 = vunpack.c.l.b16 %v324
  %v1477 = vunpack.c.l.b16 %v325
  %v1478 = vunpack.c.l.b16 %v326
  %v1479 = vunpack.c.l.b16 %v327
  %v1480 = vunpack.c.l.b16 %v328
  %v1481 = vunpack.c.l.b16 %v329
  %v1482 = vunpack.c.l.b16 %v330
  %v1483 = vunpack.c.l.b16 %v331
  %v1484 = vunpack.c.l.b16 %v332
  %v1485 = vunpack.c.l.b16 %v333
  %v1486 = vunpack.c.l.b16 %v334
  %v1487 = vunpack.c.l.b16 %v335
  %v1488 = vunpack.c.l.b16 %v336
  %v1489 = vunpack.c.l.b16 %v337
  %v1490 = vunpack.c.l.b16 %v338
  %v1491 = vunpack.c.l.b16 %v339
  %v1492 = vunpack.c.l.b16 %v340
  %v1493 = vunpack.c.l.b16 %v341
  %v1494 = vunpack.c.l.b16 %v342
  %v1495 = vunpack.c.l.b16 %v343
  %v1496 = vunpack.c.l.b16 %v344
  %v1497 = vunpack.c.l.b16 %v345
  %v1498 = vunpack.c.l.b16 %v346
  %v1499 = vunpack.c.l.b16 %v347
  %v1500 = vunpack.c.l.b16 %v348
  %v1501 = vunpack.c.l.b16 %v349
  %v1502 = vunpack.c.l.b16 %v350
  %v1503 = vunpack.c.l.b16 %v351
  %v1504 = vunpack.c.l.b16 %v352
  %v1505 = vunpack.c.l.b16 %v353
  %v1506 = vunpack.c.l.b16 %v354
  %v1507 = vunpack.c.l.b16 %v355
  %v1508 = vunpack.c.l.b16 %v356
  %v1509 = vunpack.c.l.b16 %v357
  %v1510 = vunpack.c.l.b16 %v358
  %v1511 = vunpack.c.l.b16 %v359
  %v1512 = vunpack.c.l.b16 %v360
  %v1513 = vunpack.c.l.b16 %v361
  %v1514 = vunpack.c.l.b16 %v362
  %v1515 = vunpack.c.l.b16 %v363
  %v1516 = vunpack.c.l.b16 %v364
  %v1517 = vunpack.c.l.b16 %v365
  %v1518 = vunpack.c.l.b16 %v366
  %v1519 = vunpack.c.l.b16 %v367
  %v1520 = vunpack.c.l.b16 %v368
  %v1521 = vunpack.c.l.b16 %v369
  %v1522 = vunpack.c.l.b16 %v370
  %v1523 = vunpack.c.l.b16 %v371
  %v1524 = vunpack.c.l.b16 %v372
  %v1525 = vunpack.c.l.b16 %v373
  %v1526 = vunpack.c.l.b16 %v374
  %v1527 = vunpack.c.l.b16 %v375
  %v1528 = vunpack.c.l.b16 %v376
  %v1529 = vunpack.c.l.b16 %v377
  %v1530 = vunpack.c.l.b16 %v378
  %v1531 = vunpack.c.l.b16 %v379
  %v1532 = vunpack.c.l.b16 %v380
  %v1533 = vunpack.c.l.b16 %v381
  %v1534 = vunpack.c.l.b16 %v382
  %v1535 = vunpack.c.l.b16 %v383
  %v1536 = vunpack.c.l.b16 %v384
  %v1537 = vunpack.c.l.b16 %v385
  %v1538 = vunpack.c.l.b16 %v386
  %v1539 = vunpack.c.l.b16 %v387
  %v1540 = vunpack.c.l.b16 %v388
  %v1541 = vunpack.c.l.b16 %v389
  %v1542 = vunpack.c.l.b16 %v390
  %v1543 = vunpack.c.l.b16 %v391
  %v1544 = vunpack.c.l.b16 %v392
  %v1545 = vunpack.c.l.b16 %v393
  %v1546 = vunpack.c.l.b16 %v394
  %v1547 = vunpack.c.l.b16 %v395
  %v1548 = vunpack.c.l.b16 %v396
  %v1549 = vunpack.c.l.b16 %v397
  %v1550 = vunpack.c.l.b16 %v398
  %v1551 = vunpack.c.l.b16 %v399
  %v1552 = vunpack.c.l.b16 %v400
  %v1553 = vpack.c.b16 %v1298, %v1297
  %v1554 = vpack.c.b16 %v1300, %v1299
  %v1555 = vpack.c.b16 %v1302, %v1301
  %v1556 = vpack.c.b16 %v1304, %v1303
  %v1557 = vpack.c.b16 %v1306, %v1305
  %v1558 = vpack.c.b16 %v1308, %v1307
  %v1559 = vpack.c.b16 %v1310, %v1309
  %v1560 = vpack.c.b16 %v1312, %v1311
  %v1561 = vpack.c.b16 %v1314, %v1313
  %v1562 = vpack.c.b16 %v1316, %v1315
  %v1563 = vpack.c.b16 %v1318, %v1317
  %v1564 = vpack.c.b16 %v1320, %v1319
  %v1565 = vpack.c.b16 %v1322, %v1321
  %v1566 = vpack.c.b16 %v1324, %v1323
  %v1567 = vpack.c.b16 %v1326, %v1325
  %v1568 = vpack.c.b16 %v1328, %v1327
  %v1569 = vpack.c.b16 %v1330, %v1329
  %v1570 = vpack.c.b16 %v1332, %v1331
  %v1571 = vpack.c.b16 %v1334, %v1333
  %v1572 = vpack.c.b16 %v1336, %v1335
  %v1573 = vpack.c.b16 %v1338, %v1337
  %v1574 = vpack.c.b16 %v1340, %v1339
  %v1575 = vpack.c.b16 %v1342, %v1341
  %v1576 = vpack.c.b16 %v1344, %v1343
  %v1577 = vpack.c.b16 %v1346, %v1345
  %v1578 = vpack.c.b16 %v1348, %v1347
  %v1579 = vpack.c.b16 %v1350, %v1349
  %v1580 = vpack.c.b16 %v1352, %v1351
  %v1581 = vpack.c.b16 %v1354, %v1353
  %v1582 = vpack.c.b16 %v1356, %v1355
  %v1583 = vpack.c.b16 %v1358, %v1357
  %v1584 = vpack.c.b16 %v1360, %v1359
  %v1585 = vpack.c.b16 %v1362, %v1361
  %v1586 = vpack.c.b16 %v1364, %v1363
  %v1587 = vpack.c.b16 %v1366, %v1365
  %v1588 = vpack.c.b16 %v1368, %v1367
  %v1589 = vpack.c.b16 %v1370, %v1369
  %v1590 = vpack.c.b16 %v1372, %v1371
  %v1591 = vpack.c.b16 %v1374, %v1373
  %v1592 = vpack.c.b16 %v1376, %v1375
  %v1593 = vpack.c.b16 %v1378, %v1377
  %v1594 = vpack.c.b16 %v1380, %v1379
  %v1595 = vpack.c.b16 %v1382, %v1381
  %v1596 = vpack.c.b16 %v1384, %v1383
  %v1597 = vpack.c.b16 %v1386, %v1385
  %v1598 = vpack.c.b16 %v1388, %v1387
  %v1599 = vpack.c.b16 %v1390, %v1389
  %v1600 = vpack.c.b16 %v1392, %v1391
  %v1601 = vpack.c.b16 %v1394, %v1393
  %v1602 = vpack.c.b16 %v1396, %v1395
  %v1603 = vpack.c.b16 %v1398, %v1397
  %v1604 = vpack.c.b16 %v1400, %v1399
  %v1605 = vpack.c.b16 %v1402, %v1401
  %v1606 = vpack.c.b16 %v1404, %v1403
  %v1607 = vpack.c.b16 %v1406, %v1405
  %v1608 = vpack.c.b16 %v1408, %v1407
  %v1609 = vpack.c.b16 %v1410, %v1409
  %v1610 = vpack.c.b16 %v1412, %v1411
  %v1611 = vpack.c.b16 %v1414, %v1413
  %v1612 = vpack.c.b16 %v1416, %v1415
  %v1613 = vpack.c.b16 %v1418, %v1417
  %v1614 = vpack.c.b16 %v1420, %v1419
  %v1615 = vpack.c.b16 %v1422, %v1421
  %v1616 = vpack.c.b16 %v1424, %v1423
  %v1617 = vpack.c.b16 %v1426, %v1425
  %v1618 = vpack.c.b16 %v1428, %v1427
  %v1619 = vpack.c.b16 %v1430, %v1429
  %v1620 = vpack.c.b16 %v1432, %v1431
  %v1621 = vpack.c.b16 %v1434, %v1433
  %v1622 = vpack.c.b16 %v1436, %v1435
  %v1623 = vpack.c.b16 %v1438, %v1437
  %v1624 = vpack.c.b16 %v1440, %v1439
  %v1625 = vpack.c.b16 %v1442, %v1441
  %v1626 = vpack.c.b16 %v1444, %v1443
  %v1627 = vpack.c.b16 %v1446, %v1445
  %v1628 = vpack.c.b16 %v1448, %v1447
  %v1629 = vpack.c.b16 %v1450, %v1449
  %v1630 = vpack.c.b16 %v1452, %v1451
  %v1631 = vpack.c.b16 %v1454, %v1453
  %v1632 = vpack.c.b16 %v1456, %v1455
  %v1633 = vpack.c.b16 %v1458, %v1457
  %v1634 = vpack.c.b16 %v1460, %v1459
  %v1635 = vpack.c.b16 %v1462, %v1461
  %v1636 = vpack.c.b16 %v1464, %v1463
  %v1637 = vpack.c.b16 %v1466, %v1465
  %v1638 = vpack.c.b16 %v1468, %v1467
  %v1639 = vpack.c.b16 %v1470, %v1469
  %v1640 = vpack.c.b16 %v1472, %v1471
  %v1641 = vpack.c.b16 %v1474, %v1473
  %v1642 = vpack.c.b16 %v1476, %v1475
  %v1643 = vpack.c.b16 %v1478, %v1477
  %v1644 = vpack.c.b16 %v1480, %v1479
  %v1645 = vpack.c.b16 %v1482, %v1481
  %v1646 = vpack.c.b16 %v1484, %v1483
  %v1647 = vpack.c.b16 %v1486, %v1485
  %v1648 = vpack.c.b16 %v1488, %v1487
  %v1649 = vpack.c.b16 %v1490, %v1489
  %v1650 = vpack.c.b16 %v1492, %v1491
  %v1651 = vpack.c.b16 %v1494, %v1493
  %v1652 = vpack.c.b16 %v1496, %v1495
  %v1653 = vpack.c.b16 %v1498, %v1497
  %v1654 = vpack.c.b16 %v1500, %v1499
  %v1655 = vpack.c.b16 %v1502, %v1501
  %v1656 = vpack.c.b16 %v1504, %v1503
  %v1657 = vpack.c.b16 %v1506, %v1505
  %v1658 = vpack.c.b16 %v1508, %v1507
  %v1659 = vpack.c.b16 %v1510, %v1509
  %v1660 = vpack.c.b16 %v1512, %v1511
  %v1661 = vpack.c.b16 %v1514, %v1513
  %v1662 = vpack.c.b16 %v1516, %v1515
  %v1663 = vpack.c.b16 %v1518, %v1517
  %v1664 = vpack.c.b16 %v1520, %v1519
  %v1665 = vpack.c.b16 %v1522, %v1521
  %v1666 = vpack.c.b16 %v1524, %v1523
  %v1667 = vpack.c.b16 %v1526, %v1525
  %v1668 = vpack.c.b16 %v1528, %v1527
  %v1669 = vpack.c.b16 %v1530, %v1529
  %v1670 = vpack.c.b16 %v1532, %v1531
  %v1671 = vpack.c.b16 %v1534, %v1533
  %v1672 = vpack.c.b16 %v1536, %v1535
  %v1673 = vpack.c.b16 %v1538, %v1537
  %v1674 = vpack.c.b16 %v1540, %v1539
  %v1675 = vpack.c.b16 %v1542, %v1541
  %v1676 = vpack.c.b16 %v1544, %v1543
  %v1677 = vpack.c.b16 %v1546, %v1545
  %v1678 = vpack.c.b16 %v1548, %v1547
  %v1679 = vpack.c.b16 %v1550, %v1549
  %v1680 = vpack.c.b16 %v1552, %v1551
  %1809 = vmatpush.bf16.msra.mxu0 %v1560
  %1810 = vmatpush.bf16.msra.mxu0 %v1559
  %1811 = vmatpush.bf16.msra.mxu0 %v1558
  %1812 = vmatpush.bf16.msra.mxu0 %v1557
  %1813 = vmatpush.bf16.msra.mxu0 %v1556
  %1814 = vmatpush.bf16.msra.mxu0 %v1555
  %1815 = vmatpush.bf16.msra.mxu0 %v1554
  %1816 = vmatpush.bf16.msra.mxu0 %v1553
  %1817 = vmatmul.bf16.gmra.mxu0 %v785
  %v1818 = vpop.f32.mrf.mxu0
  %v1819 = vadd.f32 0.0, %v1818
  %v1820 = vpop.f32.mrf.mxu0
  %v1821 = vadd.f32 0.0, %v1820
  %1822 = vmatmul.bf16.gmra.mxu0 %v801
  %v1823 = vpop.f32.mrf.mxu0
  %v1824 = vadd.f32 0.0, %v1823
  %v1825 = vpop.f32.mrf.mxu0
  %v1826 = vadd.f32 0.0, %v1825
  %1827 = vmatmul.bf16.gmra.mxu0 %v817
  %v1828 = vpop.f32.mrf.mxu0
  %v1829 = vadd.f32 0.0, %v1828
  %v1830 = vpop.f32.mrf.mxu0
  %v1831 = vadd.f32 0.0, %v1830
  %1832 = vmatmul.bf16.gmra.mxu0 %v833
  %v1833 = vpop.f32.mrf.mxu0
  %v1834 = vadd.f32 0.0, %v1833
  %v1835 = vpop.f32.mrf.mxu0
  %v1836 = vadd.f32 0.0, %v1835
  %1837 = vmatmul.bf16.gmra.mxu0 %v849
  %v1838 = vpop.f32.mrf.mxu0
  %v1839 = vadd.f32 0.0, %v1838
  %v1840 = vpop.f32.mrf.mxu0
  %v1841 = vadd.f32 0.0, %v1840
  %1842 = vmatmul.bf16.gmra.mxu0 %v865
  %v1843 = vpop.f32.mrf.mxu0
  %v1844 = vadd.f32 0.0, %v1843
  %v1845 = vpop.f32.mrf.mxu0
  %v1846 = vadd.f32 0.0, %v1845
  %1847 = vmatmul.bf16.gmra.mxu0 %v881
  %v1848 = vpop.f32.mrf.mxu0
  %v1849 = vadd.f32 0.0, %v1848
  %v1850 = vpop.f32.mrf.mxu0
  %v1851 = vadd.f32 0.0, %v1850
  %1852 = vmatmul.bf16.gmra.mxu0 %v897
  %v1853 = vpop.f32.mrf.mxu0
  %v1854 = vadd.f32 0.0, %v1853
  %v1855 = vpop.f32.mrf.mxu0
  %v1856 = vadd.f32 0.0, %v1855
  %1857 = vdwg.mxu0
  %1858 = vmatpush.bf16.msra.mxu0 %v1568
  %1859 = vmatpush.bf16.msra.mxu0 %v1567
  %1860 = vmatpush.bf16.msra.mxu0 %v1566
  %1861 = vmatpush.bf16.msra.mxu0 %v1565
  %1862 = vmatpush.bf16.msra.mxu0 %v1564
  %1863 = vmatpush.bf16.msra.mxu0 %v1563
  %1864 = vmatpush.bf16.msra.mxu0 %v1562
  %1865 = vmatpush.bf16.msra.mxu0 %v1561
  %1866 = vmatmul.bf16.gmra.mxu0 %v786
  %v1867 = vpop.f32.mrf.mxu0
  %v1868 = vadd.f32 %v1819, %v1867
  %v1869 = vpop.f32.mrf.mxu0
  %v1870 = vadd.f32 %v1821, %v1869
  %1871 = vmatmul.bf16.gmra.mxu0 %v802
  %v1872 = vpop.f32.mrf.mxu0
  %v1873 = vadd.f32 %v1824, %v1872
  %v1874 = vpop.f32.mrf.mxu0
  %v1875 = vadd.f32 %v1826, %v1874
  %1876 = vmatmul.bf16.gmra.mxu0 %v818
  %v1877 = vpop.f32.mrf.mxu0
  %v1878 = vadd.f32 %v1829, %v1877
  %v1879 = vpop.f32.mrf.mxu0
  %v1880 = vadd.f32 %v1831, %v1879
  %1881 = vmatmul.bf16.gmra.mxu0 %v834
  %v1882 = vpop.f32.mrf.mxu0
  %v1883 = vadd.f32 %v1834, %v1882
  %v1884 = vpop.f32.mrf.mxu0
  %v1885 = vadd.f32 %v1836, %v1884
  %1886 = vmatmul.bf16.gmra.mxu0 %v850
  %v1887 = vpop.f32.mrf.mxu0
  %v1888 = vadd.f32 %v1839, %v1887
  %v1889 = vpop.f32.mrf.mxu0
  %v1890 = vadd.f32 %v1841, %v1889
  %1891 = vmatmul.bf16.gmra.mxu0 %v866
  %v1892 = vpop.f32.mrf.mxu0
  %v1893 = vadd.f32 %v1844, %v1892
  %v1894 = vpop.f32.mrf.mxu0
  %v1895 = vadd.f32 %v1846, %v1894
  %1896 = vmatmul.bf16.gmra.mxu0 %v882
  %v1897 = vpop.f32.mrf.mxu0
  %v1898 = vadd.f32 %v1849, %v1897
  %v1899 = vpop.f32.mrf.mxu0
  %v1900 = vadd.f32 %v1851, %v1899
  %1901 = vmatmul.bf16.gmra.mxu0 %v898
  %v1902 = vpop.f32.mrf.mxu0
  %v1903 = vadd.f32 %v1854, %v1902
  %v1904 = vpop.f32.mrf.mxu0
  %v1905 = vadd.f32 %v1856, %v1904
  %1906 = vdwg.mxu0
  %1907 = vmatpush.bf16.msra.mxu0 %v1576
  %1908 = vmatpush.bf16.msra.mxu0 %v1575
  %1909 = vmatpush.bf16.msra.mxu0 %v1574
  %1910 = vmatpush.bf16.msra.mxu0 %v1573
  %1911 = vmatpush.bf16.msra.mxu0 %v1572
  %1912 = vmatpush.bf16.msra.mxu0 %v1571
  %1913 = vmatpush.bf16.msra.mxu0 %v1570
  %1914 = vmatpush.bf16.msra.mxu0 %v1569
  %1915 = vmatmul.bf16.gmra.mxu0 %v787
  %v1916 = vpop.f32.mrf.mxu0
  %v1917 = vadd.f32 %v1868, %v1916
  %v1918 = vpop.f32.mrf.mxu0
  %v1919 = vadd.f32 %v1870, %v1918
  %1920 = vmatmul.bf16.gmra.mxu0 %v803
  %v1921 = vpop.f32.mrf.mxu0
  %v1922 = vadd.f32 %v1873, %v1921
  %v1923 = vpop.f32.mrf.mxu0
  %v1924 = vadd.f32 %v1875, %v1923
  %1925 = vmatmul.bf16.gmra.mxu0 %v819
  %v1926 = vpop.f32.mrf.mxu0
  %v1927 = vadd.f32 %v1878, %v1926
  %v1928 = vpop.f32.mrf.mxu0
  %v1929 = vadd.f32 %v1880, %v1928
  %1930 = vmatmul.bf16.gmra.mxu0 %v835
  %v1931 = vpop.f32.mrf.mxu0
  %v1932 = vadd.f32 %v1883, %v1931
  %v1933 = vpop.f32.mrf.mxu0
  %v1934 = vadd.f32 %v1885, %v1933
  %1935 = vmatmul.bf16.gmra.mxu0 %v851
  %v1936 = vpop.f32.mrf.mxu0
  %v1937 = vadd.f32 %v1888, %v1936
  %v1938 = vpop.f32.mrf.mxu0
  %v1939 = vadd.f32 %v1890, %v1938
  %1940 = vmatmul.bf16.gmra.mxu0 %v867
  %v1941 = vpop.f32.mrf.mxu0
  %v1942 = vadd.f32 %v1893, %v1941
  %v1943 = vpop.f32.mrf.mxu0
  %v1944 = vadd.f32 %v1895, %v1943
  %1945 = vmatmul.bf16.gmra.mxu0 %v883
  %v1946 = vpop.f32.mrf.mxu0
  %v1947 = vadd.f32 %v1898, %v1946
  %v1948 = vpop.f32.mrf.mxu0
  %v1949 = vadd.f32 %v1900, %v1948
  %1950 = vmatmul.bf16.gmra.mxu0 %v899
  %v1951 = vpop.f32.mrf.mxu0
  %v1952 = vadd.f32 %v1903, %v1951
  %v1953 = vpop.f32.mrf.mxu0
  %v1954 = vadd.f32 %v1905, %v1953
  %1955 = vdwg.mxu0
  %1956 = vmatpush.bf16.msra.mxu0 %v1584
  %1957 = vmatpush.bf16.msra.mxu0 %v1583
  %1958 = vmatpush.bf16.msra.mxu0 %v1582
  %1959 = vmatpush.bf16.msra.mxu0 %v1581
  %1960 = vmatpush.bf16.msra.mxu0 %v1580
  %1961 = vmatpush.bf16.msra.mxu0 %v1579
  %1962 = vmatpush.bf16.msra.mxu0 %v1578
  %1963 = vmatpush.bf16.msra.mxu0 %v1577
  %1964 = vmatmul.bf16.gmra.mxu0 %v788
  %v1965 = vpop.f32.mrf.mxu0
  %v1966 = vadd.f32 %v1917, %v1965
  %v1967 = vpop.f32.mrf.mxu0
  %v1968 = vadd.f32 %v1919, %v1967
  %1969 = vmatmul.bf16.gmra.mxu0 %v804
  %v1970 = vpop.f32.mrf.mxu0
  %v1971 = vadd.f32 %v1922, %v1970
  %v1972 = vpop.f32.mrf.mxu0
  %v1973 = vadd.f32 %v1924, %v1972
  %1974 = vmatmul.bf16.gmra.mxu0 %v820
  %v1975 = vpop.f32.mrf.mxu0
  %v1976 = vadd.f32 %v1927, %v1975
  %v1977 = vpop.f32.mrf.mxu0
  %v1978 = vadd.f32 %v1929, %v1977
  %1979 = vmatmul.bf16.gmra.mxu0 %v836
  %v1980 = vpop.f32.mrf.mxu0
  %v1981 = vadd.f32 %v1932, %v1980
  %v1982 = vpop.f32.mrf.mxu0
  %v1983 = vadd.f32 %v1934, %v1982
  %1984 = vmatmul.bf16.gmra.mxu0 %v852
  %v1985 = vpop.f32.mrf.mxu0
  %v1986 = vadd.f32 %v1937, %v1985
  %v1987 = vpop.f32.mrf.mxu0
  %v1988 = vadd.f32 %v1939, %v1987
  %1989 = vmatmul.bf16.gmra.mxu0 %v868
  %v1990 = vpop.f32.mrf.mxu0
  %v1991 = vadd.f32 %v1942, %v1990
  %v1992 = vpop.f32.mrf.mxu0
  %v1993 = vadd.f32 %v1944, %v1992
  %1994 = vmatmul.bf16.gmra.mxu0 %v884
  %v1995 = vpop.f32.mrf.mxu0
  %v1996 = vadd.f32 %v1947, %v1995
  %v1997 = vpop.f32.mrf.mxu0
  %v1998 = vadd.f32 %v1949, %v1997
  %1999 = vmatmul.bf16.gmra.mxu0 %v900
  %v2000 = vpop.f32.mrf.mxu0
  %v2001 = vadd.f32 %v1952, %v2000
  %v2002 = vpop.f32.mrf.mxu0
  %v2003 = vadd.f32 %v1954, %v2002
  %2004 = vdwg.mxu0
  %2005 = vmatpush.bf16.msra.mxu0 %v1592
  %2006 = vmatpush.bf16.msra.mxu0 %v1591
  %2007 = vmatpush.bf16.msra.mxu0 %v1590
  %2008 = vmatpush.bf16.msra.mxu0 %v1589
  %2009 = vmatpush.bf16.msra.mxu0 %v1588
  %2010 = vmatpush.bf16.msra.mxu0 %v1587
  %2011 = vmatpush.bf16.msra.mxu0 %v1586
  %2012 = vmatpush.bf16.msra.mxu0 %v1585
  %2013 = vmatmul.bf16.gmra.mxu0 %v789
  %v2014 = vpop.f32.mrf.mxu0
  %v2015 = vadd.f32 %v1966, %v2014
  %v2016 = vpop.f32.mrf.mxu0
  %v2017 = vadd.f32 %v1968, %v2016
  %2018 = vmatmul.bf16.gmra.mxu0 %v805
  %v2019 = vpop.f32.mrf.mxu0
  %v2020 = vadd.f32 %v1971, %v2019
  %v2021 = vpop.f32.mrf.mxu0
  %v2022 = vadd.f32 %v1973, %v2021
  %2023 = vmatmul.bf16.gmra.mxu0 %v821
  %v2024 = vpop.f32.mrf.mxu0
  %v2025 = vadd.f32 %v1976, %v2024
  %v2026 = vpop.f32.mrf.mxu0
  %v2027 = vadd.f32 %v1978, %v2026
  %2028 = vmatmul.bf16.gmra.mxu0 %v837
  %v2029 = vpop.f32.mrf.mxu0
  %v2030 = vadd.f32 %v1981, %v2029
  %v2031 = vpop.f32.mrf.mxu0
  %v2032 = vadd.f32 %v1983, %v2031
  %2033 = vmatmul.bf16.gmra.mxu0 %v853
  %v2034 = vpop.f32.mrf.mxu0
  %v2035 = vadd.f32 %v1986, %v2034
  %v2036 = vpop.f32.mrf.mxu0
  %v2037 = vadd.f32 %v1988, %v2036
  %2038 = vmatmul.bf16.gmra.mxu0 %v869
  %v2039 = vpop.f32.mrf.mxu0
  %v2040 = vadd.f32 %v1991, %v2039
  %v2041 = vpop.f32.mrf.mxu0
  %v2042 = vadd.f32 %v1993, %v2041
  %2043 = vmatmul.bf16.gmra.mxu0 %v885
  %v2044 = vpop.f32.mrf.mxu0
  %v2045 = vadd.f32 %v1996, %v2044
  %v2046 = vpop.f32.mrf.mxu0
  %v2047 = vadd.f32 %v1998, %v2046
  %2048 = vmatmul.bf16.gmra.mxu0 %v901
  %v2049 = vpop.f32.mrf.mxu0
  %v2050 = vadd.f32 %v2001, %v2049
  %v2051 = vpop.f32.mrf.mxu0
  %v2052 = vadd.f32 %v2003, %v2051
  %2053 = vdwg.mxu0
  %2054 = vmatpush.bf16.msra.mxu0 %v1600
  %2055 = vmatpush.bf16.msra.mxu0 %v1599
  %2056 = vmatpush.bf16.msra.mxu0 %v1598
  %2057 = vmatpush.bf16.msra.mxu0 %v1597
  %2058 = vmatpush.bf16.msra.mxu0 %v1596
  %2059 = vmatpush.bf16.msra.mxu0 %v1595
  %2060 = vmatpush.bf16.msra.mxu0 %v1594
  %2061 = vmatpush.bf16.msra.mxu0 %v1593
  %2062 = vmatmul.bf16.gmra.mxu0 %v790
  %v2063 = vpop.f32.mrf.mxu0
  %v2064 = vadd.f32 %v2015, %v2063
  %v2065 = vpop.f32.mrf.mxu0
  %v2066 = vadd.f32 %v2017, %v2065
  %2067 = vmatmul.bf16.gmra.mxu0 %v806
  %v2068 = vpop.f32.mrf.mxu0
  %v2069 = vadd.f32 %v2020, %v2068
  %v2070 = vpop.f32.mrf.mxu0
  %v2071 = vadd.f32 %v2022, %v2070
  %2072 = vmatmul.bf16.gmra.mxu0 %v822
  %v2073 = vpop.f32.mrf.mxu0
  %v2074 = vadd.f32 %v2025, %v2073
  %v2075 = vpop.f32.mrf.mxu0
  %v2076 = vadd.f32 %v2027, %v2075
  %2077 = vmatmul.bf16.gmra.mxu0 %v838
  %v2078 = vpop.f32.mrf.mxu0
  %v2079 = vadd.f32 %v2030, %v2078
  %v2080 = vpop.f32.mrf.mxu0
  %v2081 = vadd.f32 %v2032, %v2080
  %2082 = vmatmul.bf16.gmra.mxu0 %v854
  %v2083 = vpop.f32.mrf.mxu0
  %v2084 = vadd.f32 %v2035, %v2083
  %v2085 = vpop.f32.mrf.mxu0
  %v2086 = vadd.f32 %v2037, %v2085
  %2087 = vmatmul.bf16.gmra.mxu0 %v870
  %v2088 = vpop.f32.mrf.mxu0
  %v2089 = vadd.f32 %v2040, %v2088
  %v2090 = vpop.f32.mrf.mxu0
  %v2091 = vadd.f32 %v2042, %v2090
  %2092 = vmatmul.bf16.gmra.mxu0 %v886
  %v2093 = vpop.f32.mrf.mxu0
  %v2094 = vadd.f32 %v2045, %v2093
  %v2095 = vpop.f32.mrf.mxu0
  %v2096 = vadd.f32 %v2047, %v2095
  %2097 = vmatmul.bf16.gmra.mxu0 %v902
  %v2098 = vpop.f32.mrf.mxu0
  %v2099 = vadd.f32 %v2050, %v2098
  %v2100 = vpop.f32.mrf.mxu0
  %v2101 = vadd.f32 %v2052, %v2100
  %2102 = vdwg.mxu0
  %2103 = vmatpush.bf16.msra.mxu0 %v1608
  %2104 = vmatpush.bf16.msra.mxu0 %v1607
  %2105 = vmatpush.bf16.msra.mxu0 %v1606
  %2106 = vmatpush.bf16.msra.mxu0 %v1605
  %2107 = vmatpush.bf16.msra.mxu0 %v1604
  %2108 = vmatpush.bf16.msra.mxu0 %v1603
  %2109 = vmatpush.bf16.msra.mxu0 %v1602
  %2110 = vmatpush.bf16.msra.mxu0 %v1601
  %2111 = vmatmul.bf16.gmra.mxu0 %v791
  %v2112 = vpop.f32.mrf.mxu0
  %v2113 = vadd.f32 %v2064, %v2112
  %v2114 = vpop.f32.mrf.mxu0
  %v2115 = vadd.f32 %v2066, %v2114
  %2116 = vmatmul.bf16.gmra.mxu0 %v807
  %v2117 = vpop.f32.mrf.mxu0
  %v2118 = vadd.f32 %v2069, %v2117
  %v2119 = vpop.f32.mrf.mxu0
  %v2120 = vadd.f32 %v2071, %v2119
  %2121 = vmatmul.bf16.gmra.mxu0 %v823
  %v2122 = vpop.f32.mrf.mxu0
  %v2123 = vadd.f32 %v2074, %v2122
  %v2124 = vpop.f32.mrf.mxu0
  %v2125 = vadd.f32 %v2076, %v2124
  %2126 = vmatmul.bf16.gmra.mxu0 %v839
  %v2127 = vpop.f32.mrf.mxu0
  %v2128 = vadd.f32 %v2079, %v2127
  %v2129 = vpop.f32.mrf.mxu0
  %v2130 = vadd.f32 %v2081, %v2129
  %2131 = vmatmul.bf16.gmra.mxu0 %v855
  %v2132 = vpop.f32.mrf.mxu0
  %v2133 = vadd.f32 %v2084, %v2132
  %v2134 = vpop.f32.mrf.mxu0
  %v2135 = vadd.f32 %v2086, %v2134
  %2136 = vmatmul.bf16.gmra.mxu0 %v871
  %v2137 = vpop.f32.mrf.mxu0
  %v2138 = vadd.f32 %v2089, %v2137
  %v2139 = vpop.f32.mrf.mxu0
  %v2140 = vadd.f32 %v2091, %v2139
  %2141 = vmatmul.bf16.gmra.mxu0 %v887
  %v2142 = vpop.f32.mrf.mxu0
  %v2143 = vadd.f32 %v2094, %v2142
  %v2144 = vpop.f32.mrf.mxu0
  %v2145 = vadd.f32 %v2096, %v2144
  %2146 = vmatmul.bf16.gmra.mxu0 %v903
  %v2147 = vpop.f32.mrf.mxu0
  %v2148 = vadd.f32 %v2099, %v2147
  %v2149 = vpop.f32.mrf.mxu0
  %v2150 = vadd.f32 %v2101, %v2149
  %2151 = vdwg.mxu0
  %2152 = vmatpush.bf16.msra.mxu0 %v1616
  %2153 = vmatpush.bf16.msra.mxu0 %v1615
  %2154 = vmatpush.bf16.msra.mxu0 %v1614
  %2155 = vmatpush.bf16.msra.mxu0 %v1613
  %2156 = vmatpush.bf16.msra.mxu0 %v1612
  %2157 = vmatpush.bf16.msra.mxu0 %v1611
  %2158 = vmatpush.bf16.msra.mxu0 %v1610
  %2159 = vmatpush.bf16.msra.mxu0 %v1609
  %2160 = vmatmul.bf16.gmra.mxu0 %v792
  %v2161 = vpop.f32.mrf.mxu0
  %v2162 = vadd.f32 %v2113, %v2161
  %v2163 = vpop.f32.mrf.mxu0
  %v2164 = vadd.f32 %v2115, %v2163
  %2165 = vmatmul.bf16.gmra.mxu0 %v808
  %v2166 = vpop.f32.mrf.mxu0
  %v2167 = vadd.f32 %v2118, %v2166
  %v2168 = vpop.f32.mrf.mxu0
  %v2169 = vadd.f32 %v2120, %v2168
  %2170 = vmatmul.bf16.gmra.mxu0 %v824
  %v2171 = vpop.f32.mrf.mxu0
  %v2172 = vadd.f32 %v2123, %v2171
  %v2173 = vpop.f32.mrf.mxu0
  %v2174 = vadd.f32 %v2125, %v2173
  %2175 = vmatmul.bf16.gmra.mxu0 %v840
  %v2176 = vpop.f32.mrf.mxu0
  %v2177 = vadd.f32 %v2128, %v2176
  %v2178 = vpop.f32.mrf.mxu0
  %v2179 = vadd.f32 %v2130, %v2178
  %2180 = vmatmul.bf16.gmra.mxu0 %v856
  %v2181 = vpop.f32.mrf.mxu0
  %v2182 = vadd.f32 %v2133, %v2181
  %v2183 = vpop.f32.mrf.mxu0
  %v2184 = vadd.f32 %v2135, %v2183
  %2185 = vmatmul.bf16.gmra.mxu0 %v872
  %v2186 = vpop.f32.mrf.mxu0
  %v2187 = vadd.f32 %v2138, %v2186
  %v2188 = vpop.f32.mrf.mxu0
  %v2189 = vadd.f32 %v2140, %v2188
  %2190 = vmatmul.bf16.gmra.mxu0 %v888
  %v2191 = vpop.f32.mrf.mxu0
  %v2192 = vadd.f32 %v2143, %v2191
  %v2193 = vpop.f32.mrf.mxu0
  %v2194 = vadd.f32 %v2145, %v2193
  %2195 = vmatmul.bf16.gmra.mxu0 %v904
  %v2196 = vpop.f32.mrf.mxu0
  %v2197 = vadd.f32 %v2148, %v2196
  %v2198 = vpop.f32.mrf.mxu0
  %v2199 = vadd.f32 %v2150, %v2198
  %2200 = vdwg.mxu0
  %2201 = vmatpush.bf16.msra.mxu0 %v1624
  %2202 = vmatpush.bf16.msra.mxu0 %v1623
  %2203 = vmatpush.bf16.msra.mxu0 %v1622
  %2204 = vmatpush.bf16.msra.mxu0 %v1621
  %2205 = vmatpush.bf16.msra.mxu0 %v1620
  %2206 = vmatpush.bf16.msra.mxu0 %v1619
  %2207 = vmatpush.bf16.msra.mxu0 %v1618
  %2208 = vmatpush.bf16.msra.mxu0 %v1617
  %2209 = vmatmul.bf16.gmra.mxu0 %v793
  %v2210 = vpop.f32.mrf.mxu0
  %v2211 = vadd.f32 %v2162, %v2210
  %v2212 = vpop.f32.mrf.mxu0
  %v2213 = vadd.f32 %v2164, %v2212
  %2214 = vmatmul.bf16.gmra.mxu0 %v809
  %v2215 = vpop.f32.mrf.mxu0
  %v2216 = vadd.f32 %v2167, %v2215
  %v2217 = vpop.f32.mrf.mxu0
  %v2218 = vadd.f32 %v2169, %v2217
  %2219 = vmatmul.bf16.gmra.mxu0 %v825
  %v2220 = vpop.f32.mrf.mxu0
  %v2221 = vadd.f32 %v2172, %v2220
  %v2222 = vpop.f32.mrf.mxu0
  %v2223 = vadd.f32 %v2174, %v2222
  %2224 = vmatmul.bf16.gmra.mxu0 %v841
  %v2225 = vpop.f32.mrf.mxu0
  %v2226 = vadd.f32 %v2177, %v2225
  %v2227 = vpop.f32.mrf.mxu0
  %v2228 = vadd.f32 %v2179, %v2227
  %2229 = vmatmul.bf16.gmra.mxu0 %v857
  %v2230 = vpop.f32.mrf.mxu0
  %v2231 = vadd.f32 %v2182, %v2230
  %v2232 = vpop.f32.mrf.mxu0
  %v2233 = vadd.f32 %v2184, %v2232
  %2234 = vmatmul.bf16.gmra.mxu0 %v873
  %v2235 = vpop.f32.mrf.mxu0
  %v2236 = vadd.f32 %v2187, %v2235
  %v2237 = vpop.f32.mrf.mxu0
  %v2238 = vadd.f32 %v2189, %v2237
  %2239 = vmatmul.bf16.gmra.mxu0 %v889
  %v2240 = vpop.f32.mrf.mxu0
  %v2241 = vadd.f32 %v2192, %v2240
  %v2242 = vpop.f32.mrf.mxu0
  %v2243 = vadd.f32 %v2194, %v2242
  %2244 = vmatmul.bf16.gmra.mxu0 %v905
  %v2245 = vpop.f32.mrf.mxu0
  %v2246 = vadd.f32 %v2197, %v2245
  %v2247 = vpop.f32.mrf.mxu0
  %v2248 = vadd.f32 %v2199, %v2247
  %2249 = vdwg.mxu0
  %2250 = vmatpush.bf16.msra.mxu0 %v1632
  %2251 = vmatpush.bf16.msra.mxu0 %v1631
  %2252 = vmatpush.bf16.msra.mxu0 %v1630
  %2253 = vmatpush.bf16.msra.mxu0 %v1629
  %2254 = vmatpush.bf16.msra.mxu0 %v1628
  %2255 = vmatpush.bf16.msra.mxu0 %v1627
  %2256 = vmatpush.bf16.msra.mxu0 %v1626
  %2257 = vmatpush.bf16.msra.mxu0 %v1625
  %2258 = vmatmul.bf16.gmra.mxu0 %v794
  %v2259 = vpop.f32.mrf.mxu0
  %v2260 = vadd.f32 %v2211, %v2259
  %v2261 = vpop.f32.mrf.mxu0
  %v2262 = vadd.f32 %v2213, %v2261
  %2263 = vmatmul.bf16.gmra.mxu0 %v810
  %v2264 = vpop.f32.mrf.mxu0
  %v2265 = vadd.f32 %v2216, %v2264
  %v2266 = vpop.f32.mrf.mxu0
  %v2267 = vadd.f32 %v2218, %v2266
  %2268 = vmatmul.bf16.gmra.mxu0 %v826
  %v2269 = vpop.f32.mrf.mxu0
  %v2270 = vadd.f32 %v2221, %v2269
  %v2271 = vpop.f32.mrf.mxu0
  %v2272 = vadd.f32 %v2223, %v2271
  %2273 = vmatmul.bf16.gmra.mxu0 %v842
  %v2274 = vpop.f32.mrf.mxu0
  %v2275 = vadd.f32 %v2226, %v2274
  %v2276 = vpop.f32.mrf.mxu0
  %v2277 = vadd.f32 %v2228, %v2276
  %2278 = vmatmul.bf16.gmra.mxu0 %v858
  %v2279 = vpop.f32.mrf.mxu0
  %v2280 = vadd.f32 %v2231, %v2279
  %v2281 = vpop.f32.mrf.mxu0
  %v2282 = vadd.f32 %v2233, %v2281
  %2283 = vmatmul.bf16.gmra.mxu0 %v874
  %v2284 = vpop.f32.mrf.mxu0
  %v2285 = vadd.f32 %v2236, %v2284
  %v2286 = vpop.f32.mrf.mxu0
  %v2287 = vadd.f32 %v2238, %v2286
  %2288 = vmatmul.bf16.gmra.mxu0 %v890
  %v2289 = vpop.f32.mrf.mxu0
  %v2290 = vadd.f32 %v2241, %v2289
  %v2291 = vpop.f32.mrf.mxu0
  %v2292 = vadd.f32 %v2243, %v2291
  %2293 = vmatmul.bf16.gmra.mxu0 %v906
  %v2294 = vpop.f32.mrf.mxu0
  %v2295 = vadd.f32 %v2246, %v2294
  %v2296 = vpop.f32.mrf.mxu0
  %v2297 = vadd.f32 %v2248, %v2296
  %2298 = vdwg.mxu0
  %2299 = vmatpush.bf16.msra.mxu0 %v1640
  %2300 = vmatpush.bf16.msra.mxu0 %v1639
  %2301 = vmatpush.bf16.msra.mxu0 %v1638
  %2302 = vmatpush.bf16.msra.mxu0 %v1637
  %2303 = vmatpush.bf16.msra.mxu0 %v1636
  %2304 = vmatpush.bf16.msra.mxu0 %v1635
  %2305 = vmatpush.bf16.msra.mxu0 %v1634
  %2306 = vmatpush.bf16.msra.mxu0 %v1633
  %2307 = vmatmul.bf16.gmra.mxu0 %v795
  %v2308 = vpop.f32.mrf.mxu0
  %v2309 = vadd.f32 %v2260, %v2308
  %v2310 = vpop.f32.mrf.mxu0
  %v2311 = vadd.f32 %v2262, %v2310
  %2312 = vmatmul.bf16.gmra.mxu0 %v811
  %v2313 = vpop.f32.mrf.mxu0
  %v2314 = vadd.f32 %v2265, %v2313
  %v2315 = vpop.f32.mrf.mxu0
  %v2316 = vadd.f32 %v2267, %v2315
  %2317 = vmatmul.bf16.gmra.mxu0 %v827
  %v2318 = vpop.f32.mrf.mxu0
  %v2319 = vadd.f32 %v2270, %v2318
  %v2320 = vpop.f32.mrf.mxu0
  %v2321 = vadd.f32 %v2272, %v2320
  %2322 = vmatmul.bf16.gmra.mxu0 %v843
  %v2323 = vpop.f32.mrf.mxu0
  %v2324 = vadd.f32 %v2275, %v2323
  %v2325 = vpop.f32.mrf.mxu0
  %v2326 = vadd.f32 %v2277, %v2325
  %2327 = vmatmul.bf16.gmra.mxu0 %v859
  %v2328 = vpop.f32.mrf.mxu0
  %v2329 = vadd.f32 %v2280, %v2328
  %v2330 = vpop.f32.mrf.mxu0
  %v2331 = vadd.f32 %v2282, %v2330
  %2332 = vmatmul.bf16.gmra.mxu0 %v875
  %v2333 = vpop.f32.mrf.mxu0
  %v2334 = vadd.f32 %v2285, %v2333
  %v2335 = vpop.f32.mrf.mxu0
  %v2336 = vadd.f32 %v2287, %v2335
  %2337 = vmatmul.bf16.gmra.mxu0 %v891
  %v2338 = vpop.f32.mrf.mxu0
  %v2339 = vadd.f32 %v2290, %v2338
  %v2340 = vpop.f32.mrf.mxu0
  %v2341 = vadd.f32 %v2292, %v2340
  %2342 = vmatmul.bf16.gmra.mxu0 %v907
  %v2343 = vpop.f32.mrf.mxu0
  %v2344 = vadd.f32 %v2295, %v2343
  %v2345 = vpop.f32.mrf.mxu0
  %v2346 = vadd.f32 %v2297, %v2345
  %2347 = vdwg.mxu0
  %2348 = vmatpush.bf16.msra.mxu0 %v1648
  %2349 = vmatpush.bf16.msra.mxu0 %v1647
  %2350 = vmatpush.bf16.msra.mxu0 %v1646
  %2351 = vmatpush.bf16.msra.mxu0 %v1645
  %2352 = vmatpush.bf16.msra.mxu0 %v1644
  %2353 = vmatpush.bf16.msra.mxu0 %v1643
  %2354 = vmatpush.bf16.msra.mxu0 %v1642
  %2355 = vmatpush.bf16.msra.mxu0 %v1641
  %2356 = vmatmul.bf16.gmra.mxu0 %v796
  %v2357 = vpop.f32.mrf.mxu0
  %v2358 = vadd.f32 %v2309, %v2357
  %v2359 = vpop.f32.mrf.mxu0
  %v2360 = vadd.f32 %v2311, %v2359
  %2361 = vmatmul.bf16.gmra.mxu0 %v812
  %v2362 = vpop.f32.mrf.mxu0
  %v2363 = vadd.f32 %v2314, %v2362
  %v2364 = vpop.f32.mrf.mxu0
  %v2365 = vadd.f32 %v2316, %v2364
  %2366 = vmatmul.bf16.gmra.mxu0 %v828
  %v2367 = vpop.f32.mrf.mxu0
  %v2368 = vadd.f32 %v2319, %v2367
  %v2369 = vpop.f32.mrf.mxu0
  %v2370 = vadd.f32 %v2321, %v2369
  %2371 = vmatmul.bf16.gmra.mxu0 %v844
  %v2372 = vpop.f32.mrf.mxu0
  %v2373 = vadd.f32 %v2324, %v2372
  %v2374 = vpop.f32.mrf.mxu0
  %v2375 = vadd.f32 %v2326, %v2374
  %2376 = vmatmul.bf16.gmra.mxu0 %v860
  %v2377 = vpop.f32.mrf.mxu0
  %v2378 = vadd.f32 %v2329, %v2377
  %v2379 = vpop.f32.mrf.mxu0
  %v2380 = vadd.f32 %v2331, %v2379
  %2381 = vmatmul.bf16.gmra.mxu0 %v876
  %v2382 = vpop.f32.mrf.mxu0
  %v2383 = vadd.f32 %v2334, %v2382
  %v2384 = vpop.f32.mrf.mxu0
  %v2385 = vadd.f32 %v2336, %v2384
  %2386 = vmatmul.bf16.gmra.mxu0 %v892
  %v2387 = vpop.f32.mrf.mxu0
  %v2388 = vadd.f32 %v2339, %v2387
  %v2389 = vpop.f32.mrf.mxu0
  %v2390 = vadd.f32 %v2341, %v2389
  %2391 = vmatmul.bf16.gmra.mxu0 %v908
  %v2392 = vpop.f32.mrf.mxu0
  %v2393 = vadd.f32 %v2344, %v2392
  %v2394 = vpop.f32.mrf.mxu0
  %v2395 = vadd.f32 %v2346, %v2394
  %2396 = vdwg.mxu0
  %2397 = vmatpush.bf16.msra.mxu0 %v1656
  %2398 = vmatpush.bf16.msra.mxu0 %v1655
  %2399 = vmatpush.bf16.msra.mxu0 %v1654
  %2400 = vmatpush.bf16.msra.mxu0 %v1653
  %2401 = vmatpush.bf16.msra.mxu0 %v1652
  %2402 = vmatpush.bf16.msra.mxu0 %v1651
  %2403 = vmatpush.bf16.msra.mxu0 %v1650
  %2404 = vmatpush.bf16.msra.mxu0 %v1649
  %2405 = vmatmul.bf16.gmra.mxu0 %v797
  %v2406 = vpop.f32.mrf.mxu0
  %v2407 = vadd.f32 %v2358, %v2406
  %v2408 = vpop.f32.mrf.mxu0
  %v2409 = vadd.f32 %v2360, %v2408
  %2410 = vmatmul.bf16.gmra.mxu0 %v813
  %v2411 = vpop.f32.mrf.mxu0
  %v2412 = vadd.f32 %v2363, %v2411
  %v2413 = vpop.f32.mrf.mxu0
  %v2414 = vadd.f32 %v2365, %v2413
  %2415 = vmatmul.bf16.gmra.mxu0 %v829
  %v2416 = vpop.f32.mrf.mxu0
  %v2417 = vadd.f32 %v2368, %v2416
  %v2418 = vpop.f32.mrf.mxu0
  %v2419 = vadd.f32 %v2370, %v2418
  %2420 = vmatmul.bf16.gmra.mxu0 %v845
  %v2421 = vpop.f32.mrf.mxu0
  %v2422 = vadd.f32 %v2373, %v2421
  %v2423 = vpop.f32.mrf.mxu0
  %v2424 = vadd.f32 %v2375, %v2423
  %2425 = vmatmul.bf16.gmra.mxu0 %v861
  %v2426 = vpop.f32.mrf.mxu0
  %v2427 = vadd.f32 %v2378, %v2426
  %v2428 = vpop.f32.mrf.mxu0
  %v2429 = vadd.f32 %v2380, %v2428
  %2430 = vmatmul.bf16.gmra.mxu0 %v877
  %v2431 = vpop.f32.mrf.mxu0
  %v2432 = vadd.f32 %v2383, %v2431
  %v2433 = vpop.f32.mrf.mxu0
  %v2434 = vadd.f32 %v2385, %v2433
  %2435 = vmatmul.bf16.gmra.mxu0 %v893
  %v2436 = vpop.f32.mrf.mxu0
  %v2437 = vadd.f32 %v2388, %v2436
  %v2438 = vpop.f32.mrf.mxu0
  %v2439 = vadd.f32 %v2390, %v2438
  %2440 = vmatmul.bf16.gmra.mxu0 %v909
  %v2441 = vpop.f32.mrf.mxu0
  %v2442 = vadd.f32 %v2393, %v2441
  %v2443 = vpop.f32.mrf.mxu0
  %v2444 = vadd.f32 %v2395, %v2443
  %2445 = vdwg.mxu0
  %2446 = vmatpush.bf16.msra.mxu0 %v1664
  %2447 = vmatpush.bf16.msra.mxu0 %v1663
  %2448 = vmatpush.bf16.msra.mxu0 %v1662
  %2449 = vmatpush.bf16.msra.mxu0 %v1661
  %2450 = vmatpush.bf16.msra.mxu0 %v1660
  %2451 = vmatpush.bf16.msra.mxu0 %v1659
  %2452 = vmatpush.bf16.msra.mxu0 %v1658
  %2453 = vmatpush.bf16.msra.mxu0 %v1657
  %2454 = vmatmul.bf16.gmra.mxu0 %v798
  %v2455 = vpop.f32.mrf.mxu0
  %v2456 = vadd.f32 %v2407, %v2455
  %v2457 = vpop.f32.mrf.mxu0
  %v2458 = vadd.f32 %v2409, %v2457
  %2459 = vmatmul.bf16.gmra.mxu0 %v814
  %v2460 = vpop.f32.mrf.mxu0
  %v2461 = vadd.f32 %v2412, %v2460
  %v2462 = vpop.f32.mrf.mxu0
  %v2463 = vadd.f32 %v2414, %v2462
  %2464 = vmatmul.bf16.gmra.mxu0 %v830
  %v2465 = vpop.f32.mrf.mxu0
  %v2466 = vadd.f32 %v2417, %v2465
  %v2467 = vpop.f32.mrf.mxu0
  %v2468 = vadd.f32 %v2419, %v2467
  %2469 = vmatmul.bf16.gmra.mxu0 %v846
  %v2470 = vpop.f32.mrf.mxu0
  %v2471 = vadd.f32 %v2422, %v2470
  %v2472 = vpop.f32.mrf.mxu0
  %v2473 = vadd.f32 %v2424, %v2472
  %2474 = vmatmul.bf16.gmra.mxu0 %v862
  %v2475 = vpop.f32.mrf.mxu0
  %v2476 = vadd.f32 %v2427, %v2475
  %v2477 = vpop.f32.mrf.mxu0
  %v2478 = vadd.f32 %v2429, %v2477
  %2479 = vmatmul.bf16.gmra.mxu0 %v878
  %v2480 = vpop.f32.mrf.mxu0
  %v2481 = vadd.f32 %v2432, %v2480
  %v2482 = vpop.f32.mrf.mxu0
  %v2483 = vadd.f32 %v2434, %v2482
  %2484 = vmatmul.bf16.gmra.mxu0 %v894
  %v2485 = vpop.f32.mrf.mxu0
  %v2486 = vadd.f32 %v2437, %v2485
  %v2487 = vpop.f32.mrf.mxu0
  %v2488 = vadd.f32 %v2439, %v2487
  %2489 = vmatmul.bf16.gmra.mxu0 %v910
  %v2490 = vpop.f32.mrf.mxu0
  %v2491 = vadd.f32 %v2442, %v2490
  %v2492 = vpop.f32.mrf.mxu0
  %v2493 = vadd.f32 %v2444, %v2492
  %2494 = vdwg.mxu0
  %2495 = vmatpush.bf16.msra.mxu0 %v1672
  %2496 = vmatpush.bf16.msra.mxu0 %v1671
  %2497 = vmatpush.bf16.msra.mxu0 %v1670
  %2498 = vmatpush.bf16.msra.mxu0 %v1669
  %2499 = vmatpush.bf16.msra.mxu0 %v1668
  %2500 = vmatpush.bf16.msra.mxu0 %v1667
  %2501 = vmatpush.bf16.msra.mxu0 %v1666
  %2502 = vmatpush.bf16.msra.mxu0 %v1665
  %2503 = vmatmul.bf16.gmra.mxu0 %v799
  %v2504 = vpop.f32.mrf.mxu0
  %v2505 = vadd.f32 %v2456, %v2504
  %v2506 = vpop.f32.mrf.mxu0
  %v2507 = vadd.f32 %v2458, %v2506
  %2508 = vmatmul.bf16.gmra.mxu0 %v815
  %v2509 = vpop.f32.mrf.mxu0
  %v2510 = vadd.f32 %v2461, %v2509
  %v2511 = vpop.f32.mrf.mxu0
  %v2512 = vadd.f32 %v2463, %v2511
  %2513 = vmatmul.bf16.gmra.mxu0 %v831
  %v2514 = vpop.f32.mrf.mxu0
  %v2515 = vadd.f32 %v2466, %v2514
  %v2516 = vpop.f32.mrf.mxu0
  %v2517 = vadd.f32 %v2468, %v2516
  %2518 = vmatmul.bf16.gmra.mxu0 %v847
  %v2519 = vpop.f32.mrf.mxu0
  %v2520 = vadd.f32 %v2471, %v2519
  %v2521 = vpop.f32.mrf.mxu0
  %v2522 = vadd.f32 %v2473, %v2521
  %2523 = vmatmul.bf16.gmra.mxu0 %v863
  %v2524 = vpop.f32.mrf.mxu0
  %v2525 = vadd.f32 %v2476, %v2524
  %v2526 = vpop.f32.mrf.mxu0
  %v2527 = vadd.f32 %v2478, %v2526
  %2528 = vmatmul.bf16.gmra.mxu0 %v879
  %v2529 = vpop.f32.mrf.mxu0
  %v2530 = vadd.f32 %v2481, %v2529
  %v2531 = vpop.f32.mrf.mxu0
  %v2532 = vadd.f32 %v2483, %v2531
  %2533 = vmatmul.bf16.gmra.mxu0 %v895
  %v2534 = vpop.f32.mrf.mxu0
  %v2535 = vadd.f32 %v2486, %v2534
  %v2536 = vpop.f32.mrf.mxu0
  %v2537 = vadd.f32 %v2488, %v2536
  %2538 = vmatmul.bf16.gmra.mxu0 %v911
  %v2539 = vpop.f32.mrf.mxu0
  %v2540 = vadd.f32 %v2491, %v2539
  %v2541 = vpop.f32.mrf.mxu0
  %v2542 = vadd.f32 %v2493, %v2541
  %2543 = vdwg.mxu0
  %2544 = vmatpush.bf16.msra.mxu0 %v1680
  %2545 = vmatpush.bf16.msra.mxu0 %v1679
  %2546 = vmatpush.bf16.msra.mxu0 %v1678
  %2547 = vmatpush.bf16.msra.mxu0 %v1677
  %2548 = vmatpush.bf16.msra.mxu0 %v1676
  %2549 = vmatpush.bf16.msra.mxu0 %v1675
  %2550 = vmatpush.bf16.msra.mxu0 %v1674
  %2551 = vmatpush.bf16.msra.mxu0 %v1673
  %2552 = vmatmul.bf16.gmra.mxu0 %v800
  %v2553 = vpop.f32.mrf.mxu0
  %v2554 = vadd.f32 %v2505, %v2553
  %v2555 = vpop.f32.mrf.mxu0
  %v2556 = vadd.f32 %v2507, %v2555
  %2557 = vmatmul.bf16.gmra.mxu0 %v816
  %v2558 = vpop.f32.mrf.mxu0
  %v2559 = vadd.f32 %v2510, %v2558
  %v2560 = vpop.f32.mrf.mxu0
  %v2561 = vadd.f32 %v2512, %v2560
  %2562 = vmatmul.bf16.gmra.mxu0 %v832
  %v2563 = vpop.f32.mrf.mxu0
  %v2564 = vadd.f32 %v2515, %v2563
  %v2565 = vpop.f32.mrf.mxu0
  %v2566 = vadd.f32 %v2517, %v2565
  %2567 = vmatmul.bf16.gmra.mxu0 %v848
  %v2568 = vpop.f32.mrf.mxu0
  %v2569 = vadd.f32 %v2520, %v2568
  %v2570 = vpop.f32.mrf.mxu0
  %v2571 = vadd.f32 %v2522, %v2570
  %2572 = vmatmul.bf16.gmra.mxu0 %v864
  %v2573 = vpop.f32.mrf.mxu0
  %v2574 = vadd.f32 %v2525, %v2573
  %v2575 = vpop.f32.mrf.mxu0
  %v2576 = vadd.f32 %v2527, %v2575
  %2577 = vmatmul.bf16.gmra.mxu0 %v880
  %v2578 = vpop.f32.mrf.mxu0
  %v2579 = vadd.f32 %v2530, %v2578
  %v2580 = vpop.f32.mrf.mxu0
  %v2581 = vadd.f32 %v2532, %v2580
  %2582 = vmatmul.bf16.gmra.mxu0 %v896
  %v2583 = vpop.f32.mrf.mxu0
  %v2584 = vadd.f32 %v2535, %v2583
  %v2585 = vpop.f32.mrf.mxu0
  %v2586 = vadd.f32 %v2537, %v2585
  %2587 = vmatmul.bf16.gmra.mxu0 %v912
  %v2588 = vpop.f32.mrf.mxu0
  %v2589 = vadd.f32 %v2540, %v2588
  %v2590 = vpop.f32.mrf.mxu0
  %v2591 = vadd.f32 %v2542, %v2590
  %2592 = vdwg.mxu0
  %v2593 = vld [vmem:[%s2] sm:$0x1]
  %v2594 = vld [vmem:[%s3] sm:$0x1]
  %v2595 = vadd.f32 %v2554, %v2556
  %v2596 = vadd.f32 %v2595, %v2559
  %v2597 = vadd.f32 %v2596, %v2561
  %v2598 = vadd.f32 %v2597, %v2564
  %v2599 = vadd.f32 %v2598, %v2566
  %v2600 = vadd.f32 %v2599, %v2569
  %v2601 = vadd.f32 %v2600, %v2571
  %v2602 = vadd.f32 %v2601, %v2574
  %v2603 = vadd.f32 %v2602, %v2576
  %v2604 = vadd.f32 %v2603, %v2579
  %v2605 = vadd.f32 %v2604, %v2581
  %v2606 = vadd.f32 %v2605, %v2584
  %v2607 = vadd.f32 %v2606, %v2586
  %v2608 = vadd.f32 %v2607, %v2589
  %v2609 = vadd.f32 %v2608, %v2591
  %v2610 = vrot.slane %v2609, 4
  %v2611 = vadd.f32 %v2609, %v2610
  %v2612 = vrot.slane %v2611, 2
  %v2613 = vadd.f32 %v2611, %v2612
  %v2614 = vrot.slane %v2613, 1
  %v2615 = vadd.f32 %v2613, %v2614
  %v2616 = vmul.f32 %v2615, 0.0078125
  %v2617 = vmul.f32 %v2554, %v2554
  %v2618 = vmul.f32 %v2556, %v2556
  %v2619 = vmul.f32 %v2559, %v2559
  %v2620 = vmul.f32 %v2561, %v2561
  %v2621 = vmul.f32 %v2564, %v2564
  %v2622 = vmul.f32 %v2566, %v2566
  %v2623 = vmul.f32 %v2569, %v2569
  %v2624 = vmul.f32 %v2571, %v2571
  %v2625 = vmul.f32 %v2574, %v2574
  %v2626 = vmul.f32 %v2576, %v2576
  %v2627 = vmul.f32 %v2579, %v2579
  %v2628 = vmul.f32 %v2581, %v2581
  %v2629 = vmul.f32 %v2584, %v2584
  %v2630 = vmul.f32 %v2586, %v2586
  %v2631 = vmul.f32 %v2589, %v2589
  %v2632 = vmul.f32 %v2591, %v2591
  %v2633 = vadd.f32 %v2617, %v2618
  %v2634 = vadd.f32 %v2633, %v2619
  %v2635 = vadd.f32 %v2634, %v2620
  %v2636 = vadd.f32 %v2635, %v2621
  %v2637 = vadd.f32 %v2636, %v2622
  %v2638 = vadd.f32 %v2637, %v2623
  %v2639 = vadd.f32 %v2638, %v2624
  %v2640 = vadd.f32 %v2639, %v2625
  %v2641 = vadd.f32 %v2640, %v2626
  %v2642 = vadd.f32 %v2641, %v2627
  %v2643 = vadd.f32 %v2642, %v2628
  %v2644 = vadd.f32 %v2643, %v2629
  %v2645 = vadd.f32 %v2644, %v2630
  %v2646 = vadd.f32 %v2645, %v2631
  %v2647 = vadd.f32 %v2646, %v2632
  %v2648 = vrot.slane %v2647, 4
  %v2649 = vadd.f32 %v2647, %v2648
  %v2650 = vrot.slane %v2649, 2
  %v2651 = vadd.f32 %v2649, %v2650
  %v2652 = vrot.slane %v2651, 1
  %v2653 = vadd.f32 %v2651, %v2652
  %v2654 = vmul.f32 %v2653, 0.0078125
  %v2655 = vmul.f32 %v2616, %v2616
  %v2656 = vsub.f32 %v2654, %v2655
  %v2657 = vmax.f32 %v2656, 0.0
  %v2658 = vadd.f32 %v2657, 1e-05
  %v2659 = vrsqrt.pop %v2658
  %v2660 = vmul.f32 %v2659, %v2658
  %v2661 = vmul.f32 %v2660, %v2659
  %v2662 = vmul.f32 0.5, %v2661
  %v2663 = vsub.f32 1.5, %v2662
  %v2664 = vmul.f32 %v2659, %v2663
  %vm2665 = vweird.f32 %v2658
  %vm2666 = vweird.f32 %v2659
  %vm2667 = vmor %vm2665, %vm2666
  %v2668 = vsel %vm2667, %v2659, %v2664
  %v2669 = vmul.f32 %v2593, %v2668
  %v2670 = vmul.f32 %v2616, %v2669
  %v2671 = vsub.f32 %v2594, %v2670
  %v2673 = vperm.slane %v2669, 0
  %v2675 = vmul.f32 %v2554, %v2673
  %v2676 = vmul.f32 %v2556, %v2673
  %v2677 = vmul.f32 %v2559, %v2673
  %v2678 = vmul.f32 %v2561, %v2673
  %v2679 = vmul.f32 %v2564, %v2673
  %v2680 = vmul.f32 %v2566, %v2673
  %v2681 = vmul.f32 %v2569, %v2673
  %v2682 = vmul.f32 %v2571, %v2673
  %v2683 = vmul.f32 %v2574, %v2673
  %v2684 = vmul.f32 %v2576, %v2673
  %v2685 = vmul.f32 %v2579, %v2673
  %v2686 = vmul.f32 %v2581, %v2673
  %v2687 = vmul.f32 %v2584, %v2673
  %v2688 = vmul.f32 %v2586, %v2673
  %v2689 = vmul.f32 %v2589, %v2673
  %v2690 = vmul.f32 %v2591, %v2673
  %v2692 = vperm.slane %v2671, 0
  %v2694 = vadd.f32 %v2675, %v2692
  %v2695 = vadd.f32 %v2676, %v2692
  %v2696 = vadd.f32 %v2677, %v2692
  %v2697 = vadd.f32 %v2678, %v2692
  %v2698 = vadd.f32 %v2679, %v2692
  %v2699 = vadd.f32 %v2680, %v2692
  %v2700 = vadd.f32 %v2681, %v2692
  %v2701 = vadd.f32 %v2682, %v2692
  %v2702 = vadd.f32 %v2683, %v2692
  %v2703 = vadd.f32 %v2684, %v2692
  %v2704 = vadd.f32 %v2685, %v2692
  %v2705 = vadd.f32 %v2686, %v2692
  %v2706 = vadd.f32 %v2687, %v2692
  %v2707 = vadd.f32 %v2688, %v2692
  %v2708 = vadd.f32 %v2689, %v2692
  %v2709 = vadd.f32 %v2690, %v2692
  %v2710 = vmul.f32 %v2694, 0.2
  %v2711 = vmul.f32 %v2695, 0.2
  %v2712 = vmul.f32 %v2696, 0.2
  %v2713 = vmul.f32 %v2697, 0.2
  %v2714 = vmul.f32 %v2698, 0.2
  %v2715 = vmul.f32 %v2699, 0.2
  %v2716 = vmul.f32 %v2700, 0.2
  %v2717 = vmul.f32 %v2701, 0.2
  %v2718 = vmul.f32 %v2702, 0.2
  %v2719 = vmul.f32 %v2703, 0.2
  %v2720 = vmul.f32 %v2704, 0.2
  %v2721 = vmul.f32 %v2705, 0.2
  %v2722 = vmul.f32 %v2706, 0.2
  %v2723 = vmul.f32 %v2707, 0.2
  %v2724 = vmul.f32 %v2708, 0.2
  %v2725 = vmul.f32 %v2709, 0.2
  %v2726 = vmax.f32 %v2694, %v2710
  %v2727 = vmax.f32 %v2695, %v2711
  %v2728 = vmax.f32 %v2696, %v2712
  %v2729 = vmax.f32 %v2697, %v2713
  %v2730 = vmax.f32 %v2698, %v2714
  %v2731 = vmax.f32 %v2699, %v2715
  %v2732 = vmax.f32 %v2700, %v2716
  %v2733 = vmax.f32 %v2701, %v2717
  %v2734 = vmax.f32 %v2702, %v2718
  %v2735 = vmax.f32 %v2703, %v2719
  %v2736 = vmax.f32 %v2704, %v2720
  %v2737 = vmax.f32 %v2705, %v2721
  %v2738 = vmax.f32 %v2706, %v2722
  %v2739 = vmax.f32 %v2707, %v2723
  %v2740 = vmax.f32 %v2708, %v2724
  %v2741 = vmax.f32 %v2709, %v2725
  %v2742 = vpack.c.bf16 %v2726, %v2726
  %v2743 = vpack.c.bf16 %v2727, %v2727
  %v2744 = vpack.c.bf16 %v2728, %v2728
  %v2745 = vpack.c.bf16 %v2729, %v2729
  %v2746 = vpack.c.bf16 %v2730, %v2730
  %v2747 = vpack.c.bf16 %v2731, %v2731
  %v2748 = vpack.c.bf16 %v2732, %v2732
  %v2749 = vpack.c.bf16 %v2733, %v2733
  %v2750 = vpack.c.bf16 %v2734, %v2734
  %v2751 = vpack.c.bf16 %v2735, %v2735
  %v2752 = vpack.c.bf16 %v2736, %v2736
  %v2753 = vpack.c.bf16 %v2737, %v2737
  %v2754 = vpack.c.bf16 %v2738, %v2738
  %v2755 = vpack.c.bf16 %v2739, %v2739
  %v2756 = vpack.c.bf16 %v2740, %v2740
  %v2757 = vpack.c.bf16 %v2741, %v2741
  %2758 = vst [vmem:[%s4] sm:$0xf] %v2742
  %2759 = vst [vmem:[%s4 + $0x4] sm:$0xf] %v2743
  %2760 = vst [vmem:[%s4 + $0x8] sm:$0xf] %v2744
  %2761 = vst [vmem:[%s4 + $0xc] sm:$0xf] %v2745
  %2762 = vst [vmem:[%s4 + $0x10] sm:$0xf] %v2746
  %2763 = vst [vmem:[%s4 + $0x14] sm:$0xf] %v2747
  %2764 = vst [vmem:[%s4 + $0x18] sm:$0xf] %v2748
  %2765 = vst [vmem:[%s4 + $0x1c] sm:$0xf] %v2749
  %2766 = vst [vmem:[%s4 + $0x20] sm:$0xf] %v2750
  %2767 = vst [vmem:[%s4 + $0x24] sm:$0xf] %v2751
  %2768 = vst [vmem:[%s4 + $0x28] sm:$0xf] %v2752
  %2769 = vst [vmem:[%s4 + $0x2c] sm:$0xf] %v2753
  %2770 = vst [vmem:[%s4 + $0x30] sm:$0xf] %v2754
  %2771 = vst [vmem:[%s4 + $0x34] sm:$0xf] %v2755
  %2772 = vst [vmem:[%s4 + $0x38] sm:$0xf] %v2756
  %2773 = vst [vmem:[%s4 + $0x3c] sm:$0xf] %v2757
  // Predicated region
  $region18: #{discriminator_forward.6} parent=0 // pred_check
    _
  $region19: #{discriminator_forward.6} parent=0 // pred_check_branch
    %2775 = sbr.rel (0) target = $region21
  $region20: #{discriminator_forward.6} parent=0 // pred_region
    _
  $region21: #{discriminator_forward.6} parent=0 // pred_fallthru
    _
  // Predicated region
  $region22: #{discriminator_forward.6} parent=0 // pred_check
    _
  $region23: #{discriminator_forward.6} parent=0 // pred_check_branch
    %2777 = sbr.rel (0) target = $region25
  $region24: #{discriminator_forward.6} parent=0 // pred_region
    _
  $region25: #{discriminator_forward.6} parent=0 // pred_fallthru
    _

// kernel: discriminator_forward.5
$region0: #{discriminator_forward.5}
  #allocation0 [shape = 'u32[]', space=smem, size = 0x4, offset = 0x4, fixed_abs, tag = 'smem constant byte address 0x4 - core index']
  #allocation1 [shape = 'u32[72,128]{1,0:T(1,128)}', space=vmem, size = 0x9000, scoped, tag = 'internal scratch']
  %s0 = inlined_call_operand.vmem [shape: bf16[512,2048], index: 0, kind: input, shape index: {}]
  %s1 = inlined_call_operand.vmem [shape: bf16[2048,128], index: 1, kind: input, shape index: {}]
  %s2 = inlined_call_operand.vmem [shape: f32[1,128], index: 2, kind: input, shape index: {}]
  %s3 = inlined_call_operand.vmem [shape: f32[1,128], index: 3, kind: input, shape index: {}]
  %s4 = inlined_call_operand.vmem [shape: bf16[512,128], index: 4, kind: output, shape index: {}]
  %s5 = sld [smem:[#allocation0]]
  $region26: #{discriminator_forward.5} parent=0
    _
  %s7 = ssub.s32 1, %s5
  %s8 = scalar_select 0, %s7, %s5
  // Predicated region
  $region2: #{discriminator_forward.5} parent=0 // pred_check
    _
  $region3: #{discriminator_forward.5} parent=0 // pred_check_branch
    %10 = sbr.rel (0) target = $region5
  $region4: #{discriminator_forward.5} parent=0 // pred_region
    _
  $region5: #{discriminator_forward.5} parent=0 // pred_fallthru
    _
  // Predicated region
  $region6: #{discriminator_forward.5} parent=0 // pred_check
    _
  $region7: #{discriminator_forward.5} parent=0 // pred_check_branch
    %12 = sbr.rel (0) target = $region9
  $region8: #{discriminator_forward.5} parent=0 // pred_region
    _
  $region9: #{discriminator_forward.5} parent=0 // pred_fallthru
    _
  // Predicated region
  $region10: #{discriminator_forward.5} parent=0 // pred_check
    _
  $region11: #{discriminator_forward.5} parent=0 // pred_check_branch
    %14 = sbr.rel (0) target = $region13
  $region12: #{discriminator_forward.5} parent=0 // pred_region
    _
  $region13: #{discriminator_forward.5} parent=0 // pred_fallthru
    _
  // Predicated region
  $region14: #{discriminator_forward.5} parent=0 // pred_check
    _
  $region15: #{discriminator_forward.5} parent=0 // pred_check_branch
    %16 = sbr.rel (0) target = $region17
  $region16: #{discriminator_forward.5} parent=0 // pred_region
    _
  $region17: #{discriminator_forward.5} parent=0 // pred_fallthru
    _
  %v17 = vld [vmem:[%s0] sm:$0xff]
  %v18 = vld [vmem:[%s0 + $0x8] sm:$0xff]
  %v19 = vld [vmem:[%s0 + $0x10] sm:$0xff]
  %v20 = vld [vmem:[%s0 + $0x18] sm:$0xff]
  %v21 = vld [vmem:[%s0 + $0x20] sm:$0xff]
  %v22 = vld [vmem:[%s0 + $0x28] sm:$0xff]
  %v23 = vld [vmem:[%s0 + $0x30] sm:$0xff]
  %v24 = vld [vmem:[%s0 + $0x38] sm:$0xff]
  %v25 = vld [vmem:[%s0 + $0x40] sm:$0xff]
  %v26 = vld [vmem:[%s0 + $0x48] sm:$0xff]
  %v27 = vld [vmem:[%s0 + $0x50] sm:$0xff]
  %v28 = vld [vmem:[%s0 + $0x58] sm:$0xff]
  %v29 = vld [vmem:[%s0 + $0x60] sm:$0xff]
  %v30 = vld [vmem:[%s0 + $0x68] sm:$0xff]
  %v31 = vld [vmem:[%s0 + $0x70] sm:$0xff]
  %v32 = vld [vmem:[%s0 + $0x78] sm:$0xff]
  %v33 = vld [vmem:[%s0 + $0x80] sm:$0xff]
  %v34 = vld [vmem:[%s0 + $0x88] sm:$0xff]
  %v35 = vld [vmem:[%s0 + $0x90] sm:$0xff]
  %v36 = vld [vmem:[%s0 + $0x98] sm:$0xff]
  %v37 = vld [vmem:[%s0 + $0xa0] sm:$0xff]
  %v38 = vld [vmem:[%s0 + $0xa8] sm:$0xff]
  %v39 = vld [vmem:[%s0 + $0xb0] sm:$0xff]
  %v40 = vld [vmem:[%s0 + $0xb8] sm:$0xff]
  %v41 = vld [vmem:[%s0 + $0xc0] sm:$0xff]
  %v42 = vld [vmem:[%s0 + $0xc8] sm:$0xff]
  %v43 = vld [vmem:[%s0 + $0xd0] sm:$0xff]
  %v44 = vld [vmem:[%s0 + $0xd8] sm:$0xff]
  %v45 = vld [vmem:[%s0 + $0xe0] sm:$0xff]
  %v46 = vld [vmem:[%s0 + $0xe8] sm:$0xff]
  %v47 = vld [vmem:[%s0 + $0xf0] sm:$0xff]
  %v48 = vld [vmem:[%s0 + $0xf8] sm:$0xff]
  %v49 = vld [vmem:[%s0 + $0x100] sm:$0xff]
  %v50 = vld [vmem:[%s0 + $0x108] sm:$0xff]
  %v51 = vld [vmem:[%s0 + $0x110] sm:$0xff]
  %v52 = vld [vmem:[%s0 + $0x118] sm:$0xff]
  %v53 = vld [vmem:[%s0 + $0x120] sm:$0xff]
  %v54 = vld [vmem:[%s0 + $0x128] sm:$0xff]
  %v55 = vld [vmem:[%s0 + $0x130] sm:$0xff]
  %v56 = vld [vmem:[%s0 + $0x138] sm:$0xff]
  %v57 = vld [vmem:[%s0 + $0x140] sm:$0xff]
  %v58 = vld [vmem:[%s0 + $0x148] sm:$0xff]
  %v59 = vld [vmem:[%s0 + $0x150] sm:$0xff]
  %v60 = vld [vmem:[%s0 + $0x158] sm:$0xff]
  %v61 = vld [vmem:[%s0 + $0x160] sm:$0xff]
  %v62 = vld [vmem:[%s0 + $0x168] sm:$0xff]
  %v63 = vld [vmem:[%s0 + $0x170] sm:$0xff]
  %v64 = vld [vmem:[%s0 + $0x178] sm:$0xff]
  %v65 = vld [vmem:[%s0 + $0x180] sm:$0xff]
  %v66 = vld [vmem:[%s0 + $0x188] sm:$0xff]
  %v67 = vld [vmem:[%s0 + $0x190] sm:$0xff]
  %v68 = vld [vmem:[%s0 + $0x198] sm:$0xff]
  %v69 = vld [vmem:[%s0 + $0x1a0] sm:$0xff]
  %v70 = vld [vmem:[%s0 + $0x1a8] sm:$0xff]
  %v71 = vld [vmem:[%s0 + $0x1b0] sm:$0xff]
  %v72 = vld [vmem:[%s0 + $0x1b8] sm:$0xff]
  %v73 = vld [vmem:[%s0 + $0x1c0] sm:$0xff]
  %v74 = vld [vmem:[%s0 + $0x1c8] sm:$0xff]
  %v75 = vld [vmem:[%s0 + $0x1d0] sm:$0xff]
  %v76 = vld [vmem:[%s0 + $0x1d8] sm:$0xff]
  %v77 = vld [vmem:[%s0 + $0x1e0] sm:$0xff]
  %v78 = vld [vmem:[%s0 + $0x1e8] sm:$0xff]
  %v79 = vld [vmem:[%s0 + $0x1f0] sm:$0xff]
  %v80 = vld [vmem:[%s0 + $0x1f8] sm:$0xff]
  %v81 = vld [vmem:[%s0 + $0x200] sm:$0xff]
  %v82 = vld [vmem:[%s0 + $0x208] sm:$0xff]
  %v83 = vld [vmem:[%s0 + $0x210] sm:$0xff]
  %v84 = vld [vmem:[%s0 + $0x218] sm:$0xff]
  %v85 = vld [vmem:[%s0 + $0x220] sm:$0xff]
  %v86 = vld [vmem:[%s0 + $0x228] sm:$0xff]
  %v87 = vld [vmem:[%s0 + $0x230] sm:$0xff]
  %v88 = vld [vmem:[%s0 + $0x238] sm:$0xff]
  %v89 = vld [vmem:[%s0 + $0x240] sm:$0xff]
  %v90 = vld [vmem:[%s0 + $0x248] sm:$0xff]
  %v91 = vld [vmem:[%s0 + $0x250] sm:$0xff]
  %v92 = vld [vmem:[%s0 + $0x258] sm:$0xff]
  %v93 = vld [vmem:[%s0 + $0x260] sm:$0xff]
  %v94 = vld [vmem:[%s0 + $0x268] sm:$0xff]
  %v95 = vld [vmem:[%s0 + $0x270] sm:$0xff]
  %v96 = vld [vmem:[%s0 + $0x278] sm:$0xff]
  %v97 = vld [vmem:[%s0 + $0x280] sm:$0xff]
  %v98 = vld [vmem:[%s0 + $0x288] sm:$0xff]
  %v99 = vld [vmem:[%s0 + $0x290] sm:$0xff]
  %v100 = vld [vmem:[%s0 + $0x298] sm:$0xff]
  %v101 = vld [vmem:[%s0 + $0x2a0] sm:$0xff]
  %v102 = vld [vmem:[%s0 + $0x2a8] sm:$0xff]
  %v103 = vld [vmem:[%s0 + $0x2b0] sm:$0xff]
  %v104 = vld [vmem:[%s0 + $0x2b8] sm:$0xff]
  %v105 = vld [vmem:[%s0 + $0x2c0] sm:$0xff]
  %v106 = vld [vmem:[%s0 + $0x2c8] sm:$0xff]
  %v107 = vld [vmem:[%s0 + $0x2d0] sm:$0xff]
  %v108 = vld [vmem:[%s0 + $0x2d8] sm:$0xff]
  %v109 = vld [vmem:[%s0 + $0x2e0] sm:$0xff]
  %v110 = vld [vmem:[%s0 + $0x2e8] sm:$0xff]
  %v111 = vld [vmem:[%s0 + $0x2f0] sm:$0xff]
  %v112 = vld [vmem:[%s0 + $0x2f8] sm:$0xff]
  %v113 = vld [vmem:[%s0 + $0x300] sm:$0xff]
  %v114 = vld [vmem:[%s0 + $0x308] sm:$0xff]
  %v115 = vld [vmem:[%s0 + $0x310] sm:$0xff]
  %v116 = vld [vmem:[%s0 + $0x318] sm:$0xff]
  %v117 = vld [vmem:[%s0 + $0x320] sm:$0xff]
  %v118 = vld [vmem:[%s0 + $0x328] sm:$0xff]
  %v119 = vld [vmem:[%s0 + $0x330] sm:$0xff]
  %v120 = vld [vmem:[%s0 + $0x338] sm:$0xff]
  %v121 = vld [vmem:[%s0 + $0x340] sm:$0xff]
  %v122 = vld [vmem:[%s0 + $0x348] sm:$0xff]
  %v123 = vld [vmem:[%s0 + $0x350] sm:$0xff]
  %v124 = vld [vmem:[%s0 + $0x358] sm:$0xff]
  %v125 = vld [vmem:[%s0 + $0x360] sm:$0xff]
  %v126 = vld [vmem:[%s0 + $0x368] sm:$0xff]
  %v127 = vld [vmem:[%s0 + $0x370] sm:$0xff]
  %v128 = vld [vmem:[%s0 + $0x378] sm:$0xff]
  %v129 = vld [vmem:[%s0 + $0x380] sm:$0xff]
  %v130 = vld [vmem:[%s0 + $0x388] sm:$0xff]
  %v131 = vld [vmem:[%s0 + $0x390] sm:$0xff]
  %v132 = vld [vmem:[%s0 + $0x398] sm:$0xff]
  %v133 = vld [vmem:[%s0 + $0x3a0] sm:$0xff]
  %v134 = vld [vmem:[%s0 + $0x3a8] sm:$0xff]
  %v135 = vld [vmem:[%s0 + $0x3b0] sm:$0xff]
  %v136 = vld [vmem:[%s0 + $0x3b8] sm:$0xff]
  %v137 = vld [vmem:[%s0 + $0x3c0] sm:$0xff]
  %v138 = vld [vmem:[%s0 + $0x3c8] sm:$0xff]
  %v139 = vld [vmem:[%s0 + $0x3d0] sm:$0xff]
  %v140 = vld [vmem:[%s0 + $0x3d8] sm:$0xff]
  %v141 = vld [vmem:[%s0 + $0x3e0] sm:$0xff]
  %v142 = vld [vmem:[%s0 + $0x3e8] sm:$0xff]
  %v143 = vld [vmem:[%s0 + $0x3f0] sm:$0xff]
  %v144 = vld [vmem:[%s0 + $0x3f8] sm:$0xff]
  %v145 = vld [vmem:[%s0 + $0x400] sm:$0xff]
  %v146 = vld [vmem:[%s0 + $0x408] sm:$0xff]
  %v147 = vld [vmem:[%s0 + $0x410] sm:$0xff]
  %v148 = vld [vmem:[%s0 + $0x418] sm:$0xff]
  %v149 = vld [vmem:[%s0 + $0x420] sm:$0xff]
  %v150 = vld [vmem:[%s0 + $0x428] sm:$0xff]
  %v151 = vld [vmem:[%s0 + $0x430] sm:$0xff]
  %v152 = vld [vmem:[%s0 + $0x438] sm:$0xff]
  %v153 = vld [vmem:[%s0 + $0x440] sm:$0xff]
  %v154 = vld [vmem:[%s0 + $0x448] sm:$0xff]
  %v155 = vld [vmem:[%s0 + $0x450] sm:$0xff]
  %v156 = vld [vmem:[%s0 + $0x458] sm:$0xff]
  %v157 = vld [vmem:[%s0 + $0x460] sm:$0xff]
  %v158 = vld [vmem:[%s0 + $0x468] sm:$0xff]
  %v159 = vld [vmem:[%s0 + $0x470] sm:$0xff]
  %v160 = vld [vmem:[%s0 + $0x478] sm:$0xff]
  %v161 = vld [vmem:[%s0 + $0x480] sm:$0xff]
  %v162 = vld [vmem:[%s0 + $0x488] sm:$0xff]
  %v163 = vld [vmem:[%s0 + $0x490] sm:$0xff]
  %v164 = vld [vmem:[%s0 + $0x498] sm:$0xff]
  %v165 = vld [vmem:[%s0 + $0x4a0] sm:$0xff]
  %v166 = vld [vmem:[%s0 + $0x4a8] sm:$0xff]
  %v167 = vld [vmem:[%s0 + $0x4b0] sm:$0xff]
  %v168 = vld [vmem:[%s0 + $0x4b8] sm:$0xff]
  %v169 = vld [vmem:[%s0 + $0x4c0] sm:$0xff]
  %v170 = vld [vmem:[%s0 + $0x4c8] sm:$0xff]
  %v171 = vld [vmem:[%s0 + $0x4d0] sm:$0xff]
  %v172 = vld [vmem:[%s0 + $0x4d8] sm:$0xff]
  %v173 = vld [vmem:[%s0 + $0x4e0] sm:$0xff]
  %v174 = vld [vmem:[%s0 + $0x4e8] sm:$0xff]
  %v175 = vld [vmem:[%s0 + $0x4f0] sm:$0xff]
  %v176 = vld [vmem:[%s0 + $0x4f8] sm:$0xff]
  %v177 = vld [vmem:[%s0 + $0x500] sm:$0xff]
  %v178 = vld [vmem:[%s0 + $0x508] sm:$0xff]
  %v179 = vld [vmem:[%s0 + $0x510] sm:$0xff]
  %v180 = vld [vmem:[%s0 + $0x518] sm:$0xff]
  %v181 = vld [vmem:[%s0 + $0x520] sm:$0xff]
  %v182 = vld [vmem:[%s0 + $0x528] sm:$0xff]
  %v183 = vld [vmem:[%s0 + $0x530] sm:$0xff]
  %v184 = vld [vmem:[%s0 + $0x538] sm:$0xff]
  %v185 = vld [vmem:[%s0 + $0x540] sm:$0xff]
  %v186 = vld [vmem:[%s0 + $0x548] sm:$0xff]
  %v187 = vld [vmem:[%s0 + $0x550] sm:$0xff]
  %v188 = vld [vmem:[%s0 + $0x558] sm:$0xff]
  %v189 = vld [vmem:[%s0 + $0x560] sm:$0xff]
  %v190 = vld [vmem:[%s0 + $0x568] sm:$0xff]
  %v191 = vld [vmem:[%s0 + $0x570] sm:$0xff]
  %v192 = vld [vmem:[%s0 + $0x578] sm:$0xff]
  %v193 = vld [vmem:[%s0 + $0x580] sm:$0xff]
  %v194 = vld [vmem:[%s0 + $0x588] sm:$0xff]
  %v195 = vld [vmem:[%s0 + $0x590] sm:$0xff]
  %v196 = vld [vmem:[%s0 + $0x598] sm:$0xff]
  %v197 = vld [vmem:[%s0 + $0x5a0] sm:$0xff]
  %v198 = vld [vmem:[%s0 + $0x5a8] sm:$0xff]
  %v199 = vld [vmem:[%s0 + $0x5b0] sm:$0xff]
  %v200 = vld [vmem:[%s0 + $0x5b8] sm:$0xff]
  %v201 = vld [vmem:[%s0 + $0x5c0] sm:$0xff]
  %v202 = vld [vmem:[%s0 + $0x5c8] sm:$0xff]
  %v203 = vld [vmem:[%s0 + $0x5d0] sm:$0xff]
  %v204 = vld [vmem:[%s0 + $0x5d8] sm:$0xff]
  %v205 = vld [vmem:[%s0 + $0x5e0] sm:$0xff]
  %v206 = vld [vmem:[%s0 + $0x5e8] sm:$0xff]
  %v207 = vld [vmem:[%s0 + $0x5f0] sm:$0xff]
  %v208 = vld [vmem:[%s0 + $0x5f8] sm:$0xff]
  %v209 = vld [vmem:[%s0 + $0x600] sm:$0xff]
  %v210 = vld [vmem:[%s0 + $0x608] sm:$0xff]
  %v211 = vld [vmem:[%s0 + $0x610] sm:$0xff]
  %v212 = vld [vmem:[%s0 + $0x618] sm:$0xff]
  %v213 = vld [vmem:[%s0 + $0x620] sm:$0xff]
  %v214 = vld [vmem:[%s0 + $0x628] sm:$0xff]
  %v215 = vld [vmem:[%s0 + $0x630] sm:$0xff]
  %v216 = vld [vmem:[%s0 + $0x638] sm:$0xff]
  %v217 = vld [vmem:[%s0 + $0x640] sm:$0xff]
  %v218 = vld [vmem:[%s0 + $0x648] sm:$0xff]
  %v219 = vld [vmem:[%s0 + $0x650] sm:$0xff]
  %v220 = vld [vmem:[%s0 + $0x658] sm:$0xff]
  %v221 = vld [vmem:[%s0 + $0x660] sm:$0xff]
  %v222 = vld [vmem:[%s0 + $0x668] sm:$0xff]
  %v223 = vld [vmem:[%s0 + $0x670] sm:$0xff]
  %v224 = vld [vmem:[%s0 + $0x678] sm:$0xff]
  %v225 = vld [vmem:[%s0 + $0x680] sm:$0xff]
  %v226 = vld [vmem:[%s0 + $0x688] sm:$0xff]
  %v227 = vld [vmem:[%s0 + $0x690] sm:$0xff]
  %v228 = vld [vmem:[%s0 + $0x698] sm:$0xff]
  %v229 = vld [vmem:[%s0 + $0x6a0] sm:$0xff]
  %v230 = vld [vmem:[%s0 + $0x6a8] sm:$0xff]
  %v231 = vld [vmem:[%s0 + $0x6b0] sm:$0xff]
  %v232 = vld [vmem:[%s0 + $0x6b8] sm:$0xff]
  %v233 = vld [vmem:[%s0 + $0x6c0] sm:$0xff]
  %v234 = vld [vmem:[%s0 + $0x6c8] sm:$0xff]
  %v235 = vld [vmem:[%s0 + $0x6d0] sm:$0xff]
  %v236 = vld [vmem:[%s0 + $0x6d8] sm:$0xff]
  %v237 = vld [vmem:[%s0 + $0x6e0] sm:$0xff]
  %v238 = vld [vmem:[%s0 + $0x6e8] sm:$0xff]
  %v239 = vld [vmem:[%s0 + $0x6f0] sm:$0xff]
  %v240 = vld [vmem:[%s0 + $0x6f8] sm:$0xff]
  %v241 = vld [vmem:[%s0 + $0x700] sm:$0xff]
  %v242 = vld [vmem:[%s0 + $0x708] sm:$0xff]
  %v243 = vld [vmem:[%s0 + $0x710] sm:$0xff]
  %v244 = vld [vmem:[%s0 + $0x718] sm:$0xff]
  %v245 = vld [vmem:[%s0 + $0x720] sm:$0xff]
  %v246 = vld [vmem:[%s0 + $0x728] sm:$0xff]
  %v247 = vld [vmem:[%s0 + $0x730] sm:$0xff]
  %v248 = vld [vmem:[%s0 + $0x738] sm:$0xff]
  %v249 = vld [vmem:[%s0 + $0x740] sm:$0xff]
  %v250 = vld [vmem:[%s0 + $0x748] sm:$0xff]
  %v251 = vld [vmem:[%s0 + $0x750] sm:$0xff]
  %v252 = vld [vmem:[%s0 + $0x758] sm:$0xff]
  %v253 = vld [vmem:[%s0 + $0x760] sm:$0xff]
  %v254 = vld [vmem:[%s0 + $0x768] sm:$0xff]
  %v255 = vld [vmem:[%s0 + $0x770] sm:$0xff]
  %v256 = vld [vmem:[%s0 + $0x778] sm:$0xff]
  %v257 = vld [vmem:[%s0 + $0x780] sm:$0xff]
  %v258 = vld [vmem:[%s0 + $0x788] sm:$0xff]
  %v259 = vld [vmem:[%s0 + $0x790] sm:$0xff]
  %v260 = vld [vmem:[%s0 + $0x798] sm:$0xff]
  %v261 = vld [vmem:[%s0 + $0x7a0] sm:$0xff]
  %v262 = vld [vmem:[%s0 + $0x7a8] sm:$0xff]
  %v263 = vld [vmem:[%s0 + $0x7b0] sm:$0xff]
  %v264 = vld [vmem:[%s0 + $0x7b8] sm:$0xff]
  %v265 = vld [vmem:[%s0 + $0x7c0] sm:$0xff]
  %v266 = vld [vmem:[%s0 + $0x7c8] sm:$0xff]
  %v267 = vld [vmem:[%s0 + $0x7d0] sm:$0xff]
  %v268 = vld [vmem:[%s0 + $0x7d8] sm:$0xff]
  %v269 = vld [vmem:[%s0 + $0x7e0] sm:$0xff]
  %v270 = vld [vmem:[%s0 + $0x7e8] sm:$0xff]
  %v271 = vld [vmem:[%s0 + $0x7f0] sm:$0xff]
  %v272 = vld [vmem:[%s0 + $0x7f8] sm:$0xff]
  %v273 = vld [vmem:[%s0 + $0x800] sm:$0xff]
  %v274 = vld [vmem:[%s0 + $0x808] sm:$0xff]
  %v275 = vld [vmem:[%s0 + $0x810] sm:$0xff]
  %v276 = vld [vmem:[%s0 + $0x818] sm:$0xff]
  %v277 = vld [vmem:[%s0 + $0x820] sm:$0xff]
  %v278 = vld [vmem:[%s0 + $0x828] sm:$0xff]
  %v279 = vld [vmem:[%s0 + $0x830] sm:$0xff]
  %v280 = vld [vmem:[%s0 + $0x838] sm:$0xff]
  %v281 = vld [vmem:[%s0 + $0x840] sm:$0xff]
  %v282 = vld [vmem:[%s0 + $0x848] sm:$0xff]
  %v283 = vld [vmem:[%s0 + $0x850] sm:$0xff]
  %v284 = vld [vmem:[%s0 + $0x858] sm:$0xff]
  %v285 = vld [vmem:[%s0 + $0x860] sm:$0xff]
  %v286 = vld [vmem:[%s0 + $0x868] sm:$0xff]
  %v287 = vld [vmem:[%s0 + $0x870] sm:$0xff]
  %v288 = vld [vmem:[%s0 + $0x878] sm:$0xff]
  %v289 = vld [vmem:[%s0 + $0x880] sm:$0xff]
  %v290 = vld [vmem:[%s0 + $0x888] sm:$0xff]
  %v291 = vld [vmem:[%s0 + $0x890] sm:$0xff]
  %v292 = vld [vmem:[%s0 + $0x898] sm:$0xff]
  %v293 = vld [vmem:[%s0 + $0x8a0] sm:$0xff]
  %v294 = vld [vmem:[%s0 + $0x8a8] sm:$0xff]
  %v295 = vld [vmem:[%s0 + $0x8b0] sm:$0xff]
  %v296 = vld [vmem:[%s0 + $0x8b8] sm:$0xff]
  %v297 = vld [vmem:[%s0 + $0x8c0] sm:$0xff]
  %v298 = vld [vmem:[%s0 + $0x8c8] sm:$0xff]
  %v299 = vld [vmem:[%s0 + $0x8d0] sm:$0xff]
  %v300 = vld [vmem:[%s0 + $0x8d8] sm:$0xff]
  %v301 = vld [vmem:[%s0 + $0x8e0] sm:$0xff]
  %v302 = vld [vmem:[%s0 + $0x8e8] sm:$0xff]
  %v303 = vld [vmem:[%s0 + $0x8f0] sm:$0xff]
  %v304 = vld [vmem:[%s0 + $0x8f8] sm:$0xff]
  %v305 = vld [vmem:[%s0 + $0x900] sm:$0xff]
  %v306 = vld [vmem:[%s0 + $0x908] sm:$0xff]
  %v307 = vld [vmem:[%s0 + $0x910] sm:$0xff]
  %v308 = vld [vmem:[%s0 + $0x918] sm:$0xff]
  %v309 = vld [vmem:[%s0 + $0x920] sm:$0xff]
  %v310 = vld [vmem:[%s0 + $0x928] sm:$0xff]
  %v311 = vld [vmem:[%s0 + $0x930] sm:$0xff]
  %v312 = vld [vmem:[%s0 + $0x938] sm:$0xff]
  %v313 = vld [vmem:[%s0 + $0x940] sm:$0xff]
  %v314 = vld [vmem:[%s0 + $0x948] sm:$0xff]
  %v315 = vld [vmem:[%s0 + $0x950] sm:$0xff]
  %v316 = vld [vmem:[%s0 + $0x958] sm:$0xff]
  %v317 = vld [vmem:[%s0 + $0x960] sm:$0xff]
  %v318 = vld [vmem:[%s0 + $0x968] sm:$0xff]
  %v319 = vld [vmem:[%s0 + $0x970] sm:$0xff]
  %v320 = vld [vmem:[%s0 + $0x978] sm:$0xff]
  %v321 = vld [vmem:[%s0 + $0x980] sm:$0xff]
  %v322 = vld [vmem:[%s0 + $0x988] sm:$0xff]
  %v323 = vld [vmem:[%s0 + $0x990] sm:$0xff]
  %v324 = vld [vmem:[%s0 + $0x998] sm:$0xff]
  %v325 = vld [vmem:[%s0 + $0x9a0] sm:$0xff]
  %v326 = vld [vmem:[%s0 + $0x9a8] sm:$0xff]
  %v327 = vld [vmem:[%s0 + $0x9b0] sm:$0xff]
  %v328 = vld [vmem:[%s0 + $0x9b8] sm:$0xff]
  %v329 = vld [vmem:[%s0 + $0x9c0] sm:$0xff]
  %v330 = vld [vmem:[%s0 + $0x9c8] sm:$0xff]
  %v331 = vld [vmem:[%s0 + $0x9d0] sm:$0xff]
  %v332 = vld [vmem:[%s0 + $0x9d8] sm:$0xff]
  %v333 = vld [vmem:[%s0 + $0x9e0] sm:$0xff]
  %v334 = vld [vmem:[%s0 + $0x9e8] sm:$0xff]
  %v335 = vld [vmem:[%s0 + $0x9f0] sm:$0xff]
  %v336 = vld [vmem:[%s0 + $0x9f8] sm:$0xff]
  %v337 = vld [vmem:[%s0 + $0xa00] sm:$0xff]
  %v338 = vld [vmem:[%s0 + $0xa08] sm:$0xff]
  %v339 = vld [vmem:[%s0 + $0xa10] sm:$0xff]
  %v340 = vld [vmem:[%s0 + $0xa18] sm:$0xff]
  %v341 = vld [vmem:[%s0 + $0xa20] sm:$0xff]
  %v342 = vld [vmem:[%s0 + $0xa28] sm:$0xff]
  %v343 = vld [vmem:[%s0 + $0xa30] sm:$0xff]
  %v344 = vld [vmem:[%s0 + $0xa38] sm:$0xff]
  %v345 = vld [vmem:[%s0 + $0xa40] sm:$0xff]
  %v346 = vld [vmem:[%s0 + $0xa48] sm:$0xff]
  %v347 = vld [vmem:[%s0 + $0xa50] sm:$0xff]
  %v348 = vld [vmem:[%s0 + $0xa58] sm:$0xff]
  %v349 = vld [vmem:[%s0 + $0xa60] sm:$0xff]
  %v350 = vld [vmem:[%s0 + $0xa68] sm:$0xff]
  %v351 = vld [vmem:[%s0 + $0xa70] sm:$0xff]
  %v352 = vld [vmem:[%s0 + $0xa78] sm:$0xff]
  %v353 = vld [vmem:[%s0 + $0xa80] sm:$0xff]
  %v354 = vld [vmem:[%s0 + $0xa88] sm:$0xff]
  %v355 = vld [vmem:[%s0 + $0xa90] sm:$0xff]
  %v356 = vld [vmem:[%s0 + $0xa98] sm:$0xff]
  %v357 = vld [vmem:[%s0 + $0xaa0] sm:$0xff]
  %v358 = vld [vmem:[%s0 + $0xaa8] sm:$0xff]
  %v359 = vld [vmem:[%s0 + $0xab0] sm:$0xff]
  %v360 = vld [vmem:[%s0 + $0xab8] sm:$0xff]
  %v361 = vld [vmem:[%s0 + $0xac0] sm:$0xff]
  %v362 = vld [vmem:[%s0 + $0xac8] sm:$0xff]
  %v363 = vld [vmem:[%s0 + $0xad0] sm:$0xff]
  %v364 = vld [vmem:[%s0 + $0xad8] sm:$0xff]
  %v365 = vld [vmem:[%s0 + $0xae0] sm:$0xff]
  %v366 = vld [vmem:[%s0 + $0xae8] sm:$0xff]
  %v367 = vld [vmem:[%s0 + $0xaf0] sm:$0xff]
  %v368 = vld [vmem:[%s0 + $0xaf8] sm:$0xff]
  %v369 = vld [vmem:[%s0 + $0xb00] sm:$0xff]
  %v370 = vld [vmem:[%s0 + $0xb08] sm:$0xff]
  %v371 = vld [vmem:[%s0 + $0xb10] sm:$0xff]
  %v372 = vld [vmem:[%s0 + $0xb18] sm:$0xff]
  %v373 = vld [vmem:[%s0 + $0xb20] sm:$0xff]
  %v374 = vld [vmem:[%s0 + $0xb28] sm:$0xff]
  %v375 = vld [vmem:[%s0 + $0xb30] sm:$0xff]
  %v376 = vld [vmem:[%s0 + $0xb38] sm:$0xff]
  %v377 = vld [vmem:[%s0 + $0xb40] sm:$0xff]
  %v378 = vld [vmem:[%s0 + $0xb48] sm:$0xff]
  %v379 = vld [vmem:[%s0 + $0xb50] sm:$0xff]
  %v380 = vld [vmem:[%s0 + $0xb58] sm:$0xff]
  %v381 = vld [vmem:[%s0 + $0xb60] sm:$0xff]
  %v382 = vld [vmem:[%s0 + $0xb68] sm:$0xff]
  %v383 = vld [vmem:[%s0 + $0xb70] sm:$0xff]
  %v384 = vld [vmem:[%s0 + $0xb78] sm:$0xff]
  %v385 = vld [vmem:[%s0 + $0xb80] sm:$0xff]
  %v386 = vld [vmem:[%s0 + $0xb88] sm:$0xff]
  %v387 = vld [vmem:[%s0 + $0xb90] sm:$0xff]
  %v388 = vld [vmem:[%s0 + $0xb98] sm:$0xff]
  %v389 = vld [vmem:[%s0 + $0xba0] sm:$0xff]
  %v390 = vld [vmem:[%s0 + $0xba8] sm:$0xff]
  %v391 = vld [vmem:[%s0 + $0xbb0] sm:$0xff]
  %v392 = vld [vmem:[%s0 + $0xbb8] sm:$0xff]
  %v393 = vld [vmem:[%s0 + $0xbc0] sm:$0xff]
  %v394 = vld [vmem:[%s0 + $0xbc8] sm:$0xff]
  %v395 = vld [vmem:[%s0 + $0xbd0] sm:$0xff]
  %v396 = vld [vmem:[%s0 + $0xbd8] sm:$0xff]
  %v397 = vld [vmem:[%s0 + $0xbe0] sm:$0xff]
  %v398 = vld [vmem:[%s0 + $0xbe8] sm:$0xff]
  %v399 = vld [vmem:[%s0 + $0xbf0] sm:$0xff]
  %v400 = vld [vmem:[%s0 + $0xbf8] sm:$0xff]
  %v401 = vld [vmem:[%s0 + $0xc00] sm:$0xff]
  %v402 = vld [vmem:[%s0 + $0xc08] sm:$0xff]
  %v403 = vld [vmem:[%s0 + $0xc10] sm:$0xff]
  %v404 = vld [vmem:[%s0 + $0xc18] sm:$0xff]
  %v405 = vld [vmem:[%s0 + $0xc20] sm:$0xff]
  %v406 = vld [vmem:[%s0 + $0xc28] sm:$0xff]
  %v407 = vld [vmem:[%s0 + $0xc30] sm:$0xff]
  %v408 = vld [vmem:[%s0 + $0xc38] sm:$0xff]
  %v409 = vld [vmem:[%s0 + $0xc40] sm:$0xff]
  %v410 = vld [vmem:[%s0 + $0xc48] sm:$0xff]
  %v411 = vld [vmem:[%s0 + $0xc50] sm:$0xff]
  %v412 = vld [vmem:[%s0 + $0xc58] sm:$0xff]
  %v413 = vld [vmem:[%s0 + $0xc60] sm:$0xff]
  %v414 = vld [vmem:[%s0 + $0xc68] sm:$0xff]
  %v415 = vld [vmem:[%s0 + $0xc70] sm:$0xff]
  %v416 = vld [vmem:[%s0 + $0xc78] sm:$0xff]
  %v417 = vld [vmem:[%s0 + $0xc80] sm:$0xff]
  %v418 = vld [vmem:[%s0 + $0xc88] sm:$0xff]
  %v419 = vld [vmem:[%s0 + $0xc90] sm:$0xff]
  %v420 = vld [vmem:[%s0 + $0xc98] sm:$0xff]
  %v421 = vld [vmem:[%s0 + $0xca0] sm:$0xff]
  %v422 = vld [vmem:[%s0 + $0xca8] sm:$0xff]
  %v423 = vld [vmem:[%s0 + $0xcb0] sm:$0xff]
  %v424 = vld [vmem:[%s0 + $0xcb8] sm:$0xff]
  %v425 = vld [vmem:[%s0 + $0xcc0] sm:$0xff]
  %v426 = vld [vmem:[%s0 + $0xcc8] sm:$0xff]
  %v427 = vld [vmem:[%s0 + $0xcd0] sm:$0xff]
  %v428 = vld [vmem:[%s0 + $0xcd8] sm:$0xff]
  %v429 = vld [vmem:[%s0 + $0xce0] sm:$0xff]
  %v430 = vld [vmem:[%s0 + $0xce8] sm:$0xff]
  %v431 = vld [vmem:[%s0 + $0xcf0] sm:$0xff]
  %v432 = vld [vmem:[%s0 + $0xcf8] sm:$0xff]
  %v433 = vld [vmem:[%s0 + $0xd00] sm:$0xff]
  %v434 = vld [vmem:[%s0 + $0xd08] sm:$0xff]
  %v435 = vld [vmem:[%s0 + $0xd10] sm:$0xff]
  %v436 = vld [vmem:[%s0 + $0xd18] sm:$0xff]
  %v437 = vld [vmem:[%s0 + $0xd20] sm:$0xff]
  %v438 = vld [vmem:[%s0 + $0xd28] sm:$0xff]
  %v439 = vld [vmem:[%s0 + $0xd30] sm:$0xff]
  %v440 = vld [vmem:[%s0 + $0xd38] sm:$0xff]
  %v441 = vld [vmem:[%s0 + $0xd40] sm:$0xff]
  %v442 = vld [vmem:[%s0 + $0xd48] sm:$0xff]
  %v443 = vld [vmem:[%s0 + $0xd50] sm:$0xff]
  %v444 = vld [vmem:[%s0 + $0xd58] sm:$0xff]
  %v445 = vld [vmem:[%s0 + $0xd60] sm:$0xff]
  %v446 = vld [vmem:[%s0 + $0xd68] sm:$0xff]
  %v447 = vld [vmem:[%s0 + $0xd70] sm:$0xff]
  %v448 = vld [vmem:[%s0 + $0xd78] sm:$0xff]
  %v449 = vld [vmem:[%s0 + $0xd80] sm:$0xff]
  %v450 = vld [vmem:[%s0 + $0xd88] sm:$0xff]
  %v451 = vld [vmem:[%s0 + $0xd90] sm:$0xff]
  %v452 = vld [vmem:[%s0 + $0xd98] sm:$0xff]
  %v453 = vld [vmem:[%s0 + $0xda0] sm:$0xff]
  %v454 = vld [vmem:[%s0 + $0xda8] sm:$0xff]
  %v455 = vld [vmem:[%s0 + $0xdb0] sm:$0xff]
  %v456 = vld [vmem:[%s0 + $0xdb8] sm:$0xff]
  %v457 = vld [vmem:[%s0 + $0xdc0] sm:$0xff]
  %v458 = vld [vmem:[%s0 + $0xdc8] sm:$0xff]
  %v459 = vld [vmem:[%s0 + $0xdd0] sm:$0xff]
  %v460 = vld [vmem:[%s0 + $0xdd8] sm:$0xff]
  %v461 = vld [vmem:[%s0 + $0xde0] sm:$0xff]
  %v462 = vld [vmem:[%s0 + $0xde8] sm:$0xff]
  %v463 = vld [vmem:[%s0 + $0xdf0] sm:$0xff]
  %v464 = vld [vmem:[%s0 + $0xdf8] sm:$0xff]
  %v465 = vld [vmem:[%s0 + $0xe00] sm:$0xff]
  %v466 = vld [vmem:[%s0 + $0xe08] sm:$0xff]
  %v467 = vld [vmem:[%s0 + $0xe10] sm:$0xff]
  %v468 = vld [vmem:[%s0 + $0xe18] sm:$0xff]
  %v469 = vld [vmem:[%s0 + $0xe20] sm:$0xff]
  %v470 = vld [vmem:[%s0 + $0xe28] sm:$0xff]
  %v471 = vld [vmem:[%s0 + $0xe30] sm:$0xff]
  %v472 = vld [vmem:[%s0 + $0xe38] sm:$0xff]
  %v473 = vld [vmem:[%s0 + $0xe40] sm:$0xff]
  %v474 = vld [vmem:[%s0 + $0xe48] sm:$0xff]
  %v475 = vld [vmem:[%s0 + $0xe50] sm:$0xff]
  %v476 = vld [vmem:[%s0 + $0xe58] sm:$0xff]
  %v477 = vld [vmem:[%s0 + $0xe60] sm:$0xff]
  %v478 = vld [vmem:[%s0 + $0xe68] sm:$0xff]
  %v479 = vld [vmem:[%s0 + $0xe70] sm:$0xff]
  %v480 = vld [vmem:[%s0 + $0xe78] sm:$0xff]
  %v481 = vld [vmem:[%s0 + $0xe80] sm:$0xff]
  %v482 = vld [vmem:[%s0 + $0xe88] sm:$0xff]
  %v483 = vld [vmem:[%s0 + $0xe90] sm:$0xff]
  %v484 = vld [vmem:[%s0 + $0xe98] sm:$0xff]
  %v485 = vld [vmem:[%s0 + $0xea0] sm:$0xff]
  %v486 = vld [vmem:[%s0 + $0xea8] sm:$0xff]
  %v487 = vld [vmem:[%s0 + $0xeb0] sm:$0xff]
  %v488 = vld [vmem:[%s0 + $0xeb8] sm:$0xff]
  %v489 = vld [vmem:[%s0 + $0xec0] sm:$0xff]
  %v490 = vld [vmem:[%s0 + $0xec8] sm:$0xff]
  %v491 = vld [vmem:[%s0 + $0xed0] sm:$0xff]
  %v492 = vld [vmem:[%s0 + $0xed8] sm:$0xff]
  %v493 = vld [vmem:[%s0 + $0xee0] sm:$0xff]
  %v494 = vld [vmem:[%s0 + $0xee8] sm:$0xff]
  %v495 = vld [vmem:[%s0 + $0xef0] sm:$0xff]
  %v496 = vld [vmem:[%s0 + $0xef8] sm:$0xff]
  %v497 = vld [vmem:[%s0 + $0xf00] sm:$0xff]
  %v498 = vld [vmem:[%s0 + $0xf08] sm:$0xff]
  %v499 = vld [vmem:[%s0 + $0xf10] sm:$0xff]
  %v500 = vld [vmem:[%s0 + $0xf18] sm:$0xff]
  %v501 = vld [vmem:[%s0 + $0xf20] sm:$0xff]
  %v502 = vld [vmem:[%s0 + $0xf28] sm:$0xff]
  %v503 = vld [vmem:[%s0 + $0xf30] sm:$0xff]
  %v504 = vld [vmem:[%s0 + $0xf38] sm:$0xff]
  %v505 = vld [vmem:[%s0 + $0xf40] sm:$0xff]
  %v506 = vld [vmem:[%s0 + $0xf48] sm:$0xff]
  %v507 = vld [vmem:[%s0 + $0xf50] sm:$0xff]
  %v508 = vld [vmem:[%s0 + $0xf58] sm:$0xff]
  %v509 = vld [vmem:[%s0 + $0xf60] sm:$0xff]
  %v510 = vld [vmem:[%s0 + $0xf68] sm:$0xff]
  %v511 = vld [vmem:[%s0 + $0xf70] sm:$0xff]
  %v512 = vld [vmem:[%s0 + $0xf78] sm:$0xff]
  %v513 = vld [vmem:[%s0 + $0xf80] sm:$0xff]
  %v514 = vld [vmem:[%s0 + $0xf88] sm:$0xff]
  %v515 = vld [vmem:[%s0 + $0xf90] sm:$0xff]
  %v516 = vld [vmem:[%s0 + $0xf98] sm:$0xff]
  %v517 = vld [vmem:[%s0 + $0xfa0] sm:$0xff]
  %v518 = vld [vmem:[%s0 + $0xfa8] sm:$0xff]
  %v519 = vld [vmem:[%s0 + $0xfb0] sm:$0xff]
  %v520 = vld [vmem:[%s0 + $0xfb8] sm:$0xff]
  %v521 = vld [vmem:[%s0 + $0xfc0] sm:$0xff]
  %v522 = vld [vmem:[%s0 + $0xfc8] sm:$0xff]
  %v523 = vld [vmem:[%s0 + $0xfd0] sm:$0xff]
  %v524 = vld [vmem:[%s0 + $0xfd8] sm:$0xff]
  %v525 = vld [vmem:[%s0 + $0xfe0] sm:$0xff]
  %v526 = vld [vmem:[%s0 + $0xfe8] sm:$0xff]
  %v527 = vld [vmem:[%s0 + $0xff0] sm:$0xff]
  %v528 = vld [vmem:[%s0 + $0xff8] sm:$0xff]
  %v529 = vld [vmem:[%s1] sm:$0xf]
  %v530 = vld [vmem:[%s1 + $0x4] sm:$0xf]
  %v531 = vld [vmem:[%s1 + $0x8] sm:$0xf]
  %v532 = vld [vmem:[%s1 + $0xc] sm:$0xf]
  %v533 = vld [vmem:[%s1 + $0x10] sm:$0xf]
  %v534 = vld [vmem:[%s1 + $0x14] sm:$0xf]
  %v535 = vld [vmem:[%s1 + $0x18] sm:$0xf]
  %v536 = vld [vmem:[%s1 + $0x1c] sm:$0xf]
  %v537 = vld [vmem:[%s1 + $0x20] sm:$0xf]
  %v538 = vld [vmem:[%s1 + $0x24] sm:$0xf]
  %v539 = vld [vmem:[%s1 + $0x28] sm:$0xf]
  %v540 = vld [vmem:[%s1 + $0x2c] sm:$0xf]
  %v541 = vld [vmem:[%s1 + $0x30] sm:$0xf]
  %v542 = vld [vmem:[%s1 + $0x34] sm:$0xf]
  %v543 = vld [vmem:[%s1 + $0x38] sm:$0xf]
  %v544 = vld [vmem:[%s1 + $0x3c] sm:$0xf]
  %v545 = vld [vmem:[%s1 + $0x40] sm:$0xf]
  %v546 = vld [vmem:[%s1 + $0x44] sm:$0xf]
  %v547 = vld [vmem:[%s1 + $0x48] sm:$0xf]
  %v548 = vld [vmem:[%s1 + $0x4c] sm:$0xf]
  %v549 = vld [vmem:[%s1 + $0x50] sm:$0xf]
  %v550 = vld [vmem:[%s1 + $0x54] sm:$0xf]
  %v551 = vld [vmem:[%s1 + $0x58] sm:$0xf]
  %v552 = vld [vmem:[%s1 + $0x5c] sm:$0xf]
  %v553 = vld [vmem:[%s1 + $0x60] sm:$0xf]
  %v554 = vld [vmem:[%s1 + $0x64] sm:$0xf]
  %v555 = vld [vmem:[%s1 + $0x68] sm:$0xf]
  %v556 = vld [vmem:[%s1 + $0x6c] sm:$0xf]
  %v557 = vld [vmem:[%s1 + $0x70] sm:$0xf]
  %v558 = vld [vmem:[%s1 + $0x74] sm:$0xf]
  %v559 = vld [vmem:[%s1 + $0x78] sm:$0xf]
  %v560 = vld [vmem:[%s1 + $0x7c] sm:$0xf]
  %v561 = vld [vmem:[%s1 + $0x80] sm:$0xf]
  %v562 = vld [vmem:[%s1 + $0x84] sm:$0xf]
  %v563 = vld [vmem:[%s1 + $0x88] sm:$0xf]
  %v564 = vld [vmem:[%s1 + $0x8c] sm:$0xf]
  %v565 = vld [vmem:[%s1 + $0x90] sm:$0xf]
  %v566 = vld [vmem:[%s1 + $0x94] sm:$0xf]
  %v567 = vld [vmem:[%s1 + $0x98] sm:$0xf]
  %v568 = vld [vmem:[%s1 + $0x9c] sm:$0xf]
  %v569 = vld [vmem:[%s1 + $0xa0] sm:$0xf]
  %v570 = vld [vmem:[%s1 + $0xa4] sm:$0xf]
  %v571 = vld [vmem:[%s1 + $0xa8] sm:$0xf]
  %v572 = vld [vmem:[%s1 + $0xac] sm:$0xf]
  %v573 = vld [vmem:[%s1 + $0xb0] sm:$0xf]
  %v574 = vld [vmem:[%s1 + $0xb4] sm:$0xf]
  %v575 = vld [vmem:[%s1 + $0xb8] sm:$0xf]
  %v576 = vld [vmem:[%s1 + $0xbc] sm:$0xf]
  %v577 = vld [vmem:[%s1 + $0xc0] sm:$0xf]
  %v578 = vld [vmem:[%s1 + $0xc4] sm:$0xf]
  %v579 = vld [vmem:[%s1 + $0xc8] sm:$0xf]
  %v580 = vld [vmem:[%s1 + $0xcc] sm:$0xf]
  %v581 = vld [vmem:[%s1 + $0xd0] sm:$0xf]
  %v582 = vld [vmem:[%s1 + $0xd4] sm:$0xf]
  %v583 = vld [vmem:[%s1 + $0xd8] sm:$0xf]
  %v584 = vld [vmem:[%s1 + $0xdc] sm:$0xf]
  %v585 = vld [vmem:[%s1 + $0xe0] sm:$0xf]
  %v586 = vld [vmem:[%s1 + $0xe4] sm:$0xf]
  %v587 = vld [vmem:[%s1 + $0xe8] sm:$0xf]
  %v588 = vld [vmem:[%s1 + $0xec] sm:$0xf]
  %v589 = vld [vmem:[%s1 + $0xf0] sm:$0xf]
  %v590 = vld [vmem:[%s1 + $0xf4] sm:$0xf]
  %v591 = vld [vmem:[%s1 + $0xf8] sm:$0xf]
  %v592 = vld [vmem:[%s1 + $0xfc] sm:$0xf]
  %v593 = vld [vmem:[%s1 + $0x100] sm:$0xf]
  %v594 = vld [vmem:[%s1 + $0x104] sm:$0xf]
  %v595 = vld [vmem:[%s1 + $0x108] sm:$0xf]
  %v596 = vld [vmem:[%s1 + $0x10c] sm:$0xf]
  %v597 = vld [vmem:[%s1 + $0x110] sm:$0xf]
  %v598 = vld [vmem:[%s1 + $0x114] sm:$0xf]
  %v599 = vld [vmem:[%s1 + $0x118] sm:$0xf]
  %v600 = vld [vmem:[%s1 + $0x11c] sm:$0xf]
  %v601 = vld [vmem:[%s1 + $0x120] sm:$0xf]
  %v602 = vld [vmem:[%s1 + $0x124] sm:$0xf]
  %v603 = vld [vmem:[%s1 + $0x128] sm:$0xf]
  %v604 = vld [vmem:[%s1 + $0x12c] sm:$0xf]
  %v605 = vld [vmem:[%s1 + $0x130] sm:$0xf]
  %v606 = vld [vmem:[%s1 + $0x134] sm:$0xf]
  %v607 = vld [vmem:[%s1 + $0x138] sm:$0xf]
  %v608 = vld [vmem:[%s1 + $0x13c] sm:$0xf]
  %v609 = vld [vmem:[%s1 + $0x140] sm:$0xf]
  %v610 = vld [vmem:[%s1 + $0x144] sm:$0xf]
  %v611 = vld [vmem:[%s1 + $0x148] sm:$0xf]
  %v612 = vld [vmem:[%s1 + $0x14c] sm:$0xf]
  %v613 = vld [vmem:[%s1 + $0x150] sm:$0xf]
  %v614 = vld [vmem:[%s1 + $0x154] sm:$0xf]
  %v615 = vld [vmem:[%s1 + $0x158] sm:$0xf]
  %v616 = vld [vmem:[%s1 + $0x15c] sm:$0xf]
  %v617 = vld [vmem:[%s1 + $0x160] sm:$0xf]
  %v618 = vld [vmem:[%s1 + $0x164] sm:$0xf]
  %v619 = vld [vmem:[%s1 + $0x168] sm:$0xf]
  %v620 = vld [vmem:[%s1 + $0x16c] sm:$0xf]
  %v621 = vld [vmem:[%s1 + $0x170] sm:$0xf]
  %v622 = vld [vmem:[%s1 + $0x174] sm:$0xf]
  %v623 = vld [vmem:[%s1 + $0x178] sm:$0xf]
  %v624 = vld [vmem:[%s1 + $0x17c] sm:$0xf]
  %v625 = vld [vmem:[%s1 + $0x180] sm:$0xf]
  %v626 = vld [vmem:[%s1 + $0x184] sm:$0xf]
  %v627 = vld [vmem:[%s1 + $0x188] sm:$0xf]
  %v628 = vld [vmem:[%s1 + $0x18c] sm:$0xf]
  %v629 = vld [vmem:[%s1 + $0x190] sm:$0xf]
  %v630 = vld [vmem:[%s1 + $0x194] sm:$0xf]
  %v631 = vld [vmem:[%s1 + $0x198] sm:$0xf]
  %v632 = vld [vmem:[%s1 + $0x19c] sm:$0xf]
  %v633 = vld [vmem:[%s1 + $0x1a0] sm:$0xf]
  %v634 = vld [vmem:[%s1 + $0x1a4] sm:$0xf]
  %v635 = vld [vmem:[%s1 + $0x1a8] sm:$0xf]
  %v636 = vld [vmem:[%s1 + $0x1ac] sm:$0xf]
  %v637 = vld [vmem:[%s1 + $0x1b0] sm:$0xf]
  %v638 = vld [vmem:[%s1 + $0x1b4] sm:$0xf]
  %v639 = vld [vmem:[%s1 + $0x1b8] sm:$0xf]
  %v640 = vld [vmem:[%s1 + $0x1bc] sm:$0xf]
  %v641 = vld [vmem:[%s1 + $0x1c0] sm:$0xf]
  %v642 = vld [vmem:[%s1 + $0x1c4] sm:$0xf]
  %v643 = vld [vmem:[%s1 + $0x1c8] sm:$0xf]
  %v644 = vld [vmem:[%s1 + $0x1cc] sm:$0xf]
  %v645 = vld [vmem:[%s1 + $0x1d0] sm:$0xf]
  %v646 = vld [vmem:[%s1 + $0x1d4] sm:$0xf]
  %v647 = vld [vmem:[%s1 + $0x1d8] sm:$0xf]
  %v648 = vld [vmem:[%s1 + $0x1dc] sm:$0xf]
  %v649 = vld [vmem:[%s1 + $0x1e0] sm:$0xf]
  %v650 = vld [vmem:[%s1 + $0x1e4] sm:$0xf]
  %v651 = vld [vmem:[%s1 + $0x1e8] sm:$0xf]
  %v652 = vld [vmem:[%s1 + $0x1ec] sm:$0xf]
  %v653 = vld [vmem:[%s1 + $0x1f0] sm:$0xf]
  %v654 = vld [vmem:[%s1 + $0x1f4] sm:$0xf]
  %v655 = vld [vmem:[%s1 + $0x1f8] sm:$0xf]
  %v656 = vld [vmem:[%s1 + $0x1fc] sm:$0xf]
  %v657 = vld [vmem:[%s1 + $0x200] sm:$0xf]
  %v658 = vld [vmem:[%s1 + $0x204] sm:$0xf]
  %v659 = vld [vmem:[%s1 + $0x208] sm:$0xf]
  %v660 = vld [vmem:[%s1 + $0x20c] sm:$0xf]
  %v661 = vld [vmem:[%s1 + $0x210] sm:$0xf]
  %v662 = vld [vmem:[%s1 + $0x214] sm:$0xf]
  %v663 = vld [vmem:[%s1 + $0x218] sm:$0xf]
  %v664 = vld [vmem:[%s1 + $0x21c] sm:$0xf]
  %v665 = vld [vmem:[%s1 + $0x220] sm:$0xf]
  %v666 = vld [vmem:[%s1 + $0x224] sm:$0xf]
  %v667 = vld [vmem:[%s1 + $0x228] sm:$0xf]
  %v668 = vld [vmem:[%s1 + $0x22c] sm:$0xf]
  %v669 = vld [vmem:[%s1 + $0x230] sm:$0xf]
  %v670 = vld [vmem:[%s1 + $0x234] sm:$0xf]
  %v671 = vld [vmem:[%s1 + $0x238] sm:$0xf]
  %v672 = vld [vmem:[%s1 + $0x23c] sm:$0xf]
  %v673 = vld [vmem:[%s1 + $0x240] sm:$0xf]
  %v674 = vld [vmem:[%s1 + $0x244] sm:$0xf]
  %v675 = vld [vmem:[%s1 + $0x248] sm:$0xf]
  %v676 = vld [vmem:[%s1 + $0x24c] sm:$0xf]
  %v677 = vld [vmem:[%s1 + $0x250] sm:$0xf]
  %v678 = vld [vmem:[%s1 + $0x254] sm:$0xf]
  %v679 = vld [vmem:[%s1 + $0x258] sm:$0xf]
  %v680 = vld [vmem:[%s1 + $0x25c] sm:$0xf]
  %v681 = vld [vmem:[%s1 + $0x260] sm:$0xf]
  %v682 = vld [vmem:[%s1 + $0x264] sm:$0xf]
  %v683 = vld [vmem:[%s1 + $0x268] sm:$0xf]
  %v684 = vld [vmem:[%s1 + $0x26c] sm:$0xf]
  %v685 = vld [vmem:[%s1 + $0x270] sm:$0xf]
  %v686 = vld [vmem:[%s1 + $0x274] sm:$0xf]
  %v687 = vld [vmem:[%s1 + $0x278] sm:$0xf]
  %v688 = vld [vmem:[%s1 + $0x27c] sm:$0xf]
  %v689 = vld [vmem:[%s1 + $0x280] sm:$0xf]
  %v690 = vld [vmem:[%s1 + $0x284] sm:$0xf]
  %v691 = vld [vmem:[%s1 + $0x288] sm:$0xf]
  %v692 = vld [vmem:[%s1 + $0x28c] sm:$0xf]
  %v693 = vld [vmem:[%s1 + $0x290] sm:$0xf]
  %v694 = vld [vmem:[%s1 + $0x294] sm:$0xf]
  %v695 = vld [vmem:[%s1 + $0x298] sm:$0xf]
  %v696 = vld [vmem:[%s1 + $0x29c] sm:$0xf]
  %v697 = vld [vmem:[%s1 + $0x2a0] sm:$0xf]
  %v698 = vld [vmem:[%s1 + $0x2a4] sm:$0xf]
  %v699 = vld [vmem:[%s1 + $0x2a8] sm:$0xf]
  %v700 = vld [vmem:[%s1 + $0x2ac] sm:$0xf]
  %v701 = vld [vmem:[%s1 + $0x2b0] sm:$0xf]
  %v702 = vld [vmem:[%s1 + $0x2b4] sm:$0xf]
  %v703 = vld [vmem:[%s1 + $0x2b8] sm:$0xf]
  %v704 = vld [vmem:[%s1 + $0x2bc] sm:$0xf]
  %v705 = vld [vmem:[%s1 + $0x2c0] sm:$0xf]
  %v706 = vld [vmem:[%s1 + $0x2c4] sm:$0xf]
  %v707 = vld [vmem:[%s1 + $0x2c8] sm:$0xf]
  %v708 = vld [vmem:[%s1 + $0x2cc] sm:$0xf]
  %v709 = vld [vmem:[%s1 + $0x2d0] sm:$0xf]
  %v710 = vld [vmem:[%s1 + $0x2d4] sm:$0xf]
  %v711 = vld [vmem:[%s1 + $0x2d8] sm:$0xf]
  %v712 = vld [vmem:[%s1 + $0x2dc] sm:$0xf]
  %v713 = vld [vmem:[%s1 + $0x2e0] sm:$0xf]
  %v714 = vld [vmem:[%s1 + $0x2e4] sm:$0xf]
  %v715 = vld [vmem:[%s1 + $0x2e8] sm:$0xf]
  %v716 = vld [vmem:[%s1 + $0x2ec] sm:$0xf]
  %v717 = vld [vmem:[%s1 + $0x2f0] sm:$0xf]
  %v718 = vld [vmem:[%s1 + $0x2f4] sm:$0xf]
  %v719 = vld [vmem:[%s1 + $0x2f8] sm:$0xf]
  %v720 = vld [vmem:[%s1 + $0x2fc] sm:$0xf]
  %v721 = vld [vmem:[%s1 + $0x300] sm:$0xf]
  %v722 = vld [vmem:[%s1 + $0x304] sm:$0xf]
  %v723 = vld [vmem:[%s1 + $0x308] sm:$0xf]
  %v724 = vld [vmem:[%s1 + $0x30c] sm:$0xf]
  %v725 = vld [vmem:[%s1 + $0x310] sm:$0xf]
  %v726 = vld [vmem:[%s1 + $0x314] sm:$0xf]
  %v727 = vld [vmem:[%s1 + $0x318] sm:$0xf]
  %v728 = vld [vmem:[%s1 + $0x31c] sm:$0xf]
  %v729 = vld [vmem:[%s1 + $0x320] sm:$0xf]
  %v730 = vld [vmem:[%s1 + $0x324] sm:$0xf]
  %v731 = vld [vmem:[%s1 + $0x328] sm:$0xf]
  %v732 = vld [vmem:[%s1 + $0x32c] sm:$0xf]
  %v733 = vld [vmem:[%s1 + $0x330] sm:$0xf]
  %v734 = vld [vmem:[%s1 + $0x334] sm:$0xf]
  %v735 = vld [vmem:[%s1 + $0x338] sm:$0xf]
  %v736 = vld [vmem:[%s1 + $0x33c] sm:$0xf]
  %v737 = vld [vmem:[%s1 + $0x340] sm:$0xf]
  %v738 = vld [vmem:[%s1 + $0x344] sm:$0xf]
  %v739 = vld [vmem:[%s1 + $0x348] sm:$0xf]
  %v740 = vld [vmem:[%s1 + $0x34c] sm:$0xf]
  %v741 = vld [vmem:[%s1 + $0x350] sm:$0xf]
  %v742 = vld [vmem:[%s1 + $0x354] sm:$0xf]
  %v743 = vld [vmem:[%s1 + $0x358] sm:$0xf]
  %v744 = vld [vmem:[%s1 + $0x35c] sm:$0xf]
  %v745 = vld [vmem:[%s1 + $0x360] sm:$0xf]
  %v746 = vld [vmem:[%s1 + $0x364] sm:$0xf]
  %v747 = vld [vmem:[%s1 + $0x368] sm:$0xf]
  %v748 = vld [vmem:[%s1 + $0x36c] sm:$0xf]
  %v749 = vld [vmem:[%s1 + $0x370] sm:$0xf]
  %v750 = vld [vmem:[%s1 + $0x374] sm:$0xf]
  %v751 = vld [vmem:[%s1 + $0x378] sm:$0xf]
  %v752 = vld [vmem:[%s1 + $0x37c] sm:$0xf]
  %v753 = vld [vmem:[%s1 + $0x380] sm:$0xf]
  %v754 = vld [vmem:[%s1 + $0x384] sm:$0xf]
  %v755 = vld [vmem:[%s1 + $0x388] sm:$0xf]
  %v756 = vld [vmem:[%s1 + $0x38c] sm:$0xf]
  %v757 = vld [vmem:[%s1 + $0x390] sm:$0xf]
  %v758 = vld [vmem:[%s1 + $0x394] sm:$0xf]
  %v759 = vld [vmem:[%s1 + $0x398] sm:$0xf]
  %v760 = vld [vmem:[%s1 + $0x39c] sm:$0xf]
  %v761 = vld [vmem:[%s1 + $0x3a0] sm:$0xf]
  %v762 = vld [vmem:[%s1 + $0x3a4] sm:$0xf]
  %v763 = vld [vmem:[%s1 + $0x3a8] sm:$0xf]
  %v764 = vld [vmem:[%s1 + $0x3ac] sm:$0xf]
  %v765 = vld [vmem:[%s1 + $0x3b0] sm:$0xf]
  %v766 = vld [vmem:[%s1 + $0x3b4] sm:$0xf]
  %v767 = vld [vmem:[%s1 + $0x3b8] sm:$0xf]
  %v768 = vld [vmem:[%s1 + $0x3bc] sm:$0xf]
  %v769 = vld [vmem:[%s1 + $0x3c0] sm:$0xf]
  %v770 = vld [vmem:[%s1 + $0x3c4] sm:$0xf]
  %v771 = vld [vmem:[%s1 + $0x3c8] sm:$0xf]
  %v772 = vld [vmem:[%s1 + $0x3cc] sm:$0xf]
  %v773 = vld [vmem:[%s1 + $0x3d0] sm:$0xf]
  %v774 = vld [vmem:[%s1 + $0x3d4] sm:$0xf]
  %v775 = vld [vmem:[%s1 + $0x3d8] sm:$0xf]
  %v776 = vld [vmem:[%s1 + $0x3dc] sm:$0xf]
  %v777 = vld [vmem:[%s1 + $0x3e0] sm:$0xf]
  %v778 = vld [vmem:[%s1 + $0x3e4] sm:$0xf]
  %v779 = vld [vmem:[%s1 + $0x3e8] sm:$0xf]
  %v780 = vld [vmem:[%s1 + $0x3ec] sm:$0xf]
  %v781 = vld [vmem:[%s1 + $0x3f0] sm:$0xf]
  %v782 = vld [vmem:[%s1 + $0x3f4] sm:$0xf]
  %v783 = vld [vmem:[%s1 + $0x3f8] sm:$0xf]
  %v784 = vld [vmem:[%s1 + $0x3fc] sm:$0xf]
  %v1297 = vunpack.c.l.b16 %v17
  %v1298 = vunpack.c.h.b16 %v17
  %v1299 = vunpack.c.l.b16 %v18
  %v1300 = vunpack.c.h.b16 %v18
  %v1301 = vunpack.c.l.b16 %v19
  %v1302 = vunpack.c.h.b16 %v19
  %v1303 = vunpack.c.l.b16 %v20
  %v1304 = vunpack.c.h.b16 %v20
  %v1305 = vunpack.c.l.b16 %v21
  %v1306 = vunpack.c.h.b16 %v21
  %v1307 = vunpack.c.l.b16 %v22
  %v1308 = vunpack.c.h.b16 %v22
  %v1309 = vunpack.c.l.b16 %v23
  %v1310 = vunpack.c.h.b16 %v23
  %v1311 = vunpack.c.l.b16 %v24
  %v1312 = vunpack.c.h.b16 %v24
  %v1313 = vunpack.c.l.b16 %v25
  %v1314 = vunpack.c.h.b16 %v25
  %v1315 = vunpack.c.l.b16 %v26
  %v1316 = vunpack.c.h.b16 %v26
  %v1317 = vunpack.c.l.b16 %v27
  %v1318 = vunpack.c.h.b16 %v27
  %v1319 = vunpack.c.l.b16 %v28
  %v1320 = vunpack.c.h.b16 %v28
  %v1321 = vunpack.c.l.b16 %v29
  %v1322 = vunpack.c.h.b16 %v29
  %v1323 = vunpack.c.l.b16 %v30
  %v1324 = vunpack.c.h.b16 %v30
  %v1325 = vunpack.c.l.b16 %v31
  %v1326 = vunpack.c.h.b16 %v31
  %v1327 = vunpack.c.l.b16 %v32
  %v1328 = vunpack.c.h.b16 %v32
  %v1329 = vunpack.c.l.b16 %v33
  %v1330 = vunpack.c.h.b16 %v33
  %v1331 = vunpack.c.l.b16 %v34
  %v1332 = vunpack.c.h.b16 %v34
  %v1333 = vunpack.c.l.b16 %v35
  %v1334 = vunpack.c.h.b16 %v35
  %v1335 = vunpack.c.l.b16 %v36
  %v1336 = vunpack.c.h.b16 %v36
  %v1337 = vunpack.c.l.b16 %v37
  %v1338 = vunpack.c.h.b16 %v37
  %v1339 = vunpack.c.l.b16 %v38
  %v1340 = vunpack.c.h.b16 %v38
  %v1341 = vunpack.c.l.b16 %v39
  %v1342 = vunpack.c.h.b16 %v39
  %v1343 = vunpack.c.l.b16 %v40
  %v1344 = vunpack.c.h.b16 %v40
  %v1345 = vunpack.c.l.b16 %v41
  %v1346 = vunpack.c.h.b16 %v41
  %v1347 = vunpack.c.l.b16 %v42
  %v1348 = vunpack.c.h.b16 %v42
  %v1349 = vunpack.c.l.b16 %v43
  %v1350 = vunpack.c.h.b16 %v43
  %v1351 = vunpack.c.l.b16 %v44
  %v1352 = vunpack.c.h.b16 %v44
  %v1353 = vunpack.c.l.b16 %v45
  %v1354 = vunpack.c.h.b16 %v45
  %v1355 = vunpack.c.l.b16 %v46
  %v1356 = vunpack.c.h.b16 %v46
  %v1357 = vunpack.c.l.b16 %v47
  %v1358 = vunpack.c.h.b16 %v47
  %v1359 = vunpack.c.l.b16 %v48
  %v1360 = vunpack.c.h.b16 %v48
  %v1361 = vunpack.c.l.b16 %v49
  %v1362 = vunpack.c.h.b16 %v49
  %v1363 = vunpack.c.l.b16 %v50
  %v1364 = vunpack.c.h.b16 %v50
  %v1365 = vunpack.c.l.b16 %v51
  %v1366 = vunpack.c.h.b16 %v51
  %v1367 = vunpack.c.l.b16 %v52
  %v1368 = vunpack.c.h.b16 %v52
  %v1369 = vunpack.c.l.b16 %v53
  %v1370 = vunpack.c.h.b16 %v53
  %v1371 = vunpack.c.l.b16 %v54
  %v1372 = vunpack.c.h.b16 %v54
  %v1373 = vunpack.c.l.b16 %v55
  %v1374 = vunpack.c.h.b16 %v55
  %v1375 = vunpack.c.l.b16 %v56
  %v1376 = vunpack.c.h.b16 %v56
  %v1377 = vunpack.c.l.b16 %v57
  %v1378 = vunpack.c.h.b16 %v57
  %v1379 = vunpack.c.l.b16 %v58
  %v1380 = vunpack.c.h.b16 %v58
  %v1381 = vunpack.c.l.b16 %v59
  %v1382 = vunpack.c.h.b16 %v59
  %v1383 = vunpack.c.l.b16 %v60
  %v1384 = vunpack.c.h.b16 %v60
  %v1385 = vunpack.c.l.b16 %v61
  %v1386 = vunpack.c.h.b16 %v61
  %v1387 = vunpack.c.l.b16 %v62
  %v1388 = vunpack.c.h.b16 %v62
  %v1389 = vunpack.c.l.b16 %v63
  %v1390 = vunpack.c.h.b16 %v63
  %v1391 = vunpack.c.l.b16 %v64
  %v1392 = vunpack.c.h.b16 %v64
  %v1393 = vunpack.c.l.b16 %v65
  %v1394 = vunpack.c.h.b16 %v65
  %v1395 = vunpack.c.l.b16 %v66
  %v1396 = vunpack.c.h.b16 %v66
  %v1397 = vunpack.c.l.b16 %v67
  %v1398 = vunpack.c.h.b16 %v67
  %v1399 = vunpack.c.l.b16 %v68
  %v1400 = vunpack.c.h.b16 %v68
  %v1401 = vunpack.c.l.b16 %v69
  %v1402 = vunpack.c.h.b16 %v69
  %v1403 = vunpack.c.l.b16 %v70
  %v1404 = vunpack.c.h.b16 %v70
  %v1405 = vunpack.c.l.b16 %v71
  %v1406 = vunpack.c.h.b16 %v71
  %v1407 = vunpack.c.l.b16 %v72
  %v1408 = vunpack.c.h.b16 %v72
  %v1409 = vunpack.c.l.b16 %v73
  %v1410 = vunpack.c.h.b16 %v73
  %v1411 = vunpack.c.l.b16 %v74
  %v1412 = vunpack.c.h.b16 %v74
  %v1413 = vunpack.c.l.b16 %v75
  %v1414 = vunpack.c.h.b16 %v75
  %v1415 = vunpack.c.l.b16 %v76
  %v1416 = vunpack.c.h.b16 %v76
  %v1417 = vunpack.c.l.b16 %v77
  %v1418 = vunpack.c.h.b16 %v77
  %v1419 = vunpack.c.l.b16 %v78
  %v1420 = vunpack.c.h.b16 %v78
  %v1421 = vunpack.c.l.b16 %v79
  %v1422 = vunpack.c.h.b16 %v79
  %v1423 = vunpack.c.l.b16 %v80
  %v1424 = vunpack.c.h.b16 %v80
  %v1425 = vunpack.c.l.b16 %v81
  %v1426 = vunpack.c.h.b16 %v81
  %v1427 = vunpack.c.l.b16 %v82
  %v1428 = vunpack.c.h.b16 %v82
  %v1429 = vunpack.c.l.b16 %v83
  %v1430 = vunpack.c.h.b16 %v83
  %v1431 = vunpack.c.l.b16 %v84
  %v1432 = vunpack.c.h.b16 %v84
  %v1433 = vunpack.c.l.b16 %v85
  %v1434 = vunpack.c.h.b16 %v85
  %v1435 = vunpack.c.l.b16 %v86
  %v1436 = vunpack.c.h.b16 %v86
  %v1437 = vunpack.c.l.b16 %v87
  %v1438 = vunpack.c.h.b16 %v87
  %v1439 = vunpack.c.l.b16 %v88
  %v1440 = vunpack.c.h.b16 %v88
  %v1441 = vunpack.c.l.b16 %v89
  %v1442 = vunpack.c.h.b16 %v89
  %v1443 = vunpack.c.l.b16 %v90
  %v1444 = vunpack.c.h.b16 %v90
  %v1445 = vunpack.c.l.b16 %v91
  %v1446 = vunpack.c.h.b16 %v91
  %v1447 = vunpack.c.l.b16 %v92
  %v1448 = vunpack.c.h.b16 %v92
  %v1449 = vunpack.c.l.b16 %v93
  %v1450 = vunpack.c.h.b16 %v93
  %v1451 = vunpack.c.l.b16 %v94
  %v1452 = vunpack.c.h.b16 %v94
  %v1453 = vunpack.c.l.b16 %v95
  %v1454 = vunpack.c.h.b16 %v95
  %v1455 = vunpack.c.l.b16 %v96
  %v1456 = vunpack.c.h.b16 %v96
  %v1457 = vunpack.c.l.b16 %v97
  %v1458 = vunpack.c.h.b16 %v97
  %v1459 = vunpack.c.l.b16 %v98
  %v1460 = vunpack.c.h.b16 %v98
  %v1461 = vunpack.c.l.b16 %v99
  %v1462 = vunpack.c.h.b16 %v99
  %v1463 = vunpack.c.l.b16 %v100
  %v1464 = vunpack.c.h.b16 %v100
  %v1465 = vunpack.c.l.b16 %v101
  %v1466 = vunpack.c.h.b16 %v101
  %v1467 = vunpack.c.l.b16 %v102
  %v1468 = vunpack.c.h.b16 %v102
  %v1469 = vunpack.c.l.b16 %v103
  %v1470 = vunpack.c.h.b16 %v103
  %v1471 = vunpack.c.l.b16 %v104
  %v1472 = vunpack.c.h.b16 %v104
  %v1473 = vunpack.c.l.b16 %v105
  %v1474 = vunpack.c.h.b16 %v105
  %v1475 = vunpack.c.l.b16 %v106
  %v1476 = vunpack.c.h.b16 %v106
  %v1477 = vunpack.c.l.b16 %v107
  %v1478 = vunpack.c.h.b16 %v107
  %v1479 = vunpack.c.l.b16 %v108
  %v1480 = vunpack.c.h.b16 %v108
  %v1481 = vunpack.c.l.b16 %v109
  %v1482 = vunpack.c.h.b16 %v109
  %v1483 = vunpack.c.l.b16 %v110
  %v1484 = vunpack.c.h.b16 %v110
  %v1485 = vunpack.c.l.b16 %v111
  %v1486 = vunpack.c.h.b16 %v111
  %v1487 = vunpack.c.l.b16 %v112
  %v1488 = vunpack.c.h.b16 %v112
  %v1489 = vunpack.c.l.b16 %v113
  %v1490 = vunpack.c.h.b16 %v113
  %v1491 = vunpack.c.l.b16 %v114
  %v1492 = vunpack.c.h.b16 %v114
  %v1493 = vunpack.c.l.b16 %v115
  %v1494 = vunpack.c.h.b16 %v115
  %v1495 = vunpack.c.l.b16 %v116
  %v1496 = vunpack.c.h.b16 %v116
  %v1497 = vunpack.c.l.b16 %v117
  %v1498 = vunpack.c.h.b16 %v117
  %v1499 = vunpack.c.l.b16 %v118
  %v1500 = vunpack.c.h.b16 %v118
  %v1501 = vunpack.c.l.b16 %v119
  %v1502 = vunpack.c.h.b16 %v119
  %v1503 = vunpack.c.l.b16 %v120
  %v1504 = vunpack.c.h.b16 %v120
  %v1505 = vunpack.c.l.b16 %v121
  %v1506 = vunpack.c.h.b16 %v121
  %v1507 = vunpack.c.l.b16 %v122
  %v1508 = vunpack.c.h.b16 %v122
  %v1509 = vunpack.c.l.b16 %v123
  %v1510 = vunpack.c.h.b16 %v123
  %v1511 = vunpack.c.l.b16 %v124
  %v1512 = vunpack.c.h.b16 %v124
  %v1513 = vunpack.c.l.b16 %v125
  %v1514 = vunpack.c.h.b16 %v125
  %v1515 = vunpack.c.l.b16 %v126
  %v1516 = vunpack.c.h.b16 %v126
  %v1517 = vunpack.c.l.b16 %v127
  %v1518 = vunpack.c.h.b16 %v127
  %v1519 = vunpack.c.l.b16 %v128
  %v1520 = vunpack.c.h.b16 %v128
  %v1521 = vunpack.c.l.b16 %v129
  %v1522 = vunpack.c.h.b16 %v129
  %v1523 = vunpack.c.l.b16 %v130
  %v1524 = vunpack.c.h.b16 %v130
  %v1525 = vunpack.c.l.b16 %v131
  %v1526 = vunpack.c.h.b16 %v131
  %v1527 = vunpack.c.l.b16 %v132
  %v1528 = vunpack.c.h.b16 %v132
  %v1529 = vunpack.c.l.b16 %v133
  %v1530 = vunpack.c.h.b16 %v133
  %v1531 = vunpack.c.l.b16 %v134
  %v1532 = vunpack.c.h.b16 %v134
  %v1533 = vunpack.c.l.b16 %v135
  %v1534 = vunpack.c.h.b16 %v135
  %v1535 = vunpack.c.l.b16 %v136
  %v1536 = vunpack.c.h.b16 %v136
  %v1537 = vunpack.c.l.b16 %v137
  %v1538 = vunpack.c.h.b16 %v137
  %v1539 = vunpack.c.l.b16 %v138
  %v1540 = vunpack.c.h.b16 %v138
  %v1541 = vunpack.c.l.b16 %v139
  %v1542 = vunpack.c.h.b16 %v139
  %v1543 = vunpack.c.l.b16 %v140
  %v1544 = vunpack.c.h.b16 %v140
  %v1545 = vunpack.c.l.b16 %v141
  %v1546 = vunpack.c.h.b16 %v141
  %v1547 = vunpack.c.l.b16 %v142
  %v1548 = vunpack.c.h.b16 %v142
  %v1549 = vunpack.c.l.b16 %v143
  %v1550 = vunpack.c.h.b16 %v143
  %v1551 = vunpack.c.l.b16 %v144
  %v1552 = vunpack.c.h.b16 %v144
  %v1553 = vunpack.c.l.b16 %v145
  %v1554 = vunpack.c.h.b16 %v145
  %v1555 = vunpack.c.l.b16 %v146
  %v1556 = vunpack.c.h.b16 %v146
  %v1557 = vunpack.c.l.b16 %v147
  %v1558 = vunpack.c.h.b16 %v147
  %v1559 = vunpack.c.l.b16 %v148
  %v1560 = vunpack.c.h.b16 %v148
  %v1561 = vunpack.c.l.b16 %v149
  %v1562 = vunpack.c.h.b16 %v149
  %v1563 = vunpack.c.l.b16 %v150
  %v1564 = vunpack.c.h.b16 %v150
  %v1565 = vunpack.c.l.b16 %v151
  %v1566 = vunpack.c.h.b16 %v151
  %v1567 = vunpack.c.l.b16 %v152
  %v1568 = vunpack.c.h.b16 %v152
  %v1569 = vunpack.c.l.b16 %v153
  %v1570 = vunpack.c.h.b16 %v153
  %v1571 = vunpack.c.l.b16 %v154
  %v1572 = vunpack.c.h.b16 %v154
  %v1573 = vunpack.c.l.b16 %v155
  %v1574 = vunpack.c.h.b16 %v155
  %v1575 = vunpack.c.l.b16 %v156
  %v1576 = vunpack.c.h.b16 %v156
  %v1577 = vunpack.c.l.b16 %v157
  %v1578 = vunpack.c.h.b16 %v157
  %v1579 = vunpack.c.l.b16 %v158
  %v1580 = vunpack.c.h.b16 %v158
  %v1581 = vunpack.c.l.b16 %v159
  %v1582 = vunpack.c.h.b16 %v159
  %v1583 = vunpack.c.l.b16 %v160
  %v1584 = vunpack.c.h.b16 %v160
  %v1585 = vunpack.c.l.b16 %v161
  %v1586 = vunpack.c.h.b16 %v161
  %v1587 = vunpack.c.l.b16 %v162
  %v1588 = vunpack.c.h.b16 %v162
  %v1589 = vunpack.c.l.b16 %v163
  %v1590 = vunpack.c.h.b16 %v163
  %v1591 = vunpack.c.l.b16 %v164
  %v1592 = vunpack.c.h.b16 %v164
  %v1593 = vunpack.c.l.b16 %v165
  %v1594 = vunpack.c.h.b16 %v165
  %v1595 = vunpack.c.l.b16 %v166
  %v1596 = vunpack.c.h.b16 %v166
  %v1597 = vunpack.c.l.b16 %v167
  %v1598 = vunpack.c.h.b16 %v167
  %v1599 = vunpack.c.l.b16 %v168
  %v1600 = vunpack.c.h.b16 %v168
  %v1601 = vunpack.c.l.b16 %v169
  %v1602 = vunpack.c.h.b16 %v169
  %v1603 = vunpack.c.l.b16 %v170
  %v1604 = vunpack.c.h.b16 %v170
  %v1605 = vunpack.c.l.b16 %v171
  %v1606 = vunpack.c.h.b16 %v171
  %v1607 = vunpack.c.l.b16 %v172
  %v1608 = vunpack.c.h.b16 %v172
  %v1609 = vunpack.c.l.b16 %v173
  %v1610 = vunpack.c.h.b16 %v173
  %v1611 = vunpack.c.l.b16 %v174
  %v1612 = vunpack.c.h.b16 %v174
  %v1613 = vunpack.c.l.b16 %v175
  %v1614 = vunpack.c.h.b16 %v175
  %v1615 = vunpack.c.l.b16 %v176
  %v1616 = vunpack.c.h.b16 %v176
  %v1617 = vunpack.c.l.b16 %v177
  %v1618 = vunpack.c.h.b16 %v177
  %v1619 = vunpack.c.l.b16 %v178
  %v1620 = vunpack.c.h.b16 %v178
  %v1621 = vunpack.c.l.b16 %v179
  %v1622 = vunpack.c.h.b16 %v179
  %v1623 = vunpack.c.l.b16 %v180
  %v1624 = vunpack.c.h.b16 %v180
  %v1625 = vunpack.c.l.b16 %v181
  %v1626 = vunpack.c.h.b16 %v181
  %v1627 = vunpack.c.l.b16 %v182
  %v1628 = vunpack.c.h.b16 %v182
  %v1629 = vunpack.c.l.b16 %v183
  %v1630 = vunpack.c.h.b16 %v183
  %v1631 = vunpack.c.l.b16 %v184
  %v1632 = vunpack.c.h.b16 %v184
  %v1633 = vunpack.c.l.b16 %v185
  %v1634 = vunpack.c.h.b16 %v185
  %v1635 = vunpack.c.l.b16 %v186
  %v1636 = vunpack.c.h.b16 %v186
  %v1637 = vunpack.c.l.b16 %v187
  %v1638 = vunpack.c.h.b16 %v187
  %v1639 = vunpack.c.l.b16 %v188
  %v1640 = vunpack.c.h.b16 %v188
  %v1641 = vunpack.c.l.b16 %v189
  %v1642 = vunpack.c.h.b16 %v189
  %v1643 = vunpack.c.l.b16 %v190
  %v1644 = vunpack.c.h.b16 %v190
  %v1645 = vunpack.c.l.b16 %v191
  %v1646 = vunpack.c.h.b16 %v191
  %v1647 = vunpack.c.l.b16 %v192
  %v1648 = vunpack.c.h.b16 %v192
  %v1649 = vunpack.c.l.b16 %v193
  %v1650 = vunpack.c.h.b16 %v193
  %v1651 = vunpack.c.l.b16 %v194
  %v1652 = vunpack.c.h.b16 %v194
  %v1653 = vunpack.c.l.b16 %v195
  %v1654 = vunpack.c.h.b16 %v195
  %v1655 = vunpack.c.l.b16 %v196
  %v1656 = vunpack.c.h.b16 %v196
  %v1657 = vunpack.c.l.b16 %v197
  %v1658 = vunpack.c.h.b16 %v197
  %v1659 = vunpack.c.l.b16 %v198
  %v1660 = vunpack.c.h.b16 %v198
  %v1661 = vunpack.c.l.b16 %v199
  %v1662 = vunpack.c.h.b16 %v199
  %v1663 = vunpack.c.l.b16 %v200
  %v1664 = vunpack.c.h.b16 %v200
  %v1665 = vunpack.c.l.b16 %v201
  %v1666 = vunpack.c.h.b16 %v201
  %v1667 = vunpack.c.l.b16 %v202
  %v1668 = vunpack.c.h.b16 %v202
  %v1669 = vunpack.c.l.b16 %v203
  %v1670 = vunpack.c.h.b16 %v203
  %v1671 = vunpack.c.l.b16 %v204
  %v1672 = vunpack.c.h.b16 %v204
  %v1673 = vunpack.c.l.b16 %v205
  %v1674 = vunpack.c.h.b16 %v205
  %v1675 = vunpack.c.l.b16 %v206
  %v1676 = vunpack.c.h.b16 %v206
  %v1677 = vunpack.c.l.b16 %v207
  %v1678 = vunpack.c.h.b16 %v207
  %v1679 = vunpack.c.l.b16 %v208
  %v1680 = vunpack.c.h.b16 %v208
  %v1681 = vunpack.c.l.b16 %v209
  %v1682 = vunpack.c.h.b16 %v209
  %v1683 = vunpack.c.l.b16 %v210
  %v1684 = vunpack.c.h.b16 %v210
  %v1685 = vunpack.c.l.b16 %v211
  %v1686 = vunpack.c.h.b16 %v211
  %v1687 = vunpack.c.l.b16 %v212
  %v1688 = vunpack.c.h.b16 %v212
  %v1689 = vunpack.c.l.b16 %v213
  %v1690 = vunpack.c.h.b16 %v213
  %v1691 = vunpack.c.l.b16 %v214
  %v1692 = vunpack.c.h.b16 %v214
  %v1693 = vunpack.c.l.b16 %v215
  %v1694 = vunpack.c.h.b16 %v215
  %v1695 = vunpack.c.l.b16 %v216
  %v1696 = vunpack.c.h.b16 %v216
  %v1697 = vunpack.c.l.b16 %v217
  %v1698 = vunpack.c.h.b16 %v217
  %v1699 = vunpack.c.l.b16 %v218
  %v1700 = vunpack.c.h.b16 %v218
  %v1701 = vunpack.c.l.b16 %v219
  %v1702 = vunpack.c.h.b16 %v219
  %v1703 = vunpack.c.l.b16 %v220
  %v1704 = vunpack.c.h.b16 %v220
  %v1705 = vunpack.c.l.b16 %v221
  %v1706 = vunpack.c.h.b16 %v221
  %v1707 = vunpack.c.l.b16 %v222
  %v1708 = vunpack.c.h.b16 %v222
  %v1709 = vunpack.c.l.b16 %v223
  %v1710 = vunpack.c.h.b16 %v223
  %v1711 = vunpack.c.l.b16 %v224
  %v1712 = vunpack.c.h.b16 %v224
  %v1713 = vunpack.c.l.b16 %v225
  %v1714 = vunpack.c.h.b16 %v225
  %v1715 = vunpack.c.l.b16 %v226
  %v1716 = vunpack.c.h.b16 %v226
  %v1717 = vunpack.c.l.b16 %v227
  %v1718 = vunpack.c.h.b16 %v227
  %v1719 = vunpack.c.l.b16 %v228
  %v1720 = vunpack.c.h.b16 %v228
  %v1721 = vunpack.c.l.b16 %v229
  %v1722 = vunpack.c.h.b16 %v229
  %v1723 = vunpack.c.l.b16 %v230
  %v1724 = vunpack.c.h.b16 %v230
  %v1725 = vunpack.c.l.b16 %v231
  %v1726 = vunpack.c.h.b16 %v231
  %v1727 = vunpack.c.l.b16 %v232
  %v1728 = vunpack.c.h.b16 %v232
  %v1729 = vunpack.c.l.b16 %v233
  %v1730 = vunpack.c.h.b16 %v233
  %v1731 = vunpack.c.l.b16 %v234
  %v1732 = vunpack.c.h.b16 %v234
  %v1733 = vunpack.c.l.b16 %v235
  %v1734 = vunpack.c.h.b16 %v235
  %v1735 = vunpack.c.l.b16 %v236
  %v1736 = vunpack.c.h.b16 %v236
  %v1737 = vunpack.c.l.b16 %v237
  %v1738 = vunpack.c.h.b16 %v237
  %v1739 = vunpack.c.l.b16 %v238
  %v1740 = vunpack.c.h.b16 %v238
  %v1741 = vunpack.c.l.b16 %v239
  %v1742 = vunpack.c.h.b16 %v239
  %v1743 = vunpack.c.l.b16 %v240
  %v1744 = vunpack.c.h.b16 %v240
  %v1745 = vunpack.c.l.b16 %v241
  %v1746 = vunpack.c.h.b16 %v241
  %v1747 = vunpack.c.l.b16 %v242
  %v1748 = vunpack.c.h.b16 %v242
  %v1749 = vunpack.c.l.b16 %v243
  %v1750 = vunpack.c.h.b16 %v243
  %v1751 = vunpack.c.l.b16 %v244
  %v1752 = vunpack.c.h.b16 %v244
  %v1753 = vunpack.c.l.b16 %v245
  %v1754 = vunpack.c.h.b16 %v245
  %v1755 = vunpack.c.l.b16 %v246
  %v1756 = vunpack.c.h.b16 %v246
  %v1757 = vunpack.c.l.b16 %v247
  %v1758 = vunpack.c.h.b16 %v247
  %v1759 = vunpack.c.l.b16 %v248
  %v1760 = vunpack.c.h.b16 %v248
  %v1761 = vunpack.c.l.b16 %v249
  %v1762 = vunpack.c.h.b16 %v249
  %v1763 = vunpack.c.l.b16 %v250
  %v1764 = vunpack.c.h.b16 %v250
  %v1765 = vunpack.c.l.b16 %v251
  %v1766 = vunpack.c.h.b16 %v251
  %v1767 = vunpack.c.l.b16 %v252
  %v1768 = vunpack.c.h.b16 %v252
  %v1769 = vunpack.c.l.b16 %v253
  %v1770 = vunpack.c.h.b16 %v253
  %v1771 = vunpack.c.l.b16 %v254
  %v1772 = vunpack.c.h.b16 %v254
  %v1773 = vunpack.c.l.b16 %v255
  %v1774 = vunpack.c.h.b16 %v255
  %v1775 = vunpack.c.l.b16 %v256
  %v1776 = vunpack.c.h.b16 %v256
  %v1777 = vunpack.c.l.b16 %v257
  %v1778 = vunpack.c.h.b16 %v257
  %v1779 = vunpack.c.l.b16 %v258
  %v1780 = vunpack.c.h.b16 %v258
  %v1781 = vunpack.c.l.b16 %v259
  %v1782 = vunpack.c.h.b16 %v259
  %v1783 = vunpack.c.l.b16 %v260
  %v1784 = vunpack.c.h.b16 %v260
  %v1785 = vunpack.c.l.b16 %v261
  %v1786 = vunpack.c.h.b16 %v261
  %v1787 = vunpack.c.l.b16 %v262
  %v1788 = vunpack.c.h.b16 %v262
  %v1789 = vunpack.c.l.b16 %v263
  %v1790 = vunpack.c.h.b16 %v263
  %v1791 = vunpack.c.l.b16 %v264
  %v1792 = vunpack.c.h.b16 %v264
  %v1793 = vunpack.c.l.b16 %v265
  %v1794 = vunpack.c.h.b16 %v265
  %v1795 = vunpack.c.l.b16 %v266
  %v1796 = vunpack.c.h.b16 %v266
  %v1797 = vunpack.c.l.b16 %v267
  %v1798 = vunpack.c.h.b16 %v267
  %v1799 = vunpack.c.l.b16 %v268
  %v1800 = vunpack.c.h.b16 %v268
  %v1801 = vunpack.c.l.b16 %v269
  %v1802 = vunpack.c.h.b16 %v269
  %v1803 = vunpack.c.l.b16 %v270
  %v1804 = vunpack.c.h.b16 %v270
  %v1805 = vunpack.c.l.b16 %v271
  %v1806 = vunpack.c.h.b16 %v271
  %v1807 = vunpack.c.l.b16 %v272
  %v1808 = vunpack.c.h.b16 %v272
  %v1809 = vunpack.c.l.b16 %v273
  %v1810 = vunpack.c.h.b16 %v273
  %v1811 = vunpack.c.l.b16 %v274
  %v1812 = vunpack.c.h.b16 %v274
  %v1813 = vunpack.c.l.b16 %v275
  %v1814 = vunpack.c.h.b16 %v275
  %v1815 = vunpack.c.l.b16 %v276
  %v1816 = vunpack.c.h.b16 %v276
  %v1817 = vunpack.c.l.b16 %v277
  %v1818 = vunpack.c.h.b16 %v277
  %v1819 = vunpack.c.l.b16 %v278
  %v1820 = vunpack.c.h.b16 %v278
  %v1821 = vunpack.c.l.b16 %v279
  %v1822 = vunpack.c.h.b16 %v279
  %v1823 = vunpack.c.l.b16 %v280
  %v1824 = vunpack.c.h.b16 %v280
  %v1825 = vunpack.c.l.b16 %v281
  %v1826 = vunpack.c.h.b16 %v281
  %v1827 = vunpack.c.l.b16 %v282
  %v1828 = vunpack.c.h.b16 %v282
  %v1829 = vunpack.c.l.b16 %v283
  %v1830 = vunpack.c.h.b16 %v283
  %v1831 = vunpack.c.l.b16 %v284
  %v1832 = vunpack.c.h.b16 %v284
  %v1833 = vunpack.c.l.b16 %v285
  %v1834 = vunpack.c.h.b16 %v285
  %v1835 = vunpack.c.l.b16 %v286
  %v1836 = vunpack.c.h.b16 %v286
  %v1837 = vunpack.c.l.b16 %v287
  %v1838 = vunpack.c.h.b16 %v287
  %v1839 = vunpack.c.l.b16 %v288
  %v1840 = vunpack.c.h.b16 %v288
  %v1841 = vunpack.c.l.b16 %v289
  %v1842 = vunpack.c.h.b16 %v289
  %v1843 = vunpack.c.l.b16 %v290
  %v1844 = vunpack.c.h.b16 %v290
  %v1845 = vunpack.c.l.b16 %v291
  %v1846 = vunpack.c.h.b16 %v291
  %v1847 = vunpack.c.l.b16 %v292
  %v1848 = vunpack.c.h.b16 %v292
  %v1849 = vunpack.c.l.b16 %v293
  %v1850 = vunpack.c.h.b16 %v293
  %v1851 = vunpack.c.l.b16 %v294
  %v1852 = vunpack.c.h.b16 %v294
  %v1853 = vunpack.c.l.b16 %v295
  %v1854 = vunpack.c.h.b16 %v295
  %v1855 = vunpack.c.l.b16 %v296
  %v1856 = vunpack.c.h.b16 %v296
  %v1857 = vunpack.c.l.b16 %v297
  %v1858 = vunpack.c.h.b16 %v297
  %v1859 = vunpack.c.l.b16 %v298
  %v1860 = vunpack.c.h.b16 %v298
  %v1861 = vunpack.c.l.b16 %v299
  %v1862 = vunpack.c.h.b16 %v299
  %v1863 = vunpack.c.l.b16 %v300
  %v1864 = vunpack.c.h.b16 %v300
  %v1865 = vunpack.c.l.b16 %v301
  %v1866 = vunpack.c.h.b16 %v301
  %v1867 = vunpack.c.l.b16 %v302
  %v1868 = vunpack.c.h.b16 %v302
  %v1869 = vunpack.c.l.b16 %v303
  %v1870 = vunpack.c.h.b16 %v303
  %v1871 = vunpack.c.l.b16 %v304
  %v1872 = vunpack.c.h.b16 %v304
  %v1873 = vunpack.c.l.b16 %v305
  %v1874 = vunpack.c.h.b16 %v305
  %v1875 = vunpack.c.l.b16 %v306
  %v1876 = vunpack.c.h.b16 %v306
  %v1877 = vunpack.c.l.b16 %v307
  %v1878 = vunpack.c.h.b16 %v307
  %v1879 = vunpack.c.l.b16 %v308
  %v1880 = vunpack.c.h.b16 %v308
  %v1881 = vunpack.c.l.b16 %v309
  %v1882 = vunpack.c.h.b16 %v309
  %v1883 = vunpack.c.l.b16 %v310
  %v1884 = vunpack.c.h.b16 %v310
  %v1885 = vunpack.c.l.b16 %v311
  %v1886 = vunpack.c.h.b16 %v311
  %v1887 = vunpack.c.l.b16 %v312
  %v1888 = vunpack.c.h.b16 %v312
  %v1889 = vunpack.c.l.b16 %v313
  %v1890 = vunpack.c.h.b16 %v313
  %v1891 = vunpack.c.l.b16 %v314
  %v1892 = vunpack.c.h.b16 %v314
  %v1893 = vunpack.c.l.b16 %v315
  %v1894 = vunpack.c.h.b16 %v315
  %v1895 = vunpack.c.l.b16 %v316
  %v1896 = vunpack.c.h.b16 %v316
  %v1897 = vunpack.c.l.b16 %v317
  %v1898 = vunpack.c.h.b16 %v317
  %v1899 = vunpack.c.l.b16 %v318
  %v1900 = vunpack.c.h.b16 %v318
  %v1901 = vunpack.c.l.b16 %v319
  %v1902 = vunpack.c.h.b16 %v319
  %v1903 = vunpack.c.l.b16 %v320
  %v1904 = vunpack.c.h.b16 %v320
  %v1905 = vunpack.c.l.b16 %v321
  %v1906 = vunpack.c.h.b16 %v321
  %v1907 = vunpack.c.l.b16 %v322
  %v1908 = vunpack.c.h.b16 %v322
  %v1909 = vunpack.c.l.b16 %v323
  %v1910 = vunpack.c.h.b16 %v323
  %v1911 = vunpack.c.l.b16 %v324
  %v1912 = vunpack.c.h.b16 %v324
  %v1913 = vunpack.c.l.b16 %v325
  %v1914 = vunpack.c.h.b16 %v325
  %v1915 = vunpack.c.l.b16 %v326
  %v1916 = vunpack.c.h.b16 %v326
  %v1917 = vunpack.c.l.b16 %v327
  %v1918 = vunpack.c.h.b16 %v327
  %v1919 = vunpack.c.l.b16 %v328
  %v1920 = vunpack.c.h.b16 %v328
  %v1921 = vunpack.c.l.b16 %v329
  %v1922 = vunpack.c.h.b16 %v329
  %v1923 = vunpack.c.l.b16 %v330
  %v1924 = vunpack.c.h.b16 %v330
  %v1925 = vunpack.c.l.b16 %v331
  %v1926 = vunpack.c.h.b16 %v331
  %v1927 = vunpack.c.l.b16 %v332
  %v1928 = vunpack.c.h.b16 %v332
  %v1929 = vunpack.c.l.b16 %v333
  %v1930 = vunpack.c.h.b16 %v333
  %v1931 = vunpack.c.l.b16 %v334
  %v1932 = vunpack.c.h.b16 %v334
  %v1933 = vunpack.c.l.b16 %v335
  %v1934 = vunpack.c.h.b16 %v335
  %v1935 = vunpack.c.l.b16 %v336
  %v1936 = vunpack.c.h.b16 %v336
  %v1937 = vunpack.c.l.b16 %v337
  %v1938 = vunpack.c.h.b16 %v337
  %v1939 = vunpack.c.l.b16 %v338
  %v1940 = vunpack.c.h.b16 %v338
  %v1941 = vunpack.c.l.b16 %v339
  %v1942 = vunpack.c.h.b16 %v339
  %v1943 = vunpack.c.l.b16 %v340
  %v1944 = vunpack.c.h.b16 %v340
  %v1945 = vunpack.c.l.b16 %v341
  %v1946 = vunpack.c.h.b16 %v341
  %v1947 = vunpack.c.l.b16 %v342
  %v1948 = vunpack.c.h.b16 %v342
  %v1949 = vunpack.c.l.b16 %v343
  %v1950 = vunpack.c.h.b16 %v343
  %v1951 = vunpack.c.l.b16 %v344
  %v1952 = vunpack.c.h.b16 %v344
  %v1953 = vunpack.c.l.b16 %v345
  %v1954 = vunpack.c.h.b16 %v345
  %v1955 = vunpack.c.l.b16 %v346
  %v1956 = vunpack.c.h.b16 %v346
  %v1957 = vunpack.c.l.b16 %v347
  %v1958 = vunpack.c.h.b16 %v347
  %v1959 = vunpack.c.l.b16 %v348
  %v1960 = vunpack.c.h.b16 %v348
  %v1961 = vunpack.c.l.b16 %v349
  %v1962 = vunpack.c.h.b16 %v349
  %v1963 = vunpack.c.l.b16 %v350
  %v1964 = vunpack.c.h.b16 %v350
  %v1965 = vunpack.c.l.b16 %v351
  %v1966 = vunpack.c.h.b16 %v351
  %v1967 = vunpack.c.l.b16 %v352
  %v1968 = vunpack.c.h.b16 %v352
  %v1969 = vunpack.c.l.b16 %v353
  %v1970 = vunpack.c.h.b16 %v353
  %v1971 = vunpack.c.l.b16 %v354
  %v1972 = vunpack.c.h.b16 %v354
  %v1973 = vunpack.c.l.b16 %v355
  %v1974 = vunpack.c.h.b16 %v355
  %v1975 = vunpack.c.l.b16 %v356
  %v1976 = vunpack.c.h.b16 %v356
  %v1977 = vunpack.c.l.b16 %v357
  %v1978 = vunpack.c.h.b16 %v357
  %v1979 = vunpack.c.l.b16 %v358
  %v1980 = vunpack.c.h.b16 %v358
  %v1981 = vunpack.c.l.b16 %v359
  %v1982 = vunpack.c.h.b16 %v359
  %v1983 = vunpack.c.l.b16 %v360
  %v1984 = vunpack.c.h.b16 %v360
  %v1985 = vunpack.c.l.b16 %v361
  %v1986 = vunpack.c.h.b16 %v361
  %v1987 = vunpack.c.l.b16 %v362
  %v1988 = vunpack.c.h.b16 %v362
  %v1989 = vunpack.c.l.b16 %v363
  %v1990 = vunpack.c.h.b16 %v363
  %v1991 = vunpack.c.l.b16 %v364
  %v1992 = vunpack.c.h.b16 %v364
  %v1993 = vunpack.c.l.b16 %v365
  %v1994 = vunpack.c.h.b16 %v365
  %v1995 = vunpack.c.l.b16 %v366
  %v1996 = vunpack.c.h.b16 %v366
  %v1997 = vunpack.c.l.b16 %v367
  %v1998 = vunpack.c.h.b16 %v367
  %v1999 = vunpack.c.l.b16 %v368
  %v2000 = vunpack.c.h.b16 %v368
  %v2001 = vunpack.c.l.b16 %v369
  %v2002 = vunpack.c.h.b16 %v369
  %v2003 = vunpack.c.l.b16 %v370
  %v2004 = vunpack.c.h.b16 %v370
  %v2005 = vunpack.c.l.b16 %v371
  %v2006 = vunpack.c.h.b16 %v371
  %v2007 = vunpack.c.l.b16 %v372
  %v2008 = vunpack.c.h.b16 %v372
  %v2009 = vunpack.c.l.b16 %v373
  %v2010 = vunpack.c.h.b16 %v373
  %v2011 = vunpack.c.l.b16 %v374
  %v2012 = vunpack.c.h.b16 %v374
  %v2013 = vunpack.c.l.b16 %v375
  %v2014 = vunpack.c.h.b16 %v375
  %v2015 = vunpack.c.l.b16 %v376
  %v2016 = vunpack.c.h.b16 %v376
  %v2017 = vunpack.c.l.b16 %v377
  %v2018 = vunpack.c.h.b16 %v377
  %v2019 = vunpack.c.l.b16 %v378
  %v2020 = vunpack.c.h.b16 %v378
  %v2021 = vunpack.c.l.b16 %v379
  %v2022 = vunpack.c.h.b16 %v379
  %v2023 = vunpack.c.l.b16 %v380
  %v2024 = vunpack.c.h.b16 %v380
  %v2025 = vunpack.c.l.b16 %v381
  %v2026 = vunpack.c.h.b16 %v381
  %v2027 = vunpack.c.l.b16 %v382
  %v2028 = vunpack.c.h.b16 %v382
  %v2029 = vunpack.c.l.b16 %v383
  %v2030 = vunpack.c.h.b16 %v383
  %v2031 = vunpack.c.l.b16 %v384
  %v2032 = vunpack.c.h.b16 %v384
  %v2033 = vunpack.c.l.b16 %v385
  %v2034 = vunpack.c.h.b16 %v385
  %v2035 = vunpack.c.l.b16 %v386
  %v2036 = vunpack.c.h.b16 %v386
  %v2037 = vunpack.c.l.b16 %v387
  %v2038 = vunpack.c.h.b16 %v387
  %v2039 = vunpack.c.l.b16 %v388
  %v2040 = vunpack.c.h.b16 %v388
  %v2041 = vunpack.c.l.b16 %v389
  %v2042 = vunpack.c.h.b16 %v389
  %v2043 = vunpack.c.l.b16 %v390
  %v2044 = vunpack.c.h.b16 %v390
  %v2045 = vunpack.c.l.b16 %v391
  %v2046 = vunpack.c.h.b16 %v391
  %v2047 = vunpack.c.l.b16 %v392
  %v2048 = vunpack.c.h.b16 %v392
  %v2049 = vunpack.c.l.b16 %v393
  %v2050 = vunpack.c.h.b16 %v393
  %v2051 = vunpack.c.l.b16 %v394
  %v2052 = vunpack.c.h.b16 %v394
  %v2053 = vunpack.c.l.b16 %v395
  %v2054 = vunpack.c.h.b16 %v395
  %v2055 = vunpack.c.l.b16 %v396
  %v2056 = vunpack.c.h.b16 %v396
  %v2057 = vunpack.c.l.b16 %v397
  %v2058 = vunpack.c.h.b16 %v397
  %v2059 = vunpack.c.l.b16 %v398
  %v2060 = vunpack.c.h.b16 %v398
  %v2061 = vunpack.c.l.b16 %v399
  %v2062 = vunpack.c.h.b16 %v399
  %v2063 = vunpack.c.l.b16 %v400
  %v2064 = vunpack.c.h.b16 %v400
  %v2065 = vunpack.c.l.b16 %v401
  %v2066 = vunpack.c.h.b16 %v401
  %v2067 = vunpack.c.l.b16 %v402
  %v2068 = vunpack.c.h.b16 %v402
  %v2069 = vunpack.c.l.b16 %v403
  %v2070 = vunpack.c.h.b16 %v403
  %v2071 = vunpack.c.l.b16 %v404
  %v2072 = vunpack.c.h.b16 %v404
  %v2073 = vunpack.c.l.b16 %v405
  %v2074 = vunpack.c.h.b16 %v405
  %v2075 = vunpack.c.l.b16 %v406
  %v2076 = vunpack.c.h.b16 %v406
  %v2077 = vunpack.c.l.b16 %v407
  %v2078 = vunpack.c.h.b16 %v407
  %v2079 = vunpack.c.l.b16 %v408
  %v2080 = vunpack.c.h.b16 %v408
  %v2081 = vunpack.c.l.b16 %v409
  %v2082 = vunpack.c.h.b16 %v409
  %v2083 = vunpack.c.l.b16 %v410
  %v2084 = vunpack.c.h.b16 %v410
  %v2085 = vunpack.c.l.b16 %v411
  %v2086 = vunpack.c.h.b16 %v411
  %v2087 = vunpack.c.l.b16 %v412
  %v2088 = vunpack.c.h.b16 %v412
  %v2089 = vunpack.c.l.b16 %v413
  %v2090 = vunpack.c.h.b16 %v413
  %v2091 = vunpack.c.l.b16 %v414
  %v2092 = vunpack.c.h.b16 %v414
  %v2093 = vunpack.c.l.b16 %v415
  %v2094 = vunpack.c.h.b16 %v415
  %v2095 = vunpack.c.l.b16 %v416
  %v2096 = vunpack.c.h.b16 %v416
  %v2097 = vunpack.c.l.b16 %v417
  %v2098 = vunpack.c.h.b16 %v417
  %v2099 = vunpack.c.l.b16 %v418
  %v2100 = vunpack.c.h.b16 %v418
  %v2101 = vunpack.c.l.b16 %v419
  %v2102 = vunpack.c.h.b16 %v419
  %v2103 = vunpack.c.l.b16 %v420
  %v2104 = vunpack.c.h.b16 %v420
  %v2105 = vunpack.c.l.b16 %v421
  %v2106 = vunpack.c.h.b16 %v421
  %v2107 = vunpack.c.l.b16 %v422
  %v2108 = vunpack.c.h.b16 %v422
  %v2109 = vunpack.c.l.b16 %v423
  %v2110 = vunpack.c.h.b16 %v423
  %v2111 = vunpack.c.l.b16 %v424
  %v2112 = vunpack.c.h.b16 %v424
  %v2113 = vunpack.c.l.b16 %v425
  %v2114 = vunpack.c.h.b16 %v425
  %v2115 = vunpack.c.l.b16 %v426
  %v2116 = vunpack.c.h.b16 %v426
  %v2117 = vunpack.c.l.b16 %v427
  %v2118 = vunpack.c.h.b16 %v427
  %v2119 = vunpack.c.l.b16 %v428
  %v2120 = vunpack.c.h.b16 %v428
  %v2121 = vunpack.c.l.b16 %v429
  %v2122 = vunpack.c.h.b16 %v429
  %v2123 = vunpack.c.l.b16 %v430
  %v2124 = vunpack.c.h.b16 %v430
  %v2125 = vunpack.c.l.b16 %v431
  %v2126 = vunpack.c.h.b16 %v431
  %v2127 = vunpack.c.l.b16 %v432
  %v2128 = vunpack.c.h.b16 %v432
  %v2129 = vunpack.c.l.b16 %v433
  %v2130 = vunpack.c.h.b16 %v433
  %v2131 = vunpack.c.l.b16 %v434
  %v2132 = vunpack.c.h.b16 %v434
  %v2133 = vunpack.c.l.b16 %v435
  %v2134 = vunpack.c.h.b16 %v435
  %v2135 = vunpack.c.l.b16 %v436
  %v2136 = vunpack.c.h.b16 %v436
  %v2137 = vunpack.c.l.b16 %v437
  %v2138 = vunpack.c.h.b16 %v437
  %v2139 = vunpack.c.l.b16 %v438
  %v2140 = vunpack.c.h.b16 %v438
  %v2141 = vunpack.c.l.b16 %v439
  %v2142 = vunpack.c.h.b16 %v439
  %v2143 = vunpack.c.l.b16 %v440
  %v2144 = vunpack.c.h.b16 %v440
  %v2145 = vunpack.c.l.b16 %v441
  %v2146 = vunpack.c.h.b16 %v441
  %v2147 = vunpack.c.l.b16 %v442
  %v2148 = vunpack.c.h.b16 %v442
  %v2149 = vunpack.c.l.b16 %v443
  %v2150 = vunpack.c.h.b16 %v443
  %v2151 = vunpack.c.l.b16 %v444
  %v2152 = vunpack.c.h.b16 %v444
  %v2153 = vunpack.c.l.b16 %v445
  %v2154 = vunpack.c.h.b16 %v445
  %v2155 = vunpack.c.l.b16 %v446
  %v2156 = vunpack.c.h.b16 %v446
  %v2157 = vunpack.c.l.b16 %v447
  %v2158 = vunpack.c.h.b16 %v447
  %v2159 = vunpack.c.l.b16 %v448
  %v2160 = vunpack.c.h.b16 %v448
  %v2161 = vunpack.c.l.b16 %v449
  %v2162 = vunpack.c.h.b16 %v449
  %v2163 = vunpack.c.l.b16 %v450
  %v2164 = vunpack.c.h.b16 %v450
  %v2165 = vunpack.c.l.b16 %v451
  %v2166 = vunpack.c.h.b16 %v451
  %v2167 = vunpack.c.l.b16 %v452
  %v2168 = vunpack.c.h.b16 %v452
  %v2169 = vunpack.c.l.b16 %v453
  %v2170 = vunpack.c.h.b16 %v453
  %v2171 = vunpack.c.l.b16 %v454
  %v2172 = vunpack.c.h.b16 %v454
  %v2173 = vunpack.c.l.b16 %v455
  %v2174 = vunpack.c.h.b16 %v455
  %v2175 = vunpack.c.l.b16 %v456
  %v2176 = vunpack.c.h.b16 %v456
  %v2177 = vunpack.c.l.b16 %v457
  %v2178 = vunpack.c.h.b16 %v457
  %v2179 = vunpack.c.l.b16 %v458
  %v2180 = vunpack.c.h.b16 %v458
  %v2181 = vunpack.c.l.b16 %v459
  %v2182 = vunpack.c.h.b16 %v459
  %v2183 = vunpack.c.l.b16 %v460
  %v2184 = vunpack.c.h.b16 %v460
  %v2185 = vunpack.c.l.b16 %v461
  %v2186 = vunpack.c.h.b16 %v461
  %v2187 = vunpack.c.l.b16 %v462
  %v2188 = vunpack.c.h.b16 %v462
  %v2189 = vunpack.c.l.b16 %v463
  %v2190 = vunpack.c.h.b16 %v463
  %v2191 = vunpack.c.l.b16 %v464
  %v2192 = vunpack.c.h.b16 %v464
  %v2193 = vunpack.c.l.b16 %v465
  %v2194 = vunpack.c.h.b16 %v465
  %v2195 = vunpack.c.l.b16 %v466
  %v2196 = vunpack.c.h.b16 %v466
  %v2197 = vunpack.c.l.b16 %v467
  %v2198 = vunpack.c.h.b16 %v467
  %v2199 = vunpack.c.l.b16 %v468
  %v2200 = vunpack.c.h.b16 %v468
  %v2201 = vunpack.c.l.b16 %v469
  %v2202 = vunpack.c.h.b16 %v469
  %v2203 = vunpack.c.l.b16 %v470
  %v2204 = vunpack.c.h.b16 %v470
  %v2205 = vunpack.c.l.b16 %v471
  %v2206 = vunpack.c.h.b16 %v471
  %v2207 = vunpack.c.l.b16 %v472
  %v2208 = vunpack.c.h.b16 %v472
  %v2209 = vunpack.c.l.b16 %v473
  %v2210 = vunpack.c.h.b16 %v473
  %v2211 = vunpack.c.l.b16 %v474
  %v2212 = vunpack.c.h.b16 %v474
  %v2213 = vunpack.c.l.b16 %v475
  %v2214 = vunpack.c.h.b16 %v475
  %v2215 = vunpack.c.l.b16 %v476
  %v2216 = vunpack.c.h.b16 %v476
  %v2217 = vunpack.c.l.b16 %v477
  %v2218 = vunpack.c.h.b16 %v477
  %v2219 = vunpack.c.l.b16 %v478
  %v2220 = vunpack.c.h.b16 %v478
  %v2221 = vunpack.c.l.b16 %v479
  %v2222 = vunpack.c.h.b16 %v479
  %v2223 = vunpack.c.l.b16 %v480
  %v2224 = vunpack.c.h.b16 %v480
  %v2225 = vunpack.c.l.b16 %v481
  %v2226 = vunpack.c.h.b16 %v481
  %v2227 = vunpack.c.l.b16 %v482
  %v2228 = vunpack.c.h.b16 %v482
  %v2229 = vunpack.c.l.b16 %v483
  %v2230 = vunpack.c.h.b16 %v483
  %v2231 = vunpack.c.l.b16 %v484
  %v2232 = vunpack.c.h.b16 %v484
  %v2233 = vunpack.c.l.b16 %v485
  %v2234 = vunpack.c.h.b16 %v485
  %v2235 = vunpack.c.l.b16 %v486
  %v2236 = vunpack.c.h.b16 %v486
  %v2237 = vunpack.c.l.b16 %v487
  %v2238 = vunpack.c.h.b16 %v487
  %v2239 = vunpack.c.l.b16 %v488
  %v2240 = vunpack.c.h.b16 %v488
  %v2241 = vunpack.c.l.b16 %v489
  %v2242 = vunpack.c.h.b16 %v489
  %v2243 = vunpack.c.l.b16 %v490
  %v2244 = vunpack.c.h.b16 %v490
  %v2245 = vunpack.c.l.b16 %v491
  %v2246 = vunpack.c.h.b16 %v491
  %v2247 = vunpack.c.l.b16 %v492
  %v2248 = vunpack.c.h.b16 %v492
  %v2249 = vunpack.c.l.b16 %v493
  %v2250 = vunpack.c.h.b16 %v493
  %v2251 = vunpack.c.l.b16 %v494
  %v2252 = vunpack.c.h.b16 %v494
  %v2253 = vunpack.c.l.b16 %v495
  %v2254 = vunpack.c.h.b16 %v495
  %v2255 = vunpack.c.l.b16 %v496
  %v2256 = vunpack.c.h.b16 %v496
  %v2257 = vunpack.c.l.b16 %v497
  %v2258 = vunpack.c.h.b16 %v497
  %v2259 = vunpack.c.l.b16 %v498
  %v2260 = vunpack.c.h.b16 %v498
  %v2261 = vunpack.c.l.b16 %v499
  %v2262 = vunpack.c.h.b16 %v499
  %v2263 = vunpack.c.l.b16 %v500
  %v2264 = vunpack.c.h.b16 %v500
  %v2265 = vunpack.c.l.b16 %v501
  %v2266 = vunpack.c.h.b16 %v501
  %v2267 = vunpack.c.l.b16 %v502
  %v2268 = vunpack.c.h.b16 %v502
  %v2269 = vunpack.c.l.b16 %v503
  %v2270 = vunpack.c.h.b16 %v503
  %v2271 = vunpack.c.l.b16 %v504
  %v2272 = vunpack.c.h.b16 %v504
  %v2273 = vunpack.c.l.b16 %v505
  %v2274 = vunpack.c.h.b16 %v505
  %v2275 = vunpack.c.l.b16 %v506
  %v2276 = vunpack.c.h.b16 %v506
  %v2277 = vunpack.c.l.b16 %v507
  %v2278 = vunpack.c.h.b16 %v507
  %v2279 = vunpack.c.l.b16 %v508
  %v2280 = vunpack.c.h.b16 %v508
  %v2281 = vunpack.c.l.b16 %v509
  %v2282 = vunpack.c.h.b16 %v509
  %v2283 = vunpack.c.l.b16 %v510
  %v2284 = vunpack.c.h.b16 %v510
  %v2285 = vunpack.c.l.b16 %v511
  %v2286 = vunpack.c.h.b16 %v511
  %v2287 = vunpack.c.l.b16 %v512
  %v2288 = vunpack.c.h.b16 %v512
  %v2289 = vunpack.c.l.b16 %v513
  %v2290 = vunpack.c.h.b16 %v513
  %v2291 = vunpack.c.l.b16 %v514
  %v2292 = vunpack.c.h.b16 %v514
  %v2293 = vunpack.c.l.b16 %v515
  %v2294 = vunpack.c.h.b16 %v515
  %v2295 = vunpack.c.l.b16 %v516
  %v2296 = vunpack.c.h.b16 %v516
  %v2297 = vunpack.c.l.b16 %v517
  %v2298 = vunpack.c.h.b16 %v517
  %v2299 = vunpack.c.l.b16 %v518
  %v2300 = vunpack.c.h.b16 %v518
  %v2301 = vunpack.c.l.b16 %v519
  %v2302 = vunpack.c.h.b16 %v519
  %v2303 = vunpack.c.l.b16 %v520
  %v2304 = vunpack.c.h.b16 %v520
  %v2305 = vunpack.c.l.b16 %v521
  %v2306 = vunpack.c.h.b16 %v521
  %v2307 = vunpack.c.l.b16 %v522
  %v2308 = vunpack.c.h.b16 %v522
  %v2309 = vunpack.c.l.b16 %v523
  %v2310 = vunpack.c.h.b16 %v523
  %v2311 = vunpack.c.l.b16 %v524
  %v2312 = vunpack.c.h.b16 %v524
  %v2313 = vunpack.c.l.b16 %v525
  %v2314 = vunpack.c.h.b16 %v525
  %v2315 = vunpack.c.l.b16 %v526
  %v2316 = vunpack.c.h.b16 %v526
  %v2317 = vunpack.c.l.b16 %v527
  %v2318 = vunpack.c.h.b16 %v527
  %v2319 = vunpack.c.l.b16 %v528
  %v2320 = vunpack.c.h.b16 %v528
  %v2321 = vpack.c.b16 %v1313, %v1297
  %v2322 = vpack.c.b16 %v1314, %v1298
  %v2323 = vpack.c.b16 %v1315, %v1299
  %v2324 = vpack.c.b16 %v1316, %v1300
  %v2325 = vpack.c.b16 %v1317, %v1301
  %v2326 = vpack.c.b16 %v1318, %v1302
  %v2327 = vpack.c.b16 %v1319, %v1303
  %v2328 = vpack.c.b16 %v1320, %v1304
  %v2329 = vpack.c.b16 %v1321, %v1305
  %v2330 = vpack.c.b16 %v1322, %v1306
  %v2331 = vpack.c.b16 %v1323, %v1307
  %v2332 = vpack.c.b16 %v1324, %v1308
  %v2333 = vpack.c.b16 %v1325, %v1309
  %v2334 = vpack.c.b16 %v1326, %v1310
  %v2335 = vpack.c.b16 %v1327, %v1311
  %v2336 = vpack.c.b16 %v1328, %v1312
  %v2337 = vpack.c.b16 %v1345, %v1329
  %v2338 = vpack.c.b16 %v1346, %v1330
  %v2339 = vpack.c.b16 %v1347, %v1331
  %v2340 = vpack.c.b16 %v1348, %v1332
  %v2341 = vpack.c.b16 %v1349, %v1333
  %v2342 = vpack.c.b16 %v1350, %v1334
  %v2343 = vpack.c.b16 %v1351, %v1335
  %v2344 = vpack.c.b16 %v1352, %v1336
  %v2345 = vpack.c.b16 %v1353, %v1337
  %v2346 = vpack.c.b16 %v1354, %v1338
  %v2347 = vpack.c.b16 %v1355, %v1339
  %v2348 = vpack.c.b16 %v1356, %v1340
  %v2349 = vpack.c.b16 %v1357, %v1341
  %v2350 = vpack.c.b16 %v1358, %v1342
  %v2351 = vpack.c.b16 %v1359, %v1343
  %v2352 = vpack.c.b16 %v1360, %v1344
  %v2353 = vpack.c.b16 %v1377, %v1361
  %v2354 = vpack.c.b16 %v1378, %v1362
  %v2355 = vpack.c.b16 %v1379, %v1363
  %v2356 = vpack.c.b16 %v1380, %v1364
  %v2357 = vpack.c.b16 %v1381, %v1365
  %v2358 = vpack.c.b16 %v1382, %v1366
  %v2359 = vpack.c.b16 %v1383, %v1367
  %v2360 = vpack.c.b16 %v1384, %v1368
  %v2361 = vpack.c.b16 %v1385, %v1369
  %v2362 = vpack.c.b16 %v1386, %v1370
  %v2363 = vpack.c.b16 %v1387, %v1371
  %v2364 = vpack.c.b16 %v1388, %v1372
  %v2365 = vpack.c.b16 %v1389, %v1373
  %v2366 = vpack.c.b16 %v1390, %v1374
  %v2367 = vpack.c.b16 %v1391, %v1375
  %v2368 = vpack.c.b16 %v1392, %v1376
  %v2369 = vpack.c.b16 %v1409, %v1393
  %v2370 = vpack.c.b16 %v1410, %v1394
  %v2371 = vpack.c.b16 %v1411, %v1395
  %v2372 = vpack.c.b16 %v1412, %v1396
  %v2373 = vpack.c.b16 %v1413, %v1397
  %v2374 = vpack.c.b16 %v1414, %v1398
  %v2375 = vpack.c.b16 %v1415, %v1399
  %v2376 = vpack.c.b16 %v1416, %v1400
  %v2377 = vpack.c.b16 %v1417, %v1401
  %v2378 = vpack.c.b16 %v1418, %v1402
  %v2379 = vpack.c.b16 %v1419, %v1403
  %v2380 = vpack.c.b16 %v1420, %v1404
  %v2381 = vpack.c.b16 %v1421, %v1405
  %v2382 = vpack.c.b16 %v1422, %v1406
  %v2383 = vpack.c.b16 %v1423, %v1407
  %v2384 = vpack.c.b16 %v1424, %v1408
  %v2385 = vpack.c.b16 %v1441, %v1425
  %v2386 = vpack.c.b16 %v1442, %v1426
  %v2387 = vpack.c.b16 %v1443, %v1427
  %v2388 = vpack.c.b16 %v1444, %v1428
  %v2389 = vpack.c.b16 %v1445, %v1429
  %v2390 = vpack.c.b16 %v1446, %v1430
  %v2391 = vpack.c.b16 %v1447, %v1431
  %v2392 = vpack.c.b16 %v1448, %v1432
  %v2393 = vpack.c.b16 %v1449, %v1433
  %v2394 = vpack.c.b16 %v1450, %v1434
  %v2395 = vpack.c.b16 %v1451, %v1435
  %v2396 = vpack.c.b16 %v1452, %v1436
  %v2397 = vpack.c.b16 %v1453, %v1437
  %v2398 = vpack.c.b16 %v1454, %v1438
  %v2399 = vpack.c.b16 %v1455, %v1439
  %v2400 = vpack.c.b16 %v1456, %v1440
  %v2401 = vpack.c.b16 %v1473, %v1457
  %v2402 = vpack.c.b16 %v1474, %v1458
  %v2403 = vpack.c.b16 %v1475, %v1459
  %v2404 = vpack.c.b16 %v1476, %v1460
  %v2405 = vpack.c.b16 %v1477, %v1461
  %v2406 = vpack.c.b16 %v1478, %v1462
  %v2407 = vpack.c.b16 %v1479, %v1463
  %v2408 = vpack.c.b16 %v1480, %v1464
  %v2409 = vpack.c.b16 %v1481, %v1465
  %v2410 = vpack.c.b16 %v1482, %v1466
  %v2411 = vpack.c.b16 %v1483, %v1467
  %v2412 = vpack.c.b16 %v1484, %v1468
  %v2413 = vpack.c.b16 %v1485, %v1469
  %v2414 = vpack.c.b16 %v1486, %v1470
  %v2415 = vpack.c.b16 %v1487, %v1471
  %v2416 = vpack.c.b16 %v1488, %v1472
  %v2417 = vpack.c.b16 %v1505, %v1489
  %v2418 = vpack.c.b16 %v1506, %v1490
  %v2419 = vpack.c.b16 %v1507, %v1491
  %v2420 = vpack.c.b16 %v1508, %v1492
  %v2421 = vpack.c.b16 %v1509, %v1493
  %v2422 = vpack.c.b16 %v1510, %v1494
  %v2423 = vpack.c.b16 %v1511, %v1495
  %v2424 = vpack.c.b16 %v1512, %v1496
  %v2425 = vpack.c.b16 %v1513, %v1497
  %v2426 = vpack.c.b16 %v1514, %v1498
  %v2427 = vpack.c.b16 %v1515, %v1499
  %v2428 = vpack.c.b16 %v1516, %v1500
  %v2429 = vpack.c.b16 %v1517, %v1501
  %v2430 = vpack.c.b16 %v1518, %v1502
  %v2431 = vpack.c.b16 %v1519, %v1503
  %v2432 = vpack.c.b16 %v1520, %v1504
  %v2433 = vpack.c.b16 %v1537, %v1521
  %v2434 = vpack.c.b16 %v1538, %v1522
  %v2435 = vpack.c.b16 %v1539, %v1523
  %v2436 = vpack.c.b16 %v1540, %v1524
  %v2437 = vpack.c.b16 %v1541, %v1525
  %v2438 = vpack.c.b16 %v1542, %v1526
  %v2439 = vpack.c.b16 %v1543, %v1527
  %v2440 = vpack.c.b16 %v1544, %v1528
  %v2441 = vpack.c.b16 %v1545, %v1529
  %v2442 = vpack.c.b16 %v1546, %v1530
  %v2443 = vpack.c.b16 %v1547, %v1531
  %v2444 = vpack.c.b16 %v1548, %v1532
  %v2445 = vpack.c.b16 %v1549, %v1533
  %v2446 = vpack.c.b16 %v1550, %v1534
  %v2447 = vpack.c.b16 %v1551, %v1535
  %v2448 = vpack.c.b16 %v1552, %v1536
  %v2449 = vpack.c.b16 %v1569, %v1553
  %v2450 = vpack.c.b16 %v1570, %v1554
  %v2451 = vpack.c.b16 %v1571, %v1555
  %v2452 = vpack.c.b16 %v1572, %v1556
  %v2453 = vpack.c.b16 %v1573, %v1557
  %v2454 = vpack.c.b16 %v1574, %v1558
  %v2455 = vpack.c.b16 %v1575, %v1559
  %v2456 = vpack.c.b16 %v1576, %v1560
  %v2457 = vpack.c.b16 %v1577, %v1561
  %v2458 = vpack.c.b16 %v1578, %v1562
  %v2459 = vpack.c.b16 %v1579, %v1563
  %v2460 = vpack.c.b16 %v1580, %v1564
  %v2461 = vpack.c.b16 %v1581, %v1565
  %v2462 = vpack.c.b16 %v1582, %v1566
  %v2463 = vpack.c.b16 %v1583, %v1567
  %v2464 = vpack.c.b16 %v1584, %v1568
  %v2465 = vpack.c.b16 %v1601, %v1585
  %v2466 = vpack.c.b16 %v1602, %v1586
  %v2467 = vpack.c.b16 %v1603, %v1587
  %v2468 = vpack.c.b16 %v1604, %v1588
  %v2469 = vpack.c.b16 %v1605, %v1589
  %v2470 = vpack.c.b16 %v1606, %v1590
  %v2471 = vpack.c.b16 %v1607, %v1591
  %v2472 = vpack.c.b16 %v1608, %v1592
  %v2473 = vpack.c.b16 %v1609, %v1593
  %v2474 = vpack.c.b16 %v1610, %v1594
  %v2475 = vpack.c.b16 %v1611, %v1595
  %v2476 = vpack.c.b16 %v1612, %v1596
  %v2477 = vpack.c.b16 %v1613, %v1597
  %v2478 = vpack.c.b16 %v1614, %v1598
  %v2479 = vpack.c.b16 %v1615, %v1599
  %v2480 = vpack.c.b16 %v1616, %v1600
  %v2481 = vpack.c.b16 %v1633, %v1617
  %v2482 = vpack.c.b16 %v1634, %v1618
  %v2483 = vpack.c.b16 %v1635, %v1619
  %v2484 = vpack.c.b16 %v1636, %v1620
  %v2485 = vpack.c.b16 %v1637, %v1621
  %v2486 = vpack.c.b16 %v1638, %v1622
  %v2487 = vpack.c.b16 %v1639, %v1623
  %v2488 = vpack.c.b16 %v1640, %v1624
  %v2489 = vpack.c.b16 %v1641, %v1625
  %v2490 = vpack.c.b16 %v1642, %v1626
  %v2491 = vpack.c.b16 %v1643, %v1627
  %v2492 = vpack.c.b16 %v1644, %v1628
  %v2493 = vpack.c.b16 %v1645, %v1629
  %v2494 = vpack.c.b16 %v1646, %v1630
  %v2495 = vpack.c.b16 %v1647, %v1631
  %v2496 = vpack.c.b16 %v1648, %v1632
  %v2497 = vpack.c.b16 %v1665, %v1649
  %v2498 = vpack.c.b16 %v1666, %v1650
  %v2499 = vpack.c.b16 %v1667, %v1651
  %v2500 = vpack.c.b16 %v1668, %v1652
  %v2501 = vpack.c.b16 %v1669, %v1653
  %v2502 = vpack.c.b16 %v1670, %v1654
  %v2503 = vpack.c.b16 %v1671, %v1655
  %v2504 = vpack.c.b16 %v1672, %v1656
  %v2505 = vpack.c.b16 %v1673, %v1657
  %v2506 = vpack.c.b16 %v1674, %v1658
  %v2507 = vpack.c.b16 %v1675, %v1659
  %v2508 = vpack.c.b16 %v1676, %v1660
  %v2509 = vpack.c.b16 %v1677, %v1661
  %v2510 = vpack.c.b16 %v1678, %v1662
  %v2511 = vpack.c.b16 %v1679, %v1663
  %v2512 = vpack.c.b16 %v1680, %v1664
  %v2513 = vpack.c.b16 %v1697, %v1681
  %v2514 = vpack.c.b16 %v1698, %v1682
  %v2515 = vpack.c.b16 %v1699, %v1683
  %v2516 = vpack.c.b16 %v1700, %v1684
  %v2517 = vpack.c.b16 %v1701, %v1685
  %v2518 = vpack.c.b16 %v1702, %v1686
  %v2519 = vpack.c.b16 %v1703, %v1687
  %v2520 = vpack.c.b16 %v1704, %v1688
  %v2521 = vpack.c.b16 %v1705, %v1689
  %v2522 = vpack.c.b16 %v1706, %v1690
  %v2523 = vpack.c.b16 %v1707, %v1691
  %v2524 = vpack.c.b16 %v1708, %v1692
  %v2525 = vpack.c.b16 %v1709, %v1693
  %v2526 = vpack.c.b16 %v1710, %v1694
  %v2527 = vpack.c.b16 %v1711, %v1695
  %v2528 = vpack.c.b16 %v1712, %v1696
  %v2529 = vpack.c.b16 %v1729, %v1713
  %v2530 = vpack.c.b16 %v1730, %v1714
  %v2531 = vpack.c.b16 %v1731, %v1715
  %v2532 = vpack.c.b16 %v1732, %v1716
  %v2533 = vpack.c.b16 %v1733, %v1717
  %v2534 = vpack.c.b16 %v1734, %v1718
  %v2535 = vpack.c.b16 %v1735, %v1719
  %v2536 = vpack.c.b16 %v1736, %v1720
  %v2537 = vpack.c.b16 %v1737, %v1721
  %v2538 = vpack.c.b16 %v1738, %v1722
  %v2539 = vpack.c.b16 %v1739, %v1723
  %v2540 = vpack.c.b16 %v1740, %v1724
  %v2541 = vpack.c.b16 %v1741, %v1725
  %v2542 = vpack.c.b16 %v1742, %v1726
  %v2543 = vpack.c.b16 %v1743, %v1727
  %v2544 = vpack.c.b16 %v1744, %v1728
  %v2545 = vpack.c.b16 %v1761, %v1745
  %v2546 = vpack.c.b16 %v1762, %v1746
  %v2547 = vpack.c.b16 %v1763, %v1747
  %v2548 = vpack.c.b16 %v1764, %v1748
  %v2549 = vpack.c.b16 %v1765, %v1749
  %v2550 = vpack.c.b16 %v1766, %v1750
  %v2551 = vpack.c.b16 %v1767, %v1751
  %v2552 = vpack.c.b16 %v1768, %v1752
  %v2553 = vpack.c.b16 %v1769, %v1753
  %v2554 = vpack.c.b16 %v1770, %v1754
  %v2555 = vpack.c.b16 %v1771, %v1755
  %v2556 = vpack.c.b16 %v1772, %v1756
  %v2557 = vpack.c.b16 %v1773, %v1757
  %v2558 = vpack.c.b16 %v1774, %v1758
  %v2559 = vpack.c.b16 %v1775, %v1759
  %v2560 = vpack.c.b16 %v1776, %v1760
  %v2561 = vpack.c.b16 %v1793, %v1777
  %v2562 = vpack.c.b16 %v1794, %v1778
  %v2563 = vpack.c.b16 %v1795, %v1779
  %v2564 = vpack.c.b16 %v1796, %v1780
  %v2565 = vpack.c.b16 %v1797, %v1781
  %v2566 = vpack.c.b16 %v1798, %v1782
  %v2567 = vpack.c.b16 %v1799, %v1783
  %v2568 = vpack.c.b16 %v1800, %v1784
  %v2569 = vpack.c.b16 %v1801, %v1785
  %v2570 = vpack.c.b16 %v1802, %v1786
  %v2571 = vpack.c.b16 %v1803, %v1787
  %v2572 = vpack.c.b16 %v1804, %v1788
  %v2573 = vpack.c.b16 %v1805, %v1789
  %v2574 = vpack.c.b16 %v1806, %v1790
  %v2575 = vpack.c.b16 %v1807, %v1791
  %v2576 = vpack.c.b16 %v1808, %v1792
  %v2577 = vpack.c.b16 %v1825, %v1809
  %v2578 = vpack.c.b16 %v1826, %v1810
  %v2579 = vpack.c.b16 %v1827, %v1811
  %v2580 = vpack.c.b16 %v1828, %v1812
  %v2581 = vpack.c.b16 %v1829, %v1813
  %v2582 = vpack.c.b16 %v1830, %v1814
  %v2583 = vpack.c.b16 %v1831, %v1815
  %v2584 = vpack.c.b16 %v1832, %v1816
  %v2585 = vpack.c.b16 %v1833, %v1817
  %v2586 = vpack.c.b16 %v1834, %v1818
  %v2587 = vpack.c.b16 %v1835, %v1819
  %v2588 = vpack.c.b16 %v1836, %v1820
  %v2589 = vpack.c.b16 %v1837, %v1821
  %v2590 = vpack.c.b16 %v1838, %v1822
  %v2591 = vpack.c.b16 %v1839, %v1823
  %v2592 = vpack.c.b16 %v1840, %v1824
  %v2593 = vpack.c.b16 %v1857, %v1841
  %v2594 = vpack.c.b16 %v1858, %v1842
  %v2595 = vpack.c.b16 %v1859, %v1843
  %v2596 = vpack.c.b16 %v1860, %v1844
  %v2597 = vpack.c.b16 %v1861, %v1845
  %v2598 = vpack.c.b16 %v1862, %v1846
  %v2599 = vpack.c.b16 %v1863, %v1847
  %v2600 = vpack.c.b16 %v1864, %v1848
  %v2601 = vpack.c.b16 %v1865, %v1849
  %v2602 = vpack.c.b16 %v1866, %v1850
  %v2603 = vpack.c.b16 %v1867, %v1851
  %v2604 = vpack.c.b16 %v1868, %v1852
  %v2605 = vpack.c.b16 %v1869, %v1853
  %v2606 = vpack.c.b16 %v1870, %v1854
  %v2607 = vpack.c.b16 %v1871, %v1855
  %v2608 = vpack.c.b16 %v1872, %v1856
  %v2609 = vpack.c.b16 %v1889, %v1873
  %v2610 = vpack.c.b16 %v1890, %v1874
  %v2611 = vpack.c.b16 %v1891, %v1875
  %v2612 = vpack.c.b16 %v1892, %v1876
  %v2613 = vpack.c.b16 %v1893, %v1877
  %v2614 = vpack.c.b16 %v1894, %v1878
  %v2615 = vpack.c.b16 %v1895, %v1879
  %v2616 = vpack.c.b16 %v1896, %v1880
  %v2617 = vpack.c.b16 %v1897, %v1881
  %v2618 = vpack.c.b16 %v1898, %v1882
  %v2619 = vpack.c.b16 %v1899, %v1883
  %v2620 = vpack.c.b16 %v1900, %v1884
  %v2621 = vpack.c.b16 %v1901, %v1885
  %v2622 = vpack.c.b16 %v1902, %v1886
  %v2623 = vpack.c.b16 %v1903, %v1887
  %v2624 = vpack.c.b16 %v1904, %v1888
  %v2625 = vpack.c.b16 %v1921, %v1905
  %v2626 = vpack.c.b16 %v1922, %v1906
  %v2627 = vpack.c.b16 %v1923, %v1907
  %v2628 = vpack.c.b16 %v1924, %v1908
  %v2629 = vpack.c.b16 %v1925, %v1909
  %v2630 = vpack.c.b16 %v1926, %v1910
  %v2631 = vpack.c.b16 %v1927, %v1911
  %v2632 = vpack.c.b16 %v1928, %v1912
  %v2633 = vpack.c.b16 %v1929, %v1913
  %v2634 = vpack.c.b16 %v1930, %v1914
  %v2635 = vpack.c.b16 %v1931, %v1915
  %v2636 = vpack.c.b16 %v1932, %v1916
  %v2637 = vpack.c.b16 %v1933, %v1917
  %v2638 = vpack.c.b16 %v1934, %v1918
  %v2639 = vpack.c.b16 %v1935, %v1919
  %v2640 = vpack.c.b16 %v1936, %v1920
  %v2641 = vpack.c.b16 %v1953, %v1937
  %v2642 = vpack.c.b16 %v1954, %v1938
  %v2643 = vpack.c.b16 %v1955, %v1939
  %v2644 = vpack.c.b16 %v1956, %v1940
  %v2645 = vpack.c.b16 %v1957, %v1941
  %v2646 = vpack.c.b16 %v1958, %v1942
  %v2647 = vpack.c.b16 %v1959, %v1943
  %v2648 = vpack.c.b16 %v1960, %v1944
  %v2649 = vpack.c.b16 %v1961, %v1945
  %v2650 = vpack.c.b16 %v1962, %v1946
  %v2651 = vpack.c.b16 %v1963, %v1947
  %v2652 = vpack.c.b16 %v1964, %v1948
  %v2653 = vpack.c.b16 %v1965, %v1949
  %v2654 = vpack.c.b16 %v1966, %v1950
  %v2655 = vpack.c.b16 %v1967, %v1951
  %v2656 = vpack.c.b16 %v1968, %v1952
  %v2657 = vpack.c.b16 %v1985, %v1969
  %v2658 = vpack.c.b16 %v1986, %v1970
  %v2659 = vpack.c.b16 %v1987, %v1971
  %v2660 = vpack.c.b16 %v1988, %v1972
  %v2661 = vpack.c.b16 %v1989, %v1973
  %v2662 = vpack.c.b16 %v1990, %v1974
  %v2663 = vpack.c.b16 %v1991, %v1975
  %v2664 = vpack.c.b16 %v1992, %v1976
  %v2665 = vpack.c.b16 %v1993, %v1977
  %v2666 = vpack.c.b16 %v1994, %v1978
  %v2667 = vpack.c.b16 %v1995, %v1979
  %v2668 = vpack.c.b16 %v1996, %v1980
  %v2669 = vpack.c.b16 %v1997, %v1981
  %v2670 = vpack.c.b16 %v1998, %v1982
  %v2671 = vpack.c.b16 %v1999, %v1983
  %v2672 = vpack.c.b16 %v2000, %v1984
  %v2673 = vpack.c.b16 %v2017, %v2001
  %v2674 = vpack.c.b16 %v2018, %v2002
  %v2675 = vpack.c.b16 %v2019, %v2003
  %v2676 = vpack.c.b16 %v2020, %v2004
  %v2677 = vpack.c.b16 %v2021, %v2005
  %v2678 = vpack.c.b16 %v2022, %v2006
  %v2679 = vpack.c.b16 %v2023, %v2007
  %v2680 = vpack.c.b16 %v2024, %v2008
  %v2681 = vpack.c.b16 %v2025, %v2009
  %v2682 = vpack.c.b16 %v2026, %v2010
  %v2683 = vpack.c.b16 %v2027, %v2011
  %v2684 = vpack.c.b16 %v2028, %v2012
  %v2685 = vpack.c.b16 %v2029, %v2013
  %v2686 = vpack.c.b16 %v2030, %v2014
  %v2687 = vpack.c.b16 %v2031, %v2015
  %v2688 = vpack.c.b16 %v2032, %v2016
  %v2689 = vpack.c.b16 %v2049, %v2033
  %v2690 = vpack.c.b16 %v2050, %v2034
  %v2691 = vpack.c.b16 %v2051, %v2035
  %v2692 = vpack.c.b16 %v2052, %v2036
  %v2693 = vpack.c.b16 %v2053, %v2037
  %v2694 = vpack.c.b16 %v2054, %v2038
  %v2695 = vpack.c.b16 %v2055, %v2039
  %v2696 = vpack.c.b16 %v2056, %v2040
  %v2697 = vpack.c.b16 %v2057, %v2041
  %v2698 = vpack.c.b16 %v2058, %v2042
  %v2699 = vpack.c.b16 %v2059, %v2043
  %v2700 = vpack.c.b16 %v2060, %v2044
  %v2701 = vpack.c.b16 %v2061, %v2045
  %v2702 = vpack.c.b16 %v2062, %v2046
  %v2703 = vpack.c.b16 %v2063, %v2047
  %v2704 = vpack.c.b16 %v2064, %v2048
  %v2705 = vpack.c.b16 %v2081, %v2065
  %v2706 = vpack.c.b16 %v2082, %v2066
  %v2707 = vpack.c.b16 %v2083, %v2067
  %v2708 = vpack.c.b16 %v2084, %v2068
  %v2709 = vpack.c.b16 %v2085, %v2069
  %v2710 = vpack.c.b16 %v2086, %v2070
  %v2711 = vpack.c.b16 %v2087, %v2071
  %v2712 = vpack.c.b16 %v2088, %v2072
  %v2713 = vpack.c.b16 %v2089, %v2073
  %v2714 = vpack.c.b16 %v2090, %v2074
  %v2715 = vpack.c.b16 %v2091, %v2075
  %v2716 = vpack.c.b16 %v2092, %v2076
  %v2717 = vpack.c.b16 %v2093, %v2077
  %v2718 = vpack.c.b16 %v2094, %v2078
  %v2719 = vpack.c.b16 %v2095, %v2079
  %v2720 = vpack.c.b16 %v2096, %v2080
  %v2721 = vpack.c.b16 %v2113, %v2097
  %v2722 = vpack.c.b16 %v2114, %v2098
  %v2723 = vpack.c.b16 %v2115, %v2099
  %v2724 = vpack.c.b16 %v2116, %v2100
  %v2725 = vpack.c.b16 %v2117, %v2101
  %v2726 = vpack.c.b16 %v2118, %v2102
  %v2727 = vpack.c.b16 %v2119, %v2103
  %v2728 = vpack.c.b16 %v2120, %v2104
  %v2729 = vpack.c.b16 %v2121, %v2105
  %v2730 = vpack.c.b16 %v2122, %v2106
  %v2731 = vpack.c.b16 %v2123, %v2107
  %v2732 = vpack.c.b16 %v2124, %v2108
  %v2733 = vpack.c.b16 %v2125, %v2109
  %v2734 = vpack.c.b16 %v2126, %v2110
  %v2735 = vpack.c.b16 %v2127, %v2111
  %v2736 = vpack.c.b16 %v2128, %v2112
  %v2737 = vpack.c.b16 %v2145, %v2129
  %v2738 = vpack.c.b16 %v2146, %v2130
  %v2739 = vpack.c.b16 %v2147, %v2131
  %v2740 = vpack.c.b16 %v2148, %v2132
  %v2741 = vpack.c.b16 %v2149, %v2133
  %v2742 = vpack.c.b16 %v2150, %v2134
  %v2743 = vpack.c.b16 %v2151, %v2135
  %v2744 = vpack.c.b16 %v2152, %v2136
  %v2745 = vpack.c.b16 %v2153, %v2137
  %v2746 = vpack.c.b16 %v2154, %v2138
  %v2747 = vpack.c.b16 %v2155, %v2139
  %v2748 = vpack.c.b16 %v2156, %v2140
  %v2749 = vpack.c.b16 %v2157, %v2141
  %v2750 = vpack.c.b16 %v2158, %v2142
  %v2751 = vpack.c.b16 %v2159, %v2143
  %v2752 = vpack.c.b16 %v2160, %v2144
  %v2753 = vpack.c.b16 %v2177, %v2161
  %v2754 = vpack.c.b16 %v2178, %v2162
  %v2755 = vpack.c.b16 %v2179, %v2163
  %v2756 = vpack.c.b16 %v2180, %v2164
  %v2757 = vpack.c.b16 %v2181, %v2165
  %v2758 = vpack.c.b16 %v2182, %v2166
  %v2759 = vpack.c.b16 %v2183, %v2167
  %v2760 = vpack.c.b16 %v2184, %v2168
  %v2761 = vpack.c.b16 %v2185, %v2169
  %v2762 = vpack.c.b16 %v2186, %v2170
  %v2763 = vpack.c.b16 %v2187, %v2171
  %v2764 = vpack.c.b16 %v2188, %v2172
  %v2765 = vpack.c.b16 %v2189, %v2173
  %v2766 = vpack.c.b16 %v2190, %v2174
  %v2767 = vpack.c.b16 %v2191, %v2175
  %v2768 = vpack.c.b16 %v2192, %v2176
  %v2769 = vpack.c.b16 %v2209, %v2193
  %v2770 = vpack.c.b16 %v2210, %v2194
  %v2771 = vpack.c.b16 %v2211, %v2195
  %v2772 = vpack.c.b16 %v2212, %v2196
  %v2773 = vpack.c.b16 %v2213, %v2197
  %v2774 = vpack.c.b16 %v2214, %v2198
  %v2775 = vpack.c.b16 %v2215, %v2199
  %v2776 = vpack.c.b16 %v2216, %v2200
  %v2777 = vpack.c.b16 %v2217, %v2201
  %v2778 = vpack.c.b16 %v2218, %v2202
  %v2779 = vpack.c.b16 %v2219, %v2203
  %v2780 = vpack.c.b16 %v2220, %v2204
  %v2781 = vpack.c.b16 %v2221, %v2205
  %v2782 = vpack.c.b16 %v2222, %v2206
  %v2783 = vpack.c.b16 %v2223, %v2207
  %v2784 = vpack.c.b16 %v2224, %v2208
  %v2785 = vpack.c.b16 %v2241, %v2225
  %v2786 = vpack.c.b16 %v2242, %v2226
  %v2787 = vpack.c.b16 %v2243, %v2227
  %v2788 = vpack.c.b16 %v2244, %v2228
  %v2789 = vpack.c.b16 %v2245, %v2229
  %v2790 = vpack.c.b16 %v2246, %v2230
  %v2791 = vpack.c.b16 %v2247, %v2231
  %v2792 = vpack.c.b16 %v2248, %v2232
  %v2793 = vpack.c.b16 %v2249, %v2233
  %v2794 = vpack.c.b16 %v2250, %v2234
  %v2795 = vpack.c.b16 %v2251, %v2235
  %v2796 = vpack.c.b16 %v2252, %v2236
  %v2797 = vpack.c.b16 %v2253, %v2237
  %v2798 = vpack.c.b16 %v2254, %v2238
  %v2799 = vpack.c.b16 %v2255, %v2239
  %v2800 = vpack.c.b16 %v2256, %v2240
  %v2801 = vpack.c.b16 %v2273, %v2257
  %v2802 = vpack.c.b16 %v2274, %v2258
  %v2803 = vpack.c.b16 %v2275, %v2259
  %v2804 = vpack.c.b16 %v2276, %v2260
  %v2805 = vpack.c.b16 %v2277, %v2261
  %v2806 = vpack.c.b16 %v2278, %v2262
  %v2807 = vpack.c.b16 %v2279, %v2263
  %v2808 = vpack.c.b16 %v2280, %v2264
  %v2809 = vpack.c.b16 %v2281, %v2265
  %v2810 = vpack.c.b16 %v2282, %v2266
  %v2811 = vpack.c.b16 %v2283, %v2267
  %v2812 = vpack.c.b16 %v2284, %v2268
  %v2813 = vpack.c.b16 %v2285, %v2269
  %v2814 = vpack.c.b16 %v2286, %v2270
  %v2815 = vpack.c.b16 %v2287, %v2271
  %v2816 = vpack.c.b16 %v2288, %v2272
  %v2817 = vpack.c.b16 %v2305, %v2289
  %v2818 = vpack.c.b16 %v2306, %v2290
  %v2819 = vpack.c.b16 %v2307, %v2291
  %v2820 = vpack.c.b16 %v2308, %v2292
  %v2821 = vpack.c.b16 %v2309, %v2293
  %v2822 = vpack.c.b16 %v2310, %v2294
  %v2823 = vpack.c.b16 %v2311, %v2295
  %v2824 = vpack.c.b16 %v2312, %v2296
  %v2825 = vpack.c.b16 %v2313, %v2297
  %v2826 = vpack.c.b16 %v2314, %v2298
  %v2827 = vpack.c.b16 %v2315, %v2299
  %v2828 = vpack.c.b16 %v2316, %v2300
  %v2829 = vpack.c.b16 %v2317, %v2301
  %v2830 = vpack.c.b16 %v2318, %v2302
  %v2831 = vpack.c.b16 %v2319, %v2303
  %v2832 = vpack.c.b16 %v2320, %v2304
  %v3601 = vunpack.c.l.b16 %v529
  %v3602 = vunpack.c.l.b16 %v530
  %v3603 = vunpack.c.l.b16 %v531
  %v3604 = vunpack.c.l.b16 %v532
  %v3605 = vunpack.c.l.b16 %v533
  %v3606 = vunpack.c.l.b16 %v534
  %v3607 = vunpack.c.l.b16 %v535
  %v3608 = vunpack.c.l.b16 %v536
  %v3609 = vunpack.c.l.b16 %v537
  %v3610 = vunpack.c.l.b16 %v538
  %v3611 = vunpack.c.l.b16 %v539
  %v3612 = vunpack.c.l.b16 %v540
  %v3613 = vunpack.c.l.b16 %v541
  %v3614 = vunpack.c.l.b16 %v542
  %v3615 = vunpack.c.l.b16 %v543
  %v3616 = vunpack.c.l.b16 %v544
  %v3617 = vunpack.c.l.b16 %v545
  %v3618 = vunpack.c.l.b16 %v546
  %v3619 = vunpack.c.l.b16 %v547
  %v3620 = vunpack.c.l.b16 %v548
  %v3621 = vunpack.c.l.b16 %v549
  %v3622 = vunpack.c.l.b16 %v550
  %v3623 = vunpack.c.l.b16 %v551
  %v3624 = vunpack.c.l.b16 %v552
  %v3625 = vunpack.c.l.b16 %v553
  %v3626 = vunpack.c.l.b16 %v554
  %v3627 = vunpack.c.l.b16 %v555
  %v3628 = vunpack.c.l.b16 %v556
  %v3629 = vunpack.c.l.b16 %v557
  %v3630 = vunpack.c.l.b16 %v558
  %v3631 = vunpack.c.l.b16 %v559
  %v3632 = vunpack.c.l.b16 %v560
  %v3633 = vunpack.c.l.b16 %v561
  %v3634 = vunpack.c.l.b16 %v562
  %v3635 = vunpack.c.l.b16 %v563
  %v3636 = vunpack.c.l.b16 %v564
  %v3637 = vunpack.c.l.b16 %v565
  %v3638 = vunpack.c.l.b16 %v566
  %v3639 = vunpack.c.l.b16 %v567
  %v3640 = vunpack.c.l.b16 %v568
  %v3641 = vunpack.c.l.b16 %v569
  %v3642 = vunpack.c.l.b16 %v570
  %v3643 = vunpack.c.l.b16 %v571
  %v3644 = vunpack.c.l.b16 %v572
  %v3645 = vunpack.c.l.b16 %v573
  %v3646 = vunpack.c.l.b16 %v574
  %v3647 = vunpack.c.l.b16 %v575
  %v3648 = vunpack.c.l.b16 %v576
  %v3649 = vunpack.c.l.b16 %v577
  %v3650 = vunpack.c.l.b16 %v578
  %v3651 = vunpack.c.l.b16 %v579
  %v3652 = vunpack.c.l.b16 %v580
  %v3653 = vunpack.c.l.b16 %v581
  %v3654 = vunpack.c.l.b16 %v582
  %v3655 = vunpack.c.l.b16 %v583
  %v3656 = vunpack.c.l.b16 %v584
  %v3657 = vunpack.c.l.b16 %v585
  %v3658 = vunpack.c.l.b16 %v586
  %v3659 = vunpack.c.l.b16 %v587
  %v3660 = vunpack.c.l.b16 %v588
  %v3661 = vunpack.c.l.b16 %v589
  %v3662 = vunpack.c.l.b16 %v590
  %v3663 = vunpack.c.l.b16 %v591
  %v3664 = vunpack.c.l.b16 %v592
  %v3665 = vunpack.c.l.b16 %v593
  %v3666 = vunpack.c.l.b16 %v594
  %v3667 = vunpack.c.l.b16 %v595
  %v3668 = vunpack.c.l.b16 %v596
  %v3669 = vunpack.c.l.b16 %v597
  %v3670 = vunpack.c.l.b16 %v598
  %v3671 = vunpack.c.l.b16 %v599
  %v3672 = vunpack.c.l.b16 %v600
  %v3673 = vunpack.c.l.b16 %v601
  %v3674 = vunpack.c.l.b16 %v602
  %v3675 = vunpack.c.l.b16 %v603
  %v3676 = vunpack.c.l.b16 %v604
  %v3677 = vunpack.c.l.b16 %v605
  %v3678 = vunpack.c.l.b16 %v606
  %v3679 = vunpack.c.l.b16 %v607
  %v3680 = vunpack.c.l.b16 %v608
  %v3681 = vunpack.c.l.b16 %v609
  %v3682 = vunpack.c.l.b16 %v610
  %v3683 = vunpack.c.l.b16 %v611
  %v3684 = vunpack.c.l.b16 %v612
  %v3685 = vunpack.c.l.b16 %v613
  %v3686 = vunpack.c.l.b16 %v614
  %v3687 = vunpack.c.l.b16 %v615
  %v3688 = vunpack.c.l.b16 %v616
  %v3689 = vunpack.c.l.b16 %v617
  %v3690 = vunpack.c.l.b16 %v618
  %v3691 = vunpack.c.l.b16 %v619
  %v3692 = vunpack.c.l.b16 %v620
  %v3693 = vunpack.c.l.b16 %v621
  %v3694 = vunpack.c.l.b16 %v622
  %v3695 = vunpack.c.l.b16 %v623
  %v3696 = vunpack.c.l.b16 %v624
  %v3697 = vunpack.c.l.b16 %v625
  %v3698 = vunpack.c.l.b16 %v626
  %v3699 = vunpack.c.l.b16 %v627
  %v3700 = vunpack.c.l.b16 %v628
  %v3701 = vunpack.c.l.b16 %v629
  %v3702 = vunpack.c.l.b16 %v630
  %v3703 = vunpack.c.l.b16 %v631
  %v3704 = vunpack.c.l.b16 %v632
  %v3705 = vunpack.c.l.b16 %v633
  %v3706 = vunpack.c.l.b16 %v634
  %v3707 = vunpack.c.l.b16 %v635
  %v3708 = vunpack.c.l.b16 %v636
  %v3709 = vunpack.c.l.b16 %v637
  %v3710 = vunpack.c.l.b16 %v638
  %v3711 = vunpack.c.l.b16 %v639
  %v3712 = vunpack.c.l.b16 %v640
  %v3713 = vunpack.c.l.b16 %v641
  %v3714 = vunpack.c.l.b16 %v642
  %v3715 = vunpack.c.l.b16 %v643
  %v3716 = vunpack.c.l.b16 %v644
  %v3717 = vunpack.c.l.b16 %v645
  %v3718 = vunpack.c.l.b16 %v646
  %v3719 = vunpack.c.l.b16 %v647
  %v3720 = vunpack.c.l.b16 %v648
  %v3721 = vunpack.c.l.b16 %v649
  %v3722 = vunpack.c.l.b16 %v650
  %v3723 = vunpack.c.l.b16 %v651
  %v3724 = vunpack.c.l.b16 %v652
  %v3725 = vunpack.c.l.b16 %v653
  %v3726 = vunpack.c.l.b16 %v654
  %v3727 = vunpack.c.l.b16 %v655
  %v3728 = vunpack.c.l.b16 %v656
  %v3729 = vunpack.c.l.b16 %v657
  %v3730 = vunpack.c.l.b16 %v658
  %v3731 = vunpack.c.l.b16 %v659
  %v3732 = vunpack.c.l.b16 %v660
  %v3733 = vunpack.c.l.b16 %v661
  %v3734 = vunpack.c.l.b16 %v662
  %v3735 = vunpack.c.l.b16 %v663
  %v3736 = vunpack.c.l.b16 %v664
  %v3737 = vunpack.c.l.b16 %v665
  %v3738 = vunpack.c.l.b16 %v666
  %v3739 = vunpack.c.l.b16 %v667
  %v3740 = vunpack.c.l.b16 %v668
  %v3741 = vunpack.c.l.b16 %v669
  %v3742 = vunpack.c.l.b16 %v670
  %v3743 = vunpack.c.l.b16 %v671
  %v3744 = vunpack.c.l.b16 %v672
  %v3745 = vunpack.c.l.b16 %v673
  %v3746 = vunpack.c.l.b16 %v674
  %v3747 = vunpack.c.l.b16 %v675
  %v3748 = vunpack.c.l.b16 %v676
  %v3749 = vunpack.c.l.b16 %v677
  %v3750 = vunpack.c.l.b16 %v678
  %v3751 = vunpack.c.l.b16 %v679
  %v3752 = vunpack.c.l.b16 %v680
  %v3753 = vunpack.c.l.b16 %v681
  %v3754 = vunpack.c.l.b16 %v682
  %v3755 = vunpack.c.l.b16 %v683
  %v3756 = vunpack.c.l.b16 %v684
  %v3757 = vunpack.c.l.b16 %v685
  %v3758 = vunpack.c.l.b16 %v686
  %v3759 = vunpack.c.l.b16 %v687
  %v3760 = vunpack.c.l.b16 %v688
  %v3761 = vunpack.c.l.b16 %v689
  %v3762 = vunpack.c.l.b16 %v690
  %v3763 = vunpack.c.l.b16 %v691
  %v3764 = vunpack.c.l.b16 %v692
  %v3765 = vunpack.c.l.b16 %v693
  %v3766 = vunpack.c.l.b16 %v694
  %v3767 = vunpack.c.l.b16 %v695
  %v3768 = vunpack.c.l.b16 %v696
  %v3769 = vunpack.c.l.b16 %v697
  %v3770 = vunpack.c.l.b16 %v698
  %v3771 = vunpack.c.l.b16 %v699
  %v3772 = vunpack.c.l.b16 %v700
  %v3773 = vunpack.c.l.b16 %v701
  %v3774 = vunpack.c.l.b16 %v702
  %v3775 = vunpack.c.l.b16 %v703
  %v3776 = vunpack.c.l.b16 %v704
  %v3777 = vunpack.c.l.b16 %v705
  %v3778 = vunpack.c.l.b16 %v706
  %v3779 = vunpack.c.l.b16 %v707
  %v3780 = vunpack.c.l.b16 %v708
  %v3781 = vunpack.c.l.b16 %v709
  %v3782 = vunpack.c.l.b16 %v710
  %v3783 = vunpack.c.l.b16 %v711
  %v3784 = vunpack.c.l.b16 %v712
  %v3785 = vunpack.c.l.b16 %v713
  %v3786 = vunpack.c.l.b16 %v714
  %v3787 = vunpack.c.l.b16 %v715
  %v3788 = vunpack.c.l.b16 %v716
  %v3789 = vunpack.c.l.b16 %v717
  %v3790 = vunpack.c.l.b16 %v718
  %v3791 = vunpack.c.l.b16 %v719
  %v3792 = vunpack.c.l.b16 %v720
  %v3793 = vunpack.c.l.b16 %v721
  %v3794 = vunpack.c.l.b16 %v722
  %v3795 = vunpack.c.l.b16 %v723
  %v3796 = vunpack.c.l.b16 %v724
  %v3797 = vunpack.c.l.b16 %v725
  %v3798 = vunpack.c.l.b16 %v726
  %v3799 = vunpack.c.l.b16 %v727
  %v3800 = vunpack.c.l.b16 %v728
  %v3801 = vunpack.c.l.b16 %v729
  %v3802 = vunpack.c.l.b16 %v730
  %v3803 = vunpack.c.l.b16 %v731
  %v3804 = vunpack.c.l.b16 %v732
  %v3805 = vunpack.c.l.b16 %v733
  %v3806 = vunpack.c.l.b16 %v734
  %v3807 = vunpack.c.l.b16 %v735
  %v3808 = vunpack.c.l.b16 %v736
  %v3809 = vunpack.c.l.b16 %v737
  %v3810 = vunpack.c.l.b16 %v738
  %v3811 = vunpack.c.l.b16 %v739
  %v3812 = vunpack.c.l.b16 %v740
  %v3813 = vunpack.c.l.b16 %v741
  %v3814 = vunpack.c.l.b16 %v742
  %v3815 = vunpack.c.l.b16 %v743
  %v3816 = vunpack.c.l.b16 %v744
  %v3817 = vunpack.c.l.b16 %v745
  %v3818 = vunpack.c.l.b16 %v746
  %v3819 = vunpack.c.l.b16 %v747
  %v3820 = vunpack.c.l.b16 %v748
  %v3821 = vunpack.c.l.b16 %v749
  %v3822 = vunpack.c.l.b16 %v750
  %v3823 = vunpack.c.l.b16 %v751
  %v3824 = vunpack.c.l.b16 %v752
  %v3825 = vunpack.c.l.b16 %v753
  %v3826 = vunpack.c.l.b16 %v754
  %v3827 = vunpack.c.l.b16 %v755
  %v3828 = vunpack.c.l.b16 %v756
  %v3829 = vunpack.c.l.b16 %v757
  %v3830 = vunpack.c.l.b16 %v758
  %v3831 = vunpack.c.l.b16 %v759
  %v3832 = vunpack.c.l.b16 %v760
  %v3833 = vunpack.c.l.b16 %v761
  %v3834 = vunpack.c.l.b16 %v762
  %v3835 = vunpack.c.l.b16 %v763
  %v3836 = vunpack.c.l.b16 %v764
  %v3837 = vunpack.c.l.b16 %v765
  %v3838 = vunpack.c.l.b16 %v766
  %v3839 = vunpack.c.l.b16 %v767
  %v3840 = vunpack.c.l.b16 %v768
  %v3841 = vunpack.c.l.b16 %v769
  %v3842 = vunpack.c.l.b16 %v770
  %v3843 = vunpack.c.l.b16 %v771
  %v3844 = vunpack.c.l.b16 %v772
  %v3845 = vunpack.c.l.b16 %v773
  %v3846 = vunpack.c.l.b16 %v774
  %v3847 = vunpack.c.l.b16 %v775
  %v3848 = vunpack.c.l.b16 %v776
  %v3849 = vunpack.c.l.b16 %v777
  %v3850 = vunpack.c.l.b16 %v778
  %v3851 = vunpack.c.l.b16 %v779
  %v3852 = vunpack.c.l.b16 %v780
  %v3853 = vunpack.c.l.b16 %v781
  %v3854 = vunpack.c.l.b16 %v782
  %v3855 = vunpack.c.l.b16 %v783
  %v3856 = vunpack.c.l.b16 %v784
  %v3857 = vpack.c.b16 %v3602, %v3601
  %v3858 = vpack.c.b16 %v3604, %v3603
  %v3859 = vpack.c.b16 %v3606, %v3605
  %v3860 = vpack.c.b16 %v3608, %v3607
  %v3861 = vpack.c.b16 %v3610, %v3609
  %v3862 = vpack.c.b16 %v3612, %v3611
  %v3863 = vpack.c.b16 %v3614, %v3613
  %v3864 = vpack.c.b16 %v3616, %v3615
  %v3865 = vpack.c.b16 %v3618, %v3617
  %v3866 = vpack.c.b16 %v3620, %v3619
  %v3867 = vpack.c.b16 %v3622, %v3621
  %v3868 = vpack.c.b16 %v3624, %v3623
  %v3869 = vpack.c.b16 %v3626, %v3625
  %v3870 = vpack.c.b16 %v3628, %v3627
  %v3871 = vpack.c.b16 %v3630, %v3629
  %v3872 = vpack.c.b16 %v3632, %v3631
  %v3873 = vpack.c.b16 %v3634, %v3633
  %v3874 = vpack.c.b16 %v3636, %v3635
  %v3875 = vpack.c.b16 %v3638, %v3637
  %v3876 = vpack.c.b16 %v3640, %v3639
  %v3877 = vpack.c.b16 %v3642, %v3641
  %v3878 = vpack.c.b16 %v3644, %v3643
  %v3879 = vpack.c.b16 %v3646, %v3645
  %v3880 = vpack.c.b16 %v3648, %v3647
  %v3881 = vpack.c.b16 %v3650, %v3649
  %v3882 = vpack.c.b16 %v3652, %v3651
  %v3883 = vpack.c.b16 %v3654, %v3653
  %v3884 = vpack.c.b16 %v3656, %v3655
  %v3885 = vpack.c.b16 %v3658, %v3657
  %v3886 = vpack.c.b16 %v3660, %v3659
  %v3887 = vpack.c.b16 %v3662, %v3661
  %v3888 = vpack.c.b16 %v3664, %v3663
  %v3889 = vpack.c.b16 %v3666, %v3665
  %v3890 = vpack.c.b16 %v3668, %v3667
  %v3891 = vpack.c.b16 %v3670, %v3669
  %v3892 = vpack.c.b16 %v3672, %v3671
  %v3893 = vpack.c.b16 %v3674, %v3673
  %v3894 = vpack.c.b16 %v3676, %v3675
  %v3895 = vpack.c.b16 %v3678, %v3677
  %v3896 = vpack.c.b16 %v3680, %v3679
  %v3897 = vpack.c.b16 %v3682, %v3681
  %v3898 = vpack.c.b16 %v3684, %v3683
  %v3899 = vpack.c.b16 %v3686, %v3685
  %v3900 = vpack.c.b16 %v3688, %v3687
  %v3901 = vpack.c.b16 %v3690, %v3689
  %v3902 = vpack.c.b16 %v3692, %v3691
  %v3903 = vpack.c.b16 %v3694, %v3693
  %v3904 = vpack.c.b16 %v3696, %v3695
  %v3905 = vpack.c.b16 %v3698, %v3697
  %v3906 = vpack.c.b16 %v3700, %v3699
  %v3907 = vpack.c.b16 %v3702, %v3701
  %v3908 = vpack.c.b16 %v3704, %v3703
  %v3909 = vpack.c.b16 %v3706, %v3705
  %v3910 = vpack.c.b16 %v3708, %v3707
  %v3911 = vpack.c.b16 %v3710, %v3709
  %v3912 = vpack.c.b16 %v3712, %v3711
  %v3913 = vpack.c.b16 %v3714, %v3713
  %v3914 = vpack.c.b16 %v3716, %v3715
  %v3915 = vpack.c.b16 %v3718, %v3717
  %v3916 = vpack.c.b16 %v3720, %v3719
  %v3917 = vpack.c.b16 %v3722, %v3721
  %v3918 = vpack.c.b16 %v3724, %v3723
  %v3919 = vpack.c.b16 %v3726, %v3725
  %v3920 = vpack.c.b16 %v3728, %v3727
  %v3921 = vpack.c.b16 %v3730, %v3729
  %v3922 = vpack.c.b16 %v3732, %v3731
  %v3923 = vpack.c.b16 %v3734, %v3733
  %v3924 = vpack.c.b16 %v3736, %v3735
  %v3925 = vpack.c.b16 %v3738, %v3737
  %v3926 = vpack.c.b16 %v3740, %v3739
  %v3927 = vpack.c.b16 %v3742, %v3741
  %v3928 = vpack.c.b16 %v3744, %v3743
  %v3929 = vpack.c.b16 %v3746, %v3745
  %v3930 = vpack.c.b16 %v3748, %v3747
  %v3931 = vpack.c.b16 %v3750, %v3749
  %v3932 = vpack.c.b16 %v3752, %v3751
  %v3933 = vpack.c.b16 %v3754, %v3753
  %v3934 = vpack.c.b16 %v3756, %v3755
  %v3935 = vpack.c.b16 %v3758, %v3757
  %v3936 = vpack.c.b16 %v3760, %v3759
  %v3937 = vpack.c.b16 %v3762, %v3761
  %v3938 = vpack.c.b16 %v3764, %v3763
  %v3939 = vpack.c.b16 %v3766, %v3765
  %v3940 = vpack.c.b16 %v3768, %v3767
  %v3941 = vpack.c.b16 %v3770, %v3769
  %v3942 = vpack.c.b16 %v3772, %v3771
  %v3943 = vpack.c.b16 %v3774, %v3773
  %v3944 = vpack.c.b16 %v3776, %v3775
  %v3945 = vpack.c.b16 %v3778, %v3777
  %v3946 = vpack.c.b16 %v3780, %v3779
  %v3947 = vpack.c.b16 %v3782, %v3781
  %v3948 = vpack.c.b16 %v3784, %v3783
  %v3949 = vpack.c.b16 %v3786, %v3785
  %v3950 = vpack.c.b16 %v3788, %v3787
  %v3951 = vpack.c.b16 %v3790, %v3789
  %v3952 = vpack.c.b16 %v3792, %v3791
  %v3953 = vpack.c.b16 %v3794, %v3793
  %v3954 = vpack.c.b16 %v3796, %v3795
  %v3955 = vpack.c.b16 %v3798, %v3797
  %v3956 = vpack.c.b16 %v3800, %v3799
  %v3957 = vpack.c.b16 %v3802, %v3801
  %v3958 = vpack.c.b16 %v3804, %v3803
  %v3959 = vpack.c.b16 %v3806, %v3805
  %v3960 = vpack.c.b16 %v3808, %v3807
  %v3961 = vpack.c.b16 %v3810, %v3809
  %v3962 = vpack.c.b16 %v3812, %v3811
  %v3963 = vpack.c.b16 %v3814, %v3813
  %v3964 = vpack.c.b16 %v3816, %v3815
  %v3965 = vpack.c.b16 %v3818, %v3817
  %v3966 = vpack.c.b16 %v3820, %v3819
  %v3967 = vpack.c.b16 %v3822, %v3821
  %v3968 = vpack.c.b16 %v3824, %v3823
  %v3969 = vpack.c.b16 %v3826, %v3825
  %v3970 = vpack.c.b16 %v3828, %v3827
  %v3971 = vpack.c.b16 %v3830, %v3829
  %v3972 = vpack.c.b16 %v3832, %v3831
  %v3973 = vpack.c.b16 %v3834, %v3833
  %v3974 = vpack.c.b16 %v3836, %v3835
  %v3975 = vpack.c.b16 %v3838, %v3837
  %v3976 = vpack.c.b16 %v3840, %v3839
  %v3977 = vpack.c.b16 %v3842, %v3841
  %v3978 = vpack.c.b16 %v3844, %v3843
  %v3979 = vpack.c.b16 %v3846, %v3845
  %v3980 = vpack.c.b16 %v3848, %v3847
  %v3981 = vpack.c.b16 %v3850, %v3849
  %v3982 = vpack.c.b16 %v3852, %v3851
  %v3983 = vpack.c.b16 %v3854, %v3853
  %v3984 = vpack.c.b16 %v3856, %v3855
  %4113 = vmatpush.bf16.msra.mxu0 %v3864
  %4114 = vmatpush.bf16.msra.mxu0 %v3863
  %4115 = vmatpush.bf16.msra.mxu0 %v3862
  %4116 = vmatpush.bf16.msra.mxu0 %v3861
  %4117 = vmatpush.bf16.msra.mxu0 %v3860
  %4118 = vmatpush.bf16.msra.mxu0 %v3859
  %4119 = vmatpush.bf16.msra.mxu0 %v3858
  %4120 = vmatpush.bf16.msra.mxu0 %v3857
  %4121 = vmatmul.bf16.gmra.mxu0 %v2321
  %v4122 = vpop.f32.mrf.mxu0
  %v4123 = vadd.f32 0.0, %v4122
  %v4124 = vpop.f32.mrf.mxu0
  %v4125 = vadd.f32 0.0, %v4124
  %4126 = vmatmul.bf16.gmra.mxu0 %v2337
  %v4127 = vpop.f32.mrf.mxu0
  %v4128 = vadd.f32 0.0, %v4127
  %v4129 = vpop.f32.mrf.mxu0
  %v4130 = vadd.f32 0.0, %v4129
  %4131 = vmatmul.bf16.gmra.mxu0 %v2353
  %v4132 = vpop.f32.mrf.mxu0
  %v4133 = vadd.f32 0.0, %v4132
  %v4134 = vpop.f32.mrf.mxu0
  %v4135 = vadd.f32 0.0, %v4134
  %4136 = vmatmul.bf16.gmra.mxu0 %v2369
  %v4137 = vpop.f32.mrf.mxu0
  %v4138 = vadd.f32 0.0, %v4137
  %v4139 = vpop.f32.mrf.mxu0
  %v4140 = vadd.f32 0.0, %v4139
  %4141 = vmatmul.bf16.gmra.mxu0 %v2385
  %v4142 = vpop.f32.mrf.mxu0
  %v4143 = vadd.f32 0.0, %v4142
  %v4144 = vpop.f32.mrf.mxu0
  %v4145 = vadd.f32 0.0, %v4144
  %4146 = vmatmul.bf16.gmra.mxu0 %v2401
  %v4147 = vpop.f32.mrf.mxu0
  %v4148 = vadd.f32 0.0, %v4147
  %v4149 = vpop.f32.mrf.mxu0
  %v4150 = vadd.f32 0.0, %v4149
  %4151 = vmatmul.bf16.gmra.mxu0 %v2417
  %v4152 = vpop.f32.mrf.mxu0
  %v4153 = vadd.f32 0.0, %v4152
  %v4154 = vpop.f32.mrf.mxu0
  %v4155 = vadd.f32 0.0, %v4154
  %4156 = vmatmul.bf16.gmra.mxu0 %v2433
  %v4157 = vpop.f32.mrf.mxu0
  %v4158 = vadd.f32 0.0, %v4157
  %v4159 = vpop.f32.mrf.mxu0
  %v4160 = vadd.f32 0.0, %v4159
  %4161 = vmatmul.bf16.gmra.mxu0 %v2449
  %v4162 = vpop.f32.mrf.mxu0
  %v4163 = vadd.f32 0.0, %v4162
  %v4164 = vpop.f32.mrf.mxu0
  %v4165 = vadd.f32 0.0, %v4164
  %4166 = vmatmul.bf16.gmra.mxu0 %v2465
  %v4167 = vpop.f32.mrf.mxu0
  %v4168 = vadd.f32 0.0, %v4167
  %v4169 = vpop.f32.mrf.mxu0
  %v4170 = vadd.f32 0.0, %v4169
  %4171 = vmatmul.bf16.gmra.mxu0 %v2481
  %v4172 = vpop.f32.mrf.mxu0
  %v4173 = vadd.f32 0.0, %v4172
  %v4174 = vpop.f32.mrf.mxu0
  %v4175 = vadd.f32 0.0, %v4174
  %4176 = vmatmul.bf16.gmra.mxu0 %v2497
  %v4177 = vpop.f32.mrf.mxu0
  %v4178 = vadd.f32 0.0, %v4177
  %v4179 = vpop.f32.mrf.mxu0
  %v4180 = vadd.f32 0.0, %v4179
  %4181 = vmatmul.bf16.gmra.mxu0 %v2513
  %v4182 = vpop.f32.mrf.mxu0
  %v4183 = vadd.f32 0.0, %v4182
  %v4184 = vpop.f32.mrf.mxu0
  %v4185 = vadd.f32 0.0, %v4184
  %4186 = vmatmul.bf16.gmra.mxu0 %v2529
  %v4187 = vpop.f32.mrf.mxu0
  %v4188 = vadd.f32 0.0, %v4187
  %v4189 = vpop.f32.mrf.mxu0
  %v4190 = vadd.f32 0.0, %v4189
  %4191 = vmatmul.bf16.gmra.mxu0 %v2545
  %v4192 = vpop.f32.mrf.mxu0
  %v4193 = vadd.f32 0.0, %v4192
  %v4194 = vpop.f32.mrf.mxu0
  %v4195 = vadd.f32 0.0, %v4194
  %4196 = vmatmul.bf16.gmra.mxu0 %v2561
  %v4197 = vpop.f32.mrf.mxu0
  %v4198 = vadd.f32 0.0, %v4197
  %v4199 = vpop.f32.mrf.mxu0
  %v4200 = vadd.f32 0.0, %v4199
  %4201 = vmatmul.bf16.gmra.mxu0 %v2577
  %v4202 = vpop.f32.mrf.mxu0
  %v4203 = vadd.f32 0.0, %v4202
  %v4204 = vpop.f32.mrf.mxu0
  %v4205 = vadd.f32 0.0, %v4204
  %4206 = vmatmul.bf16.gmra.mxu0 %v2593
  %v4207 = vpop.f32.mrf.mxu0
  %v4208 = vadd.f32 0.0, %v4207
  %v4209 = vpop.f32.mrf.mxu0
  %v4210 = vadd.f32 0.0, %v4209
  %4211 = vmatmul.bf16.gmra.mxu0 %v2609
  %v4212 = vpop.f32.mrf.mxu0
  %v4213 = vadd.f32 0.0, %v4212
  %v4214 = vpop.f32.mrf.mxu0
  %v4215 = vadd.f32 0.0, %v4214
  %4216 = vmatmul.bf16.gmra.mxu0 %v2625
  %v4217 = vpop.f32.mrf.mxu0
  %v4218 = vadd.f32 0.0, %v4217
  %v4219 = vpop.f32.mrf.mxu0
  %v4220 = vadd.f32 0.0, %v4219
  %4221 = vmatmul.bf16.gmra.mxu0 %v2641
  %v4222 = vpop.f32.mrf.mxu0
  %v4223 = vadd.f32 0.0, %v4222
  %v4224 = vpop.f32.mrf.mxu0
  %v4225 = vadd.f32 0.0, %v4224
  %4226 = vmatmul.bf16.gmra.mxu0 %v2657
  %v4227 = vpop.f32.mrf.mxu0
  %v4228 = vadd.f32 0.0, %v4227
  %v4229 = vpop.f32.mrf.mxu0
  %v4230 = vadd.f32 0.0, %v4229
  %4231 = vmatmul.bf16.gmra.mxu0 %v2673
  %v4232 = vpop.f32.mrf.mxu0
  %v4233 = vadd.f32 0.0, %v4232
  %v4234 = vpop.f32.mrf.mxu0
  %v4235 = vadd.f32 0.0, %v4234
  %4236 = vmatmul.bf16.gmra.mxu0 %v2689
  %v4237 = vpop.f32.mrf.mxu0
  %v4238 = vadd.f32 0.0, %v4237
  %v4239 = vpop.f32.mrf.mxu0
  %v4240 = vadd.f32 0.0, %v4239
  %4241 = vmatmul.bf16.gmra.mxu0 %v2705
  %v4242 = vpop.f32.mrf.mxu0
  %v4243 = vadd.f32 0.0, %v4242
  %v4244 = vpop.f32.mrf.mxu0
  %v4245 = vadd.f32 0.0, %v4244
  %4246 = vmatmul.bf16.gmra.mxu0 %v2721
  %v4247 = vpop.f32.mrf.mxu0
  %v4248 = vadd.f32 0.0, %v4247
  %v4249 = vpop.f32.mrf.mxu0
  %v4250 = vadd.f32 0.0, %v4249
  %4251 = vmatmul.bf16.gmra.mxu0 %v2737
  %v4252 = vpop.f32.mrf.mxu0
  %v4253 = vadd.f32 0.0, %v4252
  %v4254 = vpop.f32.mrf.mxu0
  %v4255 = vadd.f32 0.0, %v4254
  %4256 = vmatmul.bf16.gmra.mxu0 %v2753
  %v4257 = vpop.f32.mrf.mxu0
  %v4258 = vadd.f32 0.0, %v4257
  %v4259 = vpop.f32.mrf.mxu0
  %v4260 = vadd.f32 0.0, %v4259
  %4261 = vmatmul.bf16.gmra.mxu0 %v2769
  %v4262 = vpop.f32.mrf.mxu0
  %v4263 = vadd.f32 0.0, %v4262
  %v4264 = vpop.f32.mrf.mxu0
  %v4265 = vadd.f32 0.0, %v4264
  %4266 = vmatmul.bf16.gmra.mxu0 %v2785
  %v4267 = vpop.f32.mrf.mxu0
  %v4268 = vadd.f32 0.0, %v4267
  %v4269 = vpop.f32.mrf.mxu0
  %v4270 = vadd.f32 0.0, %v4269
  %4271 = vmatmul.bf16.gmra.mxu0 %v2801
  %v4272 = vpop.f32.mrf.mxu0
  %v4273 = vadd.f32 0.0, %v4272
  %v4274 = vpop.f32.mrf.mxu0
  %v4275 = vadd.f32 0.0, %v4274
  %4276 = vmatmul.bf16.gmra.mxu0 %v2817
  %v4277 = vpop.f32.mrf.mxu0
  %v4278 = vadd.f32 0.0, %v4277
  %v4279 = vpop.f32.mrf.mxu0
  %v4280 = vadd.f32 0.0, %v4279
  %4281 = vdwg.mxu0
  %4282 = vmatpush.bf16.msra.mxu0 %v3872
  %4283 = vmatpush.bf16.msra.mxu0 %v3871
  %4284 = vmatpush.bf16.msra.mxu0 %v3870
  %4285 = vmatpush.bf16.msra.mxu0 %v3869
  %4286 = vmatpush.bf16.msra.mxu0 %v3868
  %4287 = vmatpush.bf16.msra.mxu0 %v3867
  %4288 = vmatpush.bf16.msra.mxu0 %v3866
  %4289 = vmatpush.bf16.msra.mxu0 %v3865
  %4290 = vmatmul.bf16.gmra.mxu0 %v2322
  %v4291 = vpop.f32.mrf.mxu0
  %v4292 = vadd.f32 %v4123, %v4291
  %v4293 = vpop.f32.mrf.mxu0
  %v4294 = vadd.f32 %v4125, %v4293
  %4295 = vmatmul.bf16.gmra.mxu0 %v2338
  %v4296 = vpop.f32.mrf.mxu0
  %v4297 = vadd.f32 %v4128, %v4296
  %v4298 = vpop.f32.mrf.mxu0
  %v4299 = vadd.f32 %v4130, %v4298
  %4300 = vmatmul.bf16.gmra.mxu0 %v2354
  %v4301 = vpop.f32.mrf.mxu0
  %v4302 = vadd.f32 %v4133, %v4301
  %v4303 = vpop.f32.mrf.mxu0
  %v4304 = vadd.f32 %v4135, %v4303
  %4305 = vmatmul.bf16.gmra.mxu0 %v2370
  %v4306 = vpop.f32.mrf.mxu0
  %v4307 = vadd.f32 %v4138, %v4306
  %v4308 = vpop.f32.mrf.mxu0
  %v4309 = vadd.f32 %v4140, %v4308
  %4310 = vmatmul.bf16.gmra.mxu0 %v2386
  %v4311 = vpop.f32.mrf.mxu0
  %v4312 = vadd.f32 %v4143, %v4311
  %v4313 = vpop.f32.mrf.mxu0
  %v4314 = vadd.f32 %v4145, %v4313
  %4315 = vmatmul.bf16.gmra.mxu0 %v2402
  %v4316 = vpop.f32.mrf.mxu0
  %v4317 = vadd.f32 %v4148, %v4316
  %v4318 = vpop.f32.mrf.mxu0
  %v4319 = vadd.f32 %v4150, %v4318
  %4320 = vmatmul.bf16.gmra.mxu0 %v2418
  %v4321 = vpop.f32.mrf.mxu0
  %v4322 = vadd.f32 %v4153, %v4321
  %v4323 = vpop.f32.mrf.mxu0
  %v4324 = vadd.f32 %v4155, %v4323
  %4325 = vmatmul.bf16.gmra.mxu0 %v2434
  %v4326 = vpop.f32.mrf.mxu0
  %v4327 = vadd.f32 %v4158, %v4326
  %v4328 = vpop.f32.mrf.mxu0
  %v4329 = vadd.f32 %v4160, %v4328
  %4330 = vmatmul.bf16.gmra.mxu0 %v2450
  %v4331 = vpop.f32.mrf.mxu0
  %v4332 = vadd.f32 %v4163, %v4331
  %v4333 = vpop.f32.mrf.mxu0
  %v4334 = vadd.f32 %v4165, %v4333
  %4335 = vmatmul.bf16.gmra.mxu0 %v2466
  %v4336 = vpop.f32.mrf.mxu0
  %v4337 = vadd.f32 %v4168, %v4336
  %v4338 = vpop.f32.mrf.mxu0
  %v4339 = vadd.f32 %v4170, %v4338
  %4340 = vmatmul.bf16.gmra.mxu0 %v2482
  %v4341 = vpop.f32.mrf.mxu0
  %v4342 = vadd.f32 %v4173, %v4341
  %v4343 = vpop.f32.mrf.mxu0
  %v4344 = vadd.f32 %v4175, %v4343
  %4345 = vmatmul.bf16.gmra.mxu0 %v2498
  %v4346 = vpop.f32.mrf.mxu0
  %v4347 = vadd.f32 %v4178, %v4346
  %v4348 = vpop.f32.mrf.mxu0
  %v4349 = vadd.f32 %v4180, %v4348
  %4350 = vmatmul.bf16.gmra.mxu0 %v2514
  %v4351 = vpop.f32.mrf.mxu0
  %v4352 = vadd.f32 %v4183, %v4351
  %v4353 = vpop.f32.mrf.mxu0
  %v4354 = vadd.f32 %v4185, %v4353
  %4355 = vmatmul.bf16.gmra.mxu0 %v2530
  %v4356 = vpop.f32.mrf.mxu0
  %v4357 = vadd.f32 %v4188, %v4356
  %v4358 = vpop.f32.mrf.mxu0
  %v4359 = vadd.f32 %v4190, %v4358
  %4360 = vmatmul.bf16.gmra.mxu0 %v2546
  %v4361 = vpop.f32.mrf.mxu0
  %v4362 = vadd.f32 %v4193, %v4361
  %v4363 = vpop.f32.mrf.mxu0
  %v4364 = vadd.f32 %v4195, %v4363
  %4365 = vmatmul.bf16.gmra.mxu0 %v2562
  %v4366 = vpop.f32.mrf.mxu0
  %v4367 = vadd.f32 %v4198, %v4366
  %v4368 = vpop.f32.mrf.mxu0
  %v4369 = vadd.f32 %v4200, %v4368
  %4370 = vmatmul.bf16.gmra.mxu0 %v2578
  %v4371 = vpop.f32.mrf.mxu0
  %v4372 = vadd.f32 %v4203, %v4371
  %v4373 = vpop.f32.mrf.mxu0
  %v4374 = vadd.f32 %v4205, %v4373
  %4375 = vmatmul.bf16.gmra.mxu0 %v2594
  %v4376 = vpop.f32.mrf.mxu0
  %v4377 = vadd.f32 %v4208, %v4376
  %v4378 = vpop.f32.mrf.mxu0
  %v4379 = vadd.f32 %v4210, %v4378
  %4380 = vmatmul.bf16.gmra.mxu0 %v2610
  %v4381 = vpop.f32.mrf.mxu0
  %v4382 = vadd.f32 %v4213, %v4381
  %v4383 = vpop.f32.mrf.mxu0
  %v4384 = vadd.f32 %v4215, %v4383
  %4385 = vmatmul.bf16.gmra.mxu0 %v2626
  %v4386 = vpop.f32.mrf.mxu0
  %v4387 = vadd.f32 %v4218, %v4386
  %v4388 = vpop.f32.mrf.mxu0
  %v4389 = vadd.f32 %v4220, %v4388
  %4390 = vmatmul.bf16.gmra.mxu0 %v2642
  %v4391 = vpop.f32.mrf.mxu0
  %v4392 = vadd.f32 %v4223, %v4391
  %v4393 = vpop.f32.mrf.mxu0
  %v4394 = vadd.f32 %v4225, %v4393
  %4395 = vmatmul.bf16.gmra.mxu0 %v2658
  %v4396 = vpop.f32.mrf.mxu0
  %v4397 = vadd.f32 %v4228, %v4396
  %v4398 = vpop.f32.mrf.mxu0
  %v4399 = vadd.f32 %v4230, %v4398
  %4400 = vmatmul.bf16.gmra.mxu0 %v2674
  %v4401 = vpop.f32.mrf.mxu0
  %v4402 = vadd.f32 %v4233, %v4401
  %v4403 = vpop.f32.mrf.mxu0
  %v4404 = vadd.f32 %v4235, %v4403
  %4405 = vmatmul.bf16.gmra.mxu0 %v2690
  %v4406 = vpop.f32.mrf.mxu0
  %v4407 = vadd.f32 %v4238, %v4406
  %v4408 = vpop.f32.mrf.mxu0
  %v4409 = vadd.f32 %v4240, %v4408
  %4410 = vmatmul.bf16.gmra.mxu0 %v2706
  %v4411 = vpop.f32.mrf.mxu0
  %v4412 = vadd.f32 %v4243, %v4411
  %v4413 = vpop.f32.mrf.mxu0
  %v4414 = vadd.f32 %v4245, %v4413
  %4415 = vmatmul.bf16.gmra.mxu0 %v2722
  %v4416 = vpop.f32.mrf.mxu0
  %v4417 = vadd.f32 %v4248, %v4416
  %v4418 = vpop.f32.mrf.mxu0
  %v4419 = vadd.f32 %v4250, %v4418
  %4420 = vmatmul.bf16.gmra.mxu0 %v2738
  %v4421 = vpop.f32.mrf.mxu0
  %v4422 = vadd.f32 %v4253, %v4421
  %v4423 = vpop.f32.mrf.mxu0
  %v4424 = vadd.f32 %v4255, %v4423
  %4425 = vmatmul.bf16.gmra.mxu0 %v2754
  %v4426 = vpop.f32.mrf.mxu0
  %v4427 = vadd.f32 %v4258, %v4426
  %v4428 = vpop.f32.mrf.mxu0
  %v4429 = vadd.f32 %v4260, %v4428
  %4430 = vmatmul.bf16.gmra.mxu0 %v2770
  %v4431 = vpop.f32.mrf.mxu0
  %v4432 = vadd.f32 %v4263, %v4431
  %v4433 = vpop.f32.mrf.mxu0
  %v4434 = vadd.f32 %v4265, %v4433
  %4435 = vmatmul.bf16.gmra.mxu0 %v2786
  %v4436 = vpop.f32.mrf.mxu0
  %v4437 = vadd.f32 %v4268, %v4436
  %v4438 = vpop.f32.mrf.mxu0
  %v4439 = vadd.f32 %v4270, %v4438
  %4440 = vmatmul.bf16.gmra.mxu0 %v2802
  %v4441 = vpop.f32.mrf.mxu0
  %v4442 = vadd.f32 %v4273, %v4441
  %v4443 = vpop.f32.mrf.mxu0
  %v4444 = vadd.f32 %v4275, %v4443
  %4445 = vmatmul.bf16.gmra.mxu0 %v2818
  %v4446 = vpop.f32.mrf.mxu0
  %v4447 = vadd.f32 %v4278, %v4446
  %v4448 = vpop.f32.mrf.mxu0
  %v4449 = vadd.f32 %v4280, %v4448
  %4450 = vdwg.mxu0
  %4451 = vmatpush.bf16.msra.mxu0 %v3880
  %4452 = vmatpush.bf16.msra.mxu0 %v3879
  %4453 = vmatpush.bf16.msra.mxu0 %v3878
  %4454 = vmatpush.bf16.msra.mxu0 %v3877
  %4455 = vmatpush.bf16.msra.mxu0 %v3876
  %4456 = vmatpush.bf16.msra.mxu0 %v3875
  %4457 = vmatpush.bf16.msra.mxu0 %v3874
  %4458 = vmatpush.bf16.msra.mxu0 %v3873
  %4459 = vmatmul.bf16.gmra.mxu0 %v2323
  %v4460 = vpop.f32.mrf.mxu0
  %v4461 = vadd.f32 %v4292, %v4460
  %v4462 = vpop.f32.mrf.mxu0
  %v4463 = vadd.f32 %v4294, %v4462
  %4464 = vmatmul.bf16.gmra.mxu0 %v2339
  %v4465 = vpop.f32.mrf.mxu0
  %v4466 = vadd.f32 %v4297, %v4465
  %v4467 = vpop.f32.mrf.mxu0
  %v4468 = vadd.f32 %v4299, %v4467
  %4469 = vmatmul.bf16.gmra.mxu0 %v2355
  %v4470 = vpop.f32.mrf.mxu0
  %v4471 = vadd.f32 %v4302, %v4470
  %v4472 = vpop.f32.mrf.mxu0
  %v4473 = vadd.f32 %v4304, %v4472
  %4474 = vmatmul.bf16.gmra.mxu0 %v2371
  %v4475 = vpop.f32.mrf.mxu0
  %v4476 = vadd.f32 %v4307, %v4475
  %v4477 = vpop.f32.mrf.mxu0
  %v4478 = vadd.f32 %v4309, %v4477
  %4479 = vmatmul.bf16.gmra.mxu0 %v2387
  %v4480 = vpop.f32.mrf.mxu0
  %v4481 = vadd.f32 %v4312, %v4480
  %v4482 = vpop.f32.mrf.mxu0
  %v4483 = vadd.f32 %v4314, %v4482
  %4484 = vmatmul.bf16.gmra.mxu0 %v2403
  %v4485 = vpop.f32.mrf.mxu0
  %v4486 = vadd.f32 %v4317, %v4485
  %v4487 = vpop.f32.mrf.mxu0
  %v4488 = vadd.f32 %v4319, %v4487
  %4489 = vmatmul.bf16.gmra.mxu0 %v2419
  %v4490 = vpop.f32.mrf.mxu0
  %v4491 = vadd.f32 %v4322, %v4490
  %v4492 = vpop.f32.mrf.mxu0
  %v4493 = vadd.f32 %v4324, %v4492
  %4494 = vmatmul.bf16.gmra.mxu0 %v2435
  %v4495 = vpop.f32.mrf.mxu0
  %v4496 = vadd.f32 %v4327, %v4495
  %v4497 = vpop.f32.mrf.mxu0
  %v4498 = vadd.f32 %v4329, %v4497
  %4499 = vmatmul.bf16.gmra.mxu0 %v2451
  %v4500 = vpop.f32.mrf.mxu0
  %v4501 = vadd.f32 %v4332, %v4500
  %v4502 = vpop.f32.mrf.mxu0
  %v4503 = vadd.f32 %v4334, %v4502
  %4504 = vmatmul.bf16.gmra.mxu0 %v2467
  %v4505 = vpop.f32.mrf.mxu0
  %v4506 = vadd.f32 %v4337, %v4505
  %v4507 = vpop.f32.mrf.mxu0
  %v4508 = vadd.f32 %v4339, %v4507
  %4509 = vmatmul.bf16.gmra.mxu0 %v2483
  %v4510 = vpop.f32.mrf.mxu0
  %v4511 = vadd.f32 %v4342, %v4510
  %v4512 = vpop.f32.mrf.mxu0
  %v4513 = vadd.f32 %v4344, %v4512
  %4514 = vmatmul.bf16.gmra.mxu0 %v2499
  %v4515 = vpop.f32.mrf.mxu0
  %v4516 = vadd.f32 %v4347, %v4515
  %v4517 = vpop.f32.mrf.mxu0
  %v4518 = vadd.f32 %v4349, %v4517
  %4519 = vmatmul.bf16.gmra.mxu0 %v2515
  %v4520 = vpop.f32.mrf.mxu0
  %v4521 = vadd.f32 %v4352, %v4520
  %v4522 = vpop.f32.mrf.mxu0
  %v4523 = vadd.f32 %v4354, %v4522
  %4524 = vmatmul.bf16.gmra.mxu0 %v2531
  %v4525 = vpop.f32.mrf.mxu0
  %v4526 = vadd.f32 %v4357, %v4525
  %v4527 = vpop.f32.mrf.mxu0
  %v4528 = vadd.f32 %v4359, %v4527
  %4529 = vmatmul.bf16.gmra.mxu0 %v2547
  %v4530 = vpop.f32.mrf.mxu0
  %v4531 = vadd.f32 %v4362, %v4530
  %v4532 = vpop.f32.mrf.mxu0
  %v4533 = vadd.f32 %v4364, %v4532
  %4534 = vmatmul.bf16.gmra.mxu0 %v2563
  %v4535 = vpop.f32.mrf.mxu0
  %v4536 = vadd.f32 %v4367, %v4535
  %v4537 = vpop.f32.mrf.mxu0
  %v4538 = vadd.f32 %v4369, %v4537
  %4539 = vmatmul.bf16.gmra.mxu0 %v2579
  %v4540 = vpop.f32.mrf.mxu0
  %v4541 = vadd.f32 %v4372, %v4540
  %v4542 = vpop.f32.mrf.mxu0
  %v4543 = vadd.f32 %v4374, %v4542
  %4544 = vmatmul.bf16.gmra.mxu0 %v2595
  %v4545 = vpop.f32.mrf.mxu0
  %v4546 = vadd.f32 %v4377, %v4545
  %v4547 = vpop.f32.mrf.mxu0
  %v4548 = vadd.f32 %v4379, %v4547
  %4549 = vmatmul.bf16.gmra.mxu0 %v2611
  %v4550 = vpop.f32.mrf.mxu0
  %v4551 = vadd.f32 %v4382, %v4550
  %v4552 = vpop.f32.mrf.mxu0
  %v4553 = vadd.f32 %v4384, %v4552
  %4554 = vmatmul.bf16.gmra.mxu0 %v2627
  %v4555 = vpop.f32.mrf.mxu0
  %v4556 = vadd.f32 %v4387, %v4555
  %v4557 = vpop.f32.mrf.mxu0
  %v4558 = vadd.f32 %v4389, %v4557
  %4559 = vmatmul.bf16.gmra.mxu0 %v2643
  %v4560 = vpop.f32.mrf.mxu0
  %v4561 = vadd.f32 %v4392, %v4560
  %v4562 = vpop.f32.mrf.mxu0
  %v4563 = vadd.f32 %v4394, %v4562
  %4564 = vmatmul.bf16.gmra.mxu0 %v2659
  %v4565 = vpop.f32.mrf.mxu0
  %v4566 = vadd.f32 %v4397, %v4565
  %v4567 = vpop.f32.mrf.mxu0
  %v4568 = vadd.f32 %v4399, %v4567
  %4569 = vmatmul.bf16.gmra.mxu0 %v2675
  %v4570 = vpop.f32.mrf.mxu0
  %v4571 = vadd.f32 %v4402, %v4570
  %v4572 = vpop.f32.mrf.mxu0
  %v4573 = vadd.f32 %v4404, %v4572
  %4574 = vmatmul.bf16.gmra.mxu0 %v2691
  %v4575 = vpop.f32.mrf.mxu0
  %v4576 = vadd.f32 %v4407, %v4575
  %v4577 = vpop.f32.mrf.mxu0
  %v4578 = vadd.f32 %v4409, %v4577
  %4579 = vmatmul.bf16.gmra.mxu0 %v2707
  %v4580 = vpop.f32.mrf.mxu0
  %v4581 = vadd.f32 %v4412, %v4580
  %v4582 = vpop.f32.mrf.mxu0
  %v4583 = vadd.f32 %v4414, %v4582
  %4584 = vmatmul.bf16.gmra.mxu0 %v2723
  %v4585 = vpop.f32.mrf.mxu0
  %v4586 = vadd.f32 %v4417, %v4585
  %v4587 = vpop.f32.mrf.mxu0
  %v4588 = vadd.f32 %v4419, %v4587
  %4589 = vmatmul.bf16.gmra.mxu0 %v2739
  %v4590 = vpop.f32.mrf.mxu0
  %v4591 = vadd.f32 %v4422, %v4590
  %v4592 = vpop.f32.mrf.mxu0
  %v4593 = vadd.f32 %v4424, %v4592
  %4594 = vmatmul.bf16.gmra.mxu0 %v2755
  %v4595 = vpop.f32.mrf.mxu0
  %v4596 = vadd.f32 %v4427, %v4595
  %v4597 = vpop.f32.mrf.mxu0
  %v4598 = vadd.f32 %v4429, %v4597
  %4599 = vmatmul.bf16.gmra.mxu0 %v2771
  %v4600 = vpop.f32.mrf.mxu0
  %v4601 = vadd.f32 %v4432, %v4600
  %v4602 = vpop.f32.mrf.mxu0
  %v4603 = vadd.f32 %v4434, %v4602
  %4604 = vmatmul.bf16.gmra.mxu0 %v2787
  %v4605 = vpop.f32.mrf.mxu0
  %v4606 = vadd.f32 %v4437, %v4605
  %v4607 = vpop.f32.mrf.mxu0
  %v4608 = vadd.f32 %v4439, %v4607
  %4609 = vmatmul.bf16.gmra.mxu0 %v2803
  %v4610 = vpop.f32.mrf.mxu0
  %v4611 = vadd.f32 %v4442, %v4610
  %v4612 = vpop.f32.mrf.mxu0
  %v4613 = vadd.f32 %v4444, %v4612
  %4614 = vmatmul.bf16.gmra.mxu0 %v2819
  %v4615 = vpop.f32.mrf.mxu0
  %v4616 = vadd.f32 %v4447, %v4615
  %v4617 = vpop.f32.mrf.mxu0
  %v4618 = vadd.f32 %v4449, %v4617
  %4619 = vdwg.mxu0
  %4620 = vmatpush.bf16.msra.mxu0 %v3888
  %4621 = vmatpush.bf16.msra.mxu0 %v3887
  %4622 = vmatpush.bf16.msra.mxu0 %v3886
  %4623 = vmatpush.bf16.msra.mxu0 %v3885
  %4624 = vmatpush.bf16.msra.mxu0 %v3884
  %4625 = vmatpush.bf16.msra.mxu0 %v3883
  %4626 = vmatpush.bf16.msra.mxu0 %v3882
  %4627 = vmatpush.bf16.msra.mxu0 %v3881
  %4628 = vmatmul.bf16.gmra.mxu0 %v2324
  %v4629 = vpop.f32.mrf.mxu0
  %v4630 = vadd.f32 %v4461, %v4629
  %v4631 = vpop.f32.mrf.mxu0
  %v4632 = vadd.f32 %v4463, %v4631
  %4633 = vmatmul.bf16.gmra.mxu0 %v2340
  %v4634 = vpop.f32.mrf.mxu0
  %v4635 = vadd.f32 %v4466, %v4634
  %v4636 = vpop.f32.mrf.mxu0
  %v4637 = vadd.f32 %v4468, %v4636
  %4638 = vmatmul.bf16.gmra.mxu0 %v2356
  %v4639 = vpop.f32.mrf.mxu0
  %v4640 = vadd.f32 %v4471, %v4639
  %v4641 = vpop.f32.mrf.mxu0
  %v4642 = vadd.f32 %v4473, %v4641
  %4643 = vmatmul.bf16.gmra.mxu0 %v2372
  %v4644 = vpop.f32.mrf.mxu0
  %v4645 = vadd.f32 %v4476, %v4644
  %v4646 = vpop.f32.mrf.mxu0
  %v4647 = vadd.f32 %v4478, %v4646
  %4648 = vmatmul.bf16.gmra.mxu0 %v2388
  %v4649 = vpop.f32.mrf.mxu0
  %v4650 = vadd.f32 %v4481, %v4649
  %v4651 = vpop.f32.mrf.mxu0
  %v4652 = vadd.f32 %v4483, %v4651
  %4653 = vmatmul.bf16.gmra.mxu0 %v2404
  %v4654 = vpop.f32.mrf.mxu0
  %v4655 = vadd.f32 %v4486, %v4654
  %v4656 = vpop.f32.mrf.mxu0
  %v4657 = vadd.f32 %v4488, %v4656
  %4658 = vmatmul.bf16.gmra.mxu0 %v2420
  %v4659 = vpop.f32.mrf.mxu0
  %v4660 = vadd.f32 %v4491, %v4659
  %v4661 = vpop.f32.mrf.mxu0
  %v4662 = vadd.f32 %v4493, %v4661
  %4663 = vmatmul.bf16.gmra.mxu0 %v2436
  %v4664 = vpop.f32.mrf.mxu0
  %v4665 = vadd.f32 %v4496, %v4664
  %v4666 = vpop.f32.mrf.mxu0
  %v4667 = vadd.f32 %v4498, %v4666
  %4668 = vmatmul.bf16.gmra.mxu0 %v2452
  %v4669 = vpop.f32.mrf.mxu0
  %v4670 = vadd.f32 %v4501, %v4669
  %v4671 = vpop.f32.mrf.mxu0
  %v4672 = vadd.f32 %v4503, %v4671
  %4673 = vmatmul.bf16.gmra.mxu0 %v2468
  %v4674 = vpop.f32.mrf.mxu0
  %v4675 = vadd.f32 %v4506, %v4674
  %v4676 = vpop.f32.mrf.mxu0
  %v4677 = vadd.f32 %v4508, %v4676
  %4678 = vmatmul.bf16.gmra.mxu0 %v2484
  %v4679 = vpop.f32.mrf.mxu0
  %v4680 = vadd.f32 %v4511, %v4679
  %v4681 = vpop.f32.mrf.mxu0
  %v4682 = vadd.f32 %v4513, %v4681
  %4683 = vmatmul.bf16.gmra.mxu0 %v2500
  %v4684 = vpop.f32.mrf.mxu0
  %v4685 = vadd.f32 %v4516, %v4684
  %v4686 = vpop.f32.mrf.mxu0
  %v4687 = vadd.f32 %v4518, %v4686
  %4688 = vmatmul.bf16.gmra.mxu0 %v2516
  %v4689 = vpop.f32.mrf.mxu0
  %v4690 = vadd.f32 %v4521, %v4689
  %v4691 = vpop.f32.mrf.mxu0
  %v4692 = vadd.f32 %v4523, %v4691
  %4693 = vmatmul.bf16.gmra.mxu0 %v2532
  %v4694 = vpop.f32.mrf.mxu0
  %v4695 = vadd.f32 %v4526, %v4694
  %v4696 = vpop.f32.mrf.mxu0
  %v4697 = vadd.f32 %v4528, %v4696
  %4698 = vmatmul.bf16.gmra.mxu0 %v2548
  %v4699 = vpop.f32.mrf.mxu0
  %v4700 = vadd.f32 %v4531, %v4699
  %v4701 = vpop.f32.mrf.mxu0
  %v4702 = vadd.f32 %v4533, %v4701
  %4703 = vmatmul.bf16.gmra.mxu0 %v2564
  %v4704 = vpop.f32.mrf.mxu0
  %v4705 = vadd.f32 %v4536, %v4704
  %v4706 = vpop.f32.mrf.mxu0
  %v4707 = vadd.f32 %v4538, %v4706
  %4708 = vmatmul.bf16.gmra.mxu0 %v2580
  %v4709 = vpop.f32.mrf.mxu0
  %v4710 = vadd.f32 %v4541, %v4709
  %v4711 = vpop.f32.mrf.mxu0
  %v4712 = vadd.f32 %v4543, %v4711
  %4713 = vmatmul.bf16.gmra.mxu0 %v2596
  %v4714 = vpop.f32.mrf.mxu0
  %v4715 = vadd.f32 %v4546, %v4714
  %v4716 = vpop.f32.mrf.mxu0
  %v4717 = vadd.f32 %v4548, %v4716
  %4718 = vmatmul.bf16.gmra.mxu0 %v2612
  %v4719 = vpop.f32.mrf.mxu0
  %v4720 = vadd.f32 %v4551, %v4719
  %v4721 = vpop.f32.mrf.mxu0
  %v4722 = vadd.f32 %v4553, %v4721
  %4723 = vmatmul.bf16.gmra.mxu0 %v2628
  %v4724 = vpop.f32.mrf.mxu0
  %v4725 = vadd.f32 %v4556, %v4724
  %v4726 = vpop.f32.mrf.mxu0
  %v4727 = vadd.f32 %v4558, %v4726
  %4728 = vmatmul.bf16.gmra.mxu0 %v2644
  %v4729 = vpop.f32.mrf.mxu0
  %v4730 = vadd.f32 %v4561, %v4729
  %v4731 = vpop.f32.mrf.mxu0
  %v4732 = vadd.f32 %v4563, %v4731
  %4733 = vmatmul.bf16.gmra.mxu0 %v2660
  %v4734 = vpop.f32.mrf.mxu0
  %v4735 = vadd.f32 %v4566, %v4734
  %v4736 = vpop.f32.mrf.mxu0
  %v4737 = vadd.f32 %v4568, %v4736
  %4738 = vmatmul.bf16.gmra.mxu0 %v2676
  %v4739 = vpop.f32.mrf.mxu0
  %v4740 = vadd.f32 %v4571, %v4739
  %v4741 = vpop.f32.mrf.mxu0
  %v4742 = vadd.f32 %v4573, %v4741
  %4743 = vmatmul.bf16.gmra.mxu0 %v2692
  %v4744 = vpop.f32.mrf.mxu0
  %v4745 = vadd.f32 %v4576, %v4744
  %v4746 = vpop.f32.mrf.mxu0
  %v4747 = vadd.f32 %v4578, %v4746
  %4748 = vmatmul.bf16.gmra.mxu0 %v2708
  %v4749 = vpop.f32.mrf.mxu0
  %v4750 = vadd.f32 %v4581, %v4749
  %v4751 = vpop.f32.mrf.mxu0
  %v4752 = vadd.f32 %v4583, %v4751
  %4753 = vmatmul.bf16.gmra.mxu0 %v2724
  %v4754 = vpop.f32.mrf.mxu0
  %v4755 = vadd.f32 %v4586, %v4754
  %v4756 = vpop.f32.mrf.mxu0
  %v4757 = vadd.f32 %v4588, %v4756
  %4758 = vmatmul.bf16.gmra.mxu0 %v2740
  %v4759 = vpop.f32.mrf.mxu0
  %v4760 = vadd.f32 %v4591, %v4759
  %v4761 = vpop.f32.mrf.mxu0
  %v4762 = vadd.f32 %v4593, %v4761
  %4763 = vmatmul.bf16.gmra.mxu0 %v2756
  %v4764 = vpop.f32.mrf.mxu0
  %v4765 = vadd.f32 %v4596, %v4764
  %v4766 = vpop.f32.mrf.mxu0
  %v4767 = vadd.f32 %v4598, %v4766
  %4768 = vmatmul.bf16.gmra.mxu0 %v2772
  %v4769 = vpop.f32.mrf.mxu0
  %v4770 = vadd.f32 %v4601, %v4769
  %v4771 = vpop.f32.mrf.mxu0
  %v4772 = vadd.f32 %v4603, %v4771
  %4773 = vmatmul.bf16.gmra.mxu0 %v2788
  %v4774 = vpop.f32.mrf.mxu0
  %v4775 = vadd.f32 %v4606, %v4774
  %v4776 = vpop.f32.mrf.mxu0
  %v4777 = vadd.f32 %v4608, %v4776
  %4778 = vmatmul.bf16.gmra.mxu0 %v2804
  %v4779 = vpop.f32.mrf.mxu0
  %v4780 = vadd.f32 %v4611, %v4779
  %v4781 = vpop.f32.mrf.mxu0
  %v4782 = vadd.f32 %v4613, %v4781
  %4783 = vmatmul.bf16.gmra.mxu0 %v2820
  %v4784 = vpop.f32.mrf.mxu0
  %v4785 = vadd.f32 %v4616, %v4784
  %v4786 = vpop.f32.mrf.mxu0
  %v4787 = vadd.f32 %v4618, %v4786
  %4788 = vdwg.mxu0
  %4789 = vmatpush.bf16.msra.mxu0 %v3896
  %4790 = vmatpush.bf16.msra.mxu0 %v3895
  %4791 = vmatpush.bf16.msra.mxu0 %v3894
  %4792 = vmatpush.bf16.msra.mxu0 %v3893
  %4793 = vmatpush.bf16.msra.mxu0 %v3892
  %4794 = vmatpush.bf16.msra.mxu0 %v3891
  %4795 = vmatpush.bf16.msra.mxu0 %v3890
  %4796 = vmatpush.bf16.msra.mxu0 %v3889
  %4797 = vmatmul.bf16.gmra.mxu0 %v2325
  %v4798 = vpop.f32.mrf.mxu0
  %v4799 = vadd.f32 %v4630, %v4798
  %v4800 = vpop.f32.mrf.mxu0
  %v4801 = vadd.f32 %v4632, %v4800
  %4802 = vmatmul.bf16.gmra.mxu0 %v2341
  %v4803 = vpop.f32.mrf.mxu0
  %v4804 = vadd.f32 %v4635, %v4803
  %v4805 = vpop.f32.mrf.mxu0
  %v4806 = vadd.f32 %v4637, %v4805
  %4807 = vmatmul.bf16.gmra.mxu0 %v2357
  %v4808 = vpop.f32.mrf.mxu0
  %v4809 = vadd.f32 %v4640, %v4808
  %v4810 = vpop.f32.mrf.mxu0
  %v4811 = vadd.f32 %v4642, %v4810
  %4812 = vmatmul.bf16.gmra.mxu0 %v2373
  %v4813 = vpop.f32.mrf.mxu0
  %v4814 = vadd.f32 %v4645, %v4813
  %v4815 = vpop.f32.mrf.mxu0
  %v4816 = vadd.f32 %v4647, %v4815
  %4817 = vmatmul.bf16.gmra.mxu0 %v2389
  %v4818 = vpop.f32.mrf.mxu0
  %v4819 = vadd.f32 %v4650, %v4818
  %v4820 = vpop.f32.mrf.mxu0
  %v4821 = vadd.f32 %v4652, %v4820
  %4822 = vmatmul.bf16.gmra.mxu0 %v2405
  %v4823 = vpop.f32.mrf.mxu0
  %v4824 = vadd.f32 %v4655, %v4823
  %v4825 = vpop.f32.mrf.mxu0
  %v4826 = vadd.f32 %v4657, %v4825
  %4827 = vmatmul.bf16.gmra.mxu0 %v2421
  %v4828 = vpop.f32.mrf.mxu0
  %v4829 = vadd.f32 %v4660, %v4828
  %v4830 = vpop.f32.mrf.mxu0
  %v4831 = vadd.f32 %v4662, %v4830
  %4832 = vmatmul.bf16.gmra.mxu0 %v2437
  %v4833 = vpop.f32.mrf.mxu0
  %v4834 = vadd.f32 %v4665, %v4833
  %v4835 = vpop.f32.mrf.mxu0
  %v4836 = vadd.f32 %v4667, %v4835
  %4837 = vmatmul.bf16.gmra.mxu0 %v2453
  %v4838 = vpop.f32.mrf.mxu0
  %v4839 = vadd.f32 %v4670, %v4838
  %v4840 = vpop.f32.mrf.mxu0
  %v4841 = vadd.f32 %v4672, %v4840
  %4842 = vmatmul.bf16.gmra.mxu0 %v2469
  %v4843 = vpop.f32.mrf.mxu0
  %v4844 = vadd.f32 %v4675, %v4843
  %v4845 = vpop.f32.mrf.mxu0
  %v4846 = vadd.f32 %v4677, %v4845
  %4847 = vmatmul.bf16.gmra.mxu0 %v2485
  %v4848 = vpop.f32.mrf.mxu0
  %v4849 = vadd.f32 %v4680, %v4848
  %v4850 = vpop.f32.mrf.mxu0
  %v4851 = vadd.f32 %v4682, %v4850
  %4852 = vmatmul.bf16.gmra.mxu0 %v2501
  %v4853 = vpop.f32.mrf.mxu0
  %v4854 = vadd.f32 %v4685, %v4853
  %v4855 = vpop.f32.mrf.mxu0
  %v4856 = vadd.f32 %v4687, %v4855
  %4857 = vmatmul.bf16.gmra.mxu0 %v2517
  %v4858 = vpop.f32.mrf.mxu0
  %v4859 = vadd.f32 %v4690, %v4858
  %v4860 = vpop.f32.mrf.mxu0
  %v4861 = vadd.f32 %v4692, %v4860
  %4862 = vmatmul.bf16.gmra.mxu0 %v2533
  %v4863 = vpop.f32.mrf.mxu0
  %v4864 = vadd.f32 %v4695, %v4863
  %v4865 = vpop.f32.mrf.mxu0
  %v4866 = vadd.f32 %v4697, %v4865
  %4867 = vmatmul.bf16.gmra.mxu0 %v2549
  %v4868 = vpop.f32.mrf.mxu0
  %v4869 = vadd.f32 %v4700, %v4868
  %v4870 = vpop.f32.mrf.mxu0
  %v4871 = vadd.f32 %v4702, %v4870
  %4872 = vmatmul.bf16.gmra.mxu0 %v2565
  %v4873 = vpop.f32.mrf.mxu0
  %v4874 = vadd.f32 %v4705, %v4873
  %v4875 = vpop.f32.mrf.mxu0
  %v4876 = vadd.f32 %v4707, %v4875
  %4877 = vmatmul.bf16.gmra.mxu0 %v2581
  %v4878 = vpop.f32.mrf.mxu0
  %v4879 = vadd.f32 %v4710, %v4878
  %v4880 = vpop.f32.mrf.mxu0
  %v4881 = vadd.f32 %v4712, %v4880
  %4882 = vmatmul.bf16.gmra.mxu0 %v2597
  %v4883 = vpop.f32.mrf.mxu0
  %v4884 = vadd.f32 %v4715, %v4883
  %v4885 = vpop.f32.mrf.mxu0
  %v4886 = vadd.f32 %v4717, %v4885
  %4887 = vmatmul.bf16.gmra.mxu0 %v2613
  %v4888 = vpop.f32.mrf.mxu0
  %v4889 = vadd.f32 %v4720, %v4888
  %v4890 = vpop.f32.mrf.mxu0
  %v4891 = vadd.f32 %v4722, %v4890
  %4892 = vmatmul.bf16.gmra.mxu0 %v2629
  %v4893 = vpop.f32.mrf.mxu0
  %v4894 = vadd.f32 %v4725, %v4893
  %v4895 = vpop.f32.mrf.mxu0
  %v4896 = vadd.f32 %v4727, %v4895
  %4897 = vmatmul.bf16.gmra.mxu0 %v2645
  %v4898 = vpop.f32.mrf.mxu0
  %v4899 = vadd.f32 %v4730, %v4898
  %v4900 = vpop.f32.mrf.mxu0
  %v4901 = vadd.f32 %v4732, %v4900
  %4902 = vmatmul.bf16.gmra.mxu0 %v2661
  %v4903 = vpop.f32.mrf.mxu0
  %v4904 = vadd.f32 %v4735, %v4903
  %v4905 = vpop.f32.mrf.mxu0
  %v4906 = vadd.f32 %v4737, %v4905
  %4907 = vmatmul.bf16.gmra.mxu0 %v2677
  %v4908 = vpop.f32.mrf.mxu0
  %v4909 = vadd.f32 %v4740, %v4908
  %v4910 = vpop.f32.mrf.mxu0
  %v4911 = vadd.f32 %v4742, %v4910
  %4912 = vmatmul.bf16.gmra.mxu0 %v2693
  %v4913 = vpop.f32.mrf.mxu0
  %v4914 = vadd.f32 %v4745, %v4913
  %v4915 = vpop.f32.mrf.mxu0
  %v4916 = vadd.f32 %v4747, %v4915
  %4917 = vmatmul.bf16.gmra.mxu0 %v2709
  %v4918 = vpop.f32.mrf.mxu0
  %v4919 = vadd.f32 %v4750, %v4918
  %v4920 = vpop.f32.mrf.mxu0
  %v4921 = vadd.f32 %v4752, %v4920
  %4922 = vmatmul.bf16.gmra.mxu0 %v2725
  %v4923 = vpop.f32.mrf.mxu0
  %v4924 = vadd.f32 %v4755, %v4923
  %v4925 = vpop.f32.mrf.mxu0
  %v4926 = vadd.f32 %v4757, %v4925
  %4927 = vmatmul.bf16.gmra.mxu0 %v2741
  %v4928 = vpop.f32.mrf.mxu0
  %v4929 = vadd.f32 %v4760, %v4928
  %v4930 = vpop.f32.mrf.mxu0
  %v4931 = vadd.f32 %v4762, %v4930
  %4932 = vmatmul.bf16.gmra.mxu0 %v2757
  %v4933 = vpop.f32.mrf.mxu0
  %v4934 = vadd.f32 %v4765, %v4933
  %v4935 = vpop.f32.mrf.mxu0
  %v4936 = vadd.f32 %v4767, %v4935
  %4937 = vmatmul.bf16.gmra.mxu0 %v2773
  %v4938 = vpop.f32.mrf.mxu0
  %v4939 = vadd.f32 %v4770, %v4938
  %v4940 = vpop.f32.mrf.mxu0
  %v4941 = vadd.f32 %v4772, %v4940
  %4942 = vmatmul.bf16.gmra.mxu0 %v2789
  %v4943 = vpop.f32.mrf.mxu0
  %v4944 = vadd.f32 %v4775, %v4943
  %v4945 = vpop.f32.mrf.mxu0
  %v4946 = vadd.f32 %v4777, %v4945
  %4947 = vmatmul.bf16.gmra.mxu0 %v2805
  %v4948 = vpop.f32.mrf.mxu0
  %v4949 = vadd.f32 %v4780, %v4948
  %v4950 = vpop.f32.mrf.mxu0
  %v4951 = vadd.f32 %v4782, %v4950
  %4952 = vmatmul.bf16.gmra.mxu0 %v2821
  %v4953 = vpop.f32.mrf.mxu0
  %v4954 = vadd.f32 %v4785, %v4953
  %v4955 = vpop.f32.mrf.mxu0
  %v4956 = vadd.f32 %v4787, %v4955
  %4957 = vdwg.mxu0
  %4958 = vmatpush.bf16.msra.mxu0 %v3904
  %4959 = vmatpush.bf16.msra.mxu0 %v3903
  %4960 = vmatpush.bf16.msra.mxu0 %v3902
  %4961 = vmatpush.bf16.msra.mxu0 %v3901
  %4962 = vmatpush.bf16.msra.mxu0 %v3900
  %4963 = vmatpush.bf16.msra.mxu0 %v3899
  %4964 = vmatpush.bf16.msra.mxu0 %v3898
  %4965 = vmatpush.bf16.msra.mxu0 %v3897
  %4966 = vmatmul.bf16.gmra.mxu0 %v2326
  %v4967 = vpop.f32.mrf.mxu0
  %v4968 = vadd.f32 %v4799, %v4967
  %v4969 = vpop.f32.mrf.mxu0
  %v4970 = vadd.f32 %v4801, %v4969
  %4971 = vmatmul.bf16.gmra.mxu0 %v2342
  %v4972 = vpop.f32.mrf.mxu0
  %v4973 = vadd.f32 %v4804, %v4972
  %v4974 = vpop.f32.mrf.mxu0
  %v4975 = vadd.f32 %v4806, %v4974
  %4976 = vmatmul.bf16.gmra.mxu0 %v2358
  %v4977 = vpop.f32.mrf.mxu0
  %v4978 = vadd.f32 %v4809, %v4977
  %v4979 = vpop.f32.mrf.mxu0
  %v4980 = vadd.f32 %v4811, %v4979
  %4981 = vmatmul.bf16.gmra.mxu0 %v2374
  %v4982 = vpop.f32.mrf.mxu0
  %v4983 = vadd.f32 %v4814, %v4982
  %v4984 = vpop.f32.mrf.mxu0
  %v4985 = vadd.f32 %v4816, %v4984
  %4986 = vmatmul.bf16.gmra.mxu0 %v2390
  %v4987 = vpop.f32.mrf.mxu0
  %v4988 = vadd.f32 %v4819, %v4987
  %v4989 = vpop.f32.mrf.mxu0
  %v4990 = vadd.f32 %v4821, %v4989
  %4991 = vmatmul.bf16.gmra.mxu0 %v2406
  %v4992 = vpop.f32.mrf.mxu0
  %v4993 = vadd.f32 %v4824, %v4992
  %v4994 = vpop.f32.mrf.mxu0
  %v4995 = vadd.f32 %v4826, %v4994
  %4996 = vmatmul.bf16.gmra.mxu0 %v2422
  %v4997 = vpop.f32.mrf.mxu0
  %v4998 = vadd.f32 %v4829, %v4997
  %v4999 = vpop.f32.mrf.mxu0
  %v5000 = vadd.f32 %v4831, %v4999
  %5001 = vmatmul.bf16.gmra.mxu0 %v2438
  %v5002 = vpop.f32.mrf.mxu0
  %v5003 = vadd.f32 %v4834, %v5002
  %v5004 = vpop.f32.mrf.mxu0
  %v5005 = vadd.f32 %v4836, %v5004
  %5006 = vmatmul.bf16.gmra.mxu0 %v2454
  %v5007 = vpop.f32.mrf.mxu0
  %v5008 = vadd.f32 %v4839, %v5007
  %v5009 = vpop.f32.mrf.mxu0
  %v5010 = vadd.f32 %v4841, %v5009
  %5011 = vmatmul.bf16.gmra.mxu0 %v2470
  %v5012 = vpop.f32.mrf.mxu0
  %v5013 = vadd.f32 %v4844, %v5012
  %v5014 = vpop.f32.mrf.mxu0
  %v5015 = vadd.f32 %v4846, %v5014
  %5016 = vmatmul.bf16.gmra.mxu0 %v2486
  %v5017 = vpop.f32.mrf.mxu0
  %v5018 = vadd.f32 %v4849, %v5017
  %v5019 = vpop.f32.mrf.mxu0
  %v5020 = vadd.f32 %v4851, %v5019
  %5021 = vmatmul.bf16.gmra.mxu0 %v2502
  %v5022 = vpop.f32.mrf.mxu0
  %v5023 = vadd.f32 %v4854, %v5022
  %v5024 = vpop.f32.mrf.mxu0
  %v5025 = vadd.f32 %v4856, %v5024
  %5026 = vmatmul.bf16.gmra.mxu0 %v2518
  %v5027 = vpop.f32.mrf.mxu0
  %v5028 = vadd.f32 %v4859, %v5027
  %v5029 = vpop.f32.mrf.mxu0
  %v5030 = vadd.f32 %v4861, %v5029
  %5031 = vmatmul.bf16.gmra.mxu0 %v2534
  %v5032 = vpop.f32.mrf.mxu0
  %v5033 = vadd.f32 %v4864, %v5032
  %v5034 = vpop.f32.mrf.mxu0
  %v5035 = vadd.f32 %v4866, %v5034
  %5036 = vmatmul.bf16.gmra.mxu0 %v2550
  %v5037 = vpop.f32.mrf.mxu0
  %v5038 = vadd.f32 %v4869, %v5037
  %v5039 = vpop.f32.mrf.mxu0
  %v5040 = vadd.f32 %v4871, %v5039
  %5041 = vmatmul.bf16.gmra.mxu0 %v2566
  %v5042 = vpop.f32.mrf.mxu0
  %v5043 = vadd.f32 %v4874, %v5042
  %v5044 = vpop.f32.mrf.mxu0
  %v5045 = vadd.f32 %v4876, %v5044
  %5046 = vmatmul.bf16.gmra.mxu0 %v2582
  %v5047 = vpop.f32.mrf.mxu0
  %v5048 = vadd.f32 %v4879, %v5047
  %v5049 = vpop.f32.mrf.mxu0
  %v5050 = vadd.f32 %v4881, %v5049
  %5051 = vmatmul.bf16.gmra.mxu0 %v2598
  %v5052 = vpop.f32.mrf.mxu0
  %v5053 = vadd.f32 %v4884, %v5052
  %v5054 = vpop.f32.mrf.mxu0
  %v5055 = vadd.f32 %v4886, %v5054
  %5056 = vmatmul.bf16.gmra.mxu0 %v2614
  %v5057 = vpop.f32.mrf.mxu0
  %v5058 = vadd.f32 %v4889, %v5057
  %v5059 = vpop.f32.mrf.mxu0
  %v5060 = vadd.f32 %v4891, %v5059
  %5061 = vmatmul.bf16.gmra.mxu0 %v2630
  %v5062 = vpop.f32.mrf.mxu0
  %v5063 = vadd.f32 %v4894, %v5062
  %v5064 = vpop.f32.mrf.mxu0
  %v5065 = vadd.f32 %v4896, %v5064
  %5066 = vmatmul.bf16.gmra.mxu0 %v2646
  %v5067 = vpop.f32.mrf.mxu0
  %v5068 = vadd.f32 %v4899, %v5067
  %v5069 = vpop.f32.mrf.mxu0
  %v5070 = vadd.f32 %v4901, %v5069
  %5071 = vmatmul.bf16.gmra.mxu0 %v2662
  %v5072 = vpop.f32.mrf.mxu0
  %v5073 = vadd.f32 %v4904, %v5072
  %v5074 = vpop.f32.mrf.mxu0
  %v5075 = vadd.f32 %v4906, %v5074
  %5076 = vmatmul.bf16.gmra.mxu0 %v2678
  %v5077 = vpop.f32.mrf.mxu0
  %v5078 = vadd.f32 %v4909, %v5077
  %v5079 = vpop.f32.mrf.mxu0
  %v5080 = vadd.f32 %v4911, %v5079
  %5081 = vmatmul.bf16.gmra.mxu0 %v2694
  %v5082 = vpop.f32.mrf.mxu0
  %v5083 = vadd.f32 %v4914, %v5082
  %v5084 = vpop.f32.mrf.mxu0
  %v5085 = vadd.f32 %v4916, %v5084
  %5086 = vmatmul.bf16.gmra.mxu0 %v2710
  %v5087 = vpop.f32.mrf.mxu0
  %v5088 = vadd.f32 %v4919, %v5087
  %v5089 = vpop.f32.mrf.mxu0
  %v5090 = vadd.f32 %v4921, %v5089
  %5091 = vmatmul.bf16.gmra.mxu0 %v2726
  %v5092 = vpop.f32.mrf.mxu0
  %v5093 = vadd.f32 %v4924, %v5092
  %v5094 = vpop.f32.mrf.mxu0
  %v5095 = vadd.f32 %v4926, %v5094
  %5096 = vmatmul.bf16.gmra.mxu0 %v2742
  %v5097 = vpop.f32.mrf.mxu0
  %v5098 = vadd.f32 %v4929, %v5097
  %v5099 = vpop.f32.mrf.mxu0
  %v5100 = vadd.f32 %v4931, %v5099
  %5101 = vmatmul.bf16.gmra.mxu0 %v2758
  %v5102 = vpop.f32.mrf.mxu0
  %v5103 = vadd.f32 %v4934, %v5102
  %v5104 = vpop.f32.mrf.mxu0
  %v5105 = vadd.f32 %v4936, %v5104
  %5106 = vmatmul.bf16.gmra.mxu0 %v2774
  %v5107 = vpop.f32.mrf.mxu0
  %v5108 = vadd.f32 %v4939, %v5107
  %v5109 = vpop.f32.mrf.mxu0
  %v5110 = vadd.f32 %v4941, %v5109
  %5111 = vmatmul.bf16.gmra.mxu0 %v2790
  %v5112 = vpop.f32.mrf.mxu0
  %v5113 = vadd.f32 %v4944, %v5112
  %v5114 = vpop.f32.mrf.mxu0
  %v5115 = vadd.f32 %v4946, %v5114
  %5116 = vmatmul.bf16.gmra.mxu0 %v2806
  %v5117 = vpop.f32.mrf.mxu0
  %v5118 = vadd.f32 %v4949, %v5117
  %v5119 = vpop.f32.mrf.mxu0
  %v5120 = vadd.f32 %v4951, %v5119
  %5121 = vmatmul.bf16.gmra.mxu0 %v2822
  %v5122 = vpop.f32.mrf.mxu0
  %v5123 = vadd.f32 %v4954, %v5122
  %v5124 = vpop.f32.mrf.mxu0
  %v5125 = vadd.f32 %v4956, %v5124
  %5126 = vdwg.mxu0
  %5127 = vmatpush.bf16.msra.mxu0 %v3912
  %5128 = vmatpush.bf16.msra.mxu0 %v3911
  %5129 = vmatpush.bf16.msra.mxu0 %v3910
  %5130 = vmatpush.bf16.msra.mxu0 %v3909
  %5131 = vmatpush.bf16.msra.mxu0 %v3908
  %5132 = vmatpush.bf16.msra.mxu0 %v3907
  %5133 = vmatpush.bf16.msra.mxu0 %v3906
  %5134 = vmatpush.bf16.msra.mxu0 %v3905
  %5135 = vmatmul.bf16.gmra.mxu0 %v2327
  %v5136 = vpop.f32.mrf.mxu0
  %v5137 = vadd.f32 %v4968, %v5136
  %v5138 = vpop.f32.mrf.mxu0
  %v5139 = vadd.f32 %v4970, %v5138
  %5140 = vmatmul.bf16.gmra.mxu0 %v2343
  %v5141 = vpop.f32.mrf.mxu0
  %v5142 = vadd.f32 %v4973, %v5141
  %v5143 = vpop.f32.mrf.mxu0
  %v5144 = vadd.f32 %v4975, %v5143
  %5145 = vmatmul.bf16.gmra.mxu0 %v2359
  %v5146 = vpop.f32.mrf.mxu0
  %v5147 = vadd.f32 %v4978, %v5146
  %v5148 = vpop.f32.mrf.mxu0
  %v5149 = vadd.f32 %v4980, %v5148
  %5150 = vmatmul.bf16.gmra.mxu0 %v2375
  %v5151 = vpop.f32.mrf.mxu0
  %v5152 = vadd.f32 %v4983, %v5151
  %v5153 = vpop.f32.mrf.mxu0
  %v5154 = vadd.f32 %v4985, %v5153
  %5155 = vmatmul.bf16.gmra.mxu0 %v2391
  %v5156 = vpop.f32.mrf.mxu0
  %v5157 = vadd.f32 %v4988, %v5156
  %v5158 = vpop.f32.mrf.mxu0
  %v5159 = vadd.f32 %v4990, %v5158
  %5160 = vmatmul.bf16.gmra.mxu0 %v2407
  %v5161 = vpop.f32.mrf.mxu0
  %v5162 = vadd.f32 %v4993, %v5161
  %v5163 = vpop.f32.mrf.mxu0
  %v5164 = vadd.f32 %v4995, %v5163
  %5165 = vmatmul.bf16.gmra.mxu0 %v2423
  %v5166 = vpop.f32.mrf.mxu0
  %v5167 = vadd.f32 %v4998, %v5166
  %v5168 = vpop.f32.mrf.mxu0
  %v5169 = vadd.f32 %v5000, %v5168
  %5170 = vmatmul.bf16.gmra.mxu0 %v2439
  %v5171 = vpop.f32.mrf.mxu0
  %v5172 = vadd.f32 %v5003, %v5171
  %v5173 = vpop.f32.mrf.mxu0
  %v5174 = vadd.f32 %v5005, %v5173
  %5175 = vmatmul.bf16.gmra.mxu0 %v2455
  %v5176 = vpop.f32.mrf.mxu0
  %v5177 = vadd.f32 %v5008, %v5176
  %v5178 = vpop.f32.mrf.mxu0
  %v5179 = vadd.f32 %v5010, %v5178
  %5180 = vmatmul.bf16.gmra.mxu0 %v2471
  %v5181 = vpop.f32.mrf.mxu0
  %v5182 = vadd.f32 %v5013, %v5181
  %v5183 = vpop.f32.mrf.mxu0
  %v5184 = vadd.f32 %v5015, %v5183
  %5185 = vmatmul.bf16.gmra.mxu0 %v2487
  %v5186 = vpop.f32.mrf.mxu0
  %v5187 = vadd.f32 %v5018, %v5186
  %v5188 = vpop.f32.mrf.mxu0
  %v5189 = vadd.f32 %v5020, %v5188
  %5190 = vmatmul.bf16.gmra.mxu0 %v2503
  %v5191 = vpop.f32.mrf.mxu0
  %v5192 = vadd.f32 %v5023, %v5191
  %v5193 = vpop.f32.mrf.mxu0
  %v5194 = vadd.f32 %v5025, %v5193
  %5195 = vmatmul.bf16.gmra.mxu0 %v2519
  %v5196 = vpop.f32.mrf.mxu0
  %v5197 = vadd.f32 %v5028, %v5196
  %v5198 = vpop.f32.mrf.mxu0
  %v5199 = vadd.f32 %v5030, %v5198
  %5200 = vmatmul.bf16.gmra.mxu0 %v2535
  %v5201 = vpop.f32.mrf.mxu0
  %v5202 = vadd.f32 %v5033, %v5201
  %v5203 = vpop.f32.mrf.mxu0
  %v5204 = vadd.f32 %v5035, %v5203
  %5205 = vmatmul.bf16.gmra.mxu0 %v2551
  %v5206 = vpop.f32.mrf.mxu0
  %v5207 = vadd.f32 %v5038, %v5206
  %v5208 = vpop.f32.mrf.mxu0
  %v5209 = vadd.f32 %v5040, %v5208
  %5210 = vmatmul.bf16.gmra.mxu0 %v2567
  %v5211 = vpop.f32.mrf.mxu0
  %v5212 = vadd.f32 %v5043, %v5211
  %v5213 = vpop.f32.mrf.mxu0
  %v5214 = vadd.f32 %v5045, %v5213
  %5215 = vmatmul.bf16.gmra.mxu0 %v2583
  %v5216 = vpop.f32.mrf.mxu0
  %v5217 = vadd.f32 %v5048, %v5216
  %v5218 = vpop.f32.mrf.mxu0
  %v5219 = vadd.f32 %v5050, %v5218
  %5220 = vmatmul.bf16.gmra.mxu0 %v2599
  %v5221 = vpop.f32.mrf.mxu0
  %v5222 = vadd.f32 %v5053, %v5221
  %v5223 = vpop.f32.mrf.mxu0
  %v5224 = vadd.f32 %v5055, %v5223
  %5225 = vmatmul.bf16.gmra.mxu0 %v2615
  %v5226 = vpop.f32.mrf.mxu0
  %v5227 = vadd.f32 %v5058, %v5226
  %v5228 = vpop.f32.mrf.mxu0
  %v5229 = vadd.f32 %v5060, %v5228
  %5230 = vmatmul.bf16.gmra.mxu0 %v2631
  %v5231 = vpop.f32.mrf.mxu0
  %v5232 = vadd.f32 %v5063, %v5231
  %v5233 = vpop.f32.mrf.mxu0
  %v5234 = vadd.f32 %v5065, %v5233
  %5235 = vmatmul.bf16.gmra.mxu0 %v2647
  %v5236 = vpop.f32.mrf.mxu0
  %v5237 = vadd.f32 %v5068, %v5236
  %v5238 = vpop.f32.mrf.mxu0
  %v5239 = vadd.f32 %v5070, %v5238
  %5240 = vmatmul.bf16.gmra.mxu0 %v2663
  %v5241 = vpop.f32.mrf.mxu0
  %v5242 = vadd.f32 %v5073, %v5241
  %v5243 = vpop.f32.mrf.mxu0
  %v5244 = vadd.f32 %v5075, %v5243
  %5245 = vmatmul.bf16.gmra.mxu0 %v2679
  %v5246 = vpop.f32.mrf.mxu0
  %v5247 = vadd.f32 %v5078, %v5246
  %v5248 = vpop.f32.mrf.mxu0
  %v5249 = vadd.f32 %v5080, %v5248
  %5250 = vmatmul.bf16.gmra.mxu0 %v2695
  %v5251 = vpop.f32.mrf.mxu0
  %v5252 = vadd.f32 %v5083, %v5251
  %v5253 = vpop.f32.mrf.mxu0
  %v5254 = vadd.f32 %v5085, %v5253
  %5255 = vmatmul.bf16.gmra.mxu0 %v2711
  %v5256 = vpop.f32.mrf.mxu0
  %v5257 = vadd.f32 %v5088, %v5256
  %v5258 = vpop.f32.mrf.mxu0
  %v5259 = vadd.f32 %v5090, %v5258
  %5260 = vmatmul.bf16.gmra.mxu0 %v2727
  %v5261 = vpop.f32.mrf.mxu0
  %v5262 = vadd.f32 %v5093, %v5261
  %v5263 = vpop.f32.mrf.mxu0
  %v5264 = vadd.f32 %v5095, %v5263
  %5265 = vmatmul.bf16.gmra.mxu0 %v2743
  %v5266 = vpop.f32.mrf.mxu0
  %v5267 = vadd.f32 %v5098, %v5266
  %v5268 = vpop.f32.mrf.mxu0
  %v5269 = vadd.f32 %v5100, %v5268
  %5270 = vmatmul.bf16.gmra.mxu0 %v2759
  %v5271 = vpop.f32.mrf.mxu0
  %v5272 = vadd.f32 %v5103, %v5271
  %v5273 = vpop.f32.mrf.mxu0
  %v5274 = vadd.f32 %v5105, %v5273
  %5275 = vmatmul.bf16.gmra.mxu0 %v2775
  %v5276 = vpop.f32.mrf.mxu0
  %v5277 = vadd.f32 %v5108, %v5276
  %v5278 = vpop.f32.mrf.mxu0
  %v5279 = vadd.f32 %v5110, %v5278
  %5280 = vmatmul.bf16.gmra.mxu0 %v2791
  %v5281 = vpop.f32.mrf.mxu0
  %v5282 = vadd.f32 %v5113, %v5281
  %v5283 = vpop.f32.mrf.mxu0
  %v5284 = vadd.f32 %v5115, %v5283
  %5285 = vmatmul.bf16.gmra.mxu0 %v2807
  %v5286 = vpop.f32.mrf.mxu0
  %v5287 = vadd.f32 %v5118, %v5286
  %v5288 = vpop.f32.mrf.mxu0
  %v5289 = vadd.f32 %v5120, %v5288
  %5290 = vmatmul.bf16.gmra.mxu0 %v2823
  %v5291 = vpop.f32.mrf.mxu0
  %v5292 = vadd.f32 %v5123, %v5291
  %v5293 = vpop.f32.mrf.mxu0
  %v5294 = vadd.f32 %v5125, %v5293
  %5295 = vdwg.mxu0
  %5296 = vmatpush.bf16.msra.mxu0 %v3920
  %5297 = vmatpush.bf16.msra.mxu0 %v3919
  %5298 = vmatpush.bf16.msra.mxu0 %v3918
  %5299 = vmatpush.bf16.msra.mxu0 %v3917
  %5300 = vmatpush.bf16.msra.mxu0 %v3916
  %5301 = vmatpush.bf16.msra.mxu0 %v3915
  %5302 = vmatpush.bf16.msra.mxu0 %v3914
  %5303 = vmatpush.bf16.msra.mxu0 %v3913
  %5304 = vmatmul.bf16.gmra.mxu0 %v2328
  %v5305 = vpop.f32.mrf.mxu0
  %v5306 = vadd.f32 %v5137, %v5305
  %v5307 = vpop.f32.mrf.mxu0
  %v5308 = vadd.f32 %v5139, %v5307
  %5309 = vmatmul.bf16.gmra.mxu0 %v2344
  %v5310 = vpop.f32.mrf.mxu0
  %v5311 = vadd.f32 %v5142, %v5310
  %v5312 = vpop.f32.mrf.mxu0
  %v5313 = vadd.f32 %v5144, %v5312
  %5314 = vmatmul.bf16.gmra.mxu0 %v2360
  %v5315 = vpop.f32.mrf.mxu0
  %v5316 = vadd.f32 %v5147, %v5315
  %v5317 = vpop.f32.mrf.mxu0
  %v5318 = vadd.f32 %v5149, %v5317
  %5319 = vmatmul.bf16.gmra.mxu0 %v2376
  %v5320 = vpop.f32.mrf.mxu0
  %v5321 = vadd.f32 %v5152, %v5320
  %v5322 = vpop.f32.mrf.mxu0
  %v5323 = vadd.f32 %v5154, %v5322
  %5324 = vmatmul.bf16.gmra.mxu0 %v2392
  %v5325 = vpop.f32.mrf.mxu0
  %v5326 = vadd.f32 %v5157, %v5325
  %v5327 = vpop.f32.mrf.mxu0
  %v5328 = vadd.f32 %v5159, %v5327
  %5329 = vmatmul.bf16.gmra.mxu0 %v2408
  %v5330 = vpop.f32.mrf.mxu0
  %v5331 = vadd.f32 %v5162, %v5330
  %v5332 = vpop.f32.mrf.mxu0
  %v5333 = vadd.f32 %v5164, %v5332
  %5334 = vmatmul.bf16.gmra.mxu0 %v2424
  %v5335 = vpop.f32.mrf.mxu0
  %v5336 = vadd.f32 %v5167, %v5335
  %v5337 = vpop.f32.mrf.mxu0
  %v5338 = vadd.f32 %v5169, %v5337
  %5339 = vmatmul.bf16.gmra.mxu0 %v2440
  %v5340 = vpop.f32.mrf.mxu0
  %v5341 = vadd.f32 %v5172, %v5340
  %v5342 = vpop.f32.mrf.mxu0
  %v5343 = vadd.f32 %v5174, %v5342
  %5344 = vmatmul.bf16.gmra.mxu0 %v2456
  %v5345 = vpop.f32.mrf.mxu0
  %v5346 = vadd.f32 %v5177, %v5345
  %v5347 = vpop.f32.mrf.mxu0
  %v5348 = vadd.f32 %v5179, %v5347
  %5349 = vmatmul.bf16.gmra.mxu0 %v2472
  %v5350 = vpop.f32.mrf.mxu0
  %v5351 = vadd.f32 %v5182, %v5350
  %v5352 = vpop.f32.mrf.mxu0
  %v5353 = vadd.f32 %v5184, %v5352
  %5354 = vmatmul.bf16.gmra.mxu0 %v2488
  %v5355 = vpop.f32.mrf.mxu0
  %v5356 = vadd.f32 %v5187, %v5355
  %v5357 = vpop.f32.mrf.mxu0
  %v5358 = vadd.f32 %v5189, %v5357
  %5359 = vmatmul.bf16.gmra.mxu0 %v2504
  %v5360 = vpop.f32.mrf.mxu0
  %v5361 = vadd.f32 %v5192, %v5360
  %v5362 = vpop.f32.mrf.mxu0
  %v5363 = vadd.f32 %v5194, %v5362
  %5364 = vmatmul.bf16.gmra.mxu0 %v2520
  %v5365 = vpop.f32.mrf.mxu0
  %v5366 = vadd.f32 %v5197, %v5365
  %v5367 = vpop.f32.mrf.mxu0
  %v5368 = vadd.f32 %v5199, %v5367
  %5369 = vmatmul.bf16.gmra.mxu0 %v2536
  %v5370 = vpop.f32.mrf.mxu0
  %v5371 = vadd.f32 %v5202, %v5370
  %v5372 = vpop.f32.mrf.mxu0
  %v5373 = vadd.f32 %v5204, %v5372
  %5374 = vmatmul.bf16.gmra.mxu0 %v2552
  %v5375 = vpop.f32.mrf.mxu0
  %v5376 = vadd.f32 %v5207, %v5375
  %v5377 = vpop.f32.mrf.mxu0
  %v5378 = vadd.f32 %v5209, %v5377
  %5379 = vmatmul.bf16.gmra.mxu0 %v2568
  %v5380 = vpop.f32.mrf.mxu0
  %v5381 = vadd.f32 %v5212, %v5380
  %v5382 = vpop.f32.mrf.mxu0
  %v5383 = vadd.f32 %v5214, %v5382
  %5384 = vmatmul.bf16.gmra.mxu0 %v2584
  %v5385 = vpop.f32.mrf.mxu0
  %v5386 = vadd.f32 %v5217, %v5385
  %v5387 = vpop.f32.mrf.mxu0
  %v5388 = vadd.f32 %v5219, %v5387
  %5389 = vmatmul.bf16.gmra.mxu0 %v2600
  %v5390 = vpop.f32.mrf.mxu0
  %v5391 = vadd.f32 %v5222, %v5390
  %v5392 = vpop.f32.mrf.mxu0
  %v5393 = vadd.f32 %v5224, %v5392
  %5394 = vmatmul.bf16.gmra.mxu0 %v2616
  %v5395 = vpop.f32.mrf.mxu0
  %v5396 = vadd.f32 %v5227, %v5395
  %v5397 = vpop.f32.mrf.mxu0
  %v5398 = vadd.f32 %v5229, %v5397
  %5399 = vmatmul.bf16.gmra.mxu0 %v2632
  %v5400 = vpop.f32.mrf.mxu0
  %v5401 = vadd.f32 %v5232, %v5400
  %v5402 = vpop.f32.mrf.mxu0
  %v5403 = vadd.f32 %v5234, %v5402
  %5404 = vmatmul.bf16.gmra.mxu0 %v2648
  %v5405 = vpop.f32.mrf.mxu0
  %v5406 = vadd.f32 %v5237, %v5405
  %v5407 = vpop.f32.mrf.mxu0
  %v5408 = vadd.f32 %v5239, %v5407
  %5409 = vmatmul.bf16.gmra.mxu0 %v2664
  %v5410 = vpop.f32.mrf.mxu0
  %v5411 = vadd.f32 %v5242, %v5410
  %v5412 = vpop.f32.mrf.mxu0
  %v5413 = vadd.f32 %v5244, %v5412
  %5414 = vmatmul.bf16.gmra.mxu0 %v2680
  %v5415 = vpop.f32.mrf.mxu0
  %v5416 = vadd.f32 %v5247, %v5415
  %v5417 = vpop.f32.mrf.mxu0
  %v5418 = vadd.f32 %v5249, %v5417
  %5419 = vmatmul.bf16.gmra.mxu0 %v2696
  %v5420 = vpop.f32.mrf.mxu0
  %v5421 = vadd.f32 %v5252, %v5420
  %v5422 = vpop.f32.mrf.mxu0
  %v5423 = vadd.f32 %v5254, %v5422
  %5424 = vmatmul.bf16.gmra.mxu0 %v2712
  %v5425 = vpop.f32.mrf.mxu0
  %v5426 = vadd.f32 %v5257, %v5425
  %v5427 = vpop.f32.mrf.mxu0
  %v5428 = vadd.f32 %v5259, %v5427
  %5429 = vmatmul.bf16.gmra.mxu0 %v2728
  %v5430 = vpop.f32.mrf.mxu0
  %v5431 = vadd.f32 %v5262, %v5430
  %v5432 = vpop.f32.mrf.mxu0
  %v5433 = vadd.f32 %v5264, %v5432
  %5434 = vmatmul.bf16.gmra.mxu0 %v2744
  %v5435 = vpop.f32.mrf.mxu0
  %v5436 = vadd.f32 %v5267, %v5435
  %v5437 = vpop.f32.mrf.mxu0
  %v5438 = vadd.f32 %v5269, %v5437
  %5439 = vmatmul.bf16.gmra.mxu0 %v2760
  %v5440 = vpop.f32.mrf.mxu0
  %v5441 = vadd.f32 %v5272, %v5440
  %v5442 = vpop.f32.mrf.mxu0
  %v5443 = vadd.f32 %v5274, %v5442
  %5444 = vmatmul.bf16.gmra.mxu0 %v2776
  %v5445 = vpop.f32.mrf.mxu0
  %v5446 = vadd.f32 %v5277, %v5445
  %v5447 = vpop.f32.mrf.mxu0
  %v5448 = vadd.f32 %v5279, %v5447
  %5449 = vmatmul.bf16.gmra.mxu0 %v2792
  %v5450 = vpop.f32.mrf.mxu0
  %v5451 = vadd.f32 %v5282, %v5450
  %v5452 = vpop.f32.mrf.mxu0
  %v5453 = vadd.f32 %v5284, %v5452
  %5454 = vmatmul.bf16.gmra.mxu0 %v2808
  %v5455 = vpop.f32.mrf.mxu0
  %v5456 = vadd.f32 %v5287, %v5455
  %v5457 = vpop.f32.mrf.mxu0
  %v5458 = vadd.f32 %v5289, %v5457
  %5459 = vmatmul.bf16.gmra.mxu0 %v2824
  %v5460 = vpop.f32.mrf.mxu0
  %v5461 = vadd.f32 %v5292, %v5460
  %v5462 = vpop.f32.mrf.mxu0
  %v5463 = vadd.f32 %v5294, %v5462
  %5464 = vdwg.mxu0
  %5465 = vmatpush.bf16.msra.mxu0 %v3928
  %5466 = vmatpush.bf16.msra.mxu0 %v3927
  %5467 = vmatpush.bf16.msra.mxu0 %v3926
  %5468 = vmatpush.bf16.msra.mxu0 %v3925
  %5469 = vmatpush.bf16.msra.mxu0 %v3924
  %5470 = vmatpush.bf16.msra.mxu0 %v3923
  %5471 = vmatpush.bf16.msra.mxu0 %v3922
  %5472 = vmatpush.bf16.msra.mxu0 %v3921
  %5473 = vmatmul.bf16.gmra.mxu0 %v2329
  %v5474 = vpop.f32.mrf.mxu0
  %v5475 = vadd.f32 %v5306, %v5474
  %v5476 = vpop.f32.mrf.mxu0
  %v5477 = vadd.f32 %v5308, %v5476
  %5478 = vmatmul.bf16.gmra.mxu0 %v2345
  %v5479 = vpop.f32.mrf.mxu0
  %v5480 = vadd.f32 %v5311, %v5479
  %v5481 = vpop.f32.mrf.mxu0
  %v5482 = vadd.f32 %v5313, %v5481
  %5483 = vmatmul.bf16.gmra.mxu0 %v2361
  %v5484 = vpop.f32.mrf.mxu0
  %v5485 = vadd.f32 %v5316, %v5484
  %v5486 = vpop.f32.mrf.mxu0
  %v5487 = vadd.f32 %v5318, %v5486
  %5488 = vmatmul.bf16.gmra.mxu0 %v2377
  %v5489 = vpop.f32.mrf.mxu0
  %v5490 = vadd.f32 %v5321, %v5489
  %v5491 = vpop.f32.mrf.mxu0
  %v5492 = vadd.f32 %v5323, %v5491
  %5493 = vmatmul.bf16.gmra.mxu0 %v2393
  %v5494 = vpop.f32.mrf.mxu0
  %v5495 = vadd.f32 %v5326, %v5494
  %v5496 = vpop.f32.mrf.mxu0
  %v5497 = vadd.f32 %v5328, %v5496
  %5498 = vmatmul.bf16.gmra.mxu0 %v2409
  %v5499 = vpop.f32.mrf.mxu0
  %v5500 = vadd.f32 %v5331, %v5499
  %v5501 = vpop.f32.mrf.mxu0
  %v5502 = vadd.f32 %v5333, %v5501
  %5503 = vmatmul.bf16.gmra.mxu0 %v2425
  %v5504 = vpop.f32.mrf.mxu0
  %v5505 = vadd.f32 %v5336, %v5504
  %v5506 = vpop.f32.mrf.mxu0
  %v5507 = vadd.f32 %v5338, %v5506
  %5508 = vmatmul.bf16.gmra.mxu0 %v2441
  %v5509 = vpop.f32.mrf.mxu0
  %v5510 = vadd.f32 %v5341, %v5509
  %v5511 = vpop.f32.mrf.mxu0
  %v5512 = vadd.f32 %v5343, %v5511
  %5513 = vmatmul.bf16.gmra.mxu0 %v2457
  %v5514 = vpop.f32.mrf.mxu0
  %v5515 = vadd.f32 %v5346, %v5514
  %v5516 = vpop.f32.mrf.mxu0
  %v5517 = vadd.f32 %v5348, %v5516
  %5518 = vmatmul.bf16.gmra.mxu0 %v2473
  %v5519 = vpop.f32.mrf.mxu0
  %v5520 = vadd.f32 %v5351, %v5519
  %v5521 = vpop.f32.mrf.mxu0
  %v5522 = vadd.f32 %v5353, %v5521
  %5523 = vmatmul.bf16.gmra.mxu0 %v2489
  %v5524 = vpop.f32.mrf.mxu0
  %v5525 = vadd.f32 %v5356, %v5524
  %v5526 = vpop.f32.mrf.mxu0
  %v5527 = vadd.f32 %v5358, %v5526
  %5528 = vmatmul.bf16.gmra.mxu0 %v2505
  %v5529 = vpop.f32.mrf.mxu0
  %v5530 = vadd.f32 %v5361, %v5529
  %v5531 = vpop.f32.mrf.mxu0
  %v5532 = vadd.f32 %v5363, %v5531
  %5533 = vmatmul.bf16.gmra.mxu0 %v2521
  %v5534 = vpop.f32.mrf.mxu0
  %v5535 = vadd.f32 %v5366, %v5534
  %v5536 = vpop.f32.mrf.mxu0
  %v5537 = vadd.f32 %v5368, %v5536
  %5538 = vmatmul.bf16.gmra.mxu0 %v2537
  %v5539 = vpop.f32.mrf.mxu0
  %v5540 = vadd.f32 %v5371, %v5539
  %v5541 = vpop.f32.mrf.mxu0
  %v5542 = vadd.f32 %v5373, %v5541
  %5543 = vmatmul.bf16.gmra.mxu0 %v2553
  %v5544 = vpop.f32.mrf.mxu0
  %v5545 = vadd.f32 %v5376, %v5544
  %v5546 = vpop.f32.mrf.mxu0
  %v5547 = vadd.f32 %v5378, %v5546
  %5548 = vmatmul.bf16.gmra.mxu0 %v2569
  %v5549 = vpop.f32.mrf.mxu0
  %v5550 = vadd.f32 %v5381, %v5549
  %v5551 = vpop.f32.mrf.mxu0
  %v5552 = vadd.f32 %v5383, %v5551
  %5553 = vmatmul.bf16.gmra.mxu0 %v2585
  %v5554 = vpop.f32.mrf.mxu0
  %v5555 = vadd.f32 %v5386, %v5554
  %v5556 = vpop.f32.mrf.mxu0
  %v5557 = vadd.f32 %v5388, %v5556
  %5558 = vmatmul.bf16.gmra.mxu0 %v2601
  %v5559 = vpop.f32.mrf.mxu0
  %v5560 = vadd.f32 %v5391, %v5559
  %v5561 = vpop.f32.mrf.mxu0
  %v5562 = vadd.f32 %v5393, %v5561
  %5563 = vmatmul.bf16.gmra.mxu0 %v2617
  %v5564 = vpop.f32.mrf.mxu0
  %v5565 = vadd.f32 %v5396, %v5564
  %v5566 = vpop.f32.mrf.mxu0
  %v5567 = vadd.f32 %v5398, %v5566
  %5568 = vmatmul.bf16.gmra.mxu0 %v2633
  %v5569 = vpop.f32.mrf.mxu0
  %v5570 = vadd.f32 %v5401, %v5569
  %v5571 = vpop.f32.mrf.mxu0
  %v5572 = vadd.f32 %v5403, %v5571
  %5573 = vmatmul.bf16.gmra.mxu0 %v2649
  %v5574 = vpop.f32.mrf.mxu0
  %v5575 = vadd.f32 %v5406, %v5574
  %v5576 = vpop.f32.mrf.mxu0
  %v5577 = vadd.f32 %v5408, %v5576
  %5578 = vmatmul.bf16.gmra.mxu0 %v2665
  %v5579 = vpop.f32.mrf.mxu0
  %v5580 = vadd.f32 %v5411, %v5579
  %v5581 = vpop.f32.mrf.mxu0
  %v5582 = vadd.f32 %v5413, %v5581
  %5583 = vmatmul.bf16.gmra.mxu0 %v2681
  %v5584 = vpop.f32.mrf.mxu0
  %v5585 = vadd.f32 %v5416, %v5584
  %v5586 = vpop.f32.mrf.mxu0
  %v5587 = vadd.f32 %v5418, %v5586
  %5588 = vmatmul.bf16.gmra.mxu0 %v2697
  %v5589 = vpop.f32.mrf.mxu0
  %v5590 = vadd.f32 %v5421, %v5589
  %v5591 = vpop.f32.mrf.mxu0
  %v5592 = vadd.f32 %v5423, %v5591
  %5593 = vmatmul.bf16.gmra.mxu0 %v2713
  %v5594 = vpop.f32.mrf.mxu0
  %v5595 = vadd.f32 %v5426, %v5594
  %v5596 = vpop.f32.mrf.mxu0
  %v5597 = vadd.f32 %v5428, %v5596
  %5598 = vmatmul.bf16.gmra.mxu0 %v2729
  %v5599 = vpop.f32.mrf.mxu0
  %v5600 = vadd.f32 %v5431, %v5599
  %v5601 = vpop.f32.mrf.mxu0
  %v5602 = vadd.f32 %v5433, %v5601
  %5603 = vmatmul.bf16.gmra.mxu0 %v2745
  %v5604 = vpop.f32.mrf.mxu0
  %v5605 = vadd.f32 %v5436, %v5604
  %v5606 = vpop.f32.mrf.mxu0
  %v5607 = vadd.f32 %v5438, %v5606
  %5608 = vmatmul.bf16.gmra.mxu0 %v2761
  %v5609 = vpop.f32.mrf.mxu0
  %v5610 = vadd.f32 %v5441, %v5609
  %v5611 = vpop.f32.mrf.mxu0
  %v5612 = vadd.f32 %v5443, %v5611
  %5613 = vmatmul.bf16.gmra.mxu0 %v2777
  %v5614 = vpop.f32.mrf.mxu0
  %v5615 = vadd.f32 %v5446, %v5614
  %v5616 = vpop.f32.mrf.mxu0
  %v5617 = vadd.f32 %v5448, %v5616
  %5618 = vmatmul.bf16.gmra.mxu0 %v2793
  %v5619 = vpop.f32.mrf.mxu0
  %v5620 = vadd.f32 %v5451, %v5619
  %v5621 = vpop.f32.mrf.mxu0
  %v5622 = vadd.f32 %v5453, %v5621
  %5623 = vmatmul.bf16.gmra.mxu0 %v2809
  %v5624 = vpop.f32.mrf.mxu0
  %v5625 = vadd.f32 %v5456, %v5624
  %v5626 = vpop.f32.mrf.mxu0
  %v5627 = vadd.f32 %v5458, %v5626
  %5628 = vmatmul.bf16.gmra.mxu0 %v2825
  %v5629 = vpop.f32.mrf.mxu0
  %v5630 = vadd.f32 %v5461, %v5629
  %v5631 = vpop.f32.mrf.mxu0
  %v5632 = vadd.f32 %v5463, %v5631
  %5633 = vdwg.mxu0
  %5634 = vmatpush.bf16.msra.mxu0 %v3936
  %5635 = vmatpush.bf16.msra.mxu0 %v3935
  %5636 = vmatpush.bf16.msra.mxu0 %v3934
  %5637 = vmatpush.bf16.msra.mxu0 %v3933
  %5638 = vmatpush.bf16.msra.mxu0 %v3932
  %5639 = vmatpush.bf16.msra.mxu0 %v3931
  %5640 = vmatpush.bf16.msra.mxu0 %v3930
  %5641 = vmatpush.bf16.msra.mxu0 %v3929
  %5642 = vmatmul.bf16.gmra.mxu0 %v2330
  %v5643 = vpop.f32.mrf.mxu0
  %v5644 = vadd.f32 %v5475, %v5643
  %v5645 = vpop.f32.mrf.mxu0
  %v5646 = vadd.f32 %v5477, %v5645
  %5647 = vmatmul.bf16.gmra.mxu0 %v2346
  %v5648 = vpop.f32.mrf.mxu0
  %v5649 = vadd.f32 %v5480, %v5648
  %v5650 = vpop.f32.mrf.mxu0
  %v5651 = vadd.f32 %v5482, %v5650
  %5652 = vmatmul.bf16.gmra.mxu0 %v2362
  %v5653 = vpop.f32.mrf.mxu0
  %v5654 = vadd.f32 %v5485, %v5653
  %v5655 = vpop.f32.mrf.mxu0
  %v5656 = vadd.f32 %v5487, %v5655
  %5657 = vmatmul.bf16.gmra.mxu0 %v2378
  %v5658 = vpop.f32.mrf.mxu0
  %v5659 = vadd.f32 %v5490, %v5658
  %v5660 = vpop.f32.mrf.mxu0
  %v5661 = vadd.f32 %v5492, %v5660
  %5662 = vmatmul.bf16.gmra.mxu0 %v2394
  %v5663 = vpop.f32.mrf.mxu0
  %v5664 = vadd.f32 %v5495, %v5663
  %v5665 = vpop.f32.mrf.mxu0
  %v5666 = vadd.f32 %v5497, %v5665
  %5667 = vmatmul.bf16.gmra.mxu0 %v2410
  %v5668 = vpop.f32.mrf.mxu0
  %v5669 = vadd.f32 %v5500, %v5668
  %v5670 = vpop.f32.mrf.mxu0
  %v5671 = vadd.f32 %v5502, %v5670
  %5672 = vmatmul.bf16.gmra.mxu0 %v2426
  %v5673 = vpop.f32.mrf.mxu0
  %v5674 = vadd.f32 %v5505, %v5673
  %v5675 = vpop.f32.mrf.mxu0
  %v5676 = vadd.f32 %v5507, %v5675
  %5677 = vmatmul.bf16.gmra.mxu0 %v2442
  %v5678 = vpop.f32.mrf.mxu0
  %v5679 = vadd.f32 %v5510, %v5678
  %v5680 = vpop.f32.mrf.mxu0
  %v5681 = vadd.f32 %v5512, %v5680
  %5682 = vmatmul.bf16.gmra.mxu0 %v2458
  %v5683 = vpop.f32.mrf.mxu0
  %v5684 = vadd.f32 %v5515, %v5683
  %v5685 = vpop.f32.mrf.mxu0
  %v5686 = vadd.f32 %v5517, %v5685
  %5687 = vmatmul.bf16.gmra.mxu0 %v2474
  %v5688 = vpop.f32.mrf.mxu0
  %v5689 = vadd.f32 %v5520, %v5688
  %v5690 = vpop.f32.mrf.mxu0
  %v5691 = vadd.f32 %v5522, %v5690
  %5692 = vmatmul.bf16.gmra.mxu0 %v2490
  %v5693 = vpop.f32.mrf.mxu0
  %v5694 = vadd.f32 %v5525, %v5693
  %v5695 = vpop.f32.mrf.mxu0
  %v5696 = vadd.f32 %v5527, %v5695
  %5697 = vmatmul.bf16.gmra.mxu0 %v2506
  %v5698 = vpop.f32.mrf.mxu0
  %v5699 = vadd.f32 %v5530, %v5698
  %v5700 = vpop.f32.mrf.mxu0
  %v5701 = vadd.f32 %v5532, %v5700
  %5702 = vmatmul.bf16.gmra.mxu0 %v2522
  %v5703 = vpop.f32.mrf.mxu0
  %v5704 = vadd.f32 %v5535, %v5703
  %v5705 = vpop.f32.mrf.mxu0
  %v5706 = vadd.f32 %v5537, %v5705
  %5707 = vmatmul.bf16.gmra.mxu0 %v2538
  %v5708 = vpop.f32.mrf.mxu0
  %v5709 = vadd.f32 %v5540, %v5708
  %v5710 = vpop.f32.mrf.mxu0
  %v5711 = vadd.f32 %v5542, %v5710
  %5712 = vmatmul.bf16.gmra.mxu0 %v2554
  %v5713 = vpop.f32.mrf.mxu0
  %v5714 = vadd.f32 %v5545, %v5713
  %v5715 = vpop.f32.mrf.mxu0
  %v5716 = vadd.f32 %v5547, %v5715
  %5717 = vmatmul.bf16.gmra.mxu0 %v2570
  %v5718 = vpop.f32.mrf.mxu0
  %v5719 = vadd.f32 %v5550, %v5718
  %v5720 = vpop.f32.mrf.mxu0
  %v5721 = vadd.f32 %v5552, %v5720
  %5722 = vmatmul.bf16.gmra.mxu0 %v2586
  %v5723 = vpop.f32.mrf.mxu0
  %v5724 = vadd.f32 %v5555, %v5723
  %v5725 = vpop.f32.mrf.mxu0
  %v5726 = vadd.f32 %v5557, %v5725
  %5727 = vmatmul.bf16.gmra.mxu0 %v2602
  %v5728 = vpop.f32.mrf.mxu0
  %v5729 = vadd.f32 %v5560, %v5728
  %v5730 = vpop.f32.mrf.mxu0
  %v5731 = vadd.f32 %v5562, %v5730
  %5732 = vmatmul.bf16.gmra.mxu0 %v2618
  %v5733 = vpop.f32.mrf.mxu0
  %v5734 = vadd.f32 %v5565, %v5733
  %v5735 = vpop.f32.mrf.mxu0
  %v5736 = vadd.f32 %v5567, %v5735
  %5737 = vmatmul.bf16.gmra.mxu0 %v2634
  %v5738 = vpop.f32.mrf.mxu0
  %v5739 = vadd.f32 %v5570, %v5738
  %v5740 = vpop.f32.mrf.mxu0
  %v5741 = vadd.f32 %v5572, %v5740
  %5742 = vmatmul.bf16.gmra.mxu0 %v2650
  %v5743 = vpop.f32.mrf.mxu0
  %v5744 = vadd.f32 %v5575, %v5743
  %v5745 = vpop.f32.mrf.mxu0
  %v5746 = vadd.f32 %v5577, %v5745
  %5747 = vmatmul.bf16.gmra.mxu0 %v2666
  %v5748 = vpop.f32.mrf.mxu0
  %v5749 = vadd.f32 %v5580, %v5748
  %v5750 = vpop.f32.mrf.mxu0
  %v5751 = vadd.f32 %v5582, %v5750
  %5752 = vmatmul.bf16.gmra.mxu0 %v2682
  %v5753 = vpop.f32.mrf.mxu0
  %v5754 = vadd.f32 %v5585, %v5753
  %v5755 = vpop.f32.mrf.mxu0
  %v5756 = vadd.f32 %v5587, %v5755
  %5757 = vmatmul.bf16.gmra.mxu0 %v2698
  %v5758 = vpop.f32.mrf.mxu0
  %v5759 = vadd.f32 %v5590, %v5758
  %v5760 = vpop.f32.mrf.mxu0
  %v5761 = vadd.f32 %v5592, %v5760
  %5762 = vmatmul.bf16.gmra.mxu0 %v2714
  %v5763 = vpop.f32.mrf.mxu0
  %v5764 = vadd.f32 %v5595, %v5763
  %v5765 = vpop.f32.mrf.mxu0
  %v5766 = vadd.f32 %v5597, %v5765
  %5767 = vmatmul.bf16.gmra.mxu0 %v2730
  %v5768 = vpop.f32.mrf.mxu0
  %v5769 = vadd.f32 %v5600, %v5768
  %v5770 = vpop.f32.mrf.mxu0
  %v5771 = vadd.f32 %v5602, %v5770
  %5772 = vmatmul.bf16.gmra.mxu0 %v2746
  %v5773 = vpop.f32.mrf.mxu0
  %v5774 = vadd.f32 %v5605, %v5773
  %v5775 = vpop.f32.mrf.mxu0
  %v5776 = vadd.f32 %v5607, %v5775
  %5777 = vmatmul.bf16.gmra.mxu0 %v2762
  %v5778 = vpop.f32.mrf.mxu0
  %v5779 = vadd.f32 %v5610, %v5778
  %v5780 = vpop.f32.mrf.mxu0
  %v5781 = vadd.f32 %v5612, %v5780
  %5782 = vmatmul.bf16.gmra.mxu0 %v2778
  %v5783 = vpop.f32.mrf.mxu0
  %v5784 = vadd.f32 %v5615, %v5783
  %v5785 = vpop.f32.mrf.mxu0
  %v5786 = vadd.f32 %v5617, %v5785
  %5787 = vmatmul.bf16.gmra.mxu0 %v2794
  %v5788 = vpop.f32.mrf.mxu0
  %v5789 = vadd.f32 %v5620, %v5788
  %v5790 = vpop.f32.mrf.mxu0
  %v5791 = vadd.f32 %v5622, %v5790
  %5792 = vmatmul.bf16.gmra.mxu0 %v2810
  %v5793 = vpop.f32.mrf.mxu0
  %v5794 = vadd.f32 %v5625, %v5793
  %v5795 = vpop.f32.mrf.mxu0
  %v5796 = vadd.f32 %v5627, %v5795
  %5797 = vmatmul.bf16.gmra.mxu0 %v2826
  %v5798 = vpop.f32.mrf.mxu0
  %v5799 = vadd.f32 %v5630, %v5798
  %v5800 = vpop.f32.mrf.mxu0
  %v5801 = vadd.f32 %v5632, %v5800
  %5802 = vdwg.mxu0
  %5803 = vmatpush.bf16.msra.mxu0 %v3944
  %5804 = vmatpush.bf16.msra.mxu0 %v3943
  %5805 = vmatpush.bf16.msra.mxu0 %v3942
  %5806 = vmatpush.bf16.msra.mxu0 %v3941
  %5807 = vmatpush.bf16.msra.mxu0 %v3940
  %5808 = vmatpush.bf16.msra.mxu0 %v3939
  %5809 = vmatpush.bf16.msra.mxu0 %v3938
  %5810 = vmatpush.bf16.msra.mxu0 %v3937
  %5811 = vmatmul.bf16.gmra.mxu0 %v2331
  %v5812 = vpop.f32.mrf.mxu0
  %v5813 = vadd.f32 %v5644, %v5812
  %v5814 = vpop.f32.mrf.mxu0
  %v5815 = vadd.f32 %v5646, %v5814
  %5816 = vmatmul.bf16.gmra.mxu0 %v2347
  %v5817 = vpop.f32.mrf.mxu0
  %v5818 = vadd.f32 %v5649, %v5817
  %v5819 = vpop.f32.mrf.mxu0
  %v5820 = vadd.f32 %v5651, %v5819
  %5821 = vmatmul.bf16.gmra.mxu0 %v2363
  %v5822 = vpop.f32.mrf.mxu0
  %v5823 = vadd.f32 %v5654, %v5822
  %v5824 = vpop.f32.mrf.mxu0
  %v5825 = vadd.f32 %v5656, %v5824
  %5826 = vmatmul.bf16.gmra.mxu0 %v2379
  %v5827 = vpop.f32.mrf.mxu0
  %v5828 = vadd.f32 %v5659, %v5827
  %v5829 = vpop.f32.mrf.mxu0
  %v5830 = vadd.f32 %v5661, %v5829
  %5831 = vmatmul.bf16.gmra.mxu0 %v2395
  %v5832 = vpop.f32.mrf.mxu0
  %v5833 = vadd.f32 %v5664, %v5832
  %v5834 = vpop.f32.mrf.mxu0
  %v5835 = vadd.f32 %v5666, %v5834
  %5836 = vmatmul.bf16.gmra.mxu0 %v2411
  %v5837 = vpop.f32.mrf.mxu0
  %v5838 = vadd.f32 %v5669, %v5837
  %v5839 = vpop.f32.mrf.mxu0
  %v5840 = vadd.f32 %v5671, %v5839
  %5841 = vmatmul.bf16.gmra.mxu0 %v2427
  %v5842 = vpop.f32.mrf.mxu0
  %v5843 = vadd.f32 %v5674, %v5842
  %v5844 = vpop.f32.mrf.mxu0
  %v5845 = vadd.f32 %v5676, %v5844
  %5846 = vmatmul.bf16.gmra.mxu0 %v2443
  %v5847 = vpop.f32.mrf.mxu0
  %v5848 = vadd.f32 %v5679, %v5847
  %v5849 = vpop.f32.mrf.mxu0
  %v5850 = vadd.f32 %v5681, %v5849
  %5851 = vmatmul.bf16.gmra.mxu0 %v2459
  %v5852 = vpop.f32.mrf.mxu0
  %v5853 = vadd.f32 %v5684, %v5852
  %v5854 = vpop.f32.mrf.mxu0
  %v5855 = vadd.f32 %v5686, %v5854
  %5856 = vmatmul.bf16.gmra.mxu0 %v2475
  %v5857 = vpop.f32.mrf.mxu0
  %v5858 = vadd.f32 %v5689, %v5857
  %v5859 = vpop.f32.mrf.mxu0
  %v5860 = vadd.f32 %v5691, %v5859
  %5861 = vmatmul.bf16.gmra.mxu0 %v2491
  %v5862 = vpop.f32.mrf.mxu0
  %v5863 = vadd.f32 %v5694, %v5862
  %v5864 = vpop.f32.mrf.mxu0
  %v5865 = vadd.f32 %v5696, %v5864
  %5866 = vmatmul.bf16.gmra.mxu0 %v2507
  %v5867 = vpop.f32.mrf.mxu0
  %v5868 = vadd.f32 %v5699, %v5867
  %v5869 = vpop.f32.mrf.mxu0
  %v5870 = vadd.f32 %v5701, %v5869
  %5871 = vmatmul.bf16.gmra.mxu0 %v2523
  %v5872 = vpop.f32.mrf.mxu0
  %v5873 = vadd.f32 %v5704, %v5872
  %v5874 = vpop.f32.mrf.mxu0
  %v5875 = vadd.f32 %v5706, %v5874
  %5876 = vmatmul.bf16.gmra.mxu0 %v2539
  %v5877 = vpop.f32.mrf.mxu0
  %v5878 = vadd.f32 %v5709, %v5877
  %v5879 = vpop.f32.mrf.mxu0
  %v5880 = vadd.f32 %v5711, %v5879
  %5881 = vmatmul.bf16.gmra.mxu0 %v2555
  %v5882 = vpop.f32.mrf.mxu0
  %v5883 = vadd.f32 %v5714, %v5882
  %v5884 = vpop.f32.mrf.mxu0
  %v5885 = vadd.f32 %v5716, %v5884
  %5886 = vmatmul.bf16.gmra.mxu0 %v2571
  %v5887 = vpop.f32.mrf.mxu0
  %v5888 = vadd.f32 %v5719, %v5887
  %v5889 = vpop.f32.mrf.mxu0
  %v5890 = vadd.f32 %v5721, %v5889
  %5891 = vmatmul.bf16.gmra.mxu0 %v2587
  %v5892 = vpop.f32.mrf.mxu0
  %v5893 = vadd.f32 %v5724, %v5892
  %v5894 = vpop.f32.mrf.mxu0
  %v5895 = vadd.f32 %v5726, %v5894
  %5896 = vmatmul.bf16.gmra.mxu0 %v2603
  %v5897 = vpop.f32.mrf.mxu0
  %v5898 = vadd.f32 %v5729, %v5897
  %v5899 = vpop.f32.mrf.mxu0
  %v5900 = vadd.f32 %v5731, %v5899
  %5901 = vmatmul.bf16.gmra.mxu0 %v2619
  %v5902 = vpop.f32.mrf.mxu0
  %v5903 = vadd.f32 %v5734, %v5902
  %v5904 = vpop.f32.mrf.mxu0
  %v5905 = vadd.f32 %v5736, %v5904
  %5906 = vmatmul.bf16.gmra.mxu0 %v2635
  %v5907 = vpop.f32.mrf.mxu0
  %v5908 = vadd.f32 %v5739, %v5907
  %v5909 = vpop.f32.mrf.mxu0
  %v5910 = vadd.f32 %v5741, %v5909
  %5911 = vmatmul.bf16.gmra.mxu0 %v2651
  %v5912 = vpop.f32.mrf.mxu0
  %v5913 = vadd.f32 %v5744, %v5912
  %v5914 = vpop.f32.mrf.mxu0
  %v5915 = vadd.f32 %v5746, %v5914
  %5916 = vmatmul.bf16.gmra.mxu0 %v2667
  %v5917 = vpop.f32.mrf.mxu0
  %v5918 = vadd.f32 %v5749, %v5917
  %v5919 = vpop.f32.mrf.mxu0
  %v5920 = vadd.f32 %v5751, %v5919
  %5921 = vmatmul.bf16.gmra.mxu0 %v2683
  %v5922 = vpop.f32.mrf.mxu0
  %v5923 = vadd.f32 %v5754, %v5922
  %v5924 = vpop.f32.mrf.mxu0
  %v5925 = vadd.f32 %v5756, %v5924
  %5926 = vmatmul.bf16.gmra.mxu0 %v2699
  %v5927 = vpop.f32.mrf.mxu0
  %v5928 = vadd.f32 %v5759, %v5927
  %v5929 = vpop.f32.mrf.mxu0
  %v5930 = vadd.f32 %v5761, %v5929
  %5931 = vmatmul.bf16.gmra.mxu0 %v2715
  %v5932 = vpop.f32.mrf.mxu0
  %v5933 = vadd.f32 %v5764, %v5932
  %v5934 = vpop.f32.mrf.mxu0
  %v5935 = vadd.f32 %v5766, %v5934
  %5936 = vmatmul.bf16.gmra.mxu0 %v2731
  %v5937 = vpop.f32.mrf.mxu0
  %v5938 = vadd.f32 %v5769, %v5937
  %v5939 = vpop.f32.mrf.mxu0
  %v5940 = vadd.f32 %v5771, %v5939
  %5941 = vmatmul.bf16.gmra.mxu0 %v2747
  %v5942 = vpop.f32.mrf.mxu0
  %v5943 = vadd.f32 %v5774, %v5942
  %v5944 = vpop.f32.mrf.mxu0
  %v5945 = vadd.f32 %v5776, %v5944
  %5946 = vmatmul.bf16.gmra.mxu0 %v2763
  %v5947 = vpop.f32.mrf.mxu0
  %v5948 = vadd.f32 %v5779, %v5947
  %v5949 = vpop.f32.mrf.mxu0
  %v5950 = vadd.f32 %v5781, %v5949
  %5951 = vmatmul.bf16.gmra.mxu0 %v2779
  %v5952 = vpop.f32.mrf.mxu0
  %v5953 = vadd.f32 %v5784, %v5952
  %v5954 = vpop.f32.mrf.mxu0
  %v5955 = vadd.f32 %v5786, %v5954
  %5956 = vmatmul.bf16.gmra.mxu0 %v2795
  %v5957 = vpop.f32.mrf.mxu0
  %v5958 = vadd.f32 %v5789, %v5957
  %v5959 = vpop.f32.mrf.mxu0
  %v5960 = vadd.f32 %v5791, %v5959
  %5961 = vmatmul.bf16.gmra.mxu0 %v2811
  %v5962 = vpop.f32.mrf.mxu0
  %v5963 = vadd.f32 %v5794, %v5962
  %v5964 = vpop.f32.mrf.mxu0
  %v5965 = vadd.f32 %v5796, %v5964
  %5966 = vmatmul.bf16.gmra.mxu0 %v2827
  %v5967 = vpop.f32.mrf.mxu0
  %v5968 = vadd.f32 %v5799, %v5967
  %v5969 = vpop.f32.mrf.mxu0
  %v5970 = vadd.f32 %v5801, %v5969
  %5971 = vdwg.mxu0
  %5972 = vmatpush.bf16.msra.mxu0 %v3952
  %5973 = vmatpush.bf16.msra.mxu0 %v3951
  %5974 = vmatpush.bf16.msra.mxu0 %v3950
  %5975 = vmatpush.bf16.msra.mxu0 %v3949
  %5976 = vmatpush.bf16.msra.mxu0 %v3948
  %5977 = vmatpush.bf16.msra.mxu0 %v3947
  %5978 = vmatpush.bf16.msra.mxu0 %v3946
  %5979 = vmatpush.bf16.msra.mxu0 %v3945
  %5980 = vmatmul.bf16.gmra.mxu0 %v2332
  %v5981 = vpop.f32.mrf.mxu0
  %v5982 = vadd.f32 %v5813, %v5981
  %v5983 = vpop.f32.mrf.mxu0
  %v5984 = vadd.f32 %v5815, %v5983
  %5985 = vmatmul.bf16.gmra.mxu0 %v2348
  %v5986 = vpop.f32.mrf.mxu0
  %v5987 = vadd.f32 %v5818, %v5986
  %v5988 = vpop.f32.mrf.mxu0
  %v5989 = vadd.f32 %v5820, %v5988
  %5990 = vmatmul.bf16.gmra.mxu0 %v2364
  %v5991 = vpop.f32.mrf.mxu0
  %v5992 = vadd.f32 %v5823, %v5991
  %v5993 = vpop.f32.mrf.mxu0
  %v5994 = vadd.f32 %v5825, %v5993
  %5995 = vmatmul.bf16.gmra.mxu0 %v2380
  %v5996 = vpop.f32.mrf.mxu0
  %v5997 = vadd.f32 %v5828, %v5996
  %v5998 = vpop.f32.mrf.mxu0
  %v5999 = vadd.f32 %v5830, %v5998
  %6000 = vmatmul.bf16.gmra.mxu0 %v2396
  %v6001 = vpop.f32.mrf.mxu0
  %v6002 = vadd.f32 %v5833, %v6001
  %v6003 = vpop.f32.mrf.mxu0
  %v6004 = vadd.f32 %v5835, %v6003
  %6005 = vmatmul.bf16.gmra.mxu0 %v2412
  %v6006 = vpop.f32.mrf.mxu0
  %v6007 = vadd.f32 %v5838, %v6006
  %v6008 = vpop.f32.mrf.mxu0
  %v6009 = vadd.f32 %v5840, %v6008
  %6010 = vmatmul.bf16.gmra.mxu0 %v2428
  %v6011 = vpop.f32.mrf.mxu0
  %v6012 = vadd.f32 %v5843, %v6011
  %v6013 = vpop.f32.mrf.mxu0
  %v6014 = vadd.f32 %v5845, %v6013
  %6015 = vmatmul.bf16.gmra.mxu0 %v2444
  %v6016 = vpop.f32.mrf.mxu0
  %v6017 = vadd.f32 %v5848, %v6016
  %v6018 = vpop.f32.mrf.mxu0
  %v6019 = vadd.f32 %v5850, %v6018
  %6020 = vmatmul.bf16.gmra.mxu0 %v2460
  %v6021 = vpop.f32.mrf.mxu0
  %v6022 = vadd.f32 %v5853, %v6021
  %v6023 = vpop.f32.mrf.mxu0
  %v6024 = vadd.f32 %v5855, %v6023
  %6025 = vmatmul.bf16.gmra.mxu0 %v2476
  %v6026 = vpop.f32.mrf.mxu0
  %v6027 = vadd.f32 %v5858, %v6026
  %v6028 = vpop.f32.mrf.mxu0
  %v6029 = vadd.f32 %v5860, %v6028
  %6030 = vmatmul.bf16.gmra.mxu0 %v2492
  %v6031 = vpop.f32.mrf.mxu0
  %v6032 = vadd.f32 %v5863, %v6031
  %v6033 = vpop.f32.mrf.mxu0
  %v6034 = vadd.f32 %v5865, %v6033
  %6035 = vmatmul.bf16.gmra.mxu0 %v2508
  %v6036 = vpop.f32.mrf.mxu0
  %v6037 = vadd.f32 %v5868, %v6036
  %v6038 = vpop.f32.mrf.mxu0
  %v6039 = vadd.f32 %v5870, %v6038
  %6040 = vmatmul.bf16.gmra.mxu0 %v2524
  %v6041 = vpop.f32.mrf.mxu0
  %v6042 = vadd.f32 %v5873, %v6041
  %v6043 = vpop.f32.mrf.mxu0
  %v6044 = vadd.f32 %v5875, %v6043
  %6045 = vmatmul.bf16.gmra.mxu0 %v2540
  %v6046 = vpop.f32.mrf.mxu0
  %v6047 = vadd.f32 %v5878, %v6046
  %v6048 = vpop.f32.mrf.mxu0
  %v6049 = vadd.f32 %v5880, %v6048
  %6050 = vmatmul.bf16.gmra.mxu0 %v2556
  %v6051 = vpop.f32.mrf.mxu0
  %v6052 = vadd.f32 %v5883, %v6051
  %v6053 = vpop.f32.mrf.mxu0
  %v6054 = vadd.f32 %v5885, %v6053
  %6055 = vmatmul.bf16.gmra.mxu0 %v2572
  %v6056 = vpop.f32.mrf.mxu0
  %v6057 = vadd.f32 %v5888, %v6056
  %v6058 = vpop.f32.mrf.mxu0
  %v6059 = vadd.f32 %v5890, %v6058
  %6060 = vmatmul.bf16.gmra.mxu0 %v2588
  %v6061 = vpop.f32.mrf.mxu0
  %v6062 = vadd.f32 %v5893, %v6061
  %v6063 = vpop.f32.mrf.mxu0
  %v6064 = vadd.f32 %v5895, %v6063
  %6065 = vmatmul.bf16.gmra.mxu0 %v2604
  %v6066 = vpop.f32.mrf.mxu0
  %v6067 = vadd.f32 %v5898, %v6066
  %v6068 = vpop.f32.mrf.mxu0
  %v6069 = vadd.f32 %v5900, %v6068
  %6070 = vmatmul.bf16.gmra.mxu0 %v2620
  %v6071 = vpop.f32.mrf.mxu0
  %v6072 = vadd.f32 %v5903, %v6071
  %v6073 = vpop.f32.mrf.mxu0
  %v6074 = vadd.f32 %v5905, %v6073
  %6075 = vmatmul.bf16.gmra.mxu0 %v2636
  %v6076 = vpop.f32.mrf.mxu0
  %v6077 = vadd.f32 %v5908, %v6076
  %v6078 = vpop.f32.mrf.mxu0
  %v6079 = vadd.f32 %v5910, %v6078
  %6080 = vmatmul.bf16.gmra.mxu0 %v2652
  %v6081 = vpop.f32.mrf.mxu0
  %v6082 = vadd.f32 %v5913, %v6081
  %v6083 = vpop.f32.mrf.mxu0
  %v6084 = vadd.f32 %v5915, %v6083
  %6085 = vmatmul.bf16.gmra.mxu0 %v2668
  %v6086 = vpop.f32.mrf.mxu0
  %v6087 = vadd.f32 %v5918, %v6086
  %v6088 = vpop.f32.mrf.mxu0
  %v6089 = vadd.f32 %v5920, %v6088
  %6090 = vmatmul.bf16.gmra.mxu0 %v2684
  %v6091 = vpop.f32.mrf.mxu0
  %v6092 = vadd.f32 %v5923, %v6091
  %v6093 = vpop.f32.mrf.mxu0
  %v6094 = vadd.f32 %v5925, %v6093
  %6095 = vmatmul.bf16.gmra.mxu0 %v2700
  %v6096 = vpop.f32.mrf.mxu0
  %v6097 = vadd.f32 %v5928, %v6096
  %v6098 = vpop.f32.mrf.mxu0
  %v6099 = vadd.f32 %v5930, %v6098
  %6100 = vmatmul.bf16.gmra.mxu0 %v2716
  %v6101 = vpop.f32.mrf.mxu0
  %v6102 = vadd.f32 %v5933, %v6101
  %v6103 = vpop.f32.mrf.mxu0
  %v6104 = vadd.f32 %v5935, %v6103
  %6105 = vmatmul.bf16.gmra.mxu0 %v2732
  %v6106 = vpop.f32.mrf.mxu0
  %v6107 = vadd.f32 %v5938, %v6106
  %v6108 = vpop.f32.mrf.mxu0
  %v6109 = vadd.f32 %v5940, %v6108
  %6110 = vmatmul.bf16.gmra.mxu0 %v2748
  %v6111 = vpop.f32.mrf.mxu0
  %v6112 = vadd.f32 %v5943, %v6111
  %v6113 = vpop.f32.mrf.mxu0
  %v6114 = vadd.f32 %v5945, %v6113
  %6115 = vmatmul.bf16.gmra.mxu0 %v2764
  %v6116 = vpop.f32.mrf.mxu0
  %v6117 = vadd.f32 %v5948, %v6116
  %v6118 = vpop.f32.mrf.mxu0
  %v6119 = vadd.f32 %v5950, %v6118
  %6120 = vmatmul.bf16.gmra.mxu0 %v2780
  %v6121 = vpop.f32.mrf.mxu0
  %v6122 = vadd.f32 %v5953, %v6121
  %v6123 = vpop.f32.mrf.mxu0
  %v6124 = vadd.f32 %v5955, %v6123
  %6125 = vmatmul.bf16.gmra.mxu0 %v2796
  %v6126 = vpop.f32.mrf.mxu0
  %v6127 = vadd.f32 %v5958, %v6126
  %v6128 = vpop.f32.mrf.mxu0
  %v6129 = vadd.f32 %v5960, %v6128
  %6130 = vmatmul.bf16.gmra.mxu0 %v2812
  %v6131 = vpop.f32.mrf.mxu0
  %v6132 = vadd.f32 %v5963, %v6131
  %v6133 = vpop.f32.mrf.mxu0
  %v6134 = vadd.f32 %v5965, %v6133
  %6135 = vmatmul.bf16.gmra.mxu0 %v2828
  %v6136 = vpop.f32.mrf.mxu0
  %v6137 = vadd.f32 %v5968, %v6136
  %v6138 = vpop.f32.mrf.mxu0
  %v6139 = vadd.f32 %v5970, %v6138
  %6140 = vdwg.mxu0
  %6141 = vmatpush.bf16.msra.mxu0 %v3960
  %6142 = vmatpush.bf16.msra.mxu0 %v3959
  %6143 = vmatpush.bf16.msra.mxu0 %v3958
  %6144 = vmatpush.bf16.msra.mxu0 %v3957
  %6145 = vmatpush.bf16.msra.mxu0 %v3956
  %6146 = vmatpush.bf16.msra.mxu0 %v3955
  %6147 = vmatpush.bf16.msra.mxu0 %v3954
  %6148 = vmatpush.bf16.msra.mxu0 %v3953
  %6149 = vmatmul.bf16.gmra.mxu0 %v2333
  %v6150 = vpop.f32.mrf.mxu0
  %v6151 = vadd.f32 %v5982, %v6150
  %v6152 = vpop.f32.mrf.mxu0
  %v6153 = vadd.f32 %v5984, %v6152
  %6154 = vmatmul.bf16.gmra.mxu0 %v2349
  %v6155 = vpop.f32.mrf.mxu0
  %v6156 = vadd.f32 %v5987, %v6155
  %v6157 = vpop.f32.mrf.mxu0
  %v6158 = vadd.f32 %v5989, %v6157
  %6159 = vmatmul.bf16.gmra.mxu0 %v2365
  %v6160 = vpop.f32.mrf.mxu0
  %v6161 = vadd.f32 %v5992, %v6160
  %v6162 = vpop.f32.mrf.mxu0
  %v6163 = vadd.f32 %v5994, %v6162
  %6164 = vmatmul.bf16.gmra.mxu0 %v2381
  %v6165 = vpop.f32.mrf.mxu0
  %v6166 = vadd.f32 %v5997, %v6165
  %v6167 = vpop.f32.mrf.mxu0
  %v6168 = vadd.f32 %v5999, %v6167
  %6169 = vmatmul.bf16.gmra.mxu0 %v2397
  %v6170 = vpop.f32.mrf.mxu0
  %v6171 = vadd.f32 %v6002, %v6170
  %v6172 = vpop.f32.mrf.mxu0
  %v6173 = vadd.f32 %v6004, %v6172
  %6174 = vmatmul.bf16.gmra.mxu0 %v2413
  %v6175 = vpop.f32.mrf.mxu0
  %v6176 = vadd.f32 %v6007, %v6175
  %v6177 = vpop.f32.mrf.mxu0
  %v6178 = vadd.f32 %v6009, %v6177
  %6179 = vmatmul.bf16.gmra.mxu0 %v2429
  %v6180 = vpop.f32.mrf.mxu0
  %v6181 = vadd.f32 %v6012, %v6180
  %v6182 = vpop.f32.mrf.mxu0
  %v6183 = vadd.f32 %v6014, %v6182
  %6184 = vmatmul.bf16.gmra.mxu0 %v2445
  %v6185 = vpop.f32.mrf.mxu0
  %v6186 = vadd.f32 %v6017, %v6185
  %v6187 = vpop.f32.mrf.mxu0
  %v6188 = vadd.f32 %v6019, %v6187
  %6189 = vmatmul.bf16.gmra.mxu0 %v2461
  %v6190 = vpop.f32.mrf.mxu0
  %v6191 = vadd.f32 %v6022, %v6190
  %v6192 = vpop.f32.mrf.mxu0
  %v6193 = vadd.f32 %v6024, %v6192
  %6194 = vmatmul.bf16.gmra.mxu0 %v2477
  %v6195 = vpop.f32.mrf.mxu0
  %v6196 = vadd.f32 %v6027, %v6195
  %v6197 = vpop.f32.mrf.mxu0
  %v6198 = vadd.f32 %v6029, %v6197
  %6199 = vmatmul.bf16.gmra.mxu0 %v2493
  %v6200 = vpop.f32.mrf.mxu0
  %v6201 = vadd.f32 %v6032, %v6200
  %v6202 = vpop.f32.mrf.mxu0
  %v6203 = vadd.f32 %v6034, %v6202
  %6204 = vmatmul.bf16.gmra.mxu0 %v2509
  %v6205 = vpop.f32.mrf.mxu0
  %v6206 = vadd.f32 %v6037, %v6205
  %v6207 = vpop.f32.mrf.mxu0
  %v6208 = vadd.f32 %v6039, %v6207
  %6209 = vmatmul.bf16.gmra.mxu0 %v2525
  %v6210 = vpop.f32.mrf.mxu0
  %v6211 = vadd.f32 %v6042, %v6210
  %v6212 = vpop.f32.mrf.mxu0
  %v6213 = vadd.f32 %v6044, %v6212
  %6214 = vmatmul.bf16.gmra.mxu0 %v2541
  %v6215 = vpop.f32.mrf.mxu0
  %v6216 = vadd.f32 %v6047, %v6215
  %v6217 = vpop.f32.mrf.mxu0
  %v6218 = vadd.f32 %v6049, %v6217
  %6219 = vmatmul.bf16.gmra.mxu0 %v2557
  %v6220 = vpop.f32.mrf.mxu0
  %v6221 = vadd.f32 %v6052, %v6220
  %v6222 = vpop.f32.mrf.mxu0
  %v6223 = vadd.f32 %v6054, %v6222
  %6224 = vmatmul.bf16.gmra.mxu0 %v2573
  %v6225 = vpop.f32.mrf.mxu0
  %v6226 = vadd.f32 %v6057, %v6225
  %v6227 = vpop.f32.mrf.mxu0
  %v6228 = vadd.f32 %v6059, %v6227
  %6229 = vmatmul.bf16.gmra.mxu0 %v2589
  %v6230 = vpop.f32.mrf.mxu0
  %v6231 = vadd.f32 %v6062, %v6230
  %v6232 = vpop.f32.mrf.mxu0
  %v6233 = vadd.f32 %v6064, %v6232
  %6234 = vmatmul.bf16.gmra.mxu0 %v2605
  %v6235 = vpop.f32.mrf.mxu0
  %v6236 = vadd.f32 %v6067, %v6235
  %v6237 = vpop.f32.mrf.mxu0
  %v6238 = vadd.f32 %v6069, %v6237
  %6239 = vmatmul.bf16.gmra.mxu0 %v2621
  %v6240 = vpop.f32.mrf.mxu0
  %v6241 = vadd.f32 %v6072, %v6240
  %v6242 = vpop.f32.mrf.mxu0
  %v6243 = vadd.f32 %v6074, %v6242
  %6244 = vmatmul.bf16.gmra.mxu0 %v2637
  %v6245 = vpop.f32.mrf.mxu0
  %v6246 = vadd.f32 %v6077, %v6245
  %v6247 = vpop.f32.mrf.mxu0
  %v6248 = vadd.f32 %v6079, %v6247
  %6249 = vmatmul.bf16.gmra.mxu0 %v2653
  %v6250 = vpop.f32.mrf.mxu0
  %v6251 = vadd.f32 %v6082, %v6250
  %v6252 = vpop.f32.mrf.mxu0
  %v6253 = vadd.f32 %v6084, %v6252
  %6254 = vmatmul.bf16.gmra.mxu0 %v2669
  %v6255 = vpop.f32.mrf.mxu0
  %v6256 = vadd.f32 %v6087, %v6255
  %v6257 = vpop.f32.mrf.mxu0
  %v6258 = vadd.f32 %v6089, %v6257
  %6259 = vmatmul.bf16.gmra.mxu0 %v2685
  %v6260 = vpop.f32.mrf.mxu0
  %v6261 = vadd.f32 %v6092, %v6260
  %v6262 = vpop.f32.mrf.mxu0
  %v6263 = vadd.f32 %v6094, %v6262
  %6264 = vmatmul.bf16.gmra.mxu0 %v2701
  %v6265 = vpop.f32.mrf.mxu0
  %v6266 = vadd.f32 %v6097, %v6265
  %v6267 = vpop.f32.mrf.mxu0
  %v6268 = vadd.f32 %v6099, %v6267
  %6269 = vmatmul.bf16.gmra.mxu0 %v2717
  %v6270 = vpop.f32.mrf.mxu0
  %v6271 = vadd.f32 %v6102, %v6270
  %v6272 = vpop.f32.mrf.mxu0
  %v6273 = vadd.f32 %v6104, %v6272
  %6274 = vmatmul.bf16.gmra.mxu0 %v2733
  %v6275 = vpop.f32.mrf.mxu0
  %v6276 = vadd.f32 %v6107, %v6275
  %v6277 = vpop.f32.mrf.mxu0
  %v6278 = vadd.f32 %v6109, %v6277
  %6279 = vmatmul.bf16.gmra.mxu0 %v2749
  %v6280 = vpop.f32.mrf.mxu0
  %v6281 = vadd.f32 %v6112, %v6280
  %v6282 = vpop.f32.mrf.mxu0
  %v6283 = vadd.f32 %v6114, %v6282
  %6284 = vmatmul.bf16.gmra.mxu0 %v2765
  %v6285 = vpop.f32.mrf.mxu0
  %v6286 = vadd.f32 %v6117, %v6285
  %v6287 = vpop.f32.mrf.mxu0
  %v6288 = vadd.f32 %v6119, %v6287
  %6289 = vmatmul.bf16.gmra.mxu0 %v2781
  %v6290 = vpop.f32.mrf.mxu0
  %v6291 = vadd.f32 %v6122, %v6290
  %v6292 = vpop.f32.mrf.mxu0
  %v6293 = vadd.f32 %v6124, %v6292
  %6294 = vmatmul.bf16.gmra.mxu0 %v2797
  %v6295 = vpop.f32.mrf.mxu0
  %v6296 = vadd.f32 %v6127, %v6295
  %v6297 = vpop.f32.mrf.mxu0
  %v6298 = vadd.f32 %v6129, %v6297
  %6299 = vmatmul.bf16.gmra.mxu0 %v2813
  %v6300 = vpop.f32.mrf.mxu0
  %v6301 = vadd.f32 %v6132, %v6300
  %v6302 = vpop.f32.mrf.mxu0
  %v6303 = vadd.f32 %v6134, %v6302
  %6304 = vmatmul.bf16.gmra.mxu0 %v2829
  %v6305 = vpop.f32.mrf.mxu0
  %v6306 = vadd.f32 %v6137, %v6305
  %v6307 = vpop.f32.mrf.mxu0
  %v6308 = vadd.f32 %v6139, %v6307
  %6309 = vdwg.mxu0
  %6310 = vmatpush.bf16.msra.mxu0 %v3968
  %6311 = vmatpush.bf16.msra.mxu0 %v3967
  %6312 = vmatpush.bf16.msra.mxu0 %v3966
  %6313 = vmatpush.bf16.msra.mxu0 %v3965
  %6314 = vmatpush.bf16.msra.mxu0 %v3964
  %6315 = vmatpush.bf16.msra.mxu0 %v3963
  %6316 = vmatpush.bf16.msra.mxu0 %v3962
  %6317 = vmatpush.bf16.msra.mxu0 %v3961
  %6318 = vmatmul.bf16.gmra.mxu0 %v2334
  %v6319 = vpop.f32.mrf.mxu0
  %v6320 = vadd.f32 %v6151, %v6319
  %v6321 = vpop.f32.mrf.mxu0
  %v6322 = vadd.f32 %v6153, %v6321
  %6323 = vmatmul.bf16.gmra.mxu0 %v2350
  %v6324 = vpop.f32.mrf.mxu0
  %v6325 = vadd.f32 %v6156, %v6324
  %v6326 = vpop.f32.mrf.mxu0
  %v6327 = vadd.f32 %v6158, %v6326
  %6328 = vmatmul.bf16.gmra.mxu0 %v2366
  %v6329 = vpop.f32.mrf.mxu0
  %v6330 = vadd.f32 %v6161, %v6329
  %v6331 = vpop.f32.mrf.mxu0
  %v6332 = vadd.f32 %v6163, %v6331
  %6333 = vmatmul.bf16.gmra.mxu0 %v2382
  %v6334 = vpop.f32.mrf.mxu0
  %v6335 = vadd.f32 %v6166, %v6334
  %v6336 = vpop.f32.mrf.mxu0
  %v6337 = vadd.f32 %v6168, %v6336
  %6338 = vmatmul.bf16.gmra.mxu0 %v2398
  %v6339 = vpop.f32.mrf.mxu0
  %v6340 = vadd.f32 %v6171, %v6339
  %v6341 = vpop.f32.mrf.mxu0
  %v6342 = vadd.f32 %v6173, %v6341
  %6343 = vmatmul.bf16.gmra.mxu0 %v2414
  %v6344 = vpop.f32.mrf.mxu0
  %v6345 = vadd.f32 %v6176, %v6344
  %v6346 = vpop.f32.mrf.mxu0
  %v6347 = vadd.f32 %v6178, %v6346
  %6348 = vmatmul.bf16.gmra.mxu0 %v2430
  %v6349 = vpop.f32.mrf.mxu0
  %v6350 = vadd.f32 %v6181, %v6349
  %v6351 = vpop.f32.mrf.mxu0
  %v6352 = vadd.f32 %v6183, %v6351
  %6353 = vmatmul.bf16.gmra.mxu0 %v2446
  %v6354 = vpop.f32.mrf.mxu0
  %v6355 = vadd.f32 %v6186, %v6354
  %v6356 = vpop.f32.mrf.mxu0
  %v6357 = vadd.f32 %v6188, %v6356
  %6358 = vmatmul.bf16.gmra.mxu0 %v2462
  %v6359 = vpop.f32.mrf.mxu0
  %v6360 = vadd.f32 %v6191, %v6359
  %v6361 = vpop.f32.mrf.mxu0
  %v6362 = vadd.f32 %v6193, %v6361
  %6363 = vmatmul.bf16.gmra.mxu0 %v2478
  %v6364 = vpop.f32.mrf.mxu0
  %v6365 = vadd.f32 %v6196, %v6364
  %v6366 = vpop.f32.mrf.mxu0
  %v6367 = vadd.f32 %v6198, %v6366
  %6368 = vmatmul.bf16.gmra.mxu0 %v2494
  %v6369 = vpop.f32.mrf.mxu0
  %v6370 = vadd.f32 %v6201, %v6369
  %v6371 = vpop.f32.mrf.mxu0
  %v6372 = vadd.f32 %v6203, %v6371
  %6373 = vmatmul.bf16.gmra.mxu0 %v2510
  %v6374 = vpop.f32.mrf.mxu0
  %v6375 = vadd.f32 %v6206, %v6374
  %v6376 = vpop.f32.mrf.mxu0
  %v6377 = vadd.f32 %v6208, %v6376
  %6378 = vmatmul.bf16.gmra.mxu0 %v2526
  %v6379 = vpop.f32.mrf.mxu0
  %v6380 = vadd.f32 %v6211, %v6379
  %v6381 = vpop.f32.mrf.mxu0
  %v6382 = vadd.f32 %v6213, %v6381
  %6383 = vmatmul.bf16.gmra.mxu0 %v2542
  %v6384 = vpop.f32.mrf.mxu0
  %v6385 = vadd.f32 %v6216, %v6384
  %v6386 = vpop.f32.mrf.mxu0
  %v6387 = vadd.f32 %v6218, %v6386
  %6388 = vmatmul.bf16.gmra.mxu0 %v2558
  %v6389 = vpop.f32.mrf.mxu0
  %v6390 = vadd.f32 %v6221, %v6389
  %v6391 = vpop.f32.mrf.mxu0
  %v6392 = vadd.f32 %v6223, %v6391
  %6393 = vmatmul.bf16.gmra.mxu0 %v2574
  %v6394 = vpop.f32.mrf.mxu0
  %v6395 = vadd.f32 %v6226, %v6394
  %v6396 = vpop.f32.mrf.mxu0
  %v6397 = vadd.f32 %v6228, %v6396
  %6398 = vmatmul.bf16.gmra.mxu0 %v2590
  %v6399 = vpop.f32.mrf.mxu0
  %v6400 = vadd.f32 %v6231, %v6399
  %v6401 = vpop.f32.mrf.mxu0
  %v6402 = vadd.f32 %v6233, %v6401
  %6403 = vmatmul.bf16.gmra.mxu0 %v2606
  %v6404 = vpop.f32.mrf.mxu0
  %v6405 = vadd.f32 %v6236, %v6404
  %v6406 = vpop.f32.mrf.mxu0
  %v6407 = vadd.f32 %v6238, %v6406
  %6408 = vmatmul.bf16.gmra.mxu0 %v2622
  %v6409 = vpop.f32.mrf.mxu0
  %v6410 = vadd.f32 %v6241, %v6409
  %v6411 = vpop.f32.mrf.mxu0
  %v6412 = vadd.f32 %v6243, %v6411
  %6413 = vmatmul.bf16.gmra.mxu0 %v2638
  %v6414 = vpop.f32.mrf.mxu0
  %v6415 = vadd.f32 %v6246, %v6414
  %v6416 = vpop.f32.mrf.mxu0
  %v6417 = vadd.f32 %v6248, %v6416
  %6418 = vmatmul.bf16.gmra.mxu0 %v2654
  %v6419 = vpop.f32.mrf.mxu0
  %v6420 = vadd.f32 %v6251, %v6419
  %v6421 = vpop.f32.mrf.mxu0
  %v6422 = vadd.f32 %v6253, %v6421
  %6423 = vmatmul.bf16.gmra.mxu0 %v2670
  %v6424 = vpop.f32.mrf.mxu0
  %v6425 = vadd.f32 %v6256, %v6424
  %v6426 = vpop.f32.mrf.mxu0
  %v6427 = vadd.f32 %v6258, %v6426
  %6428 = vmatmul.bf16.gmra.mxu0 %v2686
  %v6429 = vpop.f32.mrf.mxu0
  %v6430 = vadd.f32 %v6261, %v6429
  %v6431 = vpop.f32.mrf.mxu0
  %v6432 = vadd.f32 %v6263, %v6431
  %6433 = vmatmul.bf16.gmra.mxu0 %v2702
  %v6434 = vpop.f32.mrf.mxu0
  %v6435 = vadd.f32 %v6266, %v6434
  %v6436 = vpop.f32.mrf.mxu0
  %v6437 = vadd.f32 %v6268, %v6436
  %6438 = vmatmul.bf16.gmra.mxu0 %v2718
  %v6439 = vpop.f32.mrf.mxu0
  %v6440 = vadd.f32 %v6271, %v6439
  %v6441 = vpop.f32.mrf.mxu0
  %v6442 = vadd.f32 %v6273, %v6441
  %6443 = vmatmul.bf16.gmra.mxu0 %v2734
  %v6444 = vpop.f32.mrf.mxu0
  %v6445 = vadd.f32 %v6276, %v6444
  %v6446 = vpop.f32.mrf.mxu0
  %v6447 = vadd.f32 %v6278, %v6446
  %6448 = vmatmul.bf16.gmra.mxu0 %v2750
  %v6449 = vpop.f32.mrf.mxu0
  %v6450 = vadd.f32 %v6281, %v6449
  %v6451 = vpop.f32.mrf.mxu0
  %v6452 = vadd.f32 %v6283, %v6451
  %6453 = vmatmul.bf16.gmra.mxu0 %v2766
  %v6454 = vpop.f32.mrf.mxu0
  %v6455 = vadd.f32 %v6286, %v6454
  %v6456 = vpop.f32.mrf.mxu0
  %v6457 = vadd.f32 %v6288, %v6456
  %6458 = vmatmul.bf16.gmra.mxu0 %v2782
  %v6459 = vpop.f32.mrf.mxu0
  %v6460 = vadd.f32 %v6291, %v6459
  %v6461 = vpop.f32.mrf.mxu0
  %v6462 = vadd.f32 %v6293, %v6461
  %6463 = vmatmul.bf16.gmra.mxu0 %v2798
  %v6464 = vpop.f32.mrf.mxu0
  %v6465 = vadd.f32 %v6296, %v6464
  %v6466 = vpop.f32.mrf.mxu0
  %v6467 = vadd.f32 %v6298, %v6466
  %6468 = vmatmul.bf16.gmra.mxu0 %v2814
  %v6469 = vpop.f32.mrf.mxu0
  %v6470 = vadd.f32 %v6301, %v6469
  %v6471 = vpop.f32.mrf.mxu0
  %v6472 = vadd.f32 %v6303, %v6471
  %6473 = vmatmul.bf16.gmra.mxu0 %v2830
  %v6474 = vpop.f32.mrf.mxu0
  %v6475 = vadd.f32 %v6306, %v6474
  %v6476 = vpop.f32.mrf.mxu0
  %v6477 = vadd.f32 %v6308, %v6476
  %6478 = vdwg.mxu0
  %6479 = vmatpush.bf16.msra.mxu0 %v3976
  %6480 = vmatpush.bf16.msra.mxu0 %v3975
  %6481 = vmatpush.bf16.msra.mxu0 %v3974
  %6482 = vmatpush.bf16.msra.mxu0 %v3973
  %6483 = vmatpush.bf16.msra.mxu0 %v3972
  %6484 = vmatpush.bf16.msra.mxu0 %v3971
  %6485 = vmatpush.bf16.msra.mxu0 %v3970
  %6486 = vmatpush.bf16.msra.mxu0 %v3969
  %6487 = vmatmul.bf16.gmra.mxu0 %v2335
  %v6488 = vpop.f32.mrf.mxu0
  %v6489 = vadd.f32 %v6320, %v6488
  %v6490 = vpop.f32.mrf.mxu0
  %v6491 = vadd.f32 %v6322, %v6490
  %6492 = vmatmul.bf16.gmra.mxu0 %v2351
  %v6493 = vpop.f32.mrf.mxu0
  %v6494 = vadd.f32 %v6325, %v6493
  %v6495 = vpop.f32.mrf.mxu0
  %v6496 = vadd.f32 %v6327, %v6495
  %6497 = vmatmul.bf16.gmra.mxu0 %v2367
  %v6498 = vpop.f32.mrf.mxu0
  %v6499 = vadd.f32 %v6330, %v6498
  %v6500 = vpop.f32.mrf.mxu0
  %v6501 = vadd.f32 %v6332, %v6500
  %6502 = vmatmul.bf16.gmra.mxu0 %v2383
  %v6503 = vpop.f32.mrf.mxu0
  %v6504 = vadd.f32 %v6335, %v6503
  %v6505 = vpop.f32.mrf.mxu0
  %v6506 = vadd.f32 %v6337, %v6505
  %6507 = vmatmul.bf16.gmra.mxu0 %v2399
  %v6508 = vpop.f32.mrf.mxu0
  %v6509 = vadd.f32 %v6340, %v6508
  %v6510 = vpop.f32.mrf.mxu0
  %v6511 = vadd.f32 %v6342, %v6510
  %6512 = vmatmul.bf16.gmra.mxu0 %v2415
  %v6513 = vpop.f32.mrf.mxu0
  %v6514 = vadd.f32 %v6345, %v6513
  %v6515 = vpop.f32.mrf.mxu0
  %v6516 = vadd.f32 %v6347, %v6515
  %6517 = vmatmul.bf16.gmra.mxu0 %v2431
  %v6518 = vpop.f32.mrf.mxu0
  %v6519 = vadd.f32 %v6350, %v6518
  %v6520 = vpop.f32.mrf.mxu0
  %v6521 = vadd.f32 %v6352, %v6520
  %6522 = vmatmul.bf16.gmra.mxu0 %v2447
  %v6523 = vpop.f32.mrf.mxu0
  %v6524 = vadd.f32 %v6355, %v6523
  %v6525 = vpop.f32.mrf.mxu0
  %v6526 = vadd.f32 %v6357, %v6525
  %6527 = vmatmul.bf16.gmra.mxu0 %v2463
  %v6528 = vpop.f32.mrf.mxu0
  %v6529 = vadd.f32 %v6360, %v6528
  %v6530 = vpop.f32.mrf.mxu0
  %v6531 = vadd.f32 %v6362, %v6530
  %6532 = vmatmul.bf16.gmra.mxu0 %v2479
  %v6533 = vpop.f32.mrf.mxu0
  %v6534 = vadd.f32 %v6365, %v6533
  %v6535 = vpop.f32.mrf.mxu0
  %v6536 = vadd.f32 %v6367, %v6535
  %6537 = vmatmul.bf16.gmra.mxu0 %v2495
  %v6538 = vpop.f32.mrf.mxu0
  %v6539 = vadd.f32 %v6370, %v6538
  %v6540 = vpop.f32.mrf.mxu0
  %v6541 = vadd.f32 %v6372, %v6540
  %6542 = vmatmul.bf16.gmra.mxu0 %v2511
  %v6543 = vpop.f32.mrf.mxu0
  %v6544 = vadd.f32 %v6375, %v6543
  %v6545 = vpop.f32.mrf.mxu0
  %v6546 = vadd.f32 %v6377, %v6545
  %6547 = vmatmul.bf16.gmra.mxu0 %v2527
  %v6548 = vpop.f32.mrf.mxu0
  %v6549 = vadd.f32 %v6380, %v6548
  %v6550 = vpop.f32.mrf.mxu0
  %v6551 = vadd.f32 %v6382, %v6550
  %6552 = vmatmul.bf16.gmra.mxu0 %v2543
  %v6553 = vpop.f32.mrf.mxu0
  %v6554 = vadd.f32 %v6385, %v6553
  %v6555 = vpop.f32.mrf.mxu0
  %v6556 = vadd.f32 %v6387, %v6555
  %6557 = vmatmul.bf16.gmra.mxu0 %v2559
  %v6558 = vpop.f32.mrf.mxu0
  %v6559 = vadd.f32 %v6390, %v6558
  %v6560 = vpop.f32.mrf.mxu0
  %v6561 = vadd.f32 %v6392, %v6560
  %6562 = vmatmul.bf16.gmra.mxu0 %v2575
  %v6563 = vpop.f32.mrf.mxu0
  %v6564 = vadd.f32 %v6395, %v6563
  %v6565 = vpop.f32.mrf.mxu0
  %v6566 = vadd.f32 %v6397, %v6565
  %6567 = vmatmul.bf16.gmra.mxu0 %v2591
  %v6568 = vpop.f32.mrf.mxu0
  %v6569 = vadd.f32 %v6400, %v6568
  %v6570 = vpop.f32.mrf.mxu0
  %v6571 = vadd.f32 %v6402, %v6570
  %6572 = vmatmul.bf16.gmra.mxu0 %v2607
  %v6573 = vpop.f32.mrf.mxu0
  %v6574 = vadd.f32 %v6405, %v6573
  %v6575 = vpop.f32.mrf.mxu0
  %v6576 = vadd.f32 %v6407, %v6575
  %6577 = vmatmul.bf16.gmra.mxu0 %v2623
  %v6578 = vpop.f32.mrf.mxu0
  %v6579 = vadd.f32 %v6410, %v6578
  %v6580 = vpop.f32.mrf.mxu0
  %v6581 = vadd.f32 %v6412, %v6580
  %6582 = vmatmul.bf16.gmra.mxu0 %v2639
  %v6583 = vpop.f32.mrf.mxu0
  %v6584 = vadd.f32 %v6415, %v6583
  %v6585 = vpop.f32.mrf.mxu0
  %v6586 = vadd.f32 %v6417, %v6585
  %6587 = vmatmul.bf16.gmra.mxu0 %v2655
  %v6588 = vpop.f32.mrf.mxu0
  %v6589 = vadd.f32 %v6420, %v6588
  %v6590 = vpop.f32.mrf.mxu0
  %v6591 = vadd.f32 %v6422, %v6590
  %6592 = vmatmul.bf16.gmra.mxu0 %v2671
  %v6593 = vpop.f32.mrf.mxu0
  %v6594 = vadd.f32 %v6425, %v6593
  %v6595 = vpop.f32.mrf.mxu0
  %v6596 = vadd.f32 %v6427, %v6595
  %6597 = vmatmul.bf16.gmra.mxu0 %v2687
  %v6598 = vpop.f32.mrf.mxu0
  %v6599 = vadd.f32 %v6430, %v6598
  %v6600 = vpop.f32.mrf.mxu0
  %v6601 = vadd.f32 %v6432, %v6600
  %6602 = vmatmul.bf16.gmra.mxu0 %v2703
  %v6603 = vpop.f32.mrf.mxu0
  %v6604 = vadd.f32 %v6435, %v6603
  %v6605 = vpop.f32.mrf.mxu0
  %v6606 = vadd.f32 %v6437, %v6605
  %6607 = vmatmul.bf16.gmra.mxu0 %v2719
  %v6608 = vpop.f32.mrf.mxu0
  %v6609 = vadd.f32 %v6440, %v6608
  %v6610 = vpop.f32.mrf.mxu0
  %v6611 = vadd.f32 %v6442, %v6610
  %6612 = vmatmul.bf16.gmra.mxu0 %v2735
  %v6613 = vpop.f32.mrf.mxu0
  %v6614 = vadd.f32 %v6445, %v6613
  %v6615 = vpop.f32.mrf.mxu0
  %v6616 = vadd.f32 %v6447, %v6615
  %6617 = vmatmul.bf16.gmra.mxu0 %v2751
  %v6618 = vpop.f32.mrf.mxu0
  %v6619 = vadd.f32 %v6450, %v6618
  %v6620 = vpop.f32.mrf.mxu0
  %v6621 = vadd.f32 %v6452, %v6620
  %6622 = vmatmul.bf16.gmra.mxu0 %v2767
  %v6623 = vpop.f32.mrf.mxu0
  %v6624 = vadd.f32 %v6455, %v6623
  %v6625 = vpop.f32.mrf.mxu0
  %v6626 = vadd.f32 %v6457, %v6625
  %6627 = vmatmul.bf16.gmra.mxu0 %v2783
  %v6628 = vpop.f32.mrf.mxu0
  %v6629 = vadd.f32 %v6460, %v6628
  %v6630 = vpop.f32.mrf.mxu0
  %v6631 = vadd.f32 %v6462, %v6630
  %6632 = vmatmul.bf16.gmra.mxu0 %v2799
  %v6633 = vpop.f32.mrf.mxu0
  %v6634 = vadd.f32 %v6465, %v6633
  %v6635 = vpop.f32.mrf.mxu0
  %v6636 = vadd.f32 %v6467, %v6635
  %6637 = vmatmul.bf16.gmra.mxu0 %v2815
  %v6638 = vpop.f32.mrf.mxu0
  %v6639 = vadd.f32 %v6470, %v6638
  %v6640 = vpop.f32.mrf.mxu0
  %v6641 = vadd.f32 %v6472, %v6640
  %6642 = vmatmul.bf16.gmra.mxu0 %v2831
  %v6643 = vpop.f32.mrf.mxu0
  %v6644 = vadd.f32 %v6475, %v6643
  %v6645 = vpop.f32.mrf.mxu0
  %v6646 = vadd.f32 %v6477, %v6645
  %6647 = vdwg.mxu0
  %6648 = vmatpush.bf16.msra.mxu0 %v3984
  %6649 = vmatpush.bf16.msra.mxu0 %v3983
  %6650 = vmatpush.bf16.msra.mxu0 %v3982
  %6651 = vmatpush.bf16.msra.mxu0 %v3981
  %6652 = vmatpush.bf16.msra.mxu0 %v3980
  %6653 = vmatpush.bf16.msra.mxu0 %v3979
  %6654 = vmatpush.bf16.msra.mxu0 %v3978
  %6655 = vmatpush.bf16.msra.mxu0 %v3977
  %6656 = vmatmul.bf16.gmra.mxu0 %v2336
  %v6657 = vpop.f32.mrf.mxu0
  %v6658 = vadd.f32 %v6489, %v6657
  %v6659 = vpop.f32.mrf.mxu0
  %v6660 = vadd.f32 %v6491, %v6659
  %6661 = vmatmul.bf16.gmra.mxu0 %v2352
  %v6662 = vpop.f32.mrf.mxu0
  %v6663 = vadd.f32 %v6494, %v6662
  %v6664 = vpop.f32.mrf.mxu0
  %v6665 = vadd.f32 %v6496, %v6664
  %6666 = vmatmul.bf16.gmra.mxu0 %v2368
  %v6667 = vpop.f32.mrf.mxu0
  %v6668 = vadd.f32 %v6499, %v6667
  %v6669 = vpop.f32.mrf.mxu0
  %v6670 = vadd.f32 %v6501, %v6669
  %6671 = vmatmul.bf16.gmra.mxu0 %v2384
  %v6672 = vpop.f32.mrf.mxu0
  %v6673 = vadd.f32 %v6504, %v6672
  %v6674 = vpop.f32.mrf.mxu0
  %v6675 = vadd.f32 %v6506, %v6674
  %6676 = vmatmul.bf16.gmra.mxu0 %v2400
  %v6677 = vpop.f32.mrf.mxu0
  %v6678 = vadd.f32 %v6509, %v6677
  %v6679 = vpop.f32.mrf.mxu0
  %v6680 = vadd.f32 %v6511, %v6679
  %6681 = vmatmul.bf16.gmra.mxu0 %v2416
  %v6682 = vpop.f32.mrf.mxu0
  %v6683 = vadd.f32 %v6514, %v6682
  %v6684 = vpop.f32.mrf.mxu0
  %v6685 = vadd.f32 %v6516, %v6684
  %6686 = vmatmul.bf16.gmra.mxu0 %v2432
  %v6687 = vpop.f32.mrf.mxu0
  %v6688 = vadd.f32 %v6519, %v6687
  %v6689 = vpop.f32.mrf.mxu0
  %v6690 = vadd.f32 %v6521, %v6689
  %6691 = vmatmul.bf16.gmra.mxu0 %v2448
  %v6692 = vpop.f32.mrf.mxu0
  %v6693 = vadd.f32 %v6524, %v6692
  %v6694 = vpop.f32.mrf.mxu0
  %v6695 = vadd.f32 %v6526, %v6694
  %6696 = vmatmul.bf16.gmra.mxu0 %v2464
  %v6697 = vpop.f32.mrf.mxu0
  %v6698 = vadd.f32 %v6529, %v6697
  %v6699 = vpop.f32.mrf.mxu0
  %v6700 = vadd.f32 %v6531, %v6699
  %6701 = vmatmul.bf16.gmra.mxu0 %v2480
  %v6702 = vpop.f32.mrf.mxu0
  %v6703 = vadd.f32 %v6534, %v6702
  %v6704 = vpop.f32.mrf.mxu0
  %v6705 = vadd.f32 %v6536, %v6704
  %6706 = vmatmul.bf16.gmra.mxu0 %v2496
  %v6707 = vpop.f32.mrf.mxu0
  %v6708 = vadd.f32 %v6539, %v6707
  %v6709 = vpop.f32.mrf.mxu0
  %v6710 = vadd.f32 %v6541, %v6709
  %6711 = vmatmul.bf16.gmra.mxu0 %v2512
  %v6712 = vpop.f32.mrf.mxu0
  %v6713 = vadd.f32 %v6544, %v6712
  %v6714 = vpop.f32.mrf.mxu0
  %v6715 = vadd.f32 %v6546, %v6714
  %6716 = vmatmul.bf16.gmra.mxu0 %v2528
  %v6717 = vpop.f32.mrf.mxu0
  %v6718 = vadd.f32 %v6549, %v6717
  %v6719 = vpop.f32.mrf.mxu0
  %v6720 = vadd.f32 %v6551, %v6719
  %6721 = vmatmul.bf16.gmra.mxu0 %v2544
  %v6722 = vpop.f32.mrf.mxu0
  %v6723 = vadd.f32 %v6554, %v6722
  %v6724 = vpop.f32.mrf.mxu0
  %v6725 = vadd.f32 %v6556, %v6724
  %6726 = vmatmul.bf16.gmra.mxu0 %v2560
  %v6727 = vpop.f32.mrf.mxu0
  %v6728 = vadd.f32 %v6559, %v6727
  %v6729 = vpop.f32.mrf.mxu0
  %v6730 = vadd.f32 %v6561, %v6729
  %6731 = vmatmul.bf16.gmra.mxu0 %v2576
  %v6732 = vpop.f32.mrf.mxu0
  %v6733 = vadd.f32 %v6564, %v6732
  %v6734 = vpop.f32.mrf.mxu0
  %v6735 = vadd.f32 %v6566, %v6734
  %6736 = vmatmul.bf16.gmra.mxu0 %v2592
  %v6737 = vpop.f32.mrf.mxu0
  %v6738 = vadd.f32 %v6569, %v6737
  %v6739 = vpop.f32.mrf.mxu0
  %v6740 = vadd.f32 %v6571, %v6739
  %6741 = vmatmul.bf16.gmra.mxu0 %v2608
  %v6742 = vpop.f32.mrf.mxu0
  %v6743 = vadd.f32 %v6574, %v6742
  %v6744 = vpop.f32.mrf.mxu0
  %v6745 = vadd.f32 %v6576, %v6744
  %6746 = vmatmul.bf16.gmra.mxu0 %v2624
  %v6747 = vpop.f32.mrf.mxu0
  %v6748 = vadd.f32 %v6579, %v6747
  %v6749 = vpop.f32.mrf.mxu0
  %v6750 = vadd.f32 %v6581, %v6749
  %6751 = vmatmul.bf16.gmra.mxu0 %v2640
  %v6752 = vpop.f32.mrf.mxu0
  %v6753 = vadd.f32 %v6584, %v6752
  %v6754 = vpop.f32.mrf.mxu0
  %v6755 = vadd.f32 %v6586, %v6754
  %6756 = vmatmul.bf16.gmra.mxu0 %v2656
  %v6757 = vpop.f32.mrf.mxu0
  %v6758 = vadd.f32 %v6589, %v6757
  %v6759 = vpop.f32.mrf.mxu0
  %v6760 = vadd.f32 %v6591, %v6759
  %6761 = vmatmul.bf16.gmra.mxu0 %v2672
  %v6762 = vpop.f32.mrf.mxu0
  %v6763 = vadd.f32 %v6594, %v6762
  %v6764 = vpop.f32.mrf.mxu0
  %v6765 = vadd.f32 %v6596, %v6764
  %6766 = vmatmul.bf16.gmra.mxu0 %v2688
  %v6767 = vpop.f32.mrf.mxu0
  %v6768 = vadd.f32 %v6599, %v6767
  %v6769 = vpop.f32.mrf.mxu0
  %v6770 = vadd.f32 %v6601, %v6769
  %6771 = vmatmul.bf16.gmra.mxu0 %v2704
  %v6772 = vpop.f32.mrf.mxu0
  %v6773 = vadd.f32 %v6604, %v6772
  %v6774 = vpop.f32.mrf.mxu0
  %v6775 = vadd.f32 %v6606, %v6774
  %6776 = vmatmul.bf16.gmra.mxu0 %v2720
  %v6777 = vpop.f32.mrf.mxu0
  %v6778 = vadd.f32 %v6609, %v6777
  %v6779 = vpop.f32.mrf.mxu0
  %v6780 = vadd.f32 %v6611, %v6779
  %6781 = vmatmul.bf16.gmra.mxu0 %v2736
  %v6782 = vpop.f32.mrf.mxu0
  %v6783 = vadd.f32 %v6614, %v6782
  %v6784 = vpop.f32.mrf.mxu0
  %v6785 = vadd.f32 %v6616, %v6784
  %6786 = vmatmul.bf16.gmra.mxu0 %v2752
  %v6787 = vpop.f32.mrf.mxu0
  %v6788 = vadd.f32 %v6619, %v6787
  %v6789 = vpop.f32.mrf.mxu0
  %v6790 = vadd.f32 %v6621, %v6789
  %6791 = vmatmul.bf16.gmra.mxu0 %v2768
  %v6792 = vpop.f32.mrf.mxu0
  %v6793 = vadd.f32 %v6624, %v6792
  %v6794 = vpop.f32.mrf.mxu0
  %v6795 = vadd.f32 %v6626, %v6794
  %6796 = vmatmul.bf16.gmra.mxu0 %v2784
  %v6797 = vpop.f32.mrf.mxu0
  %v6798 = vadd.f32 %v6629, %v6797
  %v6799 = vpop.f32.mrf.mxu0
  %v6800 = vadd.f32 %v6631, %v6799
  %6801 = vmatmul.bf16.gmra.mxu0 %v2800
  %v6802 = vpop.f32.mrf.mxu0
  %v6803 = vadd.f32 %v6634, %v6802
  %v6804 = vpop.f32.mrf.mxu0
  %v6805 = vadd.f32 %v6636, %v6804
  %6806 = vmatmul.bf16.gmra.mxu0 %v2816
  %v6807 = vpop.f32.mrf.mxu0
  %v6808 = vadd.f32 %v6639, %v6807
  %v6809 = vpop.f32.mrf.mxu0
  %v6810 = vadd.f32 %v6641, %v6809
  %6811 = vmatmul.bf16.gmra.mxu0 %v2832
  %v6812 = vpop.f32.mrf.mxu0
  %v6813 = vadd.f32 %v6644, %v6812
  %v6814 = vpop.f32.mrf.mxu0
  %v6815 = vadd.f32 %v6646, %v6814
  %6816 = vdwg.mxu0
  %v6817 = vld [vmem:[%s2] sm:$0x1]
  %v6818 = vld [vmem:[%s3] sm:$0x1]
  %v6819 = vadd.f32 %v6658, %v6660
  %v6820 = vadd.f32 %v6819, %v6663
  %v6821 = vadd.f32 %v6820, %v6665
  %v6822 = vadd.f32 %v6821, %v6668
  %v6823 = vadd.f32 %v6822, %v6670
  %v6824 = vadd.f32 %v6823, %v6673
  %v6825 = vadd.f32 %v6824, %v6675
  %v6826 = vadd.f32 %v6825, %v6678
  %v6827 = vadd.f32 %v6826, %v6680
  %v6828 = vadd.f32 %v6827, %v6683
  %v6829 = vadd.f32 %v6828, %v6685
  %v6830 = vadd.f32 %v6829, %v6688
  %v6831 = vadd.f32 %v6830, %v6690
  %v6832 = vadd.f32 %v6831, %v6693
  %v6833 = vadd.f32 %v6832, %v6695
  %v6834 = vadd.f32 %v6833, %v6698
  %v6835 = vadd.f32 %v6834, %v6700
  %v6836 = vadd.f32 %v6835, %v6703
  %v6837 = vadd.f32 %v6836, %v6705
  %v6838 = vadd.f32 %v6837, %v6708
  %v6839 = vadd.f32 %v6838, %v6710
  %v6840 = vadd.f32 %v6839, %v6713
  %v6841 = vadd.f32 %v6840, %v6715
  %v6842 = vadd.f32 %v6841, %v6718
  %v6843 = vadd.f32 %v6842, %v6720
  %v6844 = vadd.f32 %v6843, %v6723
  %v6845 = vadd.f32 %v6844, %v6725
  %v6846 = vadd.f32 %v6845, %v6728
  %v6847 = vadd.f32 %v6846, %v6730
  %v6848 = vadd.f32 %v6847, %v6733
  %v6849 = vadd.f32 %v6848, %v6735
  %v6850 = vadd.f32 %v6849, %v6738
  %v6851 = vadd.f32 %v6850, %v6740
  %v6852 = vadd.f32 %v6851, %v6743
  %v6853 = vadd.f32 %v6852, %v6745
  %v6854 = vadd.f32 %v6853, %v6748
  %v6855 = vadd.f32 %v6854, %v6750
  %v6856 = vadd.f32 %v6855, %v6753
  %v6857 = vadd.f32 %v6856, %v6755
  %v6858 = vadd.f32 %v6857, %v6758
  %v6859 = vadd.f32 %v6858, %v6760
  %v6860 = vadd.f32 %v6859, %v6763
  %v6861 = vadd.f32 %v6860, %v6765
  %v6862 = vadd.f32 %v6861, %v6768
  %v6863 = vadd.f32 %v6862, %v6770
  %v6864 = vadd.f32 %v6863, %v6773
  %v6865 = vadd.f32 %v6864, %v6775
  %v6866 = vadd.f32 %v6865, %v6778
  %v6867 = vadd.f32 %v6866, %v6780
  %v6868 = vadd.f32 %v6867, %v6783
  %v6869 = vadd.f32 %v6868, %v6785
  %v6870 = vadd.f32 %v6869, %v6788
  %v6871 = vadd.f32 %v6870, %v6790
  %v6872 = vadd.f32 %v6871, %v6793
  %v6873 = vadd.f32 %v6872, %v6795
  %v6874 = vadd.f32 %v6873, %v6798
  %v6875 = vadd.f32 %v6874, %v6800
  %v6876 = vadd.f32 %v6875, %v6803
  %v6877 = vadd.f32 %v6876, %v6805
  %v6878 = vadd.f32 %v6877, %v6808
  %v6879 = vadd.f32 %v6878, %v6810
  %v6880 = vadd.f32 %v6879, %v6813
  %v6881 = vadd.f32 %v6880, %v6815
  %v6882 = vrot.slane %v6881, 4
  %v6883 = vadd.f32 %v6881, %v6882
  %v6884 = vrot.slane %v6883, 2
  %v6885 = vadd.f32 %v6883, %v6884
  %v6886 = vrot.slane %v6885, 1
  %v6887 = vadd.f32 %v6885, %v6886
  %v6888 = vmul.f32 %v6887, 0.001953125
  %v6889 = vmul.f32 %v6658, %v6658
  %v6890 = vmul.f32 %v6660, %v6660
  %v6891 = vmul.f32 %v6663, %v6663
  %v6892 = vmul.f32 %v6665, %v6665
  %v6893 = vmul.f32 %v6668, %v6668
  %v6894 = vmul.f32 %v6670, %v6670
  %v6895 = vmul.f32 %v6673, %v6673
  %v6896 = vmul.f32 %v6675, %v6675
  %v6897 = vmul.f32 %v6678, %v6678
  %v6898 = vmul.f32 %v6680, %v6680
  %v6899 = vmul.f32 %v6683, %v6683
  %v6900 = vmul.f32 %v6685, %v6685
  %v6901 = vmul.f32 %v6688, %v6688
  %v6902 = vmul.f32 %v6690, %v6690
  %v6903 = vmul.f32 %v6693, %v6693
  %v6904 = vmul.f32 %v6695, %v6695
  %v6905 = vmul.f32 %v6698, %v6698
  %v6906 = vmul.f32 %v6700, %v6700
  %v6907 = vmul.f32 %v6703, %v6703
  %v6908 = vmul.f32 %v6705, %v6705
  %v6909 = vmul.f32 %v6708, %v6708
  %v6910 = vmul.f32 %v6710, %v6710
  %v6911 = vmul.f32 %v6713, %v6713
  %v6912 = vmul.f32 %v6715, %v6715
  %v6913 = vmul.f32 %v6718, %v6718
  %v6914 = vmul.f32 %v6720, %v6720
  %v6915 = vmul.f32 %v6723, %v6723
  %v6916 = vmul.f32 %v6725, %v6725
  %v6917 = vmul.f32 %v6728, %v6728
  %v6918 = vmul.f32 %v6730, %v6730
  %v6919 = vmul.f32 %v6733, %v6733
  %v6920 = vmul.f32 %v6735, %v6735
  %v6921 = vmul.f32 %v6738, %v6738
  %v6922 = vmul.f32 %v6740, %v6740
  %v6923 = vmul.f32 %v6743, %v6743
  %v6924 = vmul.f32 %v6745, %v6745
  %v6925 = vmul.f32 %v6748, %v6748
  %v6926 = vmul.f32 %v6750, %v6750
  %v6927 = vmul.f32 %v6753, %v6753
  %v6928 = vmul.f32 %v6755, %v6755
  %v6929 = vmul.f32 %v6758, %v6758
  %v6930 = vmul.f32 %v6760, %v6760
  %v6931 = vmul.f32 %v6763, %v6763
  %v6932 = vmul.f32 %v6765, %v6765
  %v6933 = vmul.f32 %v6768, %v6768
  %v6934 = vmul.f32 %v6770, %v6770
  %v6935 = vmul.f32 %v6773, %v6773
  %v6936 = vmul.f32 %v6775, %v6775
  %v6937 = vmul.f32 %v6778, %v6778
  %v6938 = vmul.f32 %v6780, %v6780
  %v6939 = vmul.f32 %v6783, %v6783
  %v6940 = vmul.f32 %v6785, %v6785
  %v6941 = vmul.f32 %v6788, %v6788
  %v6942 = vmul.f32 %v6790, %v6790
  %v6943 = vmul.f32 %v6793, %v6793
  %v6944 = vmul.f32 %v6795, %v6795
  %v6945 = vmul.f32 %v6798, %v6798
  %v6946 = vmul.f32 %v6800, %v6800
  %v6947 = vmul.f32 %v6803, %v6803
  %v6948 = vmul.f32 %v6805, %v6805
  %v6949 = vmul.f32 %v6808, %v6808
  %v6950 = vmul.f32 %v6810, %v6810
  %v6951 = vmul.f32 %v6813, %v6813
  %v6952 = vmul.f32 %v6815, %v6815
  %v6953 = vadd.f32 %v6889, %v6890
  %v6954 = vadd.f32 %v6953, %v6891
  %v6955 = vadd.f32 %v6954, %v6892
  %v6956 = vadd.f32 %v6955, %v6893
  %v6957 = vadd.f32 %v6956, %v6894
  %v6958 = vadd.f32 %v6957, %v6895
  %v6959 = vadd.f32 %v6958, %v6896
  %v6960 = vadd.f32 %v6959, %v6897
  %v6961 = vadd.f32 %v6960, %v6898
  %v6962 = vadd.f32 %v6961, %v6899
  %v6963 = vadd.f32 %v6962, %v6900
  %v6964 = vadd.f32 %v6963, %v6901
  %v6965 = vadd.f32 %v6964, %v6902
  %v6966 = vadd.f32 %v6965, %v6903
  %v6967 = vadd.f32 %v6966, %v6904
  %v6968 = vadd.f32 %v6967, %v6905
  %v6969 = vadd.f32 %v6968, %v6906
  %v6970 = vadd.f32 %v6969, %v6907
  %v6971 = vadd.f32 %v6970, %v6908
  %v6972 = vadd.f32 %v6971, %v6909
  %v6973 = vadd.f32 %v6972, %v6910
  %v6974 = vadd.f32 %v6973, %v6911
  %v6975 = vadd.f32 %v6974, %v6912
  %v6976 = vadd.f32 %v6975, %v6913
  %v6977 = vadd.f32 %v6976, %v6914
  %v6978 = vadd.f32 %v6977, %v6915
  %v6979 = vadd.f32 %v6978, %v6916
  %v6980 = vadd.f32 %v6979, %v6917
  %v6981 = vadd.f32 %v6980, %v6918
  %v6982 = vadd.f32 %v6981, %v6919
  %v6983 = vadd.f32 %v6982, %v6920
  %v6984 = vadd.f32 %v6983, %v6921
  %v6985 = vadd.f32 %v6984, %v6922
  %v6986 = vadd.f32 %v6985, %v6923
  %v6987 = vadd.f32 %v6986, %v6924
  %v6988 = vadd.f32 %v6987, %v6925
  %v6989 = vadd.f32 %v6988, %v6926
  %v6990 = vadd.f32 %v6989, %v6927
  %v6991 = vadd.f32 %v6990, %v6928
  %v6992 = vadd.f32 %v6991, %v6929
  %v6993 = vadd.f32 %v6992, %v6930
  %v6994 = vadd.f32 %v6993, %v6931
  %v6995 = vadd.f32 %v6994, %v6932
  %v6996 = vadd.f32 %v6995, %v6933
  %v6997 = vadd.f32 %v6996, %v6934
  %v6998 = vadd.f32 %v6997, %v6935
  %v6999 = vadd.f32 %v6998, %v6936
  %v7000 = vadd.f32 %v6999, %v6937
  %v7001 = vadd.f32 %v7000, %v6938
  %v7002 = vadd.f32 %v7001, %v6939
  %v7003 = vadd.f32 %v7002, %v6940
  %v7004 = vadd.f32 %v7003, %v6941
  %v7005 = vadd.f32 %v7004, %v6942
  %v7006 = vadd.f32 %v7005, %v6943
  %v7007 = vadd.f32 %v7006, %v6944
  %v7008 = vadd.f32 %v7007, %v6945
  %v7009 = vadd.f32 %v7008, %v6946
  %v7010 = vadd.f32 %v7009, %v6947
  %v7011 = vadd.f32 %v7010, %v6948
  %v7012 = vadd.f32 %v7011, %v6949
  %v7013 = vadd.f32 %v7012, %v6950
  %v7014 = vadd.f32 %v7013, %v6951
  %v7015 = vadd.f32 %v7014, %v6952
  %v7016 = vrot.slane %v7015, 4
  %v7017 = vadd.f32 %v7015, %v7016
  %v7018 = vrot.slane %v7017, 2
  %v7019 = vadd.f32 %v7017, %v7018
  %v7020 = vrot.slane %v7019, 1
  %v7021 = vadd.f32 %v7019, %v7020
  %v7022 = vmul.f32 %v7021, 0.001953125
  %v7023 = vmul.f32 %v6888, %v6888
  %v7024 = vsub.f32 %v7022, %v7023
  %v7025 = vmax.f32 %v7024, 0.0
  %v7026 = vadd.f32 %v7025, 1e-05
  %v7027 = vrsqrt.pop %v7026
  %v7028 = vmul.f32 %v7027, %v7026
  %v7029 = vmul.f32 %v7028, %v7027
  %v7030 = vmul.f32 0.5, %v7029
  %v7031 = vsub.f32 1.5, %v7030
  %v7032 = vmul.f32 %v7027, %v7031
  %vm7033 = vweird.f32 %v7026
  %vm7034 = vweird.f32 %v7027
  %vm7035 = vmor %vm7033, %vm7034
  %v7036 = vsel %vm7035, %v7027, %v7032
  %v7037 = vmul.f32 %v6817, %v7036
  %v7038 = vmul.f32 %v6888, %v7037
  %v7039 = vsub.f32 %v6818, %v7038
  %v7041 = vperm.slane %v7037, 0
  %v7043 = vmul.f32 %v6658, %v7041
  %v7044 = vmul.f32 %v6660, %v7041
  %v7045 = vmul.f32 %v6663, %v7041
  %v7046 = vmul.f32 %v6665, %v7041
  %v7047 = vmul.f32 %v6668, %v7041
  %v7048 = vmul.f32 %v6670, %v7041
  %v7049 = vmul.f32 %v6673, %v7041
  %v7050 = vmul.f32 %v6675, %v7041
  %v7051 = vmul.f32 %v6678, %v7041
  %v7052 = vmul.f32 %v6680, %v7041
  %v7053 = vmul.f32 %v6683, %v7041
  %v7054 = vmul.f32 %v6685, %v7041
  %v7055 = vmul.f32 %v6688, %v7041
  %v7056 = vmul.f32 %v6690, %v7041
  %v7057 = vmul.f32 %v6693, %v7041
  %v7058 = vmul.f32 %v6695, %v7041
  %v7059 = vmul.f32 %v6698, %v7041
  %v7060 = vmul.f32 %v6700, %v7041
  %v7061 = vmul.f32 %v6703, %v7041
  %v7062 = vmul.f32 %v6705, %v7041
  %v7063 = vmul.f32 %v6708, %v7041
  %v7064 = vmul.f32 %v6710, %v7041
  %v7065 = vmul.f32 %v6713, %v7041
  %v7066 = vmul.f32 %v6715, %v7041
  %v7067 = vmul.f32 %v6718, %v7041
  %v7068 = vmul.f32 %v6720, %v7041
  %v7069 = vmul.f32 %v6723, %v7041
  %v7070 = vmul.f32 %v6725, %v7041
  %v7071 = vmul.f32 %v6728, %v7041
  %v7072 = vmul.f32 %v6730, %v7041
  %v7073 = vmul.f32 %v6733, %v7041
  %v7074 = vmul.f32 %v6735, %v7041
  %v7075 = vmul.f32 %v6738, %v7041
  %v7076 = vmul.f32 %v6740, %v7041
  %v7077 = vmul.f32 %v6743, %v7041
  %v7078 = vmul.f32 %v6745, %v7041
  %v7079 = vmul.f32 %v6748, %v7041
  %v7080 = vmul.f32 %v6750, %v7041
  %v7081 = vmul.f32 %v6753, %v7041
  %v7082 = vmul.f32 %v6755, %v7041
  %v7083 = vmul.f32 %v6758, %v7041
  %v7084 = vmul.f32 %v6760, %v7041
  %v7085 = vmul.f32 %v6763, %v7041
  %v7086 = vmul.f32 %v6765, %v7041
  %v7087 = vmul.f32 %v6768, %v7041
  %v7088 = vmul.f32 %v6770, %v7041
  %v7089 = vmul.f32 %v6773, %v7041
  %v7090 = vmul.f32 %v6775, %v7041
  %v7091 = vmul.f32 %v6778, %v7041
  %v7092 = vmul.f32 %v6780, %v7041
  %v7093 = vmul.f32 %v6783, %v7041
  %v7094 = vmul.f32 %v6785, %v7041
  %v7095 = vmul.f32 %v6788, %v7041
  %v7096 = vmul.f32 %v6790, %v7041
  %v7097 = vmul.f32 %v6793, %v7041
  %v7098 = vmul.f32 %v6795, %v7041
  %v7099 = vmul.f32 %v6798, %v7041
  %v7100 = vmul.f32 %v6800, %v7041
  %v7101 = vmul.f32 %v6803, %v7041
  %v7102 = vmul.f32 %v6805, %v7041
  %v7103 = vmul.f32 %v6808, %v7041
  %v7104 = vmul.f32 %v6810, %v7041
  %v7105 = vmul.f32 %v6813, %v7041
  %v7106 = vmul.f32 %v6815, %v7041
  %v7108 = vperm.slane %v7039, 0
  %v7110 = vadd.f32 %v7043, %v7108
  %v7111 = vadd.f32 %v7044, %v7108
  %v7112 = vadd.f32 %v7045, %v7108
  %v7113 = vadd.f32 %v7046, %v7108
  %v7114 = vadd.f32 %v7047, %v7108
  %v7115 = vadd.f32 %v7048, %v7108
  %v7116 = vadd.f32 %v7049, %v7108
  %v7117 = vadd.f32 %v7050, %v7108
  %v7118 = vadd.f32 %v7051, %v7108
  %v7119 = vadd.f32 %v7052, %v7108
  %v7120 = vadd.f32 %v7053, %v7108
  %v7121 = vadd.f32 %v7054, %v7108
  %v7122 = vadd.f32 %v7055, %v7108
  %v7123 = vadd.f32 %v7056, %v7108
  %v7124 = vadd.f32 %v7057, %v7108
  %v7125 = vadd.f32 %v7058, %v7108
  %v7126 = vadd.f32 %v7059, %v7108
  %v7127 = vadd.f32 %v7060, %v7108
  %v7128 = vadd.f32 %v7061, %v7108
  %v7129 = vadd.f32 %v7062, %v7108
  %v7130 = vadd.f32 %v7063, %v7108
  %v7131 = vadd.f32 %v7064, %v7108
  %v7132 = vadd.f32 %v7065, %v7108
  %v7133 = vadd.f32 %v7066, %v7108
  %v7134 = vadd.f32 %v7067, %v7108
  %v7135 = vadd.f32 %v7068, %v7108
  %v7136 = vadd.f32 %v7069, %v7108
  %v7137 = vadd.f32 %v7070, %v7108
  %v7138 = vadd.f32 %v7071, %v7108
  %v7139 = vadd.f32 %v7072, %v7108
  %v7140 = vadd.f32 %v7073, %v7108
  %v7141 = vadd.f32 %v7074, %v7108
  %v7142 = vadd.f32 %v7075, %v7108
  %v7143 = vadd.f32 %v7076, %v7108
  %v7144 = vadd.f32 %v7077, %v7108
  %v7145 = vadd.f32 %v7078, %v7108
  %v7146 = vadd.f32 %v7079, %v7108
  %v7147 = vadd.f32 %v7080, %v7108
  %v7148 = vadd.f32 %v7081, %v7108
  %v7149 = vadd.f32 %v7082, %v7108
  %v7150 = vadd.f32 %v7083, %v7108
  %v7151 = vadd.f32 %v7084, %v7108
  %v7152 = vadd.f32 %v7085, %v7108
  %v7153 = vadd.f32 %v7086, %v7108
  %v7154 = vadd.f32 %v7087, %v7108
  %v7155 = vadd.f32 %v7088, %v7108
  %v7156 = vadd.f32 %v7089, %v7108
  %v7157 = vadd.f32 %v7090, %v7108
  %v7158 = vadd.f32 %v7091, %v7108
  %v7159 = vadd.f32 %v7092, %v7108
  %v7160 = vadd.f32 %v7093, %v7108
  %v7161 = vadd.f32 %v7094, %v7108
  %v7162 = vadd.f32 %v7095, %v7108
  %v7163 = vadd.f32 %v7096, %v7108
  %v7164 = vadd.f32 %v7097, %v7108
  %v7165 = vadd.f32 %v7098, %v7108
  %v7166 = vadd.f32 %v7099, %v7108
  %v7167 = vadd.f32 %v7100, %v7108
  %v7168 = vadd.f32 %v7101, %v7108
  %v7169 = vadd.f32 %v7102, %v7108
  %v7170 = vadd.f32 %v7103, %v7108
  %v7171 = vadd.f32 %v7104, %v7108
  %v7172 = vadd.f32 %v7105, %v7108
  %v7173 = vadd.f32 %v7106, %v7108
  %v7174 = vmul.f32 %v7110, 0.2
  %v7175 = vmul.f32 %v7111, 0.2
  %v7176 = vmul.f32 %v7112, 0.2
  %v7177 = vmul.f32 %v7113, 0.2
  %v7178 = vmul.f32 %v7114, 0.2
  %v7179 = vmul.f32 %v7115, 0.2
  %v7180 = vmul.f32 %v7116, 0.2
  %v7181 = vmul.f32 %v7117, 0.2
  %v7182 = vmul.f32 %v7118, 0.2
  %v7183 = vmul.f32 %v7119, 0.2
  %v7184 = vmul.f32 %v7120, 0.2
  %v7185 = vmul.f32 %v7121, 0.2
  %v7186 = vmul.f32 %v7122, 0.2
  %v7187 = vmul.f32 %v7123, 0.2
  %v7188 = vmul.f32 %v7124, 0.2
  %v7189 = vmul.f32 %v7125, 0.2
  %v7190 = vmul.f32 %v7126, 0.2
  %v7191 = vmul.f32 %v7127, 0.2
  %v7192 = vmul.f32 %v7128, 0.2
  %v7193 = vmul.f32 %v7129, 0.2
  %v7194 = vmul.f32 %v7130, 0.2
  %v7195 = vmul.f32 %v7131, 0.2
  %v7196 = vmul.f32 %v7132, 0.2
  %v7197 = vmul.f32 %v7133, 0.2
  %v7198 = vmul.f32 %v7134, 0.2
  %v7199 = vmul.f32 %v7135, 0.2
  %v7200 = vmul.f32 %v7136, 0.2
  %v7201 = vmul.f32 %v7137, 0.2
  %v7202 = vmul.f32 %v7138, 0.2
  %v7203 = vmul.f32 %v7139, 0.2
  %v7204 = vmul.f32 %v7140, 0.2
  %v7205 = vmul.f32 %v7141, 0.2
  %v7206 = vmul.f32 %v7142, 0.2
  %v7207 = vmul.f32 %v7143, 0.2
  %v7208 = vmul.f32 %v7144, 0.2
  %v7209 = vmul.f32 %v7145, 0.2
  %v7210 = vmul.f32 %v7146, 0.2
  %v7211 = vmul.f32 %v7147, 0.2
  %v7212 = vmul.f32 %v7148, 0.2
  %v7213 = vmul.f32 %v7149, 0.2
  %v7214 = vmul.f32 %v7150, 0.2
  %v7215 = vmul.f32 %v7151, 0.2
  %v7216 = vmul.f32 %v7152, 0.2
  %v7217 = vmul.f32 %v7153, 0.2
  %v7218 = vmul.f32 %v7154, 0.2
  %v7219 = vmul.f32 %v7155, 0.2
  %v7220 = vmul.f32 %v7156, 0.2
  %v7221 = vmul.f32 %v7157, 0.2
  %v7222 = vmul.f32 %v7158, 0.2
  %v7223 = vmul.f32 %v7159, 0.2
  %v7224 = vmul.f32 %v7160, 0.2
  %v7225 = vmul.f32 %v7161, 0.2
  %v7226 = vmul.f32 %v7162, 0.2
  %v7227 = vmul.f32 %v7163, 0.2
  %v7228 = vmul.f32 %v7164, 0.2
  %v7229 = vmul.f32 %v7165, 0.2
  %v7230 = vmul.f32 %v7166, 0.2
  %v7231 = vmul.f32 %v7167, 0.2
  %v7232 = vmul.f32 %v7168, 0.2
  %v7233 = vmul.f32 %v7169, 0.2
  %v7234 = vmul.f32 %v7170, 0.2
  %v7235 = vmul.f32 %v7171, 0.2
  %v7236 = vmul.f32 %v7172, 0.2
  %v7237 = vmul.f32 %v7173, 0.2
  %v7238 = vmax.f32 %v7110, %v7174
  %v7239 = vmax.f32 %v7111, %v7175
  %v7240 = vmax.f32 %v7112, %v7176
  %v7241 = vmax.f32 %v7113, %v7177
  %v7242 = vmax.f32 %v7114, %v7178
  %v7243 = vmax.f32 %v7115, %v7179
  %v7244 = vmax.f32 %v7116, %v7180
  %v7245 = vmax.f32 %v7117, %v7181
  %v7246 = vmax.f32 %v7118, %v7182
  %v7247 = vmax.f32 %v7119, %v7183
  %v7248 = vmax.f32 %v7120, %v7184
  %v7249 = vmax.f32 %v7121, %v7185
  %v7250 = vmax.f32 %v7122, %v7186
  %v7251 = vmax.f32 %v7123, %v7187
  %v7252 = vmax.f32 %v7124, %v7188
  %v7253 = vmax.f32 %v7125, %v7189
  %v7254 = vmax.f32 %v7126, %v7190
  %v7255 = vmax.f32 %v7127, %v7191
  %v7256 = vmax.f32 %v7128, %v7192
  %v7257 = vmax.f32 %v7129, %v7193
  %v7258 = vmax.f32 %v7130, %v7194
  %v7259 = vmax.f32 %v7131, %v7195
  %v7260 = vmax.f32 %v7132, %v7196
  %v7261 = vmax.f32 %v7133, %v7197
  %v7262 = vmax.f32 %v7134, %v7198
  %v7263 = vmax.f32 %v7135, %v7199
  %v7264 = vmax.f32 %v7136, %v7200
  %v7265 = vmax.f32 %v7137, %v7201
  %v7266 = vmax.f32 %v7138, %v7202
  %v7267 = vmax.f32 %v7139, %v7203
  %v7268 = vmax.f32 %v7140, %v7204
  %v7269 = vmax.f32 %v7141, %v7205
  %v7270 = vmax.f32 %v7142, %v7206
  %v7271 = vmax.f32 %v7143, %v7207
  %v7272 = vmax.f32 %v7144, %v7208
  %v7273 = vmax.f32 %v7145, %v7209
  %v7274 = vmax.f32 %v7146, %v7210
  %v7275 = vmax.f32 %v7147, %v7211
  %v7276 = vmax.f32 %v7148, %v7212
  %v7277 = vmax.f32 %v7149, %v7213
  %v7278 = vmax.f32 %v7150, %v7214
  %v7279 = vmax.f32 %v7151, %v7215
  %v7280 = vmax.f32 %v7152, %v7216
  %v7281 = vmax.f32 %v7153, %v7217
  %v7282 = vmax.f32 %v7154, %v7218
  %v7283 = vmax.f32 %v7155, %v7219
  %v7284 = vmax.f32 %v7156, %v7220
  %v7285 = vmax.f32 %v7157, %v7221
  %v7286 = vmax.f32 %v7158, %v7222
  %v7287 = vmax.f32 %v7159, %v7223
  %v7288 = vmax.f32 %v7160, %v7224
  %v7289 = vmax.f32 %v7161, %v7225
  %v7290 = vmax.f32 %v7162, %v7226
  %v7291 = vmax.f32 %v7163, %v7227
  %v7292 = vmax.f32 %v7164, %v7228
  %v7293 = vmax.f32 %v7165, %v7229
  %v7294 = vmax.f32 %v7166, %v7230
  %v7295 = vmax.f32 %v7167, %v7231
  %v7296 = vmax.f32 %v7168, %v7232
  %v7297 = vmax.f32 %v7169, %v7233
  %v7298 = vmax.f32 %v7170, %v7234
  %v7299 = vmax.f32 %v7171, %v7235
  %v7300 = vmax.f32 %v7172, %v7236
  %v7301 = vmax.f32 %v7173, %v7237
  %v7302 = vpack.c.bf16 %v7238, %v7238
  %v7303 = vpack.c.bf16 %v7239, %v7239
  %v7304 = vpack.c.bf16 %v7240, %v7240
  %v7305 = vpack.c.bf16 %v7241, %v7241
  %v7306 = vpack.c.bf16 %v7242, %v7242
  %v7307 = vpack.c.bf16 %v7243, %v7243
  %v7308 = vpack.c.bf16 %v7244, %v7244
  %v7309 = vpack.c.bf16 %v7245, %v7245
  %v7310 = vpack.c.bf16 %v7246, %v7246
  %v7311 = vpack.c.bf16 %v7247, %v7247
  %v7312 = vpack.c.bf16 %v7248, %v7248
  %v7313 = vpack.c.bf16 %v7249, %v7249
  %v7314 = vpack.c.bf16 %v7250, %v7250
  %v7315 = vpack.c.bf16 %v7251, %v7251
  %v7316 = vpack.c.bf16 %v7252, %v7252
  %v7317 = vpack.c.bf16 %v7253, %v7253
  %v7318 = vpack.c.bf16 %v7254, %v7254
  %v7319 = vpack.c.bf16 %v7255, %v7255
  %v7320 = vpack.c.bf16 %v7256, %v7256
  %v7321 = vpack.c.bf16 %v7257, %v7257
  %v7322 = vpack.c.bf16 %v7258, %v7258
  %v7323 = vpack.c.bf16 %v7259, %v7259
  %v7324 = vpack.c.bf16 %v7260, %v7260
  %v7325 = vpack.c.bf16 %v7261, %v7261
  %v7326 = vpack.c.bf16 %v7262, %v7262
  %v7327 = vpack.c.bf16 %v7263, %v7263
  %v7328 = vpack.c.bf16 %v7264, %v7264
  %v7329 = vpack.c.bf16 %v7265, %v7265
  %v7330 = vpack.c.bf16 %v7266, %v7266
  %v7331 = vpack.c.bf16 %v7267, %v7267
  %v7332 = vpack.c.bf16 %v7268, %v7268
  %v7333 = vpack.c.bf16 %v7269, %v7269
  %v7334 = vpack.c.bf16 %v7270, %v7270
  %v7335 = vpack.c.bf16 %v7271, %v7271
  %v7336 = vpack.c.bf16 %v7272, %v7272
  %v7337 = vpack.c.bf16 %v7273, %v7273
  %v7338 = vpack.c.bf16 %v7274, %v7274
  %v7339 = vpack.c.bf16 %v7275, %v7275
  %v7340 = vpack.c.bf16 %v7276, %v7276
  %v7341 = vpack.c.bf16 %v7277, %v7277
  %v7342 = vpack.c.bf16 %v7278, %v7278
  %v7343 = vpack.c.bf16 %v7279, %v7279
  %v7344 = vpack.c.bf16 %v7280, %v7280
  %v7345 = vpack.c.bf16 %v7281, %v7281
  %v7346 = vpack.c.bf16 %v7282, %v7282
  %v7347 = vpack.c.bf16 %v7283, %v7283
  %v7348 = vpack.c.bf16 %v7284, %v7284
  %v7349 = vpack.c.bf16 %v7285, %v7285
  %v7350 = vpack.c.bf16 %v7286, %v7286
  %v7351 = vpack.c.bf16 %v7287, %v7287
  %v7352 = vpack.c.bf16 %v7288, %v7288
  %v7353 = vpack.c.bf16 %v7289, %v7289
  %v7354 = vpack.c.bf16 %v7290, %v7290
  %v7355 = vpack.c.bf16 %v7291, %v7291
  %v7356 = vpack.c.bf16 %v7292, %v7292
  %v7357 = vpack.c.bf16 %v7293, %v7293
  %v7358 = vpack.c.bf16 %v7294, %v7294
  %v7359 = vpack.c.bf16 %v7295, %v7295
  %v7360 = vpack.c.bf16 %v7296, %v7296
  %v7361 = vpack.c.bf16 %v7297, %v7297
  %v7362 = vpack.c.bf16 %v7298, %v7298
  %v7363 = vpack.c.bf16 %v7299, %v7299
  %v7364 = vpack.c.bf16 %v7300, %v7300
  %v7365 = vpack.c.bf16 %v7301, %v7301
  %7366 = vst [vmem:[%s4] sm:$0xf] %v7302
  %7367 = vst [vmem:[%s4 + $0x4] sm:$0xf] %v7303
  %7368 = vst [vmem:[%s4 + $0x8] sm:$0xf] %v7304
  %7369 = vst [vmem:[%s4 + $0xc] sm:$0xf] %v7305
  %7370 = vst [vmem:[%s4 + $0x10] sm:$0xf] %v7306
  %7371 = vst [vmem:[%s4 + $0x14] sm:$0xf] %v7307
  %7372 = vst [vmem:[%s4 + $0x18] sm:$0xf] %v7308
  %7373 = vst [vmem:[%s4 + $0x1c] sm:$0xf] %v7309
  %7374 = vst [vmem:[%s4 + $0x20] sm:$0xf] %v7310
  %7375 = vst [vmem:[%s4 + $0x24] sm:$0xf] %v7311
  %7376 = vst [vmem:[%s4 + $0x28] sm:$0xf] %v7312
  %7377 = vst [vmem:[%s4 + $0x2c] sm:$0xf] %v7313
  %7378 = vst [vmem:[%s4 + $0x30] sm:$0xf] %v7314
  %7379 = vst [vmem:[%s4 + $0x34] sm:$0xf] %v7315
  %7380 = vst [vmem:[%s4 + $0x38] sm:$0xf] %v7316
  %7381 = vst [vmem:[%s4 + $0x3c] sm:$0xf] %v7317
  %7382 = vst [vmem:[%s4 + $0x40] sm:$0xf] %v7318
  %7383 = vst [vmem:[%s4 + $0x44] sm:$0xf] %v7319
  %7384 = vst [vmem:[%s4 + $0x48] sm:$0xf] %v7320
  %7385 = vst [vmem:[%s4 + $0x4c] sm:$0xf] %v7321
  %7386 = vst [vmem:[%s4 + $0x50] sm:$0xf] %v7322
  %7387 = vst [vmem:[%s4 + $0x54] sm:$0xf] %v7323
  %7388 = vst [vmem:[%s4 + $0x58] sm:$0xf] %v7324
  %7389 = vst [vmem:[%s4 + $0x5c] sm:$0xf] %v7325
  %7390 = vst [vmem:[%s4 + $0x60] sm:$0xf] %v7326
  %7391 = vst [vmem:[%s4 + $0x64] sm:$0xf] %v7327
  %7392 = vst [vmem:[%s4 + $0x68] sm:$0xf] %v7328
  %7393 = vst [vmem:[%s4 + $0x6c] sm:$0xf] %v7329
  %7394 = vst [vmem:[%s4 + $0x70] sm:$0xf] %v7330
  %7395 = vst [vmem:[%s4 + $0x74] sm:$0xf] %v7331
  %7396 = vst [vmem:[%s4 + $0x78] sm:$0xf] %v7332
  %7397 = vst [vmem:[%s4 + $0x7c] sm:$0xf] %v7333
  %7398 = vst [vmem:[%s4 + $0x80] sm:$0xf] %v7334
  %7399 = vst [vmem:[%s4 + $0x84] sm:$0xf] %v7335
  %7400 = vst [vmem:[%s4 + $0x88] sm:$0xf] %v7336
  %7401 = vst [vmem:[%s4 + $0x8c] sm:$0xf] %v7337
  %7402 = vst [vmem:[%s4 + $0x90] sm:$0xf] %v7338
  %7403 = vst [vmem:[%s4 + $0x94] sm:$0xf] %v7339
  %7404 = vst [vmem:[%s4 + $0x98] sm:$0xf] %v7340
  %7405 = vst [vmem:[%s4 + $0x9c] sm:$0xf] %v7341
  %7406 = vst [vmem:[%s4 + $0xa0] sm:$0xf] %v7342
  %7407 = vst [vmem:[%s4 + $0xa4] sm:$0xf] %v7343
  %7408 = vst [vmem:[%s4 + $0xa8] sm:$0xf] %v7344
  %7409 = vst [vmem:[%s4 + $0xac] sm:$0xf] %v7345
  %7410 = vst [vmem:[%s4 + $0xb0] sm:$0xf] %v7346
  %7411 = vst [vmem:[%s4 + $0xb4] sm:$0xf] %v7347
  %7412 = vst [vmem:[%s4 + $0xb8] sm:$0xf] %v7348
  %7413 = vst [vmem:[%s4 + $0xbc] sm:$0xf] %v7349
  %7414 = vst [vmem:[%s4 + $0xc0] sm:$0xf] %v7350
  %7415 = vst [vmem:[%s4 + $0xc4] sm:$0xf] %v7351
  %7416 = vst [vmem:[%s4 + $0xc8] sm:$0xf] %v7352
  %7417 = vst [vmem:[%s4 + $0xcc] sm:$0xf] %v7353
  %7418 = vst [vmem:[%s4 + $0xd0] sm:$0xf] %v7354
  %7419 = vst [vmem:[%s4 + $0xd4] sm:$0xf] %v7355
  %7420 = vst [vmem:[%s4 + $0xd8] sm:$0xf] %v7356
  %7421 = vst [vmem:[%s4 + $0xdc] sm:$0xf] %v7357
  %7422 = vst [vmem:[%s4 + $0xe0] sm:$0xf] %v7358
  %7423 = vst [vmem:[%s4 + $0xe4] sm:$0xf] %v7359
  %7424 = vst [vmem:[%s4 + $0xe8] sm:$0xf] %v7360
  %7425 = vst [vmem:[%s4 + $0xec] sm:$0xf] %v7361
  %7426 = vst [vmem:[%s4 + $0xf0] sm:$0xf] %v7362
  %7427 = vst [vmem:[%s4 + $0xf4] sm:$0xf] %v7363
  %7428 = vst [vmem:[%s4 + $0xf8] sm:$0xf] %v7364
  %7429 = vst [vmem:[%s4 + $0xfc] sm:$0xf] %v7365
  // Predicated region
  $region18: #{discriminator_forward.5} parent=0 // pred_check
    _
  $region19: #{discriminator_forward.5} parent=0 // pred_check_branch
    %7431 = sbr.rel (0) target = $region21
  $region20: #{discriminator_forward.5} parent=0 // pred_region
    _
  $region21: #{discriminator_forward.5} parent=0 // pred_fallthru
    _
  // Predicated region
  $region22: #{discriminator_forward.5} parent=0 // pred_check
    _
  $region23: #{discriminator_forward.5} parent=0 // pred_check_branch
    %7433 = sbr.rel (0) target = $region25
  $region24: #{discriminator_forward.5} parent=0 // pred_region
    _
  $region25: #{discriminator_forward.5} parent=0 // pred_fallthru
    _

// kernel: discriminator_forward.7
$region0: #{discriminator_forward.7}
  #allocation0 [shape = 'u32[]', space=smem, size = 0x4, offset = 0x4, fixed_abs, tag = 'smem constant byte address 0x4 - core index']
  #allocation1 [shape = 'u32[72,128]{1,0:T(1,128)}', space=vmem, size = 0x9000, scoped, tag = 'internal scratch']
  %s0 = inlined_call_operand.vmem [shape: bf16[32,2048], index: 0, kind: input, shape index: {}]
  %s1 = inlined_call_operand.vmem [shape: bf16[2048,128], index: 1, kind: input, shape index: {}]
  %s2 = inlined_call_operand.vmem [shape: f32[1,128], index: 2, kind: input, shape index: {}]
  %s3 = inlined_call_operand.vmem [shape: f32[1,128], index: 3, kind: input, shape index: {}]
  %s4 = inlined_call_operand.vmem [shape: f32[32,128], index: 4, kind: input, shape index: {}]
  %s5 = inlined_call_operand.vmem [shape: f32[2,32], index: 5, kind: input, shape index: {}]
  %s6 = inlined_call_operand.vmem [shape: f32[2,128], index: 6, kind: output, shape index: {}]
  %s7 = sld [smem:[#allocation0]]
  $region34: #{discriminator_forward.7} parent=0
    _
  %s9 = ssub.s32 1, %s7
  %s10 = scalar_select 0, %s9, %s7
  // Predicated region
  $region2: #{discriminator_forward.7} parent=0 // pred_check
    _
  $region3: #{discriminator_forward.7} parent=0 // pred_check_branch
    %12 = sbr.rel (0) target = $region5
  $region4: #{discriminator_forward.7} parent=0 // pred_region
    _
  $region5: #{discriminator_forward.7} parent=0 // pred_fallthru
    _
  // Predicated region
  $region6: #{discriminator_forward.7} parent=0 // pred_check
    _
  $region7: #{discriminator_forward.7} parent=0 // pred_check_branch
    %14 = sbr.rel (0) target = $region9
  $region8: #{discriminator_forward.7} parent=0 // pred_region
    _
  $region9: #{discriminator_forward.7} parent=0 // pred_fallthru
    _
  // Predicated region
  $region10: #{discriminator_forward.7} parent=0 // pred_check
    _
  $region11: #{discriminator_forward.7} parent=0 // pred_check_branch
    %16 = sbr.rel (0) target = $region13
  $region12: #{discriminator_forward.7} parent=0 // pred_region
    _
  $region13: #{discriminator_forward.7} parent=0 // pred_fallthru
    _
  // Predicated region
  $region14: #{discriminator_forward.7} parent=0 // pred_check
    _
  $region15: #{discriminator_forward.7} parent=0 // pred_check_branch
    %18 = sbr.rel (0) target = $region17
  $region16: #{discriminator_forward.7} parent=0 // pred_region
    _
  $region17: #{discriminator_forward.7} parent=0 // pred_fallthru
    _
  // Predicated region
  $region18: #{discriminator_forward.7} parent=0 // pred_check
    _
  $region19: #{discriminator_forward.7} parent=0 // pred_check_branch
    %20 = sbr.rel (0) target = $region21
  $region20: #{discriminator_forward.7} parent=0 // pred_region
    _
  $region21: #{discriminator_forward.7} parent=0 // pred_fallthru
    _
  // Predicated region
  $region22: #{discriminator_forward.7} parent=0 // pred_check
    _
  $region23: #{discriminator_forward.7} parent=0 // pred_check_branch
    %22 = sbr.rel (0) target = $region25
  $region24: #{discriminator_forward.7} parent=0 // pred_region
    _
  $region25: #{discriminator_forward.7} parent=0 // pred_fallthru
    _
  %v23 = vld [vmem:[%s0] sm:$0xff]
  %v24 = vld [vmem:[%s0 + $0x8] sm:$0xff]
  %v25 = vld [vmem:[%s0 + $0x10] sm:$0xff]
  %v26 = vld [vmem:[%s0 + $0x18] sm:$0xff]
  %v27 = vld [vmem:[%s0 + $0x20] sm:$0xff]
  %v28 = vld [vmem:[%s0 + $0x28] sm:$0xff]
  %v29 = vld [vmem:[%s0 + $0x30] sm:$0xff]
  %v30 = vld [vmem:[%s0 + $0x38] sm:$0xff]
  %v31 = vld [vmem:[%s0 + $0x40] sm:$0xff]
  %v32 = vld [vmem:[%s0 + $0x48] sm:$0xff]
  %v33 = vld [vmem:[%s0 + $0x50] sm:$0xff]
  %v34 = vld [vmem:[%s0 + $0x58] sm:$0xff]
  %v35 = vld [vmem:[%s0 + $0x60] sm:$0xff]
  %v36 = vld [vmem:[%s0 + $0x68] sm:$0xff]
  %v37 = vld [vmem:[%s0 + $0x70] sm:$0xff]
  %v38 = vld [vmem:[%s0 + $0x78] sm:$0xff]
  %v39 = vld [vmem:[%s0 + $0x80] sm:$0xff]
  %v40 = vld [vmem:[%s0 + $0x88] sm:$0xff]
  %v41 = vld [vmem:[%s0 + $0x90] sm:$0xff]
  %v42 = vld [vmem:[%s0 + $0x98] sm:$0xff]
  %v43 = vld [vmem:[%s0 + $0xa0] sm:$0xff]
  %v44 = vld [vmem:[%s0 + $0xa8] sm:$0xff]
  %v45 = vld [vmem:[%s0 + $0xb0] sm:$0xff]
  %v46 = vld [vmem:[%s0 + $0xb8] sm:$0xff]
  %v47 = vld [vmem:[%s0 + $0xc0] sm:$0xff]
  %v48 = vld [vmem:[%s0 + $0xc8] sm:$0xff]
  %v49 = vld [vmem:[%s0 + $0xd0] sm:$0xff]
  %v50 = vld [vmem:[%s0 + $0xd8] sm:$0xff]
  %v51 = vld [vmem:[%s0 + $0xe0] sm:$0xff]
  %v52 = vld [vmem:[%s0 + $0xe8] sm:$0xff]
  %v53 = vld [vmem:[%s0 + $0xf0] sm:$0xff]
  %v54 = vld [vmem:[%s0 + $0xf8] sm:$0xff]
  %v55 = vld [vmem:[%s1] sm:$0xf]
  %v56 = vld [vmem:[%s1 + $0x4] sm:$0xf]
  %v57 = vld [vmem:[%s1 + $0x8] sm:$0xf]
  %v58 = vld [vmem:[%s1 + $0xc] sm:$0xf]
  %v59 = vld [vmem:[%s1 + $0x10] sm:$0xf]
  %v60 = vld [vmem:[%s1 + $0x14] sm:$0xf]
  %v61 = vld [vmem:[%s1 + $0x18] sm:$0xf]
  %v62 = vld [vmem:[%s1 + $0x1c] sm:$0xf]
  %v63 = vld [vmem:[%s1 + $0x20] sm:$0xf]
  %v64 = vld [vmem:[%s1 + $0x24] sm:$0xf]
  %v65 = vld [vmem:[%s1 + $0x28] sm:$0xf]
  %v66 = vld [vmem:[%s1 + $0x2c] sm:$0xf]
  %v67 = vld [vmem:[%s1 + $0x30] sm:$0xf]
  %v68 = vld [vmem:[%s1 + $0x34] sm:$0xf]
  %v69 = vld [vmem:[%s1 + $0x38] sm:$0xf]
  %v70 = vld [vmem:[%s1 + $0x3c] sm:$0xf]
  %v71 = vld [vmem:[%s1 + $0x40] sm:$0xf]
  %v72 = vld [vmem:[%s1 + $0x44] sm:$0xf]
  %v73 = vld [vmem:[%s1 + $0x48] sm:$0xf]
  %v74 = vld [vmem:[%s1 + $0x4c] sm:$0xf]
  %v75 = vld [vmem:[%s1 + $0x50] sm:$0xf]
  %v76 = vld [vmem:[%s1 + $0x54] sm:$0xf]
  %v77 = vld [vmem:[%s1 + $0x58] sm:$0xf]
  %v78 = vld [vmem:[%s1 + $0x5c] sm:$0xf]
  %v79 = vld [vmem:[%s1 + $0x60] sm:$0xf]
  %v80 = vld [vmem:[%s1 + $0x64] sm:$0xf]
  %v81 = vld [vmem:[%s1 + $0x68] sm:$0xf]
  %v82 = vld [vmem:[%s1 + $0x6c] sm:$0xf]
  %v83 = vld [vmem:[%s1 + $0x70] sm:$0xf]
  %v84 = vld [vmem:[%s1 + $0x74] sm:$0xf]
  %v85 = vld [vmem:[%s1 + $0x78] sm:$0xf]
  %v86 = vld [vmem:[%s1 + $0x7c] sm:$0xf]
  %v87 = vld [vmem:[%s1 + $0x80] sm:$0xf]
  %v88 = vld [vmem:[%s1 + $0x84] sm:$0xf]
  %v89 = vld [vmem:[%s1 + $0x88] sm:$0xf]
  %v90 = vld [vmem:[%s1 + $0x8c] sm:$0xf]
  %v91 = vld [vmem:[%s1 + $0x90] sm:$0xf]
  %v92 = vld [vmem:[%s1 + $0x94] sm:$0xf]
  %v93 = vld [vmem:[%s1 + $0x98] sm:$0xf]
  %v94 = vld [vmem:[%s1 + $0x9c] sm:$0xf]
  %v95 = vld [vmem:[%s1 + $0xa0] sm:$0xf]
  %v96 = vld [vmem:[%s1 + $0xa4] sm:$0xf]
  %v97 = vld [vmem:[%s1 + $0xa8] sm:$0xf]
  %v98 = vld [vmem:[%s1 + $0xac] sm:$0xf]
  %v99 = vld [vmem:[%s1 + $0xb0] sm:$0xf]
  %v100 = vld [vmem:[%s1 + $0xb4] sm:$0xf]
  %v101 = vld [vmem:[%s1 + $0xb8] sm:$0xf]
  %v102 = vld [vmem:[%s1 + $0xbc] sm:$0xf]
  %v103 = vld [vmem:[%s1 + $0xc0] sm:$0xf]
  %v104 = vld [vmem:[%s1 + $0xc4] sm:$0xf]
  %v105 = vld [vmem:[%s1 + $0xc8] sm:$0xf]
  %v106 = vld [vmem:[%s1 + $0xcc] sm:$0xf]
  %v107 = vld [vmem:[%s1 + $0xd0] sm:$0xf]
  %v108 = vld [vmem:[%s1 + $0xd4] sm:$0xf]
  %v109 = vld [vmem:[%s1 + $0xd8] sm:$0xf]
  %v110 = vld [vmem:[%s1 + $0xdc] sm:$0xf]
  %v111 = vld [vmem:[%s1 + $0xe0] sm:$0xf]
  %v112 = vld [vmem:[%s1 + $0xe4] sm:$0xf]
  %v113 = vld [vmem:[%s1 + $0xe8] sm:$0xf]
  %v114 = vld [vmem:[%s1 + $0xec] sm:$0xf]
  %v115 = vld [vmem:[%s1 + $0xf0] sm:$0xf]
  %v116 = vld [vmem:[%s1 + $0xf4] sm:$0xf]
  %v117 = vld [vmem:[%s1 + $0xf8] sm:$0xf]
  %v118 = vld [vmem:[%s1 + $0xfc] sm:$0xf]
  %v119 = vld [vmem:[%s1 + $0x100] sm:$0xf]
  %v120 = vld [vmem:[%s1 + $0x104] sm:$0xf]
  %v121 = vld [vmem:[%s1 + $0x108] sm:$0xf]
  %v122 = vld [vmem:[%s1 + $0x10c] sm:$0xf]
  %v123 = vld [vmem:[%s1 + $0x110] sm:$0xf]
  %v124 = vld [vmem:[%s1 + $0x114] sm:$0xf]
  %v125 = vld [vmem:[%s1 + $0x118] sm:$0xf]
  %v126 = vld [vmem:[%s1 + $0x11c] sm:$0xf]
  %v127 = vld [vmem:[%s1 + $0x120] sm:$0xf]
  %v128 = vld [vmem:[%s1 + $0x124] sm:$0xf]
  %v129 = vld [vmem:[%s1 + $0x128] sm:$0xf]
  %v130 = vld [vmem:[%s1 + $0x12c] sm:$0xf]
  %v131 = vld [vmem:[%s1 + $0x130] sm:$0xf]
  %v132 = vld [vmem:[%s1 + $0x134] sm:$0xf]
  %v133 = vld [vmem:[%s1 + $0x138] sm:$0xf]
  %v134 = vld [vmem:[%s1 + $0x13c] sm:$0xf]
  %v135 = vld [vmem:[%s1 + $0x140] sm:$0xf]
  %v136 = vld [vmem:[%s1 + $0x144] sm:$0xf]
  %v137 = vld [vmem:[%s1 + $0x148] sm:$0xf]
  %v138 = vld [vmem:[%s1 + $0x14c] sm:$0xf]
  %v139 = vld [vmem:[%s1 + $0x150] sm:$0xf]
  %v140 = vld [vmem:[%s1 + $0x154] sm:$0xf]
  %v141 = vld [vmem:[%s1 + $0x158] sm:$0xf]
  %v142 = vld [vmem:[%s1 + $0x15c] sm:$0xf]
  %v143 = vld [vmem:[%s1 + $0x160] sm:$0xf]
  %v144 = vld [vmem:[%s1 + $0x164] sm:$0xf]
  %v145 = vld [vmem:[%s1 + $0x168] sm:$0xf]
  %v146 = vld [vmem:[%s1 + $0x16c] sm:$0xf]
  %v147 = vld [vmem:[%s1 + $0x170] sm:$0xf]
  %v148 = vld [vmem:[%s1 + $0x174] sm:$0xf]
  %v149 = vld [vmem:[%s1 + $0x178] sm:$0xf]
  %v150 = vld [vmem:[%s1 + $0x17c] sm:$0xf]
  %v151 = vld [vmem:[%s1 + $0x180] sm:$0xf]
  %v152 = vld [vmem:[%s1 + $0x184] sm:$0xf]
  %v153 = vld [vmem:[%s1 + $0x188] sm:$0xf]
  %v154 = vld [vmem:[%s1 + $0x18c] sm:$0xf]
  %v155 = vld [vmem:[%s1 + $0x190] sm:$0xf]
  %v156 = vld [vmem:[%s1 + $0x194] sm:$0xf]
  %v157 = vld [vmem:[%s1 + $0x198] sm:$0xf]
  %v158 = vld [vmem:[%s1 + $0x19c] sm:$0xf]
  %v159 = vld [vmem:[%s1 + $0x1a0] sm:$0xf]
  %v160 = vld [vmem:[%s1 + $0x1a4] sm:$0xf]
  %v161 = vld [vmem:[%s1 + $0x1a8] sm:$0xf]
  %v162 = vld [vmem:[%s1 + $0x1ac] sm:$0xf]
  %v163 = vld [vmem:[%s1 + $0x1b0] sm:$0xf]
  %v164 = vld [vmem:[%s1 + $0x1b4] sm:$0xf]
  %v165 = vld [vmem:[%s1 + $0x1b8] sm:$0xf]
  %v166 = vld [vmem:[%s1 + $0x1bc] sm:$0xf]
  %v167 = vld [vmem:[%s1 + $0x1c0] sm:$0xf]
  %v168 = vld [vmem:[%s1 + $0x1c4] sm:$0xf]
  %v169 = vld [vmem:[%s1 + $0x1c8] sm:$0xf]
  %v170 = vld [vmem:[%s1 + $0x1cc] sm:$0xf]
  %v171 = vld [vmem:[%s1 + $0x1d0] sm:$0xf]
  %v172 = vld [vmem:[%s1 + $0x1d4] sm:$0xf]
  %v173 = vld [vmem:[%s1 + $0x1d8] sm:$0xf]
  %v174 = vld [vmem:[%s1 + $0x1dc] sm:$0xf]
  %v175 = vld [vmem:[%s1 + $0x1e0] sm:$0xf]
  %v176 = vld [vmem:[%s1 + $0x1e4] sm:$0xf]
  %v177 = vld [vmem:[%s1 + $0x1e8] sm:$0xf]
  %v178 = vld [vmem:[%s1 + $0x1ec] sm:$0xf]
  %v179 = vld [vmem:[%s1 + $0x1f0] sm:$0xf]
  %v180 = vld [vmem:[%s1 + $0x1f4] sm:$0xf]
  %v181 = vld [vmem:[%s1 + $0x1f8] sm:$0xf]
  %v182 = vld [vmem:[%s1 + $0x1fc] sm:$0xf]
  %v183 = vld [vmem:[%s1 + $0x200] sm:$0xf]
  %v184 = vld [vmem:[%s1 + $0x204] sm:$0xf]
  %v185 = vld [vmem:[%s1 + $0x208] sm:$0xf]
  %v186 = vld [vmem:[%s1 + $0x20c] sm:$0xf]
  %v187 = vld [vmem:[%s1 + $0x210] sm:$0xf]
  %v188 = vld [vmem:[%s1 + $0x214] sm:$0xf]
  %v189 = vld [vmem:[%s1 + $0x218] sm:$0xf]
  %v190 = vld [vmem:[%s1 + $0x21c] sm:$0xf]
  %v191 = vld [vmem:[%s1 + $0x220] sm:$0xf]
  %v192 = vld [vmem:[%s1 + $0x224] sm:$0xf]
  %v193 = vld [vmem:[%s1 + $0x228] sm:$0xf]
  %v194 = vld [vmem:[%s1 + $0x22c] sm:$0xf]
  %v195 = vld [vmem:[%s1 + $0x230] sm:$0xf]
  %v196 = vld [vmem:[%s1 + $0x234] sm:$0xf]
  %v197 = vld [vmem:[%s1 + $0x238] sm:$0xf]
  %v198 = vld [vmem:[%s1 + $0x23c] sm:$0xf]
  %v199 = vld [vmem:[%s1 + $0x240] sm:$0xf]
  %v200 = vld [vmem:[%s1 + $0x244] sm:$0xf]
  %v201 = vld [vmem:[%s1 + $0x248] sm:$0xf]
  %v202 = vld [vmem:[%s1 + $0x24c] sm:$0xf]
  %v203 = vld [vmem:[%s1 + $0x250] sm:$0xf]
  %v204 = vld [vmem:[%s1 + $0x254] sm:$0xf]
  %v205 = vld [vmem:[%s1 + $0x258] sm:$0xf]
  %v206 = vld [vmem:[%s1 + $0x25c] sm:$0xf]
  %v207 = vld [vmem:[%s1 + $0x260] sm:$0xf]
  %v208 = vld [vmem:[%s1 + $0x264] sm:$0xf]
  %v209 = vld [vmem:[%s1 + $0x268] sm:$0xf]
  %v210 = vld [vmem:[%s1 + $0x26c] sm:$0xf]
  %v211 = vld [vmem:[%s1 + $0x270] sm:$0xf]
  %v212 = vld [vmem:[%s1 + $0x274] sm:$0xf]
  %v213 = vld [vmem:[%s1 + $0x278] sm:$0xf]
  %v214 = vld [vmem:[%s1 + $0x27c] sm:$0xf]
  %v215 = vld [vmem:[%s1 + $0x280] sm:$0xf]
  %v216 = vld [vmem:[%s1 + $0x284] sm:$0xf]
  %v217 = vld [vmem:[%s1 + $0x288] sm:$0xf]
  %v218 = vld [vmem:[%s1 + $0x28c] sm:$0xf]
  %v219 = vld [vmem:[%s1 + $0x290] sm:$0xf]
  %v220 = vld [vmem:[%s1 + $0x294] sm:$0xf]
  %v221 = vld [vmem:[%s1 + $0x298] sm:$0xf]
  %v222 = vld [vmem:[%s1 + $0x29c] sm:$0xf]
  %v223 = vld [vmem:[%s1 + $0x2a0] sm:$0xf]
  %v224 = vld [vmem:[%s1 + $0x2a4] sm:$0xf]
  %v225 = vld [vmem:[%s1 + $0x2a8] sm:$0xf]
  %v226 = vld [vmem:[%s1 + $0x2ac] sm:$0xf]
  %v227 = vld [vmem:[%s1 + $0x2b0] sm:$0xf]
  %v228 = vld [vmem:[%s1 + $0x2b4] sm:$0xf]
  %v229 = vld [vmem:[%s1 + $0x2b8] sm:$0xf]
  %v230 = vld [vmem:[%s1 + $0x2bc] sm:$0xf]
  %v231 = vld [vmem:[%s1 + $0x2c0] sm:$0xf]
  %v232 = vld [vmem:[%s1 + $0x2c4] sm:$0xf]
  %v233 = vld [vmem:[%s1 + $0x2c8] sm:$0xf]
  %v234 = vld [vmem:[%s1 + $0x2cc] sm:$0xf]
  %v235 = vld [vmem:[%s1 + $0x2d0] sm:$0xf]
  %v236 = vld [vmem:[%s1 + $0x2d4] sm:$0xf]
  %v237 = vld [vmem:[%s1 + $0x2d8] sm:$0xf]
  %v238 = vld [vmem:[%s1 + $0x2dc] sm:$0xf]
  %v239 = vld [vmem:[%s1 + $0x2e0] sm:$0xf]
  %v240 = vld [vmem:[%s1 + $0x2e4] sm:$0xf]
  %v241 = vld [vmem:[%s1 + $0x2e8] sm:$0xf]
  %v242 = vld [vmem:[%s1 + $0x2ec] sm:$0xf]
  %v243 = vld [vmem:[%s1 + $0x2f0] sm:$0xf]
  %v244 = vld [vmem:[%s1 + $0x2f4] sm:$0xf]
  %v245 = vld [vmem:[%s1 + $0x2f8] sm:$0xf]
  %v246 = vld [vmem:[%s1 + $0x2fc] sm:$0xf]
  %v247 = vld [vmem:[%s1 + $0x300] sm:$0xf]
  %v248 = vld [vmem:[%s1 + $0x304] sm:$0xf]
  %v249 = vld [vmem:[%s1 + $0x308] sm:$0xf]
  %v250 = vld [vmem:[%s1 + $0x30c] sm:$0xf]
  %v251 = vld [vmem:[%s1 + $0x310] sm:$0xf]
  %v252 = vld [vmem:[%s1 + $0x314] sm:$0xf]
  %v253 = vld [vmem:[%s1 + $0x318] sm:$0xf]
  %v254 = vld [vmem:[%s1 + $0x31c] sm:$0xf]
  %v255 = vld [vmem:[%s1 + $0x320] sm:$0xf]
  %v256 = vld [vmem:[%s1 + $0x324] sm:$0xf]
  %v257 = vld [vmem:[%s1 + $0x328] sm:$0xf]
  %v258 = vld [vmem:[%s1 + $0x32c] sm:$0xf]
  %v259 = vld [vmem:[%s1 + $0x330] sm:$0xf]
  %v260 = vld [vmem:[%s1 + $0x334] sm:$0xf]
  %v261 = vld [vmem:[%s1 + $0x338] sm:$0xf]
  %v262 = vld [vmem:[%s1 + $0x33c] sm:$0xf]
  %v263 = vld [vmem:[%s1 + $0x340] sm:$0xf]
  %v264 = vld [vmem:[%s1 + $0x344] sm:$0xf]
  %v265 = vld [vmem:[%s1 + $0x348] sm:$0xf]
  %v266 = vld [vmem:[%s1 + $0x34c] sm:$0xf]
  %v267 = vld [vmem:[%s1 + $0x350] sm:$0xf]
  %v268 = vld [vmem:[%s1 + $0x354] sm:$0xf]
  %v269 = vld [vmem:[%s1 + $0x358] sm:$0xf]
  %v270 = vld [vmem:[%s1 + $0x35c] sm:$0xf]
  %v271 = vld [vmem:[%s1 + $0x360] sm:$0xf]
  %v272 = vld [vmem:[%s1 + $0x364] sm:$0xf]
  %v273 = vld [vmem:[%s1 + $0x368] sm:$0xf]
  %v274 = vld [vmem:[%s1 + $0x36c] sm:$0xf]
  %v275 = vld [vmem:[%s1 + $0x370] sm:$0xf]
  %v276 = vld [vmem:[%s1 + $0x374] sm:$0xf]
  %v277 = vld [vmem:[%s1 + $0x378] sm:$0xf]
  %v278 = vld [vmem:[%s1 + $0x37c] sm:$0xf]
  %v279 = vld [vmem:[%s1 + $0x380] sm:$0xf]
  %v280 = vld [vmem:[%s1 + $0x384] sm:$0xf]
  %v281 = vld [vmem:[%s1 + $0x388] sm:$0xf]
  %v282 = vld [vmem:[%s1 + $0x38c] sm:$0xf]
  %v283 = vld [vmem:[%s1 + $0x390] sm:$0xf]
  %v284 = vld [vmem:[%s1 + $0x394] sm:$0xf]
  %v285 = vld [vmem:[%s1 + $0x398] sm:$0xf]
  %v286 = vld [vmem:[%s1 + $0x39c] sm:$0xf]
  %v287 = vld [vmem:[%s1 + $0x3a0] sm:$0xf]
  %v288 = vld [vmem:[%s1 + $0x3a4] sm:$0xf]
  %v289 = vld [vmem:[%s1 + $0x3a8] sm:$0xf]
  %v290 = vld [vmem:[%s1 + $0x3ac] sm:$0xf]
  %v291 = vld [vmem:[%s1 + $0x3b0] sm:$0xf]
  %v292 = vld [vmem:[%s1 + $0x3b4] sm:$0xf]
  %v293 = vld [vmem:[%s1 + $0x3b8] sm:$0xf]
  %v294 = vld [vmem:[%s1 + $0x3bc] sm:$0xf]
  %v295 = vld [vmem:[%s1 + $0x3c0] sm:$0xf]
  %v296 = vld [vmem:[%s1 + $0x3c4] sm:$0xf]
  %v297 = vld [vmem:[%s1 + $0x3c8] sm:$0xf]
  %v298 = vld [vmem:[%s1 + $0x3cc] sm:$0xf]
  %v299 = vld [vmem:[%s1 + $0x3d0] sm:$0xf]
  %v300 = vld [vmem:[%s1 + $0x3d4] sm:$0xf]
  %v301 = vld [vmem:[%s1 + $0x3d8] sm:$0xf]
  %v302 = vld [vmem:[%s1 + $0x3dc] sm:$0xf]
  %v303 = vld [vmem:[%s1 + $0x3e0] sm:$0xf]
  %v304 = vld [vmem:[%s1 + $0x3e4] sm:$0xf]
  %v305 = vld [vmem:[%s1 + $0x3e8] sm:$0xf]
  %v306 = vld [vmem:[%s1 + $0x3ec] sm:$0xf]
  %v307 = vld [vmem:[%s1 + $0x3f0] sm:$0xf]
  %v308 = vld [vmem:[%s1 + $0x3f4] sm:$0xf]
  %v309 = vld [vmem:[%s1 + $0x3f8] sm:$0xf]
  %v310 = vld [vmem:[%s1 + $0x3fc] sm:$0xf]
  %v343 = vunpack.c.l.b16 %v23
  %v344 = vunpack.c.h.b16 %v23
  %v345 = vunpack.c.l.b16 %v24
  %v346 = vunpack.c.h.b16 %v24
  %v347 = vunpack.c.l.b16 %v25
  %v348 = vunpack.c.h.b16 %v25
  %v349 = vunpack.c.l.b16 %v26
  %v350 = vunpack.c.h.b16 %v26
  %v351 = vunpack.c.l.b16 %v27
  %v352 = vunpack.c.h.b16 %v27
  %v353 = vunpack.c.l.b16 %v28
  %v354 = vunpack.c.h.b16 %v28
  %v355 = vunpack.c.l.b16 %v29
  %v356 = vunpack.c.h.b16 %v29
  %v357 = vunpack.c.l.b16 %v30
  %v358 = vunpack.c.h.b16 %v30
  %v359 = vunpack.c.l.b16 %v31
  %v360 = vunpack.c.h.b16 %v31
  %v361 = vunpack.c.l.b16 %v32
  %v362 = vunpack.c.h.b16 %v32
  %v363 = vunpack.c.l.b16 %v33
  %v364 = vunpack.c.h.b16 %v33
  %v365 = vunpack.c.l.b16 %v34
  %v366 = vunpack.c.h.b16 %v34
  %v367 = vunpack.c.l.b16 %v35
  %v368 = vunpack.c.h.b16 %v35
  %v369 = vunpack.c.l.b16 %v36
  %v370 = vunpack.c.h.b16 %v36
  %v371 = vunpack.c.l.b16 %v37
  %v372 = vunpack.c.h.b16 %v37
  %v373 = vunpack.c.l.b16 %v38
  %v374 = vunpack.c.h.b16 %v38
  %v375 = vunpack.c.l.b16 %v39
  %v376 = vunpack.c.h.b16 %v39
  %v377 = vunpack.c.l.b16 %v40
  %v378 = vunpack.c.h.b16 %v40
  %v379 = vunpack.c.l.b16 %v41
  %v380 = vunpack.c.h.b16 %v41
  %v381 = vunpack.c.l.b16 %v42
  %v382 = vunpack.c.h.b16 %v42
  %v383 = vunpack.c.l.b16 %v43
  %v384 = vunpack.c.h.b16 %v43
  %v385 = vunpack.c.l.b16 %v44
  %v386 = vunpack.c.h.b16 %v44
  %v387 = vunpack.c.l.b16 %v45
  %v388 = vunpack.c.h.b16 %v45
  %v389 = vunpack.c.l.b16 %v46
  %v390 = vunpack.c.h.b16 %v46
  %v391 = vunpack.c.l.b16 %v47
  %v392 = vunpack.c.h.b16 %v47
  %v393 = vunpack.c.l.b16 %v48
  %v394 = vunpack.c.h.b16 %v48
  %v395 = vunpack.c.l.b16 %v49
  %v396 = vunpack.c.h.b16 %v49
  %v397 = vunpack.c.l.b16 %v50
  %v398 = vunpack.c.h.b16 %v50
  %v399 = vunpack.c.l.b16 %v51
  %v400 = vunpack.c.h.b16 %v51
  %v401 = vunpack.c.l.b16 %v52
  %v402 = vunpack.c.h.b16 %v52
  %v403 = vunpack.c.l.b16 %v53
  %v404 = vunpack.c.h.b16 %v53
  %v405 = vunpack.c.l.b16 %v54
  %v406 = vunpack.c.h.b16 %v54
  %v407 = vpack.c.b16 %v359, %v343
  %v408 = vpack.c.b16 %v360, %v344
  %v409 = vpack.c.b16 %v361, %v345
  %v410 = vpack.c.b16 %v362, %v346
  %v411 = vpack.c.b16 %v363, %v347
  %v412 = vpack.c.b16 %v364, %v348
  %v413 = vpack.c.b16 %v365, %v349
  %v414 = vpack.c.b16 %v366, %v350
  %v415 = vpack.c.b16 %v367, %v351
  %v416 = vpack.c.b16 %v368, %v352
  %v417 = vpack.c.b16 %v369, %v353
  %v418 = vpack.c.b16 %v370, %v354
  %v419 = vpack.c.b16 %v371, %v355
  %v420 = vpack.c.b16 %v372, %v356
  %v421 = vpack.c.b16 %v373, %v357
  %v422 = vpack.c.b16 %v374, %v358
  %v423 = vpack.c.b16 %v391, %v375
  %v424 = vpack.c.b16 %v392, %v376
  %v425 = vpack.c.b16 %v393, %v377
  %v426 = vpack.c.b16 %v394, %v378
  %v427 = vpack.c.b16 %v395, %v379
  %v428 = vpack.c.b16 %v396, %v380
  %v429 = vpack.c.b16 %v397, %v381
  %v430 = vpack.c.b16 %v398, %v382
  %v431 = vpack.c.b16 %v399, %v383
  %v432 = vpack.c.b16 %v400, %v384
  %v433 = vpack.c.b16 %v401, %v385
  %v434 = vpack.c.b16 %v402, %v386
  %v435 = vpack.c.b16 %v403, %v387
  %v436 = vpack.c.b16 %v404, %v388
  %v437 = vpack.c.b16 %v405, %v389
  %v438 = vpack.c.b16 %v406, %v390
  %v727 = vunpack.c.l.b16 %v55
  %v728 = vunpack.c.l.b16 %v56
  %v729 = vunpack.c.l.b16 %v57
  %v730 = vunpack.c.l.b16 %v58
  %v731 = vunpack.c.l.b16 %v59
  %v732 = vunpack.c.l.b16 %v60
  %v733 = vunpack.c.l.b16 %v61
  %v734 = vunpack.c.l.b16 %v62
  %v735 = vunpack.c.l.b16 %v63
  %v736 = vunpack.c.l.b16 %v64
  %v737 = vunpack.c.l.b16 %v65
  %v738 = vunpack.c.l.b16 %v66
  %v739 = vunpack.c.l.b16 %v67
  %v740 = vunpack.c.l.b16 %v68
  %v741 = vunpack.c.l.b16 %v69
  %v742 = vunpack.c.l.b16 %v70
  %v743 = vunpack.c.l.b16 %v71
  %v744 = vunpack.c.l.b16 %v72
  %v745 = vunpack.c.l.b16 %v73
  %v746 = vunpack.c.l.b16 %v74
  %v747 = vunpack.c.l.b16 %v75
  %v748 = vunpack.c.l.b16 %v76
  %v749 = vunpack.c.l.b16 %v77
  %v750 = vunpack.c.l.b16 %v78
  %v751 = vunpack.c.l.b16 %v79
  %v752 = vunpack.c.l.b16 %v80
  %v753 = vunpack.c.l.b16 %v81
  %v754 = vunpack.c.l.b16 %v82
  %v755 = vunpack.c.l.b16 %v83
  %v756 = vunpack.c.l.b16 %v84
  %v757 = vunpack.c.l.b16 %v85
  %v758 = vunpack.c.l.b16 %v86
  %v759 = vunpack.c.l.b16 %v87
  %v760 = vunpack.c.l.b16 %v88
  %v761 = vunpack.c.l.b16 %v89
  %v762 = vunpack.c.l.b16 %v90
  %v763 = vunpack.c.l.b16 %v91
  %v764 = vunpack.c.l.b16 %v92
  %v765 = vunpack.c.l.b16 %v93
  %v766 = vunpack.c.l.b16 %v94
  %v767 = vunpack.c.l.b16 %v95
  %v768 = vunpack.c.l.b16 %v96
  %v769 = vunpack.c.l.b16 %v97
  %v770 = vunpack.c.l.b16 %v98
  %v771 = vunpack.c.l.b16 %v99
  %v772 = vunpack.c.l.b16 %v100
  %v773 = vunpack.c.l.b16 %v101
  %v774 = vunpack.c.l.b16 %v102
  %v775 = vunpack.c.l.b16 %v103
  %v776 = vunpack.c.l.b16 %v104
  %v777 = vunpack.c.l.b16 %v105
  %v778 = vunpack.c.l.b16 %v106
  %v779 = vunpack.c.l.b16 %v107
  %v780 = vunpack.c.l.b16 %v108
  %v781 = vunpack.c.l.b16 %v109
  %v782 = vunpack.c.l.b16 %v110
  %v783 = vunpack.c.l.b16 %v111
  %v784 = vunpack.c.l.b16 %v112
  %v785 = vunpack.c.l.b16 %v113
  %v786 = vunpack.c.l.b16 %v114
  %v787 = vunpack.c.l.b16 %v115
  %v788 = vunpack.c.l.b16 %v116
  %v789 = vunpack.c.l.b16 %v117
  %v790 = vunpack.c.l.b16 %v118
  %v791 = vunpack.c.l.b16 %v119
  %v792 = vunpack.c.l.b16 %v120
  %v793 = vunpack.c.l.b16 %v121
  %v794 = vunpack.c.l.b16 %v122
  %v795 = vunpack.c.l.b16 %v123
  %v796 = vunpack.c.l.b16 %v124
  %v797 = vunpack.c.l.b16 %v125
  %v798 = vunpack.c.l.b16 %v126
  %v799 = vunpack.c.l.b16 %v127
  %v800 = vunpack.c.l.b16 %v128
  %v801 = vunpack.c.l.b16 %v129
  %v802 = vunpack.c.l.b16 %v130
  %v803 = vunpack.c.l.b16 %v131
  %v804 = vunpack.c.l.b16 %v132
  %v805 = vunpack.c.l.b16 %v133
  %v806 = vunpack.c.l.b16 %v134
  %v807 = vunpack.c.l.b16 %v135
  %v808 = vunpack.c.l.b16 %v136
  %v809 = vunpack.c.l.b16 %v137
  %v810 = vunpack.c.l.b16 %v138
  %v811 = vunpack.c.l.b16 %v139
  %v812 = vunpack.c.l.b16 %v140
  %v813 = vunpack.c.l.b16 %v141
  %v814 = vunpack.c.l.b16 %v142
  %v815 = vunpack.c.l.b16 %v143
  %v816 = vunpack.c.l.b16 %v144
  %v817 = vunpack.c.l.b16 %v145
  %v818 = vunpack.c.l.b16 %v146
  %v819 = vunpack.c.l.b16 %v147
  %v820 = vunpack.c.l.b16 %v148
  %v821 = vunpack.c.l.b16 %v149
  %v822 = vunpack.c.l.b16 %v150
  %v823 = vunpack.c.l.b16 %v151
  %v824 = vunpack.c.l.b16 %v152
  %v825 = vunpack.c.l.b16 %v153
  %v826 = vunpack.c.l.b16 %v154
  %v827 = vunpack.c.l.b16 %v155
  %v828 = vunpack.c.l.b16 %v156
  %v829 = vunpack.c.l.b16 %v157
  %v830 = vunpack.c.l.b16 %v158
  %v831 = vunpack.c.l.b16 %v159
  %v832 = vunpack.c.l.b16 %v160
  %v833 = vunpack.c.l.b16 %v161
  %v834 = vunpack.c.l.b16 %v162
  %v835 = vunpack.c.l.b16 %v163
  %v836 = vunpack.c.l.b16 %v164
  %v837 = vunpack.c.l.b16 %v165
  %v838 = vunpack.c.l.b16 %v166
  %v839 = vunpack.c.l.b16 %v167
  %v840 = vunpack.c.l.b16 %v168
  %v841 = vunpack.c.l.b16 %v169
  %v842 = vunpack.c.l.b16 %v170
  %v843 = vunpack.c.l.b16 %v171
  %v844 = vunpack.c.l.b16 %v172
  %v845 = vunpack.c.l.b16 %v173
  %v846 = vunpack.c.l.b16 %v174
  %v847 = vunpack.c.l.b16 %v175
  %v848 = vunpack.c.l.b16 %v176
  %v849 = vunpack.c.l.b16 %v177
  %v850 = vunpack.c.l.b16 %v178
  %v851 = vunpack.c.l.b16 %v179
  %v852 = vunpack.c.l.b16 %v180
  %v853 = vunpack.c.l.b16 %v181
  %v854 = vunpack.c.l.b16 %v182
  %v855 = vunpack.c.l.b16 %v183
  %v856 = vunpack.c.l.b16 %v184
  %v857 = vunpack.c.l.b16 %v185
  %v858 = vunpack.c.l.b16 %v186
  %v859 = vunpack.c.l.b16 %v187
  %v860 = vunpack.c.l.b16 %v188
  %v861 = vunpack.c.l.b16 %v189
  %v862 = vunpack.c.l.b16 %v190
  %v863 = vunpack.c.l.b16 %v191
  %v864 = vunpack.c.l.b16 %v192
  %v865 = vunpack.c.l.b16 %v193
  %v866 = vunpack.c.l.b16 %v194
  %v867 = vunpack.c.l.b16 %v195
  %v868 = vunpack.c.l.b16 %v196
  %v869 = vunpack.c.l.b16 %v197
  %v870 = vunpack.c.l.b16 %v198
  %v871 = vunpack.c.l.b16 %v199
  %v872 = vunpack.c.l.b16 %v200
  %v873 = vunpack.c.l.b16 %v201
  %v874 = vunpack.c.l.b16 %v202
  %v875 = vunpack.c.l.b16 %v203
  %v876 = vunpack.c.l.b16 %v204
  %v877 = vunpack.c.l.b16 %v205
  %v878 = vunpack.c.l.b16 %v206
  %v879 = vunpack.c.l.b16 %v207
  %v880 = vunpack.c.l.b16 %v208
  %v881 = vunpack.c.l.b16 %v209
  %v882 = vunpack.c.l.b16 %v210
  %v883 = vunpack.c.l.b16 %v211
  %v884 = vunpack.c.l.b16 %v212
  %v885 = vunpack.c.l.b16 %v213
  %v886 = vunpack.c.l.b16 %v214
  %v887 = vunpack.c.l.b16 %v215
  %v888 = vunpack.c.l.b16 %v216
  %v889 = vunpack.c.l.b16 %v217
  %v890 = vunpack.c.l.b16 %v218
  %v891 = vunpack.c.l.b16 %v219
  %v892 = vunpack.c.l.b16 %v220
  %v893 = vunpack.c.l.b16 %v221
  %v894 = vunpack.c.l.b16 %v222
  %v895 = vunpack.c.l.b16 %v223
  %v896 = vunpack.c.l.b16 %v224
  %v897 = vunpack.c.l.b16 %v225
  %v898 = vunpack.c.l.b16 %v226
  %v899 = vunpack.c.l.b16 %v227
  %v900 = vunpack.c.l.b16 %v228
  %v901 = vunpack.c.l.b16 %v229
  %v902 = vunpack.c.l.b16 %v230
  %v903 = vunpack.c.l.b16 %v231
  %v904 = vunpack.c.l.b16 %v232
  %v905 = vunpack.c.l.b16 %v233
  %v906 = vunpack.c.l.b16 %v234
  %v907 = vunpack.c.l.b16 %v235
  %v908 = vunpack.c.l.b16 %v236
  %v909 = vunpack.c.l.b16 %v237
  %v910 = vunpack.c.l.b16 %v238
  %v911 = vunpack.c.l.b16 %v239
  %v912 = vunpack.c.l.b16 %v240
  %v913 = vunpack.c.l.b16 %v241
  %v914 = vunpack.c.l.b16 %v242
  %v915 = vunpack.c.l.b16 %v243
  %v916 = vunpack.c.l.b16 %v244
  %v917 = vunpack.c.l.b16 %v245
  %v918 = vunpack.c.l.b16 %v246
  %v919 = vunpack.c.l.b16 %v247
  %v920 = vunpack.c.l.b16 %v248
  %v921 = vunpack.c.l.b16 %v249
  %v922 = vunpack.c.l.b16 %v250
  %v923 = vunpack.c.l.b16 %v251
  %v924 = vunpack.c.l.b16 %v252
  %v925 = vunpack.c.l.b16 %v253
  %v926 = vunpack.c.l.b16 %v254
  %v927 = vunpack.c.l.b16 %v255
  %v928 = vunpack.c.l.b16 %v256
  %v929 = vunpack.c.l.b16 %v257
  %v930 = vunpack.c.l.b16 %v258
  %v931 = vunpack.c.l.b16 %v259
  %v932 = vunpack.c.l.b16 %v260
  %v933 = vunpack.c.l.b16 %v261
  %v934 = vunpack.c.l.b16 %v262
  %v935 = vunpack.c.l.b16 %v263
  %v936 = vunpack.c.l.b16 %v264
  %v937 = vunpack.c.l.b16 %v265
  %v938 = vunpack.c.l.b16 %v266
  %v939 = vunpack.c.l.b16 %v267
  %v940 = vunpack.c.l.b16 %v268
  %v941 = vunpack.c.l.b16 %v269
  %v942 = vunpack.c.l.b16 %v270
  %v943 = vunpack.c.l.b16 %v271
  %v944 = vunpack.c.l.b16 %v272
  %v945 = vunpack.c.l.b16 %v273
  %v946 = vunpack.c.l.b16 %v274
  %v947 = vunpack.c.l.b16 %v275
  %v948 = vunpack.c.l.b16 %v276
  %v949 = vunpack.c.l.b16 %v277
  %v950 = vunpack.c.l.b16 %v278
  %v951 = vunpack.c.l.b16 %v279
  %v952 = vunpack.c.l.b16 %v280
  %v953 = vunpack.c.l.b16 %v281
  %v954 = vunpack.c.l.b16 %v282
  %v955 = vunpack.c.l.b16 %v283
  %v956 = vunpack.c.l.b16 %v284
  %v957 = vunpack.c.l.b16 %v285
  %v958 = vunpack.c.l.b16 %v286
  %v959 = vunpack.c.l.b16 %v287
  %v960 = vunpack.c.l.b16 %v288
  %v961 = vunpack.c.l.b16 %v289
  %v962 = vunpack.c.l.b16 %v290
  %v963 = vunpack.c.l.b16 %v291
  %v964 = vunpack.c.l.b16 %v292
  %v965 = vunpack.c.l.b16 %v293
  %v966 = vunpack.c.l.b16 %v294
  %v967 = vunpack.c.l.b16 %v295
  %v968 = vunpack.c.l.b16 %v296
  %v969 = vunpack.c.l.b16 %v297
  %v970 = vunpack.c.l.b16 %v298
  %v971 = vunpack.c.l.b16 %v299
  %v972 = vunpack.c.l.b16 %v300
  %v973 = vunpack.c.l.b16 %v301
  %v974 = vunpack.c.l.b16 %v302
  %v975 = vunpack.c.l.b16 %v303
  %v976 = vunpack.c.l.b16 %v304
  %v977 = vunpack.c.l.b16 %v305
  %v978 = vunpack.c.l.b16 %v306
  %v979 = vunpack.c.l.b16 %v307
  %v980 = vunpack.c.l.b16 %v308
  %v981 = vunpack.c.l.b16 %v309
  %v982 = vunpack.c.l.b16 %v310
  %v983 = vpack.c.b16 %v728, %v727
  %v984 = vpack.c.b16 %v730, %v729
  %v985 = vpack.c.b16 %v732, %v731
  %v986 = vpack.c.b16 %v734, %v733
  %v987 = vpack.c.b16 %v736, %v735
  %v988 = vpack.c.b16 %v738, %v737
  %v989 = vpack.c.b16 %v740, %v739
  %v990 = vpack.c.b16 %v742, %v741
  %v991 = vpack.c.b16 %v744, %v743
  %v992 = vpack.c.b16 %v746, %v745
  %v993 = vpack.c.b16 %v748, %v747
  %v994 = vpack.c.b16 %v750, %v749
  %v995 = vpack.c.b16 %v752, %v751
  %v996 = vpack.c.b16 %v754, %v753
  %v997 = vpack.c.b16 %v756, %v755
  %v998 = vpack.c.b16 %v758, %v757
  %v999 = vpack.c.b16 %v760, %v759
  %v1000 = vpack.c.b16 %v762, %v761
  %v1001 = vpack.c.b16 %v764, %v763
  %v1002 = vpack.c.b16 %v766, %v765
  %v1003 = vpack.c.b16 %v768, %v767
  %v1004 = vpack.c.b16 %v770, %v769
  %v1005 = vpack.c.b16 %v772, %v771
  %v1006 = vpack.c.b16 %v774, %v773
  %v1007 = vpack.c.b16 %v776, %v775
  %v1008 = vpack.c.b16 %v778, %v777
  %v1009 = vpack.c.b16 %v780, %v779
  %v1010 = vpack.c.b16 %v782, %v781
  %v1011 = vpack.c.b16 %v784, %v783
  %v1012 = vpack.c.b16 %v786, %v785
  %v1013 = vpack.c.b16 %v788, %v787
  %v1014 = vpack.c.b16 %v790, %v789
  %v1015 = vpack.c.b16 %v792, %v791
  %v1016 = vpack.c.b16 %v794, %v793
  %v1017 = vpack.c.b16 %v796, %v795
  %v1018 = vpack.c.b16 %v798, %v797
  %v1019 = vpack.c.b16 %v800, %v799
  %v1020 = vpack.c.b16 %v802, %v801
  %v1021 = vpack.c.b16 %v804, %v803
  %v1022 = vpack.c.b16 %v806, %v805
  %v1023 = vpack.c.b16 %v808, %v807
  %v1024 = vpack.c.b16 %v810, %v809
  %v1025 = vpack.c.b16 %v812, %v811
  %v1026 = vpack.c.b16 %v814, %v813
  %v1027 = vpack.c.b16 %v816, %v815
  %v1028 = vpack.c.b16 %v818, %v817
  %v1029 = vpack.c.b16 %v820, %v819
  %v1030 = vpack.c.b16 %v822, %v821
  %v1031 = vpack.c.b16 %v824, %v823
  %v1032 = vpack.c.b16 %v826, %v825
  %v1033 = vpack.c.b16 %v828, %v827
  %v1034 = vpack.c.b16 %v830, %v829
  %v1035 = vpack.c.b16 %v832, %v831
  %v1036 = vpack.c.b16 %v834, %v833
  %v1037 = vpack.c.b16 %v836, %v835
  %v1038 = vpack.c.b16 %v838, %v837
  %v1039 = vpack.c.b16 %v840, %v839
  %v1040 = vpack.c.b16 %v842, %v841
  %v1041 = vpack.c.b16 %v844, %v843
  %v1042 = vpack.c.b16 %v846, %v845
  %v1043 = vpack.c.b16 %v848, %v847
  %v1044 = vpack.c.b16 %v850, %v849
  %v1045 = vpack.c.b16 %v852, %v851
  %v1046 = vpack.c.b16 %v854, %v853
  %v1047 = vpack.c.b16 %v856, %v855
  %v1048 = vpack.c.b16 %v858, %v857
  %v1049 = vpack.c.b16 %v860, %v859
  %v1050 = vpack.c.b16 %v862, %v861
  %v1051 = vpack.c.b16 %v864, %v863
  %v1052 = vpack.c.b16 %v866, %v865
  %v1053 = vpack.c.b16 %v868, %v867
  %v1054 = vpack.c.b16 %v870, %v869
  %v1055 = vpack.c.b16 %v872, %v871
  %v1056 = vpack.c.b16 %v874, %v873
  %v1057 = vpack.c.b16 %v876, %v875
  %v1058 = vpack.c.b16 %v878, %v877
  %v1059 = vpack.c.b16 %v880, %v879
  %v1060 = vpack.c.b16 %v882, %v881
  %v1061 = vpack.c.b16 %v884, %v883
  %v1062 = vpack.c.b16 %v886, %v885
  %v1063 = vpack.c.b16 %v888, %v887
  %v1064 = vpack.c.b16 %v890, %v889
  %v1065 = vpack.c.b16 %v892, %v891
  %v1066 = vpack.c.b16 %v894, %v893
  %v1067 = vpack.c.b16 %v896, %v895
  %v1068 = vpack.c.b16 %v898, %v897
  %v1069 = vpack.c.b16 %v900, %v899
  %v1070 = vpack.c.b16 %v902, %v901
  %v1071 = vpack.c.b16 %v904, %v903
  %v1072 = vpack.c.b16 %v906, %v905
  %v1073 = vpack.c.b16 %v908, %v907
  %v1074 = vpack.c.b16 %v910, %v909
  %v1075 = vpack.c.b16 %v912, %v911
  %v1076 = vpack.c.b16 %v914, %v913
  %v1077 = vpack.c.b16 %v916, %v915
  %v1078 = vpack.c.b16 %v918, %v917
  %v1079 = vpack.c.b16 %v920, %v919
  %v1080 = vpack.c.b16 %v922, %v921
  %v1081 = vpack.c.b16 %v924, %v923
  %v1082 = vpack.c.b16 %v926, %v925
  %v1083 = vpack.c.b16 %v928, %v927
  %v1084 = vpack.c.b16 %v930, %v929
  %v1085 = vpack.c.b16 %v932, %v931
  %v1086 = vpack.c.b16 %v934, %v933
  %v1087 = vpack.c.b16 %v936, %v935
  %v1088 = vpack.c.b16 %v938, %v937
  %v1089 = vpack.c.b16 %v940, %v939
  %v1090 = vpack.c.b16 %v942, %v941
  %v1091 = vpack.c.b16 %v944, %v943
  %v1092 = vpack.c.b16 %v946, %v945
  %v1093 = vpack.c.b16 %v948, %v947
  %v1094 = vpack.c.b16 %v950, %v949
  %v1095 = vpack.c.b16 %v952, %v951
  %v1096 = vpack.c.b16 %v954, %v953
  %v1097 = vpack.c.b16 %v956, %v955
  %v1098 = vpack.c.b16 %v958, %v957
  %v1099 = vpack.c.b16 %v960, %v959
  %v1100 = vpack.c.b16 %v962, %v961
  %v1101 = vpack.c.b16 %v964, %v963
  %v1102 = vpack.c.b16 %v966, %v965
  %v1103 = vpack.c.b16 %v968, %v967
  %v1104 = vpack.c.b16 %v970, %v969
  %v1105 = vpack.c.b16 %v972, %v971
  %v1106 = vpack.c.b16 %v974, %v973
  %v1107 = vpack.c.b16 %v976, %v975
  %v1108 = vpack.c.b16 %v978, %v977
  %v1109 = vpack.c.b16 %v980, %v979
  %v1110 = vpack.c.b16 %v982, %v981
  %1239 = vmatpush.bf16.msra.mxu0 %v990
  %1240 = vmatpush.bf16.msra.mxu0 %v989
  %1241 = vmatpush.bf16.msra.mxu0 %v988
  %1242 = vmatpush.bf16.msra.mxu0 %v987
  %1243 = vmatpush.bf16.msra.mxu0 %v986
  %1244 = vmatpush.bf16.msra.mxu0 %v985
  %1245 = vmatpush.bf16.msra.mxu0 %v984
  %1246 = vmatpush.bf16.msra.mxu0 %v983
  %1247 = vmatmul.bf16.gmra.mxu0 %v407
  %v1248 = vpop.f32.mrf.mxu0
  %v1249 = vadd.f32 0.0, %v1248
  %v1250 = vpop.f32.mrf.mxu0
  %v1251 = vadd.f32 0.0, %v1250
  %1252 = vmatmul.bf16.gmra.mxu0 %v423
  %v1253 = vpop.f32.mrf.mxu0
  %v1254 = vadd.f32 0.0, %v1253
  %v1255 = vpop.f32.mrf.mxu0
  %v1256 = vadd.f32 0.0, %v1255
  %1257 = vdwg.mxu0
  %1258 = vmatpush.bf16.msra.mxu0 %v998
  %1259 = vmatpush.bf16.msra.mxu0 %v997
  %1260 = vmatpush.bf16.msra.mxu0 %v996
  %1261 = vmatpush.bf16.msra.mxu0 %v995
  %1262 = vmatpush.bf16.msra.mxu0 %v994
  %1263 = vmatpush.bf16.msra.mxu0 %v993
  %1264 = vmatpush.bf16.msra.mxu0 %v992
  %1265 = vmatpush.bf16.msra.mxu0 %v991
  %1266 = vmatmul.bf16.gmra.mxu0 %v408
  %v1267 = vpop.f32.mrf.mxu0
  %v1268 = vadd.f32 %v1249, %v1267
  %v1269 = vpop.f32.mrf.mxu0
  %v1270 = vadd.f32 %v1251, %v1269
  %1271 = vmatmul.bf16.gmra.mxu0 %v424
  %v1272 = vpop.f32.mrf.mxu0
  %v1273 = vadd.f32 %v1254, %v1272
  %v1274 = vpop.f32.mrf.mxu0
  %v1275 = vadd.f32 %v1256, %v1274
  %1276 = vdwg.mxu0
  %1277 = vmatpush.bf16.msra.mxu0 %v1006
  %1278 = vmatpush.bf16.msra.mxu0 %v1005
  %1279 = vmatpush.bf16.msra.mxu0 %v1004
  %1280 = vmatpush.bf16.msra.mxu0 %v1003
  %1281 = vmatpush.bf16.msra.mxu0 %v1002
  %1282 = vmatpush.bf16.msra.mxu0 %v1001
  %1283 = vmatpush.bf16.msra.mxu0 %v1000
  %1284 = vmatpush.bf16.msra.mxu0 %v999
  %1285 = vmatmul.bf16.gmra.mxu0 %v409
  %v1286 = vpop.f32.mrf.mxu0
  %v1287 = vadd.f32 %v1268, %v1286
  %v1288 = vpop.f32.mrf.mxu0
  %v1289 = vadd.f32 %v1270, %v1288
  %1290 = vmatmul.bf16.gmra.mxu0 %v425
  %v1291 = vpop.f32.mrf.mxu0
  %v1292 = vadd.f32 %v1273, %v1291
  %v1293 = vpop.f32.mrf.mxu0
  %v1294 = vadd.f32 %v1275, %v1293
  %1295 = vdwg.mxu0
  %1296 = vmatpush.bf16.msra.mxu0 %v1014
  %1297 = vmatpush.bf16.msra.mxu0 %v1013
  %1298 = vmatpush.bf16.msra.mxu0 %v1012
  %1299 = vmatpush.bf16.msra.mxu0 %v1011
  %1300 = vmatpush.bf16.msra.mxu0 %v1010
  %1301 = vmatpush.bf16.msra.mxu0 %v1009
  %1302 = vmatpush.bf16.msra.mxu0 %v1008
  %1303 = vmatpush.bf16.msra.mxu0 %v1007
  %1304 = vmatmul.bf16.gmra.mxu0 %v410
  %v1305 = vpop.f32.mrf.mxu0
  %v1306 = vadd.f32 %v1287, %v1305
  %v1307 = vpop.f32.mrf.mxu0
  %v1308 = vadd.f32 %v1289, %v1307
  %1309 = vmatmul.bf16.gmra.mxu0 %v426
  %v1310 = vpop.f32.mrf.mxu0
  %v1311 = vadd.f32 %v1292, %v1310
  %v1312 = vpop.f32.mrf.mxu0
  %v1313 = vadd.f32 %v1294, %v1312
  %1314 = vdwg.mxu0
  %1315 = vmatpush.bf16.msra.mxu0 %v1022
  %1316 = vmatpush.bf16.msra.mxu0 %v1021
  %1317 = vmatpush.bf16.msra.mxu0 %v1020
  %1318 = vmatpush.bf16.msra.mxu0 %v1019
  %1319 = vmatpush.bf16.msra.mxu0 %v1018
  %1320 = vmatpush.bf16.msra.mxu0 %v1017
  %1321 = vmatpush.bf16.msra.mxu0 %v1016
  %1322 = vmatpush.bf16.msra.mxu0 %v1015
  %1323 = vmatmul.bf16.gmra.mxu0 %v411
  %v1324 = vpop.f32.mrf.mxu0
  %v1325 = vadd.f32 %v1306, %v1324
  %v1326 = vpop.f32.mrf.mxu0
  %v1327 = vadd.f32 %v1308, %v1326
  %1328 = vmatmul.bf16.gmra.mxu0 %v427
  %v1329 = vpop.f32.mrf.mxu0
  %v1330 = vadd.f32 %v1311, %v1329
  %v1331 = vpop.f32.mrf.mxu0
  %v1332 = vadd.f32 %v1313, %v1331
  %1333 = vdwg.mxu0
  %1334 = vmatpush.bf16.msra.mxu0 %v1030
  %1335 = vmatpush.bf16.msra.mxu0 %v1029
  %1336 = vmatpush.bf16.msra.mxu0 %v1028
  %1337 = vmatpush.bf16.msra.mxu0 %v1027
  %1338 = vmatpush.bf16.msra.mxu0 %v1026
  %1339 = vmatpush.bf16.msra.mxu0 %v1025
  %1340 = vmatpush.bf16.msra.mxu0 %v1024
  %1341 = vmatpush.bf16.msra.mxu0 %v1023
  %1342 = vmatmul.bf16.gmra.mxu0 %v412
  %v1343 = vpop.f32.mrf.mxu0
  %v1344 = vadd.f32 %v1325, %v1343
  %v1345 = vpop.f32.mrf.mxu0
  %v1346 = vadd.f32 %v1327, %v1345
  %1347 = vmatmul.bf16.gmra.mxu0 %v428
  %v1348 = vpop.f32.mrf.mxu0
  %v1349 = vadd.f32 %v1330, %v1348
  %v1350 = vpop.f32.mrf.mxu0
  %v1351 = vadd.f32 %v1332, %v1350
  %1352 = vdwg.mxu0
  %1353 = vmatpush.bf16.msra.mxu0 %v1038
  %1354 = vmatpush.bf16.msra.mxu0 %v1037
  %1355 = vmatpush.bf16.msra.mxu0 %v1036
  %1356 = vmatpush.bf16.msra.mxu0 %v1035
  %1357 = vmatpush.bf16.msra.mxu0 %v1034
  %1358 = vmatpush.bf16.msra.mxu0 %v1033
  %1359 = vmatpush.bf16.msra.mxu0 %v1032
  %1360 = vmatpush.bf16.msra.mxu0 %v1031
  %1361 = vmatmul.bf16.gmra.mxu0 %v413
  %v1362 = vpop.f32.mrf.mxu0
  %v1363 = vadd.f32 %v1344, %v1362
  %v1364 = vpop.f32.mrf.mxu0
  %v1365 = vadd.f32 %v1346, %v1364
  %1366 = vmatmul.bf16.gmra.mxu0 %v429
  %v1367 = vpop.f32.mrf.mxu0
  %v1368 = vadd.f32 %v1349, %v1367
  %v1369 = vpop.f32.mrf.mxu0
  %v1370 = vadd.f32 %v1351, %v1369
  %1371 = vdwg.mxu0
  %1372 = vmatpush.bf16.msra.mxu0 %v1046
  %1373 = vmatpush.bf16.msra.mxu0 %v1045
  %1374 = vmatpush.bf16.msra.mxu0 %v1044
  %1375 = vmatpush.bf16.msra.mxu0 %v1043
  %1376 = vmatpush.bf16.msra.mxu0 %v1042
  %1377 = vmatpush.bf16.msra.mxu0 %v1041
  %1378 = vmatpush.bf16.msra.mxu0 %v1040
  %1379 = vmatpush.bf16.msra.mxu0 %v1039
  %1380 = vmatmul.bf16.gmra.mxu0 %v414
  %v1381 = vpop.f32.mrf.mxu0
  %v1382 = vadd.f32 %v1363, %v1381
  %v1383 = vpop.f32.mrf.mxu0
  %v1384 = vadd.f32 %v1365, %v1383
  %1385 = vmatmul.bf16.gmra.mxu0 %v430
  %v1386 = vpop.f32.mrf.mxu0
  %v1387 = vadd.f32 %v1368, %v1386
  %v1388 = vpop.f32.mrf.mxu0
  %v1389 = vadd.f32 %v1370, %v1388
  %1390 = vdwg.mxu0
  %1391 = vmatpush.bf16.msra.mxu0 %v1054
  %1392 = vmatpush.bf16.msra.mxu0 %v1053
  %1393 = vmatpush.bf16.msra.mxu0 %v1052
  %1394 = vmatpush.bf16.msra.mxu0 %v1051
  %1395 = vmatpush.bf16.msra.mxu0 %v1050
  %1396 = vmatpush.bf16.msra.mxu0 %v1049
  %1397 = vmatpush.bf16.msra.mxu0 %v1048
  %1398 = vmatpush.bf16.msra.mxu0 %v1047
  %1399 = vmatmul.bf16.gmra.mxu0 %v415
  %v1400 = vpop.f32.mrf.mxu0
  %v1401 = vadd.f32 %v1382, %v1400
  %v1402 = vpop.f32.mrf.mxu0
  %v1403 = vadd.f32 %v1384, %v1402
  %1404 = vmatmul.bf16.gmra.mxu0 %v431
  %v1405 = vpop.f32.mrf.mxu0
  %v1406 = vadd.f32 %v1387, %v1405
  %v1407 = vpop.f32.mrf.mxu0
  %v1408 = vadd.f32 %v1389, %v1407
  %1409 = vdwg.mxu0
  %1410 = vmatpush.bf16.msra.mxu0 %v1062
  %1411 = vmatpush.bf16.msra.mxu0 %v1061
  %1412 = vmatpush.bf16.msra.mxu0 %v1060
  %1413 = vmatpush.bf16.msra.mxu0 %v1059
  %1414 = vmatpush.bf16.msra.mxu0 %v1058
  %1415 = vmatpush.bf16.msra.mxu0 %v1057
  %1416 = vmatpush.bf16.msra.mxu0 %v1056
  %1417 = vmatpush.bf16.msra.mxu0 %v1055
  %1418 = vmatmul.bf16.gmra.mxu0 %v416
  %v1419 = vpop.f32.mrf.mxu0
  %v1420 = vadd.f32 %v1401, %v1419
  %v1421 = vpop.f32.mrf.mxu0
  %v1422 = vadd.f32 %v1403, %v1421
  %1423 = vmatmul.bf16.gmra.mxu0 %v432
  %v1424 = vpop.f32.mrf.mxu0
  %v1425 = vadd.f32 %v1406, %v1424
  %v1426 = vpop.f32.mrf.mxu0
  %v1427 = vadd.f32 %v1408, %v1426
  %1428 = vdwg.mxu0
  %1429 = vmatpush.bf16.msra.mxu0 %v1070
  %1430 = vmatpush.bf16.msra.mxu0 %v1069
  %1431 = vmatpush.bf16.msra.mxu0 %v1068
  %1432 = vmatpush.bf16.msra.mxu0 %v1067
  %1433 = vmatpush.bf16.msra.mxu0 %v1066
  %1434 = vmatpush.bf16.msra.mxu0 %v1065
  %1435 = vmatpush.bf16.msra.mxu0 %v1064
  %1436 = vmatpush.bf16.msra.mxu0 %v1063
  %1437 = vmatmul.bf16.gmra.mxu0 %v417
  %v1438 = vpop.f32.mrf.mxu0
  %v1439 = vadd.f32 %v1420, %v1438
  %v1440 = vpop.f32.mrf.mxu0
  %v1441 = vadd.f32 %v1422, %v1440
  %1442 = vmatmul.bf16.gmra.mxu0 %v433
  %v1443 = vpop.f32.mrf.mxu0
  %v1444 = vadd.f32 %v1425, %v1443
  %v1445 = vpop.f32.mrf.mxu0
  %v1446 = vadd.f32 %v1427, %v1445
  %1447 = vdwg.mxu0
  %1448 = vmatpush.bf16.msra.mxu0 %v1078
  %1449 = vmatpush.bf16.msra.mxu0 %v1077
  %1450 = vmatpush.bf16.msra.mxu0 %v1076
  %1451 = vmatpush.bf16.msra.mxu0 %v1075
  %1452 = vmatpush.bf16.msra.mxu0 %v1074
  %1453 = vmatpush.bf16.msra.mxu0 %v1073
  %1454 = vmatpush.bf16.msra.mxu0 %v1072
  %1455 = vmatpush.bf16.msra.mxu0 %v1071
  %1456 = vmatmul.bf16.gmra.mxu0 %v418
  %v1457 = vpop.f32.mrf.mxu0
  %v1458 = vadd.f32 %v1439, %v1457
  %v1459 = vpop.f32.mrf.mxu0
  %v1460 = vadd.f32 %v1441, %v1459
  %1461 = vmatmul.bf16.gmra.mxu0 %v434
  %v1462 = vpop.f32.mrf.mxu0
  %v1463 = vadd.f32 %v1444, %v1462
  %v1464 = vpop.f32.mrf.mxu0
  %v1465 = vadd.f32 %v1446, %v1464
  %1466 = vdwg.mxu0
  %1467 = vmatpush.bf16.msra.mxu0 %v1086
  %1468 = vmatpush.bf16.msra.mxu0 %v1085
  %1469 = vmatpush.bf16.msra.mxu0 %v1084
  %1470 = vmatpush.bf16.msra.mxu0 %v1083
  %1471 = vmatpush.bf16.msra.mxu0 %v1082
  %1472 = vmatpush.bf16.msra.mxu0 %v1081
  %1473 = vmatpush.bf16.msra.mxu0 %v1080
  %1474 = vmatpush.bf16.msra.mxu0 %v1079
  %1475 = vmatmul.bf16.gmra.mxu0 %v419
  %v1476 = vpop.f32.mrf.mxu0
  %v1477 = vadd.f32 %v1458, %v1476
  %v1478 = vpop.f32.mrf.mxu0
  %v1479 = vadd.f32 %v1460, %v1478
  %1480 = vmatmul.bf16.gmra.mxu0 %v435
  %v1481 = vpop.f32.mrf.mxu0
  %v1482 = vadd.f32 %v1463, %v1481
  %v1483 = vpop.f32.mrf.mxu0
  %v1484 = vadd.f32 %v1465, %v1483
  %1485 = vdwg.mxu0
  %1486 = vmatpush.bf16.msra.mxu0 %v1094
  %1487 = vmatpush.bf16.msra.mxu0 %v1093
  %1488 = vmatpush.bf16.msra.mxu0 %v1092
  %1489 = vmatpush.bf16.msra.mxu0 %v1091
  %1490 = vmatpush.bf16.msra.mxu0 %v1090
  %1491 = vmatpush.bf16.msra.mxu0 %v1089
  %1492 = vmatpush.bf16.msra.mxu0 %v1088
  %1493 = vmatpush.bf16.msra.mxu0 %v1087
  %1494 = vmatmul.bf16.gmra.mxu0 %v420
  %v1495 = vpop.f32.mrf.mxu0
  %v1496 = vadd.f32 %v1477, %v1495
  %v1497 = vpop.f32.mrf.mxu0
  %v1498 = vadd.f32 %v1479, %v1497
  %1499 = vmatmul.bf16.gmra.mxu0 %v436
  %v1500 = vpop.f32.mrf.mxu0
  %v1501 = vadd.f32 %v1482, %v1500
  %v1502 = vpop.f32.mrf.mxu0
  %v1503 = vadd.f32 %v1484, %v1502
  %1504 = vdwg.mxu0
  %1505 = vmatpush.bf16.msra.mxu0 %v1102
  %1506 = vmatpush.bf16.msra.mxu0 %v1101
  %1507 = vmatpush.bf16.msra.mxu0 %v1100
  %1508 = vmatpush.bf16.msra.mxu0 %v1099
  %1509 = vmatpush.bf16.msra.mxu0 %v1098
  %1510 = vmatpush.bf16.msra.mxu0 %v1097
  %1511 = vmatpush.bf16.msra.mxu0 %v1096
  %1512 = vmatpush.bf16.msra.mxu0 %v1095
  %1513 = vmatmul.bf16.gmra.mxu0 %v421
  %v1514 = vpop.f32.mrf.mxu0
  %v1515 = vadd.f32 %v1496, %v1514
  %v1516 = vpop.f32.mrf.mxu0
  %v1517 = vadd.f32 %v1498, %v1516
  %1518 = vmatmul.bf16.gmra.mxu0 %v437
  %v1519 = vpop.f32.mrf.mxu0
  %v1520 = vadd.f32 %v1501, %v1519
  %v1521 = vpop.f32.mrf.mxu0
  %v1522 = vadd.f32 %v1503, %v1521
  %1523 = vdwg.mxu0
  %1524 = vmatpush.bf16.msra.mxu0 %v1110
  %1525 = vmatpush.bf16.msra.mxu0 %v1109
  %1526 = vmatpush.bf16.msra.mxu0 %v1108
  %1527 = vmatpush.bf16.msra.mxu0 %v1107
  %1528 = vmatpush.bf16.msra.mxu0 %v1106
  %1529 = vmatpush.bf16.msra.mxu0 %v1105
  %1530 = vmatpush.bf16.msra.mxu0 %v1104
  %1531 = vmatpush.bf16.msra.mxu0 %v1103
  %1532 = vmatmul.bf16.gmra.mxu0 %v422
  %v1533 = vpop.f32.mrf.mxu0
  %v1534 = vadd.f32 %v1515, %v1533
  %v1535 = vpop.f32.mrf.mxu0
  %v1536 = vadd.f32 %v1517, %v1535
  %1537 = vmatmul.bf16.gmra.mxu0 %v438
  %v1538 = vpop.f32.mrf.mxu0
  %v1539 = vadd.f32 %v1520, %v1538
  %v1540 = vpop.f32.mrf.mxu0
  %v1541 = vadd.f32 %v1522, %v1540
  %1542 = vdwg.mxu0
  %v1543 = vld [vmem:[%s2] sm:$0x1]
  %v1544 = vld [vmem:[%s3] sm:$0x1]
  %v1545 = vadd.f32 %v1534, %v1536
  %v1546 = vadd.f32 %v1545, %v1539
  %v1547 = vadd.f32 %v1546, %v1541
  %v1548 = vrot.slane %v1547, 4
  %v1549 = vadd.f32 %v1547, %v1548
  %v1550 = vrot.slane %v1549, 2
  %v1551 = vadd.f32 %v1549, %v1550
  %v1552 = vrot.slane %v1551, 1
  %v1553 = vadd.f32 %v1551, %v1552
  %v1554 = vmul.f32 %v1553, 0.03125
  %v1555 = vmul.f32 %v1534, %v1534
  %v1556 = vmul.f32 %v1536, %v1536
  %v1557 = vmul.f32 %v1539, %v1539
  %v1558 = vmul.f32 %v1541, %v1541
  %v1559 = vadd.f32 %v1555, %v1556
  %v1560 = vadd.f32 %v1559, %v1557
  %v1561 = vadd.f32 %v1560, %v1558
  %v1562 = vrot.slane %v1561, 4
  %v1563 = vadd.f32 %v1561, %v1562
  %v1564 = vrot.slane %v1563, 2
  %v1565 = vadd.f32 %v1563, %v1564
  %v1566 = vrot.slane %v1565, 1
  %v1567 = vadd.f32 %v1565, %v1566
  %v1568 = vmul.f32 %v1567, 0.03125
  %v1569 = vmul.f32 %v1554, %v1554
  %v1570 = vsub.f32 %v1568, %v1569
  %v1571 = vmax.f32 %v1570, 0.0
  %v1572 = vadd.f32 %v1571, 1e-05
  %v1573 = vrsqrt.pop %v1572
  %v1574 = vmul.f32 %v1573, %v1572
  %v1575 = vmul.f32 %v1574, %v1573
  %v1576 = vmul.f32 0.5, %v1575
  %v1577 = vsub.f32 1.5, %v1576
  %v1578 = vmul.f32 %v1573, %v1577
  %vm1579 = vweird.f32 %v1572
  %vm1580 = vweird.f32 %v1573
  %vm1581 = vmor %vm1579, %vm1580
  %v1582 = vsel %vm1581, %v1573, %v1578
  %v1583 = vmul.f32 %v1543, %v1582
  %v1584 = vmul.f32 %v1554, %v1583
  %v1585 = vsub.f32 %v1544, %v1584
  %v1587 = vperm.slane %v1583, 0
  %v1589 = vmul.f32 %v1534, %v1587
  %v1590 = vmul.f32 %v1536, %v1587
  %v1591 = vmul.f32 %v1539, %v1587
  %v1592 = vmul.f32 %v1541, %v1587
  %v1594 = vperm.slane %v1585, 0
  %v1596 = vadd.f32 %v1589, %v1594
  %v1597 = vadd.f32 %v1590, %v1594
  %v1598 = vadd.f32 %v1591, %v1594
  %v1599 = vadd.f32 %v1592, %v1594
  %v1600 = vmul.f32 %v1596, 0.2
  %v1601 = vmul.f32 %v1597, 0.2
  %v1602 = vmul.f32 %v1598, 0.2
  %v1603 = vmul.f32 %v1599, 0.2
  %v1604 = vmax.f32 %v1596, %v1600
  %v1605 = vmax.f32 %v1597, %v1601
  %v1606 = vmax.f32 %v1598, %v1602
  %v1607 = vmax.f32 %v1599, %v1603
  %v1608 = vld [vmem:[%s4] sm:$0xff]
  %v1609 = vld [vmem:[%s4 + $0x8] sm:$0xff]
  %v1610 = vld [vmem:[%s4 + $0x10] sm:$0xff]
  %v1611 = vld [vmem:[%s4 + $0x18] sm:$0xff]
  %v1612 = vmul.f32 %v1604, %v1608
  %v1613 = vmul.f32 %v1605, %v1609
  %v1614 = vmul.f32 %v1606, %v1610
  %v1615 = vmul.f32 %v1607, %v1611
  %1616 = vadd.xlane.f32.xlu0 %v1612
  %v1617 = vpop.xlane.xlu0 %1616
  %1618 = vadd.xlane.f32.xlu0 %v1613
  %v1619 = vpop.xlane.xlu0 %1618
  %1620 = vadd.xlane.f32.xlu0 %v1614
  %v1621 = vpop.xlane.xlu0 %1620
  %1622 = vadd.xlane.f32.xlu0 %v1615
  %v1623 = vpop.xlane.xlu0 %1622
  %v1624 = vld [vmem:[%s5] sm:$0x3]
  %vm1625 = vcmask 261120
  %v1627 = vsel %vm1625, %v1624, 0
  %1629 = vmatpush.msra.mxu0 0.0
  %1630 = vmatpush.msra.mxu0 0.0
  %1631 = vmatpush.msra.mxu0 0.0
  %1632 = vmatpush.msra.mxu0 0.0
  %1633 = vmatpush.msra.mxu0 0.0
  %1634 = vmatpush.msra.mxu0 0.0
  %1635 = vmatpush.msra.mxu0 0.0
  %1636 = vmatpush.msra.mxu0 0.0
  %1637 = vmatpush.msra.mxu0 0.0
  %1638 = vmatpush.msra.mxu0 0.0
  %1639 = vmatpush.msra.mxu0 0.0
  %1640 = vmatpush.msra.mxu0 0.0
  %1641 = vmatpush.msra.mxu0 %v1623
  %1642 = vmatpush.msra.mxu0 %v1621
  %1643 = vmatpush.msra.mxu0 %v1619
  %1644 = vmatpush.msra.mxu0 %v1617
  %1645 = vmatmul.f32.gmra.mxu0 %v1627
  %v1646 = vpop.f32.mrf.mxu0
  %v1647 = vadd.f32 0.0, %v1646
  %1648 = vdwg.mxu0
  %v1649 = vand.u32 2147483647, %v1647
  %v1650 = vsub.f32 0.0, %v1649
  %v1651 = vmul.f32 %v1650, 1.442695
  %v1652 = vpow.pop %v1651
  %v1653 = vadd.f32 %v1652, 1.0
  %v1654 = vrcp.pop %v1653
  %v1655 = vmul.f32 %v1653, %v1654
  %v1656 = vsub.f32 1.0, %v1655
  %v1657 = vmul.f32 %v1654, %v1656
  %v1658 = vadd.f32 %v1654, %v1657
  %vm1659 = vweird.f32 %v1653
  %vm1660 = vweird.f32 %v1654
  %vm1661 = vmor %vm1659, %vm1660
  %v1662 = vsel %vm1661, %v1654, %v1658
  %v1663 = vand.u32 2147483647, %v1653
  %vm1664 = vcmp.eq.f32.partialorder %v1663, 8.507059e+37
  %v1665 = vand.u32 %v1653, 2147483648
  %v1666 = vor.u32 1.1754944e-38, %v1665
  %v1667 = vsel %vm1664, %v1666, %v1662
  %v1668 = vmul.f32 1.0, %v1667
  %vm1669 = vcmp.ge.f32.partialorder %v1647, 0.0
  %v1670 = vmul.f32 %v1652, %v1668
  %v1671 = vsel %vm1669, %v1668, %v1670
  %1673 = vset.pattern.permute.xlu0 0
  %1674 = vperm.xlu0 %1673, %v1671
  %v1675 = vpop.permute.xlu0 %1674
  %1677 = vst [vmem:[%s6] sm:$0x3] %v1675
  // Predicated region
  $region26: #{discriminator_forward.7} parent=0 // pred_check
    _
  $region27: #{discriminator_forward.7} parent=0 // pred_check_branch
    %1679 = sbr.rel (0) target = $region29
  $region28: #{discriminator_forward.7} parent=0 // pred_region
    _
  $region29: #{discriminator_forward.7} parent=0 // pred_fallthru
    _
  // Predicated region
  $region30: #{discriminator_forward.7} parent=0 // pred_check
    _
  $region31: #{discriminator_forward.7} parent=0 // pred_check_branch
    %1681 = sbr.rel (0) target = $region33
  $region32: #{discriminator_forward.7} parent=0 // pred_region
    _
  $region33: #{discriminator_forward.7} parent=0 // pred_fallthru
    _

</llo_original>
